<compile_context>
chip_gen: v6e
topology: v6e:2x2x1
jax: 0.10.0
libtpu: 0.0.40
codegen_flags: <defaults>
</compile_context>

<pallas_src>
import numpy as np
import jax
import jax.numpy as jnp
from jax.experimental import pallas as pl
from jax.experimental.pallas import tpu as pltpu

_BT = 8    # images per grid step
_S = 40    # per-image row stride (32 real rows + 8 zero-pad rows)


# ----------------------------------------------------------------------------
# Kernel
# ----------------------------------------------------------------------------
def _simple_cnn_kernel(x_ref, w1_ref, b1_ref, w2_ref, b2_ref,
                       f1_ref, fb1_ref, f2_ref, fb2_ref, f3_ref, fb3_ref,
                       o_ref, a1_ref, p1_ref, a2_ref, p2_ref, h_ref):
    f32 = jnp.float32
    r = x_ref.shape[0]          # _S * Bt rows for this step
    bt = r // _S
    m1, m1p = r - 4, r - 5      # conv1 rows computed / pool1 rows computed
    m2, m2p = r - 13, r - 15    # conv2 rows / pool2 rows
    mh = r - 39                 # fc1 (Toeplitz) rows

    # ---- conv1 (5x5 valid) as 5 Toeplitz matmuls, bias+ReLU fused in tap 4 ----
    for di in range(5):
        t = jnp.dot(x_ref[di:di + m1, :], w1_ref[di], preferred_element_type=f32)
        if di == 0:
            a1_ref[...] = t
        elif di < 4:
            a1_ref[...] += t
        else:
            a1_ref[...] = jnp.maximum(a1_ref[...] + t + b1_ref[...], 0.0)

    # ---- 2x2/2 max-pool 1: row pairs (r, r+1) + lane halves (even-w, odd-w) ---
    rmax = jnp.maximum(a1_ref[0:m1p, :], a1_ref[1:m1p + 1, :])
    p1_ref[...] = jnp.maximum(rmax[:, 0:128], rmax[:, 128:256])   # lanes: 14*oc + j

    # ---- conv2 (5x5 valid) on the pooled map (row shift 2*di) ----------------
    for di in range(5):
        t = jnp.dot(p1_ref[2 * di:2 * di + m2, :], w2_ref[di],
                    preferred_element_type=f32)
        if di == 0:
            a2_ref[...] = t
        elif di < 4:
            a2_ref[...] += t
        else:
            a2_ref[...] = jnp.maximum(a2_ref[...] + t + b2_ref[...], 0.0)

    # ---- 2x2/2 max-pool 2: row pairs (r, r+2) + lane halves -------------------
    rmax2 = jnp.maximum(a2_ref[0:m2p, :], a2_ref[2:m2p + 2, :])
    p2_ref[...] = jnp.maximum(rmax2[:, 0:128], rmax2[:, 128:256])  # lanes: 5*oc2 + j3

    # ---- fc1 as a 5-tap Toeplitz matmul over pooled rows (shift 4*i3) ---------
    for i3 in range(5):
        t = jnp.dot(p2_ref[4 * i3:4 * i3 + mh, :], f1_ref[i3],
                    preferred_element_type=f32)
        if i3 == 0:
            h_ref[...] = t
        else:
            h_ref[...] += t

    # ---- gather the Bt valid fc1 rows (one per image, sublane-aligned) --------
    hb = jnp.concatenate([h_ref[_S * b:_S * b + 1, :] for b in range(bt)], axis=0)
    hb = jnp.maximum(hb + fb1_ref[...], 0.0)                       # ReLU(fc1)

    # ---- fc2 + ReLU, fc3 : M = Bt, lane-dense output --------------------------
    h2 = jnp.maximum(jnp.dot(hb, f2_ref[...], preferred_element_type=f32)
                     + fb2_ref[...], 0.0)
    out = jnp.dot(h2, f3_ref[...], preferred_element_type=f32) + fb3_ref[...]
    o_ref[...] = out.astype(o_ref.dtype)


# ----------------------------------------------------------------------------
# One-time host-side weight repacking (hoisted out of the jitted forward).
# ----------------------------------------------------------------------------
def pack_params(params):
    gp = lambda k: np.asarray(jax.device_get(params[k]), np.float32)
    c1w, c1b = gp("conv1_w"), gp("conv1_b")      # (6,3,5,5), (6,)
    c2w, c2b = gp("conv2_w"), gp("conv2_b")      # (16,6,5,5), (16,)
    f1w, f1b = gp("fc1_w"), gp("fc1_b")          # (400,120), (120,)
    f2w, f2b = gp("fc2_w"), gp("fc2_b")          # (120,84),  (84,)
    f3w, f3b = gp("fc3_w"), gp("fc3_b")          # (84,10),   (10,)

    # conv1: input lanes = c*32 + w_in, output lanes = (w%2)*128 + oc*14 + w//2
    w1 = np.arange(28)
    lane1 = lambda oc: (w1 % 2) * 128 + oc * 14 + w1 // 2
    W1T = np.zeros((5, 128, 256), np.float32)
    b1T = np.zeros((1, 256), np.float32)
    for oc in range(6):
        b1T[0, lane1(oc)] = c1b[oc]
        for di in range(5):
            for c in range(3):
                for dj in range(5):
                    W1T[di, c * 32 + dj + w1, lane1(oc)] = c1w[oc, c, di, dj]

    # conv2: input lanes = 14*oc1 + j, output lanes = (w%2)*128 + oc2*5 + w//2
    w2 = np.arange(10)
    lane2 = lambda oc: (w2 % 2) * 128 + oc * 5 + w2 // 2
    W2T = np.zeros((5, 128, 256), np.float32)
    b2T = np.zeros((1, 256), np.float32)
    for oc2 in range(16):
        b2T[0, lane2(oc2)] = c2b[oc2]
        for di in range(5):
            for oc1 in range(6):
                for dj in range(5):
                    W2T[di, oc1 * 14 + dj + w2, lane2(oc2)] = c2w[oc2, oc1, di, dj]

    # fc1 regrouped by pooled row i3 (input lanes = 5*oc2 + j3), PyTorch
    # flatten order f = oc2*25 + i3*5 + j3 preserved.
    F1 = np.zeros((5, 128, 128), np.float32)
    for i3 in range(5):
        for oc2 in range(16):
            for j3 in range(5):
                F1[i3, oc2 * 5 + j3, :120] = f1w[oc2 * 25 + i3 * 5 + j3]
    fb1 = np.zeros((1, 128), np.float32); fb1[0, :120] = f1b
    F2 = np.zeros((128, 128), np.float32); F2[:120, :84] = f2w
    fb2 = np.zeros((1, 128), np.float32); fb2[0, :84] = f2b
    F3 = np.zeros((128, 128), np.float32); F3[:84, :10] = f3w
    fb3 = np.zeros((1, 128), np.float32); fb3[0, :10] = f3b

    return tuple(jnp.asarray(a) for a in
                 (W1T, b1T, W2T, b2T, F1, fb1, F2, fb2, F3, fb3))


# ----------------------------------------------------------------------------
# Wrapper
# ----------------------------------------------------------------------------
def simple_cnn_forward(packed, x, *, bt=_BT):
    """x: (B, 3, 32, 32) float32 NCHW -> logits (B, 10) float32."""
    B = x.shape[0]
    assert x.shape[1:] == (3, 32, 32)
    g = -(-B // bt)
    Bp = g * bt

    # Layout glue only: NCHW -> (b, h, c*32 + w), pad h 32->40 and lanes 96->128.
    xl = jnp.transpose(x.astype(jnp.float32), (0, 2, 1, 3)).reshape(B, 32, 96)
    xl = jnp.pad(xl, ((0, Bp - B), (0, _S - 32), (0, 128 - 96)))
    xl = xl.reshape(Bp * _S, 128)

    r = bt * _S
    m1, m1p, m2, m2p, mh = r - 4, r - 5, r - 13, r - 15, r - 39

    grid_spec = pltpu.PrefetchScalarGridSpec(
        num_scalar_prefetch=0,
        grid=(g,),
        in_specs=[
            pl.BlockSpec((r, 128), lambda i: (i, 0)),            # image rows
            pl.BlockSpec((5, 128, 256), lambda i: (0, 0, 0)),    # conv1 Toeplitz w
            pl.BlockSpec((1, 256), lambda i: (0, 0)),            # conv1 b
            pl.BlockSpec((5, 128, 256), lambda i: (0, 0, 0)),    # conv2 Toeplitz w
            pl.BlockSpec((1, 256), lambda i: (0, 0)),            # conv2 b
            pl.BlockSpec((5, 128, 128), lambda i: (0, 0, 0)),    # fc1 w (per i3)
            pl.BlockSpec((1, 128), lambda i: (0, 0)),            # fc1 b
            pl.BlockSpec((128, 128), lambda i: (0, 0)),          # fc2 w
            pl.BlockSpec((1, 128), lambda i: (0, 0)),            # fc2 b
            pl.BlockSpec((128, 128), lambda i: (0, 0)),          # fc3 w
            pl.BlockSpec((1, 128), lambda i: (0, 0)),            # fc3 b
        ],
        out_specs=pl.BlockSpec((bt, 128), lambda i: (i, 0)),
        scratch_shapes=[
            pltpu.VMEM((m1, 256), jnp.float32),    # conv1 out
            pltpu.VMEM((m1p, 128), jnp.float32),   # pooled1
            pltpu.VMEM((m2, 256), jnp.float32),    # conv2 out
            pltpu.VMEM((m2p, 128), jnp.float32),   # pooled2
            pltpu.VMEM((mh, 128), jnp.float32),    # fc1 (pre-gather)
        ],
    )
    out = pl.pallas_call(
        _simple_cnn_kernel,
        out_shape=jax.ShapeDtypeStruct((Bp, 128), jnp.float32),
        grid_spec=grid_spec,
        compiler_params=pltpu.CompilerParams(
            dimension_semantics=("parallel",),     # batch-parallel (2 TCs on v7x)
            vmem_limit_bytes=32 * 1024 * 1024,
        ),
    )(xl, *packed)
    return out[:B, :10]


# ----------------------------------------------------------------------------
# Params + pure-JAX reference
# ----------------------------------------------------------------------------
def init_params(key):
    """Deterministic PyTorch-style uniform(-1/sqrt(fan_in), +1/sqrt(fan_in)) init."""
    ks = jax.random.split(key, 10)

    def u(k, shape, fan_in):
        bound = 1.0 / float(fan_in) ** 0.5
        return jax.random.uniform(k, shape, jnp.float32, -bound, bound)

    return {
        "conv1_w": u(ks[0], (6, 3, 5, 5), 3 * 5 * 5),
        "conv1_b": u(ks[1], (6,), 3 * 5 * 5),
        "conv2_w": u(ks[2], (16, 6, 5, 5), 6 * 5 * 5),
        "conv2_b": u(ks[3], (16,), 6 * 5 * 5),
        "fc1_w": u(ks[4], (400, 120), 400),
        "fc1_b": u(ks[5], (120,), 400),
        "fc2_w": u(ks[6], (120, 84), 120),
        "fc2_b": u(ks[7], (84,), 120),
        "fc3_w": u(ks[8], (84, 10), 84),
        "fc3_b": u(ks[9], (10,), 84),
    }


def _reference_forward(params, x):
    """Pure-JAX reference matching the PyTorch module."""
    dn = ("NCHW", "OIHW", "NCHW")
    y = jax.lax.conv_general_dilated(x, params["conv1_w"], (1, 1), "VALID",
                                     dimension_numbers=dn)
    y = jnp.maximum(y + params["conv1_b"].reshape(1, -1, 1, 1), 0.0)
    y = jax.lax.reduce_window(y, jnp.float32(-jnp.inf), jax.lax.max,
                              (1, 1, 2, 2), (1, 1, 2, 2), "VALID")
    y = jax.lax.conv_general_dilated(y, params["conv2_w"], (1, 1), "VALID",
                                     dimension_numbers=dn)
    y = jnp.maximum(y + params["conv2_b"].reshape(1, -1, 1, 1), 0.0)
    y = jax.lax.reduce_window(y, jnp.float32(-jnp.inf), jax.lax.max,
                              (1, 1, 2, 2), (1, 1, 2, 2), "VALID")
    y = y.reshape(y.shape[0], -1)
    y = jnp.maximum(y @ params["fc1_w"] + params["fc1_b"], 0.0)
    y = jnp.maximum(y @ params["fc2_w"] + params["fc2_b"], 0.0)
    return y @ params["fc3_w"] + params["fc3_b"]


if __name__ == "__main__":
    key = jax.random.PRNGKey(0)
    pkey, xkey = jax.random.split(key)
    params = init_params(pkey)
    packed = pack_params(params)        # one-time repack, outside jit
    # fc1 expects 16*5*5 features => 3x32x32 (CIFAR-sized) inputs; B=12 exercises
    # both the batch-padding path (12 -> 16) and >=2 grid steps (v7x megacore).
    x = jax.random.normal(xkey, (12, 3, 32, 32), jnp.float32)

    fwd = jax.jit(simple_cnn_forward)
    out = jax.block_until_ready(fwd(packed, x))
    assert out.shape == (12, 10) and out.dtype == jnp.float32

    ref = jax.block_until_ready(jax.jit(_reference_forward)(params, x))
    if not bool(jnp.allclose(out, ref, atol=1e-2, rtol=1e-2)):
        err = float(jnp.max(jnp.abs(out - ref)))
        raise AssertionError(f"Pallas forward mismatch vs reference, max|err|={err}")
    print("KERNEL_OK")
</pallas_src>

<mosaic_0001>
module attributes {stable_mosaic.version = 11 : i64} {
  func.func @_simple_cnn_kernel(%arg0: i32, %arg1: memref<320x128xf32, #tpu.memory_space<vmem>>, %arg2: memref<5x128x256xf32, #tpu.memory_space<vmem>>, %arg3: memref<1x256xf32, #tpu.memory_space<vmem>>, %arg4: memref<5x128x256xf32, #tpu.memory_space<vmem>>, %arg5: memref<1x256xf32, #tpu.memory_space<vmem>>, %arg6: memref<5x128x128xf32, #tpu.memory_space<vmem>>, %arg7: memref<1x128xf32, #tpu.memory_space<vmem>>, %arg8: memref<128x128xf32, #tpu.memory_space<vmem>>, %arg9: memref<1x128xf32, #tpu.memory_space<vmem>>, %arg10: memref<128x128xf32, #tpu.memory_space<vmem>>, %arg11: memref<1x128xf32, #tpu.memory_space<vmem>>, %arg12: memref<8x128xf32, #tpu.memory_space<vmem>>, %arg13: memref<316x256xf32, #tpu.memory_space<vmem>>, %arg14: memref<315x128xf32, #tpu.memory_space<vmem>>, %arg15: memref<307x256xf32, #tpu.memory_space<vmem>>, %arg16: memref<305x128xf32, #tpu.memory_space<vmem>>, %arg17: memref<281x128xf32, #tpu.memory_space<vmem>>) attributes {dimension_semantics = [#tpu.dimension_semantics<parallel>], iteration_bounds = array<i64: 2>, scalar_prefetch = 0 : i64, scratch_operands = 5 : i64, tpu.core_type = #tpu.core_type<tc>, window_params = [{transform_indices = @transform_0, window_bounds = array<i64: 320, 128>}, {pipeline_mode = #tpu.pipeline_mode<synchronous>, transform_indices = @transform_1, window_bounds = array<i64: 5, 128, 256>}, {pipeline_mode = #tpu.pipeline_mode<synchronous>, transform_indices = @transform_2, window_bounds = array<i64: 1, 256>}, {pipeline_mode = #tpu.pipeline_mode<synchronous>, transform_indices = @transform_3, window_bounds = array<i64: 5, 128, 256>}, {pipeline_mode = #tpu.pipeline_mode<synchronous>, transform_indices = @transform_4, window_bounds = array<i64: 1, 256>}, {pipeline_mode = #tpu.pipeline_mode<synchronous>, transform_indices = @transform_5, window_bounds = array<i64: 5, 128, 128>}, {pipeline_mode = #tpu.pipeline_mode<synchronous>, transform_indices = @transform_6, window_bounds = array<i64: 1, 128>}, {pipeline_mode = #tpu.pipeline_mode<synchronous>, transform_indices = @transform_7, window_bounds = array<i64: 128, 128>}, {pipeline_mode = #tpu.pipeline_mode<synchronous>, transform_indices = @transform_8, window_bounds = array<i64: 1, 128>}, {pipeline_mode = #tpu.pipeline_mode<synchronous>, transform_indices = @transform_9, window_bounds = array<i64: 128, 128>}, {pipeline_mode = #tpu.pipeline_mode<synchronous>, transform_indices = @transform_10, window_bounds = array<i64: 1, 128>}, {transform_indices = @transform_11, window_bounds = array<i64: 8, 128>}]} {
    %c0 = arith.constant 0 : index
    %c0_0 = arith.constant 0 : index
    %0 = vector.load %arg1[%c0, %c0_0] : memref<320x128xf32, #tpu.memory_space<vmem>>, vector<316x128xf32>
    %c0_1 = arith.constant 0 : index
    %c0_2 = arith.constant 0 : index
    %c0_3 = arith.constant 0 : index
    %1 = vector.load %arg2[%c0_1, %c0_2, %c0_3] : memref<5x128x256xf32, #tpu.memory_space<vmem>>, vector<1x128x256xf32>
    %2 = vector.shape_cast %1 : vector<1x128x256xf32> to vector<128x256xf32>
    %cst = arith.constant dense<0.000000e+00> : vector<316x256xf32>
    %3 = tpu.matmul %0, %2, %cst {dimension_numbers = #tpu.dot_dimension_numbers<[1], [0], [0], [1], [0, 0, 1, 1], [], []>} : vector<316x128xf32>, vector<128x256xf32>, vector<316x256xf32> -> vector<316x256xf32>
    %c0_4 = arith.constant 0 : index
    %c0_5 = arith.constant 0 : index
    %4 = vector.load %arg13[%c0_4, %c0_5] : memref<316x256xf32, #tpu.memory_space<vmem>>, vector<316x256xf32>
    tpu.vector_store %arg13[%c0_4, %c0_5], %3 {strides = array<i32>} : memref<316x256xf32, #tpu.memory_space<vmem>>, vector<316x256xf32>,
    %c1 = arith.constant 1 : index
    %c0_6 = arith.constant 0 : index
    %5 = vector.load %arg1[%c1, %c0_6] : memref<320x128xf32, #tpu.memory_space<vmem>>, vector<316x128xf32>
    %c1_7 = arith.constant 1 : index
    %c0_8 = arith.constant 0 : index
    %c0_9 = arith.constant 0 : index
    %6 = vector.load %arg2[%c1_7, %c0_8, %c0_9] : memref<5x128x256xf32, #tpu.memory_space<vmem>>, vector<1x128x256xf32>
    %7 = vector.shape_cast %6 : vector<1x128x256xf32> to vector<128x256xf32>
    %cst_10 = arith.constant dense<0.000000e+00> : vector<316x256xf32>
    %8 = tpu.matmul %5, %7, %cst_10 {dimension_numbers = #tpu.dot_dimension_numbers<[1], [0], [0], [1], [0, 0, 1, 1], [], []>} : vector<316x128xf32>, vector<128x256xf32>, vector<316x256xf32> -> vector<316x256xf32>
    %c0_11 = arith.constant 0 : index
    %c0_12 = arith.constant 0 : index
    %9 = vector.load %arg13[%c0_11, %c0_12] : memref<316x256xf32, #tpu.memory_space<vmem>>, vector<316x256xf32>
    %10 = arith.addf %9, %8 : vector<316x256xf32>
    %c0_13 = arith.constant 0 : index
    %c0_14 = arith.constant 0 : index
    %11 = vector.load %arg13[%c0_13, %c0_14] : memref<316x256xf32, #tpu.memory_space<vmem>>, vector<316x256xf32>
    tpu.vector_store %arg13[%c0_13, %c0_14], %10 {strides = array<i32>} : memref<316x256xf32, #tpu.memory_space<vmem>>, vector<316x256xf32>,
    %c2 = arith.constant 2 : index
    %c0_15 = arith.constant 0 : index
    %12 = vector.load %arg1[%c2, %c0_15] : memref<320x128xf32, #tpu.memory_space<vmem>>, vector<316x128xf32>
    %c2_16 = arith.constant 2 : index
    %c0_17 = arith.constant 0 : index
    %c0_18 = arith.constant 0 : index
    %13 = vector.load %arg2[%c2_16, %c0_17, %c0_18] : memref<5x128x256xf32, #tpu.memory_space<vmem>>, vector<1x128x256xf32>
    %14 = vector.shape_cast %13 : vector<1x128x256xf32> to vector<128x256xf32>
    %cst_19 = arith.constant dense<0.000000e+00> : vector<316x256xf32>
    %15 = tpu.matmul %12, %14, %cst_19 {dimension_numbers = #tpu.dot_dimension_numbers<[1], [0], [0], [1], [0, 0, 1, 1], [], []>} : vector<316x128xf32>, vector<128x256xf32>, vector<316x256xf32> -> vector<316x256xf32>
    %c0_20 = arith.constant 0 : index
    %c0_21 = arith.constant 0 : index
    %16 = vector.load %arg13[%c0_20, %c0_21] : memref<316x256xf32, #tpu.memory_space<vmem>>, vector<316x256xf32>
    %17 = arith.addf %16, %15 : vector<316x256xf32>
    %c0_22 = arith.constant 0 : index
    %c0_23 = arith.constant 0 : index
    %18 = vector.load %arg13[%c0_22, %c0_23] : memref<316x256xf32, #tpu.memory_space<vmem>>, vector<316x256xf32>
    tpu.vector_store %arg13[%c0_22, %c0_23], %17 {strides = array<i32>} : memref<316x256xf32, #tpu.memory_space<vmem>>, vector<316x256xf32>,
    %c3 = arith.constant 3 : index
    %c0_24 = arith.constant 0 : index
    %19 = vector.load %arg1[%c3, %c0_24] : memref<320x128xf32, #tpu.memory_space<vmem>>, vector<316x128xf32>
    %c3_25 = arith.constant 3 : index
    %c0_26 = arith.constant 0 : index
    %c0_27 = arith.constant 0 : index
    %20 = vector.load %arg2[%c3_25, %c0_26, %c0_27] : memref<5x128x256xf32, #tpu.memory_space<vmem>>, vector<1x128x256xf32>
    %21 = vector.shape_cast %20 : vector<1x128x256xf32> to vector<128x256xf32>
    %cst_28 = arith.constant dense<0.000000e+00> : vector<316x256xf32>
    %22 = tpu.matmul %19, %21, %cst_28 {dimension_numbers = #tpu.dot_dimension_numbers<[1], [0], [0], [1], [0, 0, 1, 1], [], []>} : vector<316x128xf32>, vector<128x256xf32>, vector<316x256xf32> -> vector<316x256xf32>
    %c0_29 = arith.constant 0 : index
    %c0_30 = arith.constant 0 : index
    %23 = vector.load %arg13[%c0_29, %c0_30] : memref<316x256xf32, #tpu.memory_space<vmem>>, vector<316x256xf32>
    %24 = arith.addf %23, %22 : vector<316x256xf32>
    %c0_31 = arith.constant 0 : index
    %c0_32 = arith.constant 0 : index
    %25 = vector.load %arg13[%c0_31, %c0_32] : memref<316x256xf32, #tpu.memory_space<vmem>>, vector<316x256xf32>
    tpu.vector_store %arg13[%c0_31, %c0_32], %24 {strides = array<i32>} : memref<316x256xf32, #tpu.memory_space<vmem>>, vector<316x256xf32>,
    %c4 = arith.constant 4 : index
    %c0_33 = arith.constant 0 : index
    %26 = vector.load %arg1[%c4, %c0_33] : memref<320x128xf32, #tpu.memory_space<vmem>>, vector<316x128xf32>
    %c4_34 = arith.constant 4 : index
    %c0_35 = arith.constant 0 : index
    %c0_36 = arith.constant 0 : index
    %27 = vector.load %arg2[%c4_34, %c0_35, %c0_36] : memref<5x128x256xf32, #tpu.memory_space<vmem>>, vector<1x128x256xf32>
    %28 = vector.shape_cast %27 : vector<1x128x256xf32> to vector<128x256xf32>
    %cst_37 = arith.constant dense<0.000000e+00> : vector<316x256xf32>
    %29 = tpu.matmul %26, %28, %cst_37 {dimension_numbers = #tpu.dot_dimension_numbers<[1], [0], [0], [1], [0, 0, 1, 1], [], []>} : vector<316x128xf32>, vector<128x256xf32>, vector<316x256xf32> -> vector<316x256xf32>
    %c0_38 = arith.constant 0 : index
    %c0_39 = arith.constant 0 : index
    %30 = vector.load %arg13[%c0_38, %c0_39] : memref<316x256xf32, #tpu.memory_space<vmem>>, vector<316x256xf32>
    %31 = arith.addf %30, %29 : vector<316x256xf32>
    %c0_40 = arith.constant 0 : index
    %c0_41 = arith.constant 0 : index
    %32 = vector.load %arg3[%c0_40, %c0_41] : memref<1x256xf32, #tpu.memory_space<vmem>>, vector<1x256xf32>
    %33 = vector.broadcast %32 : vector<1x256xf32> to vector<316x256xf32>
    %34 = arith.addf %31, %33 : vector<316x256xf32>
    %cst_42 = arith.constant 0.000000e+00 : f32
    %35 = vector.broadcast %cst_42 : f32 to vector<316x256xf32>
    %36 = arith.maximumf %34, %35 : vector<316x256xf32>
    %c0_43 = arith.constant 0 : index
    %c0_44 = arith.constant 0 : index
    %37 = vector.load %arg13[%c0_43, %c0_44] : memref<316x256xf32, #tpu.memory_space<vmem>>, vector<316x256xf32>
    tpu.vector_store %arg13[%c0_43, %c0_44], %36 {strides = array<i32>} : memref<316x256xf32, #tpu.memory_space<vmem>>, vector<316x256xf32>,
    %c0_45 = arith.constant 0 : index
    %c0_46 = arith.constant 0 : index
    %38 = vector.load %arg13[%c0_45, %c0_46] : memref<316x256xf32, #tpu.memory_space<vmem>>, vector<315x256xf32>
    %c1_47 = arith.constant 1 : index
    %c0_48 = arith.constant 0 : index
    %39 = vector.load %arg13[%c1_47, %c0_48] : memref<316x256xf32, #tpu.memory_space<vmem>>, vector<315x256xf32>
    %40 = arith.maximumf %38, %39 : vector<315x256xf32>
    %41 = vector.extract_strided_slice %40 {offsets = [0, 0], sizes = [315, 128], strides = [1, 1]} : vector<315x256xf32> to vector<315x128xf32>
    %42 = vector.extract_strided_slice %40 {offsets = [0, 128], sizes = [315, 128], strides = [1, 1]} : vector<315x256xf32> to vector<315x128xf32>
    %43 = arith.maximumf %41, %42 : vector<315x128xf32>
    %c0_49 = arith.constant 0 : index
    %c0_50 = arith.constant 0 : index
    %44 = vector.load %arg14[%c0_49, %c0_50] : memref<315x128xf32, #tpu.memory_space<vmem>>, vector<315x128xf32>
    tpu.vector_store %arg14[%c0_49, %c0_50], %43 {strides = array<i32>} : memref<315x128xf32, #tpu.memory_space<vmem>>, vector<315x128xf32>,
    %c0_51 = arith.constant 0 : index
    %c0_52 = arith.constant 0 : index
    %45 = vector.load %arg14[%c0_51, %c0_52] : memref<315x128xf32, #tpu.memory_space<vmem>>, vector<307x128xf32>
    %c0_53 = arith.constant 0 : index
    %c0_54 = arith.constant 0 : index
    %c0_55 = arith.constant 0 : index
    %46 = vector.load %arg4[%c0_53, %c0_54, %c0_55] : memref<5x128x256xf32, #tpu.memory_space<vmem>>, vector<1x128x256xf32>
    %47 = vector.shape_cast %46 : vector<1x128x256xf32> to vector<128x256xf32>
    %cst_56 = arith.constant dense<0.000000e+00> : vector<307x256xf32>
    %48 = tpu.matmul %45, %47, %cst_56 {dimension_numbers = #tpu.dot_dimension_numbers<[1], [0], [0], [1], [0, 0, 1, 1], [], []>} : vector<307x128xf32>, vector<128x256xf32>, vector<307x256xf32> -> vector<307x256xf32>
    %c0_57 = arith.constant 0 : index
    %c0_58 = arith.constant 0 : index
    %49 = vector.load %arg15[%c0_57, %c0_58] : memref<307x256xf32, #tpu.memory_space<vmem>>, vector<307x256xf32>
    tpu.vector_store %arg15[%c0_57, %c0_58], %48 {strides = array<i32>} : memref<307x256xf32, #tpu.memory_space<vmem>>, vector<307x256xf32>,
    %c2_59 = arith.constant 2 : index
    %c0_60 = arith.constant 0 : index
    %50 = vector.load %arg14[%c2_59, %c0_60] : memref<315x128xf32, #tpu.memory_space<vmem>>, vector<307x128xf32>
    %c1_61 = arith.constant 1 : index
    %c0_62 = arith.constant 0 : index
    %c0_63 = arith.constant 0 : index
    %51 = vector.load %arg4[%c1_61, %c0_62, %c0_63] : memref<5x128x256xf32, #tpu.memory_space<vmem>>, vector<1x128x256xf32>
    %52 = vector.shape_cast %51 : vector<1x128x256xf32> to vector<128x256xf32>
    %cst_64 = arith.constant dense<0.000000e+00> : vector<307x256xf32>
    %53 = tpu.matmul %50, %52, %cst_64 {dimension_numbers = #tpu.dot_dimension_numbers<[1], [0], [0], [1], [0, 0, 1, 1], [], []>} : vector<307x128xf32>, vector<128x256xf32>, vector<307x256xf32> -> vector<307x256xf32>
    %c0_65 = arith.constant 0 : index
    %c0_66 = arith.constant 0 : index
    %54 = vector.load %arg15[%c0_65, %c0_66] : memref<307x256xf32, #tpu.memory_space<vmem>>, vector<307x256xf32>
    %55 = arith.addf %54, %53 : vector<307x256xf32>
    %c0_67 = arith.constant 0 : index
    %c0_68 = arith.constant 0 : index
    %56 = vector.load %arg15[%c0_67, %c0_68] : memref<307x256xf32, #tpu.memory_space<vmem>>, vector<307x256xf32>
    tpu.vector_store %arg15[%c0_67, %c0_68], %55 {strides = array<i32>} : memref<307x256xf32, #tpu.memory_space<vmem>>, vector<307x256xf32>,
    %c4_69 = arith.constant 4 : index
    %c0_70 = arith.constant 0 : index
    %57 = vector.load %arg14[%c4_69, %c0_70] : memref<315x128xf32, #tpu.memory_space<vmem>>, vector<307x128xf32>
    %c2_71 = arith.constant 2 : index
    %c0_72 = arith.constant 0 : index
    %c0_73 = arith.constant 0 : index
    %58 = vector.load %arg4[%c2_71, %c0_72, %c0_73] : memref<5x128x256xf32, #tpu.memory_space<vmem>>, vector<1x128x256xf32>
    %59 = vector.shape_cast %58 : vector<1x128x256xf32> to vector<128x256xf32>
    %cst_74 = arith.constant dense<0.000000e+00> : vector<307x256xf32>
    %60 = tpu.matmul %57, %59, %cst_74 {dimension_numbers = #tpu.dot_dimension_numbers<[1], [0], [0], [1], [0, 0, 1, 1], [], []>} : vector<307x128xf32>, vector<128x256xf32>, vector<307x256xf32> -> vector<307x256xf32>
    %c0_75 = arith.constant 0 : index
    %c0_76 = arith.constant 0 : index
    %61 = vector.load %arg15[%c0_75, %c0_76] : memref<307x256xf32, #tpu.memory_space<vmem>>, vector<307x256xf32>
    %62 = arith.addf %61, %60 : vector<307x256xf32>
    %c0_77 = arith.constant 0 : index
    %c0_78 = arith.constant 0 : index
    %63 = vector.load %arg15[%c0_77, %c0_78] : memref<307x256xf32, #tpu.memory_space<vmem>>, vector<307x256xf32>
    tpu.vector_store %arg15[%c0_77, %c0_78], %62 {strides = array<i32>} : memref<307x256xf32, #tpu.memory_space<vmem>>, vector<307x256xf32>,
    %c6 = arith.constant 6 : index
    %c0_79 = arith.constant 0 : index
    %64 = vector.load %arg14[%c6, %c0_79] : memref<315x128xf32, #tpu.memory_space<vmem>>, vector<307x128xf32>
    %c3_80 = arith.constant 3 : index
    %c0_81 = arith.constant 0 : index
    %c0_82 = arith.constant 0 : index
    %65 = vector.load %arg4[%c3_80, %c0_81, %c0_82] : memref<5x128x256xf32, #tpu.memory_space<vmem>>, vector<1x128x256xf32>
    %66 = vector.shape_cast %65 : vector<1x128x256xf32> to vector<128x256xf32>
    %cst_83 = arith.constant dense<0.000000e+00> : vector<307x256xf32>
    %67 = tpu.matmul %64, %66, %cst_83 {dimension_numbers = #tpu.dot_dimension_numbers<[1], [0], [0], [1], [0, 0, 1, 1], [], []>} : vector<307x128xf32>, vector<128x256xf32>, vector<307x256xf32> -> vector<307x256xf32>
    %c0_84 = arith.constant 0 : index
    %c0_85 = arith.constant 0 : index
    %68 = vector.load %arg15[%c0_84, %c0_85] : memref<307x256xf32, #tpu.memory_space<vmem>>, vector<307x256xf32>
    %69 = arith.addf %68, %67 : vector<307x256xf32>
    %c0_86 = arith.constant 0 : index
    %c0_87 = arith.constant 0 : index
    %70 = vector.load %arg15[%c0_86, %c0_87] : memref<307x256xf32, #tpu.memory_space<vmem>>, vector<307x256xf32>
    tpu.vector_store %arg15[%c0_86, %c0_87], %69 {strides = array<i32>} : memref<307x256xf32, #tpu.memory_space<vmem>>, vector<307x256xf32>,
    %c8 = arith.constant 8 : index
    %c0_88 = arith.constant 0 : index
    %71 = vector.load %arg14[%c8, %c0_88] : memref<315x128xf32, #tpu.memory_space<vmem>>, vector<307x128xf32>
    %c4_89 = arith.constant 4 : index
    %c0_90 = arith.constant 0 : index
    %c0_91 = arith.constant 0 : index
    %72 = vector.load %arg4[%c4_89, %c0_90, %c0_91] : memref<5x128x256xf32, #tpu.memory_space<vmem>>, vector<1x128x256xf32>
    %73 = vector.shape_cast %72 : vector<1x128x256xf32> to vector<128x256xf32>
    %cst_92 = arith.constant dense<0.000000e+00> : vector<307x256xf32>
    %74 = tpu.matmul %71, %73, %cst_92 {dimension_numbers = #tpu.dot_dimension_numbers<[1], [0], [0], [1], [0, 0, 1, 1], [], []>} : vector<307x128xf32>, vector<128x256xf32>, vector<307x256xf32> -> vector<307x256xf32>
    %c0_93 = arith.constant 0 : index
    %c0_94 = arith.constant 0 : index
    %75 = vector.load %arg15[%c0_93, %c0_94] : memref<307x256xf32, #tpu.memory_space<vmem>>, vector<307x256xf32>
    %76 = arith.addf %75, %74 : vector<307x256xf32>
    %c0_95 = arith.constant 0 : index
    %c0_96 = arith.constant 0 : index
    %77 = vector.load %arg5[%c0_95, %c0_96] : memref<1x256xf32, #tpu.memory_space<vmem>>, vector<1x256xf32>
    %78 = vector.broadcast %77 : vector<1x256xf32> to vector<307x256xf32>
    %79 = arith.addf %76, %78 : vector<307x256xf32>
    %cst_97 = arith.constant 0.000000e+00 : f32
    %80 = vector.broadcast %cst_97 : f32 to vector<307x256xf32>
    %81 = arith.maximumf %79, %80 : vector<307x256xf32>
    %c0_98 = arith.constant 0 : index
    %c0_99 = arith.constant 0 : index
    %82 = vector.load %arg15[%c0_98, %c0_99] : memref<307x256xf32, #tpu.memory_space<vmem>>, vector<307x256xf32>
    tpu.vector_store %arg15[%c0_98, %c0_99], %81 {strides = array<i32>} : memref<307x256xf32, #tpu.memory_space<vmem>>, vector<307x256xf32>,
    %c0_100 = arith.constant 0 : index
    %c0_101 = arith.constant 0 : index
    %83 = vector.load %arg15[%c0_100, %c0_101] : memref<307x256xf32, #tpu.memory_space<vmem>>, vector<305x256xf32>
    %c2_102 = arith.constant 2 : index
    %c0_103 = arith.constant 0 : index
    %84 = vector.load %arg15[%c2_102, %c0_103] : memref<307x256xf32, #tpu.memory_space<vmem>>, vector<305x256xf32>
    %85 = arith.maximumf %83, %84 : vector<305x256xf32>
    %86 = vector.extract_strided_slice %85 {offsets = [0, 0], sizes = [305, 128], strides = [1, 1]} : vector<305x256xf32> to vector<305x128xf32>
    %87 = vector.extract_strided_slice %85 {offsets = [0, 128], sizes = [305, 128], strides = [1, 1]} : vector<305x256xf32> to vector<305x128xf32>
    %88 = arith.maximumf %86, %87 : vector<305x128xf32>
    %c0_104 = arith.constant 0 : index
    %c0_105 = arith.constant 0 : index
    %89 = vector.load %arg16[%c0_104, %c0_105] : memref<305x128xf32, #tpu.memory_space<vmem>>, vector<305x128xf32>
    tpu.vector_store %arg16[%c0_104, %c0_105], %88 {strides = array<i32>} : memref<305x128xf32, #tpu.memory_space<vmem>>, vector<305x128xf32>,
    %c0_106 = arith.constant 0 : index
    %c0_107 = arith.constant 0 : index
    %90 = vector.load %arg16[%c0_106, %c0_107] : memref<305x128xf32, #tpu.memory_space<vmem>>, vector<281x128xf32>
    %c0_108 = arith.constant 0 : index
    %c0_109 = arith.constant 0 : index
    %c0_110 = arith.constant 0 : index
    %91 = vector.load %arg6[%c0_108, %c0_109, %c0_110] : memref<5x128x128xf32, #tpu.memory_space<vmem>>, vector<1x128x128xf32>
    %92 = vector.shape_cast %91 : vector<1x128x128xf32> to vector<128x128xf32>
    %cst_111 = arith.constant dense<0.000000e+00> : vector<281x128xf32>
    %93 = tpu.matmul %90, %92, %cst_111 {dimension_numbers = #tpu.dot_dimension_numbers<[1], [0], [0], [1], [0, 0, 1, 1], [], []>} : vector<281x128xf32>, vector<128x128xf32>, vector<281x128xf32> -> vector<281x128xf32>
    %c0_112 = arith.constant 0 : index
    %c0_113 = arith.constant 0 : index
    %94 = vector.load %arg17[%c0_112, %c0_113] : memref<281x128xf32, #tpu.memory_space<vmem>>, vector<281x128xf32>
    tpu.vector_store %arg17[%c0_112, %c0_113], %93 {strides = array<i32>} : memref<281x128xf32, #tpu.memory_space<vmem>>, vector<281x128xf32>,
    %c4_114 = arith.constant 4 : index
    %c0_115 = arith.constant 0 : index
    %95 = vector.load %arg16[%c4_114, %c0_115] : memref<305x128xf32, #tpu.memory_space<vmem>>, vector<281x128xf32>
    %c1_116 = arith.constant 1 : index
    %c0_117 = arith.constant 0 : index
    %c0_118 = arith.constant 0 : index
    %96 = vector.load %arg6[%c1_116, %c0_117, %c0_118] : memref<5x128x128xf32, #tpu.memory_space<vmem>>, vector<1x128x128xf32>
    %97 = vector.shape_cast %96 : vector<1x128x128xf32> to vector<128x128xf32>
    %cst_119 = arith.constant dense<0.000000e+00> : vector<281x128xf32>
    %98 = tpu.matmul %95, %97, %cst_119 {dimension_numbers = #tpu.dot_dimension_numbers<[1], [0], [0], [1], [0, 0, 1, 1], [], []>} : vector<281x128xf32>, vector<128x128xf32>, vector<281x128xf32> -> vector<281x128xf32>
    %c0_120 = arith.constant 0 : index
    %c0_121 = arith.constant 0 : index
    %99 = vector.load %arg17[%c0_120, %c0_121] : memref<281x128xf32, #tpu.memory_space<vmem>>, vector<281x128xf32>
    %100 = arith.addf %99, %98 : vector<281x128xf32>
    %c0_122 = arith.constant 0 : index
    %c0_123 = arith.constant 0 : index
    %101 = vector.load %arg17[%c0_122, %c0_123] : memref<281x128xf32, #tpu.memory_space<vmem>>, vector<281x128xf32>
    tpu.vector_store %arg17[%c0_122, %c0_123], %100 {strides = array<i32>} : memref<281x128xf32, #tpu.memory_space<vmem>>, vector<281x128xf32>,
    %c8_124 = arith.constant 8 : index
    %c0_125 = arith.constant 0 : index
    %102 = vector.load %arg16[%c8_124, %c0_125] : memref<305x128xf32, #tpu.memory_space<vmem>>, vector<281x128xf32>
    %c2_126 = arith.constant 2 : index
    %c0_127 = arith.constant 0 : index
    %c0_128 = arith.constant 0 : index
    %103 = vector.load %arg6[%c2_126, %c0_127, %c0_128] : memref<5x128x128xf32, #tpu.memory_space<vmem>>, vector<1x128x128xf32>
    %104 = vector.shape_cast %103 : vector<1x128x128xf32> to vector<128x128xf32>
    %cst_129 = arith.constant dense<0.000000e+00> : vector<281x128xf32>
    %105 = tpu.matmul %102, %104, %cst_129 {dimension_numbers = #tpu.dot_dimension_numbers<[1], [0], [0], [1], [0, 0, 1, 1], [], []>} : vector<281x128xf32>, vector<128x128xf32>, vector<281x128xf32> -> vector<281x128xf32>
    %c0_130 = arith.constant 0 : index
    %c0_131 = arith.constant 0 : index
    %106 = vector.load %arg17[%c0_130, %c0_131] : memref<281x128xf32, #tpu.memory_space<vmem>>, vector<281x128xf32>
    %107 = arith.addf %106, %105 : vector<281x128xf32>
    %c0_132 = arith.constant 0 : index
    %c0_133 = arith.constant 0 : index
    %108 = vector.load %arg17[%c0_132, %c0_133] : memref<281x128xf32, #tpu.memory_space<vmem>>, vector<281x128xf32>
    tpu.vector_store %arg17[%c0_132, %c0_133], %107 {strides = array<i32>} : memref<281x128xf32, #tpu.memory_space<vmem>>, vector<281x128xf32>,
    %c12 = arith.constant 12 : index
    %c0_134 = arith.constant 0 : index
    %109 = vector.load %arg16[%c12, %c0_134] : memref<305x128xf32, #tpu.memory_space<vmem>>, vector<281x128xf32>
    %c3_135 = arith.constant 3 : index
    %c0_136 = arith.constant 0 : index
    %c0_137 = arith.constant 0 : index
    %110 = vector.load %arg6[%c3_135, %c0_136, %c0_137] : memref<5x128x128xf32, #tpu.memory_space<vmem>>, vector<1x128x128xf32>
    %111 = vector.shape_cast %110 : vector<1x128x128xf32> to vector<128x128xf32>
    %cst_138 = arith.constant dense<0.000000e+00> : vector<281x128xf32>
    %112 = tpu.matmul %109, %111, %cst_138 {dimension_numbers = #tpu.dot_dimension_numbers<[1], [0], [0], [1], [0, 0, 1, 1], [], []>} : vector<281x128xf32>, vector<128x128xf32>, vector<281x128xf32> -> vector<281x128xf32>
    %c0_139 = arith.constant 0 : index
    %c0_140 = arith.constant 0 : index
    %113 = vector.load %arg17[%c0_139, %c0_140] : memref<281x128xf32, #tpu.memory_space<vmem>>, vector<281x128xf32>
    %114 = arith.addf %113, %112 : vector<281x128xf32>
    %c0_141 = arith.constant 0 : index
    %c0_142 = arith.constant 0 : index
    %115 = vector.load %arg17[%c0_141, %c0_142] : memref<281x128xf32, #tpu.memory_space<vmem>>, vector<281x128xf32>
    tpu.vector_store %arg17[%c0_141, %c0_142], %114 {strides = array<i32>} : memref<281x128xf32, #tpu.memory_space<vmem>>, vector<281x128xf32>,
    %c16 = arith.constant 16 : index
    %c0_143 = arith.constant 0 : index
    %116 = vector.load %arg16[%c16, %c0_143] : memref<305x128xf32, #tpu.memory_space<vmem>>, vector<281x128xf32>
    %c4_144 = arith.constant 4 : index
    %c0_145 = arith.constant 0 : index
    %c0_146 = arith.constant 0 : index
    %117 = vector.load %arg6[%c4_144, %c0_145, %c0_146] : memref<5x128x128xf32, #tpu.memory_space<vmem>>, vector<1x128x128xf32>
    %118 = vector.shape_cast %117 : vector<1x128x128xf32> to vector<128x128xf32>
    %cst_147 = arith.constant dense<0.000000e+00> : vector<281x128xf32>
    %119 = tpu.matmul %116, %118, %cst_147 {dimension_numbers = #tpu.dot_dimension_numbers<[1], [0], [0], [1], [0, 0, 1, 1], [], []>} : vector<281x128xf32>, vector<128x128xf32>, vector<281x128xf32> -> vector<281x128xf32>
    %c0_148 = arith.constant 0 : index
    %c0_149 = arith.constant 0 : index
    %120 = vector.load %arg17[%c0_148, %c0_149] : memref<281x128xf32, #tpu.memory_space<vmem>>, vector<281x128xf32>
    %121 = arith.addf %120, %119 : vector<281x128xf32>
    %c0_150 = arith.constant 0 : index
    %c0_151 = arith.constant 0 : index
    %122 = vector.load %arg17[%c0_150, %c0_151] : memref<281x128xf32, #tpu.memory_space<vmem>>, vector<281x128xf32>
    tpu.vector_store %arg17[%c0_150, %c0_151], %121 {strides = array<i32>} : memref<281x128xf32, #tpu.memory_space<vmem>>, vector<281x128xf32>,
    %c0_152 = arith.constant 0 : index
    %c0_153 = arith.constant 0 : index
    %123 = vector.load %arg17[%c0_152, %c0_153] : memref<281x128xf32, #tpu.memory_space<vmem>>, vector<1x128xf32>
    %c40 = arith.constant 40 : index
    %c0_154 = arith.constant 0 : index
    %124 = vector.load %arg17[%c40, %c0_154] : memref<281x128xf32, #tpu.memory_space<vmem>>, vector<1x128xf32>
    %c80 = arith.constant 80 : index
    %c0_155 = arith.constant 0 : index
    %125 = vector.load %arg17[%c80, %c0_155] : memref<281x128xf32, #tpu.memory_space<vmem>>, vector<1x128xf32>
    %c120 = arith.constant 120 : index
    %c0_156 = arith.constant 0 : index
    %126 = vector.load %arg17[%c120, %c0_156] : memref<281x128xf32, #tpu.memory_space<vmem>>, vector<1x128xf32>
    %c160 = arith.constant 160 : index
    %c0_157 = arith.constant 0 : index
    %127 = vector.load %arg17[%c160, %c0_157] : memref<281x128xf32, #tpu.memory_space<vmem>>, vector<1x128xf32>
    %c200 = arith.constant 200 : index
    %c0_158 = arith.constant 0 : index
    %128 = vector.load %arg17[%c200, %c0_158] : memref<281x128xf32, #tpu.memory_space<vmem>>, vector<1x128xf32>
    %c240 = arith.constant 240 : index
    %c0_159 = arith.constant 0 : index
    %129 = vector.load %arg17[%c240, %c0_159] : memref<281x128xf32, #tpu.memory_space<vmem>>, vector<1x128xf32>
    %c280 = arith.constant 280 : index
    %c0_160 = arith.constant 0 : index
    %130 = vector.load %arg17[%c280, %c0_160] : memref<281x128xf32, #tpu.memory_space<vmem>>, vector<1x128xf32>
    %131 = tpu.concatenate %123, %124, %125, %126, %127, %128, %129, %130 in 0 : vector<1x128xf32>, vector<1x128xf32>, vector<1x128xf32>, vector<1x128xf32>, vector<1x128xf32>, vector<1x128xf32>, vector<1x128xf32>, vector<1x128xf32> -> vector<8x128xf32>
    %c0_161 = arith.constant 0 : index
    %c0_162 = arith.constant 0 : index
    %132 = vector.load %arg7[%c0_161, %c0_162] : memref<1x128xf32, #tpu.memory_space<vmem>>, vector<1x128xf32>
    %133 = vector.broadcast %132 : vector<1x128xf32> to vector<8x128xf32>
    %134 = arith.addf %131, %133 : vector<8x128xf32>
    %cst_163 = arith.constant 0.000000e+00 : f32
    %135 = vector.broadcast %cst_163 : f32 to vector<8x128xf32>
    %136 = arith.maximumf %134, %135 : vector<8x128xf32>
    %c0_164 = arith.constant 0 : index
    %c0_165 = arith.constant 0 : index
    %137 = vector.load %arg8[%c0_164, %c0_165] : memref<128x128xf32, #tpu.memory_space<vmem>>, vector<128x128xf32>
    %cst_166 = arith.constant dense<0.000000e+00> : vector<8x128xf32>
    %138 = tpu.matmul %136, %137, %cst_166 {dimension_numbers = #tpu.dot_dimension_numbers<[1], [0], [0], [1], [0, 0, 1, 1], [], []>} : vector<8x128xf32>, vector<128x128xf32>, vector<8x128xf32> -> vector<8x128xf32>
    %c0_167 = arith.constant 0 : index
    %c0_168 = arith.constant 0 : index
    %139 = vector.load %arg9[%c0_167, %c0_168] : memref<1x128xf32, #tpu.memory_space<vmem>>, vector<1x128xf32>
    %140 = vector.broadcast %139 : vector<1x128xf32> to vector<8x128xf32>
    %141 = arith.addf %138, %140 : vector<8x128xf32>
    %cst_169 = arith.constant 0.000000e+00 : f32
    %142 = vector.broadcast %cst_169 : f32 to vector<8x128xf32>
    %143 = arith.maximumf %141, %142 : vector<8x128xf32>
    %c0_170 = arith.constant 0 : index
    %c0_171 = arith.constant 0 : index
    %144 = vector.load %arg10[%c0_170, %c0_171] : memref<128x128xf32, #tpu.memory_space<vmem>>, vector<128x128xf32>
    %cst_172 = arith.constant dense<0.000000e+00> : vector<8x128xf32>
    %145 = tpu.matmul %143, %144, %cst_172 {dimension_numbers = #tpu.dot_dimension_numbers<[1], [0], [0], [1], [0, 0, 1, 1], [], []>} : vector<8x128xf32>, vector<128x128xf32>, vector<8x128xf32> -> vector<8x128xf32>
    %c0_173 = arith.constant 0 : index
    %c0_174 = arith.constant 0 : index
    %146 = vector.load %arg11[%c0_173, %c0_174] : memref<1x128xf32, #tpu.memory_space<vmem>>, vector<1x128xf32>
    %147 = vector.broadcast %146 : vector<1x128xf32> to vector<8x128xf32>
    %148 = arith.addf %145, %147 : vector<8x128xf32>
    %c0_175 = arith.constant 0 : index
    %c0_176 = arith.constant 0 : index
    %149 = vector.load %arg12[%c0_175, %c0_176] : memref<8x128xf32, #tpu.memory_space<vmem>>, vector<8x128xf32>
    tpu.vector_store %arg12[%c0_175, %c0_176], %148 {strides = array<i32>} : memref<8x128xf32, #tpu.memory_space<vmem>>, vector<8x128xf32>,
    return
  }
  func.func @transform_0(%arg0: i32) -> (i32, i32) {
    %c0_i32 = arith.constant 0 : i32
    %c0_i32_0 = arith.constant 0 : i32
    return %arg0, %c0_i32 : i32, i32
  }
  func.func @transform_1(%arg0: i32) -> (i32, i32, i32) {
    %c0_i32 = arith.constant 0 : i32
    %c0_i32_0 = arith.constant 0 : i32
    %c0_i32_1 = arith.constant 0 : i32
    %c0_i32_2 = arith.constant 0 : i32
    return %c0_i32, %c0_i32_0, %c0_i32_1 : i32, i32, i32
  }
  func.func @transform_2(%arg0: i32) -> (i32, i32) {
    %c0_i32 = arith.constant 0 : i32
    %c0_i32_0 = arith.constant 0 : i32
    %c0_i32_1 = arith.constant 0 : i32
    return %c0_i32, %c0_i32_0 : i32, i32
  }
  func.func @transform_3(%arg0: i32) -> (i32, i32, i32) {
    %c0_i32 = arith.constant 0 : i32
    %c0_i32_0 = arith.constant 0 : i32
    %c0_i32_1 = arith.constant 0 : i32
    %c0_i32_2 = arith.constant 0 : i32
    return %c0_i32, %c0_i32_0, %c0_i32_1 : i32, i32, i32
  }
  func.func @transform_4(%arg0: i32) -> (i32, i32) {
    %c0_i32 = arith.constant 0 : i32
    %c0_i32_0 = arith.constant 0 : i32
    %c0_i32_1 = arith.constant 0 : i32
    return %c0_i32, %c0_i32_0 : i32, i32
  }
  func.func @transform_5(%arg0: i32) -> (i32, i32, i32) {
    %c0_i32 = arith.constant 0 : i32
    %c0_i32_0 = arith.constant 0 : i32
    %c0_i32_1 = arith.constant 0 : i32
    %c0_i32_2 = arith.constant 0 : i32
    return %c0_i32, %c0_i32_0, %c0_i32_1 : i32, i32, i32
  }
  func.func @transform_6(%arg0: i32) -> (i32, i32) {
    %c0_i32 = arith.constant 0 : i32
    %c0_i32_0 = arith.constant 0 : i32
    %c0_i32_1 = arith.constant 0 : i32
    return %c0_i32, %c0_i32_0 : i32, i32
  }
  func.func @transform_7(%arg0: i32) -> (i32, i32) {
    %c0_i32 = arith.constant 0 : i32
    %c0_i32_0 = arith.constant 0 : i32
    %c0_i32_1 = arith.constant 0 : i32
    return %c0_i32, %c0_i32_0 : i32, i32
  }
  func.func @transform_8(%arg0: i32) -> (i32, i32) {
    %c0_i32 = arith.constant 0 : i32
    %c0_i32_0 = arith.constant 0 : i32
    %c0_i32_1 = arith.constant 0 : i32
    return %c0_i32, %c0_i32_0 : i32, i32
  }
  func.func @transform_9(%arg0: i32) -> (i32, i32) {
    %c0_i32 = arith.constant 0 : i32
    %c0_i32_0 = arith.constant 0 : i32
    %c0_i32_1 = arith.constant 0 : i32
    return %c0_i32, %c0_i32_0 : i32, i32
  }
  func.func @transform_10(%arg0: i32) -> (i32, i32) {
    %c0_i32 = arith.constant 0 : i32
    %c0_i32_0 = arith.constant 0 : i32
    %c0_i32_1 = arith.constant 0 : i32
    return %c0_i32, %c0_i32_0 : i32, i32
  }
  func.func @transform_11(%arg0: i32) -> (i32, i32) {
    %c0_i32 = arith.constant 0 : i32
    %c0_i32_0 = arith.constant 0 : i32
    return %arg0, %c0_i32 : i32, i32
  }
}

</mosaic_0001>

<llo_original>
// kernel: simple_cnn_forward.1
$region0: #{simple_cnn_forward.1}
  #allocation0 [shape = 'u32[]', space=smem, size = 0x4, offset = 0x4, fixed_abs, tag = 'smem constant byte address 0x4 - core index']
  #allocation1 [shape = 'u32[144,128]{1,0:T(1,128)}', space=vmem, size = 0x12000, scoped, tag = 'internal scratch']
  #allocation2 [shape = 'f32[316,256]{1,0:T(8,128)}', space=vmem, size = 0x50000, scoped, tag = 'scratch operand']
  #allocation3 [shape = 'f32[315,128]{1,0:T(8,128)}', space=vmem, size = 0x28000, scoped, tag = 'scratch operand']
  #allocation4 [shape = 'f32[307,256]{1,0:T(8,128)}', space=vmem, size = 0x4e000, scoped, tag = 'scratch operand']
  #allocation5 [shape = 'f32[305,128]{1,0:T(8,128)}', space=vmem, size = 0x27000, scoped, tag = 'scratch operand']
  #allocation6 [shape = 'f32[281,128]{1,0:T(8,128)}', space=vmem, size = 0x24000, scoped, tag = 'scratch operand']
  %s0 = inlined_call_operand.vmem [shape: f32[640,128], index: 0, kind: input, shape index: {}]
  %s1 = inlined_call_operand.vmem [shape: f32[5,128,256], index: 1, kind: input, shape index: {}]
  %s2 = inlined_call_operand.vmem [shape: f32[1,256], index: 2, kind: input, shape index: {}]
  %s3 = inlined_call_operand.vmem [shape: f32[5,128,256], index: 3, kind: input, shape index: {}]
  %s4 = inlined_call_operand.vmem [shape: f32[1,256], index: 4, kind: input, shape index: {}]
  %s5 = inlined_call_operand.vmem [shape: f32[5,128,128], index: 5, kind: input, shape index: {}]
  %s6 = inlined_call_operand.vmem [shape: f32[1,128], index: 6, kind: input, shape index: {}]
  %s7 = inlined_call_operand.vmem [shape: f32[128,128], index: 7, kind: input, shape index: {}]
  %s8 = inlined_call_operand.vmem [shape: f32[1,128], index: 8, kind: input, shape index: {}]
  %s9 = inlined_call_operand.vmem [shape: f32[128,128], index: 9, kind: input, shape index: {}]
  %s10 = inlined_call_operand.vmem [shape: f32[1,128], index: 10, kind: input, shape index: {}]
  %s11 = inlined_call_operand.hbm [shape: f32[16,128], index: 11, kind: output, shape index: {}]
  %s12 = sld [smem:[#allocation0]]
  $region77: #{simple_cnn_forward.1} parent=0
    _
  %s14 = ssub.s32 1, %s12
  %s15 = scalar_select 0, %s14, %s12
  $region1: #{simple_cnn_forward.1} parent=0
    #allocation7 [shape = 'u8[8192]{0}', space=vmem, size = 0x2000, scoped, tag = 'output window, operand 0']
    #allocation8 [shape = 's32[2]{0}', space=sflag, size = 0x8, scoped, tag = 'scoped memory for simple_cnn_forward.1']
    %16 = vsyncpa [#allocation8], 0
    %s17 = scalar_lea.sflag [#allocation8], 1
    %18 = vsyncpa %s17, 0
    loop: start=0, step=1, limit=4
    $region2: #{simple_cnn_forward.1} parent=1 // loop_pre_header
      _
    $region3: #{simple_cnn_forward.1} parent=1 // loop_header
      %s20 = sphi 0, %s24
      %p21 = scmp.ge.s32.totalorder %s20, 4
      %s30 = sphi 0, %s32
      %s33 = sphi 0, %s30
      %s34 = sphi 0, %s33
      %s50 = sphi 0, %s34
      %s54 = sphi 0, %s54
      %s56 = sphi 0, %s54
      %s57 = sphi 0, %s56
      %s71 = sphi 0, %s57
      %s75 = sphi 0, %s75
      %s77 = sphi 0, %s75
      %s78 = sphi 0, %s77
      %s92 = sphi 0, %s78
      %s96 = sphi 0, %s96
      %s98 = sphi 0, %s96
      %s99 = sphi 0, %s98
      %s113 = sphi 0, %s99
      %s117 = sphi 0, %s117
      %s119 = sphi 0, %s117
      %s120 = sphi 0, %s119
      %s134 = sphi 0, %s120
      %s138 = sphi 0, %s138
      %s140 = sphi 0, %s138
      %s141 = sphi 0, %s140
      %s155 = sphi 0, %s141
      %s159 = sphi 0, %s159
      %s161 = sphi 0, %s159
      %s162 = sphi 0, %s161
      %s176 = sphi 0, %s162
      %s180 = sphi 0, %s180
      %s182 = sphi 0, %s180
      %s183 = sphi 0, %s182
      %s197 = sphi 0, %s183
      %s201 = sphi 0, %s201
      %s203 = sphi 0, %s201
      %s204 = sphi 0, %s203
      %s218 = sphi 0, %s204
      %s222 = sphi 0, %s222
      %s224 = sphi 0, %s222
      %s225 = sphi 0, %s224
      %s239 = sphi 0, %s225
      %s243 = sphi 0, %s243
      %s245 = sphi 0, %s243
      %s246 = sphi 0, %s245
      %s260 = sphi 0, %s246
      %s266 = sphi 0, %s268
      %s269 = sphi 0, %s266
      %s270 = sphi 0, %s269
      %s286 = sphi 0, %s270
    $region4: #{simple_cnn_forward.1} parent=1 // loop_header_branch
      %23 = sbr.rel (%p21) target = $region8
    $region5: #{simple_cnn_forward.1} parent=1 // loop_body
      %s25 = ssub.s32 %s20, 1
      %s26 = ssub.s32 %s20, 2
      %s27 = sadd.s32 %s20, 1
      %s28 = ssub.s32 %s20, %s27
      %p29 = scmp.eq.s32.totalorder %s28, 0
      %s31 = sadd.s32 %s30, 1
      %s32 = scalar_select %p29, %s30, %s31
      %p35 = pneg %p29
      %p36 = scmp.eq.s32.totalorder %s20, 1
      %p37 = por %p35, %p36
      %p38 = scmp.ne.s32.totalorder %s30, %s33
      %p39 = scmp.eq.s32.totalorder %s20, 0
      %p40 = por %p38, %p39
      %p41 = scmp.ne.s32.totalorder %s30, %s33
      %p42 = scmp.eq.s32.totalorder %s25, 1
      %p43 = por %p41, %p42
      %p44 = scmp.ne.s32.totalorder %s33, %s34
      %p45 = scmp.eq.s32.totalorder %s25, 0
      %p46 = por %p44, %p45
      %p47 = scmp.ne.s32.totalorder %s33, %s34
      %p48 = scmp.eq.s32.totalorder %s26, 1
      %p49 = por %p47, %p48
      %p51 = scmp.ne.s32.totalorder %s34, %s50
      %p52 = scmp.eq.s32.totalorder %s26, 0
      %p53 = por %p51, %p52
      %s55 = sadd.s32 %s54, 1
      %p58 = scmp.eq.s32.totalorder %s20, 1
      %p59 = scmp.ne.s32.totalorder %s54, %s56
      %p60 = scmp.eq.s32.totalorder %s20, 0
      %p61 = por %p59, %p60
      %p62 = scmp.ne.s32.totalorder %s54, %s56
      %p63 = scmp.eq.s32.totalorder %s25, 1
      %p64 = por %p62, %p63
      %p65 = scmp.ne.s32.totalorder %s56, %s57
      %p66 = scmp.eq.s32.totalorder %s25, 0
      %p67 = por %p65, %p66
      %p68 = scmp.ne.s32.totalorder %s56, %s57
      %p69 = scmp.eq.s32.totalorder %s26, 1
      %p70 = por %p68, %p69
      %p72 = scmp.ne.s32.totalorder %s57, %s71
      %p73 = scmp.eq.s32.totalorder %s26, 0
      %p74 = por %p72, %p73
      %s76 = sadd.s32 %s75, 1
      %p79 = scmp.eq.s32.totalorder %s20, 1
      %p80 = scmp.ne.s32.totalorder %s75, %s77
      %p81 = scmp.eq.s32.totalorder %s20, 0
      %p82 = por %p80, %p81
      %p83 = scmp.ne.s32.totalorder %s75, %s77
      %p84 = scmp.eq.s32.totalorder %s25, 1
      %p85 = por %p83, %p84
      %p86 = scmp.ne.s32.totalorder %s77, %s78
      %p87 = scmp.eq.s32.totalorder %s25, 0
      %p88 = por %p86, %p87
      %p89 = scmp.ne.s32.totalorder %s77, %s78
      %p90 = scmp.eq.s32.totalorder %s26, 1
      %p91 = por %p89, %p90
      %p93 = scmp.ne.s32.totalorder %s78, %s92
      %p94 = scmp.eq.s32.totalorder %s26, 0
      %p95 = por %p93, %p94
      %s97 = sadd.s32 %s96, 1
      %p100 = scmp.eq.s32.totalorder %s20, 1
      %p101 = scmp.ne.s32.totalorder %s96, %s98
      %p102 = scmp.eq.s32.totalorder %s20, 0
      %p103 = por %p101, %p102
      %p104 = scmp.ne.s32.totalorder %s96, %s98
      %p105 = scmp.eq.s32.totalorder %s25, 1
      %p106 = por %p104, %p105
      %p107 = scmp.ne.s32.totalorder %s98, %s99
      %p108 = scmp.eq.s32.totalorder %s25, 0
      %p109 = por %p107, %p108
      %p110 = scmp.ne.s32.totalorder %s98, %s99
      %p111 = scmp.eq.s32.totalorder %s26, 1
      %p112 = por %p110, %p111
      %p114 = scmp.ne.s32.totalorder %s99, %s113
      %p115 = scmp.eq.s32.totalorder %s26, 0
      %p116 = por %p114, %p115
      %s118 = sadd.s32 %s117, 1
      %p121 = scmp.eq.s32.totalorder %s20, 1
      %p122 = scmp.ne.s32.totalorder %s117, %s119
      %p123 = scmp.eq.s32.totalorder %s20, 0
      %p124 = por %p122, %p123
      %p125 = scmp.ne.s32.totalorder %s117, %s119
      %p126 = scmp.eq.s32.totalorder %s25, 1
      %p127 = por %p125, %p126
      %p128 = scmp.ne.s32.totalorder %s119, %s120
      %p129 = scmp.eq.s32.totalorder %s25, 0
      %p130 = por %p128, %p129
      %p131 = scmp.ne.s32.totalorder %s119, %s120
      %p132 = scmp.eq.s32.totalorder %s26, 1
      %p133 = por %p131, %p132
      %p135 = scmp.ne.s32.totalorder %s120, %s134
      %p136 = scmp.eq.s32.totalorder %s26, 0
      %p137 = por %p135, %p136
      %s139 = sadd.s32 %s138, 1
      %p142 = scmp.eq.s32.totalorder %s20, 1
      %p143 = scmp.ne.s32.totalorder %s138, %s140
      %p144 = scmp.eq.s32.totalorder %s20, 0
      %p145 = por %p143, %p144
      %p146 = scmp.ne.s32.totalorder %s138, %s140
      %p147 = scmp.eq.s32.totalorder %s25, 1
      %p148 = por %p146, %p147
      %p149 = scmp.ne.s32.totalorder %s140, %s141
      %p150 = scmp.eq.s32.totalorder %s25, 0
      %p151 = por %p149, %p150
      %p152 = scmp.ne.s32.totalorder %s140, %s141
      %p153 = scmp.eq.s32.totalorder %s26, 1
      %p154 = por %p152, %p153
      %p156 = scmp.ne.s32.totalorder %s141, %s155
      %p157 = scmp.eq.s32.totalorder %s26, 0
      %p158 = por %p156, %p157
      %s160 = sadd.s32 %s159, 1
      %p163 = scmp.eq.s32.totalorder %s20, 1
      %p164 = scmp.ne.s32.totalorder %s159, %s161
      %p165 = scmp.eq.s32.totalorder %s20, 0
      %p166 = por %p164, %p165
      %p167 = scmp.ne.s32.totalorder %s159, %s161
      %p168 = scmp.eq.s32.totalorder %s25, 1
      %p169 = por %p167, %p168
      %p170 = scmp.ne.s32.totalorder %s161, %s162
      %p171 = scmp.eq.s32.totalorder %s25, 0
      %p172 = por %p170, %p171
      %p173 = scmp.ne.s32.totalorder %s161, %s162
      %p174 = scmp.eq.s32.totalorder %s26, 1
      %p175 = por %p173, %p174
      %p177 = scmp.ne.s32.totalorder %s162, %s176
      %p178 = scmp.eq.s32.totalorder %s26, 0
      %p179 = por %p177, %p178
      %s181 = sadd.s32 %s180, 1
      %p184 = scmp.eq.s32.totalorder %s20, 1
      %p185 = scmp.ne.s32.totalorder %s180, %s182
      %p186 = scmp.eq.s32.totalorder %s20, 0
      %p187 = por %p185, %p186
      %p188 = scmp.ne.s32.totalorder %s180, %s182
      %p189 = scmp.eq.s32.totalorder %s25, 1
      %p190 = por %p188, %p189
      %p191 = scmp.ne.s32.totalorder %s182, %s183
      %p192 = scmp.eq.s32.totalorder %s25, 0
      %p193 = por %p191, %p192
      %p194 = scmp.ne.s32.totalorder %s182, %s183
      %p195 = scmp.eq.s32.totalorder %s26, 1
      %p196 = por %p194, %p195
      %p198 = scmp.ne.s32.totalorder %s183, %s197
      %p199 = scmp.eq.s32.totalorder %s26, 0
      %p200 = por %p198, %p199
      %s202 = sadd.s32 %s201, 1
      %p205 = scmp.eq.s32.totalorder %s20, 1
      %p206 = scmp.ne.s32.totalorder %s201, %s203
      %p207 = scmp.eq.s32.totalorder %s20, 0
      %p208 = por %p206, %p207
      %p209 = scmp.ne.s32.totalorder %s201, %s203
      %p210 = scmp.eq.s32.totalorder %s25, 1
      %p211 = por %p209, %p210
      %p212 = scmp.ne.s32.totalorder %s203, %s204
      %p213 = scmp.eq.s32.totalorder %s25, 0
      %p214 = por %p212, %p213
      %p215 = scmp.ne.s32.totalorder %s203, %s204
      %p216 = scmp.eq.s32.totalorder %s26, 1
      %p217 = por %p215, %p216
      %p219 = scmp.ne.s32.totalorder %s204, %s218
      %p220 = scmp.eq.s32.totalorder %s26, 0
      %p221 = por %p219, %p220
      %s223 = sadd.s32 %s222, 1
      %p226 = scmp.eq.s32.totalorder %s20, 1
      %p227 = scmp.ne.s32.totalorder %s222, %s224
      %p228 = scmp.eq.s32.totalorder %s20, 0
      %p229 = por %p227, %p228
      %p230 = scmp.ne.s32.totalorder %s222, %s224
      %p231 = scmp.eq.s32.totalorder %s25, 1
      %p232 = por %p230, %p231
      %p233 = scmp.ne.s32.totalorder %s224, %s225
      %p234 = scmp.eq.s32.totalorder %s25, 0
      %p235 = por %p233, %p234
      %p236 = scmp.ne.s32.totalorder %s224, %s225
      %p237 = scmp.eq.s32.totalorder %s26, 1
      %p238 = por %p236, %p237
      %p240 = scmp.ne.s32.totalorder %s225, %s239
      %p241 = scmp.eq.s32.totalorder %s26, 0
      %p242 = por %p240, %p241
      %s244 = sadd.s32 %s243, 1
      %p247 = scmp.eq.s32.totalorder %s20, 1
      %p248 = scmp.ne.s32.totalorder %s243, %s245
      %p249 = scmp.eq.s32.totalorder %s20, 0
      %p250 = por %p248, %p249
      %p251 = scmp.ne.s32.totalorder %s243, %s245
      %p252 = scmp.eq.s32.totalorder %s25, 1
      %p253 = por %p251, %p252
      %p254 = scmp.ne.s32.totalorder %s245, %s246
      %p255 = scmp.eq.s32.totalorder %s25, 0
      %p256 = por %p254, %p255
      %p257 = scmp.ne.s32.totalorder %s245, %s246
      %p258 = scmp.eq.s32.totalorder %s26, 1
      %p259 = por %p257, %p258
      %p261 = scmp.ne.s32.totalorder %s246, %s260
      %p262 = scmp.eq.s32.totalorder %s26, 0
      %p263 = por %p261, %p262
      %s264 = ssub.s32 %s20, %s27
      %p265 = scmp.eq.s32.totalorder %s264, 0
      %s267 = sadd.s32 %s266, 1
      %s268 = scalar_select %p265, %s266, %s267
      %p271 = pneg %p265
      %p272 = scmp.eq.s32.totalorder %s20, 1
      %p273 = por %p271, %p272
      %p274 = scmp.ne.s32.totalorder %s266, %s269
      %p275 = scmp.eq.s32.totalorder %s20, 0
      %p276 = por %p274, %p275
      %p277 = scmp.ne.s32.totalorder %s266, %s269
      %p278 = scmp.eq.s32.totalorder %s25, 1
      %p279 = por %p277, %p278
      %p280 = scmp.ne.s32.totalorder %s269, %s270
      %p281 = scmp.eq.s32.totalorder %s25, 0
      %p282 = por %p280, %p281
      %p283 = scmp.ne.s32.totalorder %s269, %s270
      %p284 = scmp.eq.s32.totalorder %s26, 1
      %p285 = por %p283, %p284
      %p287 = scmp.ne.s32.totalorder %s270, %s286
      %p288 = scmp.eq.s32.totalorder %s26, 0
      %p289 = por %p287, %p288
      %p290 = scmp.le.s32.totalorder 1, %s20
      %p291 = scmp.lt.s32.totalorder %s20, 3
      %p292 = pnand %p290, %p291
      %p293 = pneg %p292
      // Predicated region
      $region9: #{simple_cnn_forward.1} parent=5 // pred_check
        _
      $region10: #{simple_cnn_forward.1} parent=5 // pred_check_branch
        %295 = sbr.rel (%p292) target = $region12
      $region11: #{simple_cnn_forward.1} parent=5 // pred_region
        %s296 = ssub.s32 %s20, 1
        // Predicated region
        $region13: #{simple_cnn_forward.1} parent=11 // pred_check
          %p297 = pneg %p67
        $region14: #{simple_cnn_forward.1} parent=11 // pred_check_branch
          %299 = sbr.rel (%p297) target = $region16
        $region15: #{simple_cnn_forward.1} parent=11 // pred_region
          _
        $region16: #{simple_cnn_forward.1} parent=11 // pred_fallthru
          _
        // Predicated region
        $region17: #{simple_cnn_forward.1} parent=11 // pred_check
          %p300 = pneg %p88
        $region18: #{simple_cnn_forward.1} parent=11 // pred_check_branch
          %302 = sbr.rel (%p300) target = $region20
        $region19: #{simple_cnn_forward.1} parent=11 // pred_region
          _
        $region20: #{simple_cnn_forward.1} parent=11 // pred_fallthru
          _
        // Predicated region
        $region21: #{simple_cnn_forward.1} parent=11 // pred_check
          %p303 = pneg %p109
        $region22: #{simple_cnn_forward.1} parent=11 // pred_check_branch
          %305 = sbr.rel (%p303) target = $region24
        $region23: #{simple_cnn_forward.1} parent=11 // pred_region
          _
        $region24: #{simple_cnn_forward.1} parent=11 // pred_fallthru
          _
        // Predicated region
        $region25: #{simple_cnn_forward.1} parent=11 // pred_check
          %p306 = pneg %p130
        $region26: #{simple_cnn_forward.1} parent=11 // pred_check_branch
          %308 = sbr.rel (%p306) target = $region28
        $region27: #{simple_cnn_forward.1} parent=11 // pred_region
          _
        $region28: #{simple_cnn_forward.1} parent=11 // pred_fallthru
          _
        // Predicated region
        $region29: #{simple_cnn_forward.1} parent=11 // pred_check
          %p309 = pneg %p151
        $region30: #{simple_cnn_forward.1} parent=11 // pred_check_branch
          %311 = sbr.rel (%p309) target = $region32
        $region31: #{simple_cnn_forward.1} parent=11 // pred_region
          _
        $region32: #{simple_cnn_forward.1} parent=11 // pred_fallthru
          _
        // Predicated region
        $region33: #{simple_cnn_forward.1} parent=11 // pred_check
          %p312 = pneg %p172
        $region34: #{simple_cnn_forward.1} parent=11 // pred_check_branch
          %314 = sbr.rel (%p312) target = $region36
        $region35: #{simple_cnn_forward.1} parent=11 // pred_region
          _
        $region36: #{simple_cnn_forward.1} parent=11 // pred_fallthru
          _
        // Predicated region
        $region37: #{simple_cnn_forward.1} parent=11 // pred_check
          %p315 = pneg %p193
        $region38: #{simple_cnn_forward.1} parent=11 // pred_check_branch
          %317 = sbr.rel (%p315) target = $region40
        $region39: #{simple_cnn_forward.1} parent=11 // pred_region
          _
        $region40: #{simple_cnn_forward.1} parent=11 // pred_fallthru
          _
        // Predicated region
        $region41: #{simple_cnn_forward.1} parent=11 // pred_check
          %p318 = pneg %p214
        $region42: #{simple_cnn_forward.1} parent=11 // pred_check_branch
          %320 = sbr.rel (%p318) target = $region44
        $region43: #{simple_cnn_forward.1} parent=11 // pred_region
          _
        $region44: #{simple_cnn_forward.1} parent=11 // pred_fallthru
          _
        // Predicated region
        $region45: #{simple_cnn_forward.1} parent=11 // pred_check
          %p321 = pneg %p235
        $region46: #{simple_cnn_forward.1} parent=11 // pred_check_branch
          %323 = sbr.rel (%p321) target = $region48
        $region47: #{simple_cnn_forward.1} parent=11 // pred_region
          _
        $region48: #{simple_cnn_forward.1} parent=11 // pred_fallthru
          _
        // Predicated region
        $region49: #{simple_cnn_forward.1} parent=11 // pred_check
          %p324 = pneg %p256
        $region50: #{simple_cnn_forward.1} parent=11 // pred_check_branch
          %326 = sbr.rel (%p324) target = $region52
        $region51: #{simple_cnn_forward.1} parent=11 // pred_region
          _
        $region52: #{simple_cnn_forward.1} parent=11 // pred_fallthru
          _
      $region12: #{simple_cnn_forward.1} parent=5 // pred_fallthru
        _
      %p327 = scmp.lt.s32.totalorder %s20, 2
      // Predicated region
      $region53: #{simple_cnn_forward.1} parent=5 // pred_check
        %p328 = pneg %p327
      $region54: #{simple_cnn_forward.1} parent=5 // pred_check_branch
        %330 = sbr.rel (%p328) target = $region56
      $region55: #{simple_cnn_forward.1} parent=5 // pred_region
        // Predicated region
        $region57: #{simple_cnn_forward.1} parent=55 // pred_check
          %p331 = pneg %p40
        $region58: #{simple_cnn_forward.1} parent=55 // pred_check_branch
          %333 = sbr.rel (%p331) target = $region60
        $region59: #{simple_cnn_forward.1} parent=55 // pred_region
          %s334 = smul.u32 40, %s20
          %p335 = scmp.lt.s32.totalorder %s334, 79
          %s336 = scalar_select %p335, %s334, 79
          %s337 = smul.addr %s336, 8
          %s338 = scalar_lea.vmem %s0, %s337
          %s339 = smul.u32 40, %s20
        $region60: #{simple_cnn_forward.1} parent=55 // pred_fallthru
          _
      $region56: #{simple_cnn_forward.1} parent=5 // pred_fallthru
        _
      %p340 = scmp.le.s32.totalorder 1, %s20
      %p341 = scmp.lt.s32.totalorder %s20, 3
      %p342 = pnand %p340, %p341
      %p343 = pneg %p342
      // Predicated region
      $region61: #{simple_cnn_forward.1} parent=5 // pred_check
        _
      $region62: #{simple_cnn_forward.1} parent=5 // pred_check_branch
        %345 = sbr.rel (%p342) target = $region64
      $region63: #{simple_cnn_forward.1} parent=5 // pred_region
        %s346 = ssub.s32 %s20, 1
        %s347 = smul.u32 40, %s25
        %p348 = scmp.lt.s32.totalorder %s347, 79
        %s349 = scalar_select %p348, %s347, 79
        %s350 = smul.addr %s349, 8
        %s351 = scalar_lea.vmem %s0, %s350
        %p352 = pneg %p46
        %p353 = pneg %p43
        %p354 = pneg %p67
        %p355 = pneg %p64
        %p356 = pneg %p88
        %p357 = pneg %p85
        %p358 = pneg %p109
        %p359 = pneg %p106
        %p360 = pneg %p130
        %p361 = pneg %p127
        %p362 = pneg %p151
        %p363 = pneg %p148
        %p364 = pneg %p172
        %p365 = pneg %p169
        %p366 = pneg %p193
        %p367 = pneg %p190
        %p368 = pneg %p214
        %p369 = pneg %p211
        %p370 = pneg %p235
        %p371 = pneg %p232
        %p372 = pneg %p256
        %p373 = pneg %p253
        %p374 = pneg %p282
        %p375 = pneg %p279
        %s376 = sand.u32 %s269, 1
        %s377 = scalar_lea.sflag [#allocation8], %s376
        %s378 = sand.u32 %s269, 1
        %s379 = smul.addr %s378, 8
        %s380 = scalar_lea.vmem [#allocation7], %s379
        %s381 = smul.u32 40, %s25
        %p382 = scmp.lt.s32.totalorder %s381, 79
        %s383 = scalar_select %p382, %s381, 79
        %s384 = smul.addr %s383, 8
        %s385 = scalar_lea.vmem %s0, %s384
        %s386 = smul.u32 40, %s25
        %v387 = vld [vmem:[%s385] sm:$0xff]
        %v388 = vld [vmem:[%s385 + $0x8] sm:$0xff]
        %v389 = vld [vmem:[%s385 + $0x10] sm:$0xff]
        %v390 = vld [vmem:[%s385 + $0x18] sm:$0xff]
        %v391 = vld [vmem:[%s385 + $0x20] sm:$0xff]
        %v392 = vld [vmem:[%s385 + $0x28] sm:$0xff]
        %v393 = vld [vmem:[%s385 + $0x30] sm:$0xff]
        %v394 = vld [vmem:[%s385 + $0x38] sm:$0xff]
        %v395 = vld [vmem:[%s385 + $0x40] sm:$0xff]
        %v396 = vld [vmem:[%s385 + $0x48] sm:$0xff]
        %v397 = vld [vmem:[%s385 + $0x50] sm:$0xff]
        %v398 = vld [vmem:[%s385 + $0x58] sm:$0xff]
        %v399 = vld [vmem:[%s385 + $0x60] sm:$0xff]
        %v400 = vld [vmem:[%s385 + $0x68] sm:$0xff]
        %v401 = vld [vmem:[%s385 + $0x70] sm:$0xff]
        %v402 = vld [vmem:[%s385 + $0x78] sm:$0xff]
        %v403 = vld [vmem:[%s385 + $0x80] sm:$0xff]
        %v404 = vld [vmem:[%s385 + $0x88] sm:$0xff]
        %v405 = vld [vmem:[%s385 + $0x90] sm:$0xff]
        %v406 = vld [vmem:[%s385 + $0x98] sm:$0xff]
        %v407 = vld [vmem:[%s385 + $0xa0] sm:$0xff]
        %v408 = vld [vmem:[%s385 + $0xa8] sm:$0xff]
        %v409 = vld [vmem:[%s385 + $0xb0] sm:$0xff]
        %v410 = vld [vmem:[%s385 + $0xb8] sm:$0xff]
        %v411 = vld [vmem:[%s385 + $0xc0] sm:$0xff]
        %v412 = vld [vmem:[%s385 + $0xc8] sm:$0xff]
        %v413 = vld [vmem:[%s385 + $0xd0] sm:$0xff]
        %v414 = vld [vmem:[%s385 + $0xd8] sm:$0xff]
        %v415 = vld [vmem:[%s385 + $0xe0] sm:$0xff]
        %v416 = vld [vmem:[%s385 + $0xe8] sm:$0xff]
        %v417 = vld [vmem:[%s385 + $0xf0] sm:$0xff]
        %v418 = vld [vmem:[%s385 + $0xf8] sm:$0xff]
        %v419 = vld [vmem:[%s385 + $0x100] sm:$0xff]
        %v420 = vld [vmem:[%s385 + $0x108] sm:$0xff]
        %v421 = vld [vmem:[%s385 + $0x110] sm:$0xff]
        %v422 = vld [vmem:[%s385 + $0x118] sm:$0xff]
        %v423 = vld [vmem:[%s385 + $0x120] sm:$0xff]
        %v424 = vld [vmem:[%s385 + $0x128] sm:$0xff]
        %v425 = vld [vmem:[%s385 + $0x130] sm:$0xff]
        %v426 = vld [vmem:[%s385 + $0x138] sm:$0xf]
        %v427 = vld [vmem:[%s1] sm:$0xff]
        %v428 = vld [vmem:[%s1 + $0x8] sm:$0xff]
        %v429 = vld [vmem:[%s1 + $0x10] sm:$0xff]
        %v430 = vld [vmem:[%s1 + $0x18] sm:$0xff]
        %v431 = vld [vmem:[%s1 + $0x20] sm:$0xff]
        %v432 = vld [vmem:[%s1 + $0x28] sm:$0xff]
        %v433 = vld [vmem:[%s1 + $0x30] sm:$0xff]
        %v434 = vld [vmem:[%s1 + $0x38] sm:$0xff]
        %v435 = vld [vmem:[%s1 + $0x40] sm:$0xff]
        %v436 = vld [vmem:[%s1 + $0x48] sm:$0xff]
        %v437 = vld [vmem:[%s1 + $0x50] sm:$0xff]
        %v438 = vld [vmem:[%s1 + $0x58] sm:$0xff]
        %v439 = vld [vmem:[%s1 + $0x60] sm:$0xff]
        %v440 = vld [vmem:[%s1 + $0x68] sm:$0xff]
        %v441 = vld [vmem:[%s1 + $0x70] sm:$0xff]
        %v442 = vld [vmem:[%s1 + $0x78] sm:$0xff]
        %v443 = vld [vmem:[%s1 + $0x80] sm:$0xff]
        %v444 = vld [vmem:[%s1 + $0x88] sm:$0xff]
        %v445 = vld [vmem:[%s1 + $0x90] sm:$0xff]
        %v446 = vld [vmem:[%s1 + $0x98] sm:$0xff]
        %v447 = vld [vmem:[%s1 + $0xa0] sm:$0xff]
        %v448 = vld [vmem:[%s1 + $0xa8] sm:$0xff]
        %v449 = vld [vmem:[%s1 + $0xb0] sm:$0xff]
        %v450 = vld [vmem:[%s1 + $0xb8] sm:$0xff]
        %v451 = vld [vmem:[%s1 + $0xc0] sm:$0xff]
        %v452 = vld [vmem:[%s1 + $0xc8] sm:$0xff]
        %v453 = vld [vmem:[%s1 + $0xd0] sm:$0xff]
        %v454 = vld [vmem:[%s1 + $0xd8] sm:$0xff]
        %v455 = vld [vmem:[%s1 + $0xe0] sm:$0xff]
        %v456 = vld [vmem:[%s1 + $0xe8] sm:$0xff]
        %v457 = vld [vmem:[%s1 + $0xf0] sm:$0xff]
        %v458 = vld [vmem:[%s1 + $0xf8] sm:$0xff]
        %459 = vmatprep.subr.mxu0 %v458
        %460 = vmatpush1.msra.mxu0 %v457
        %461 = vmatprep.subr.mxu0 %v456
        %462 = vmatpush1.msra.mxu0 %v455
        %463 = vmatprep.subr.mxu0 %v454
        %464 = vmatpush1.msra.mxu0 %v453
        %465 = vmatprep.subr.mxu0 %v452
        %466 = vmatpush1.msra.mxu0 %v451
        %467 = vmatprep.subr.mxu0 %v450
        %468 = vmatpush1.msra.mxu0 %v449
        %469 = vmatprep.subr.mxu0 %v448
        %470 = vmatpush1.msra.mxu0 %v447
        %471 = vmatprep.subr.mxu0 %v446
        %472 = vmatpush1.msra.mxu0 %v445
        %473 = vmatprep.subr.mxu0 %v444
        %474 = vmatpush1.msra.mxu0 %v443
        %475 = vmatprep.subr.mxu0 %v442
        %476 = vmatpush1.msra.mxu0 %v441
        %477 = vmatprep.subr.mxu0 %v440
        %478 = vmatpush1.msra.mxu0 %v439
        %479 = vmatprep.subr.mxu0 %v438
        %480 = vmatpush1.msra.mxu0 %v437
        %481 = vmatprep.subr.mxu0 %v436
        %482 = vmatpush1.msra.mxu0 %v435
        %483 = vmatprep.subr.mxu0 %v434
        %484 = vmatpush1.msra.mxu0 %v433
        %485 = vmatprep.subr.mxu0 %v432
        %486 = vmatpush1.msra.mxu0 %v431
        %487 = vmatprep.subr.mxu0 %v430
        %488 = vmatpush1.msra.mxu0 %v429
        %489 = vmatprep.subr.mxu0 %v428
        %490 = vmatpush1.msra.mxu0 %v427
        %491 = vmatprep.subr.mxu0 0.0
        %492 = vmatpush2.msra.mxu0 0.0
        %493 = vmatprep.subr.mxu0 0.0
        %494 = vmatpush2.msra.mxu0 0.0
        %495 = vmatprep.subr.mxu0 0.0
        %496 = vmatpush2.msra.mxu0 0.0
        %497 = vmatprep.subr.mxu0 0.0
        %498 = vmatpush2.msra.mxu0 0.0
        %499 = vmatprep.subr.mxu0 0.0
        %500 = vmatpush2.msra.mxu0 0.0
        %501 = vmatprep.subr.mxu0 0.0
        %502 = vmatpush2.msra.mxu0 0.0
        %503 = vmatprep.subr.mxu0 0.0
        %504 = vmatpush2.msra.mxu0 0.0
        %505 = vmatprep.subr.mxu0 0.0
        %506 = vmatpush2.msra.mxu0 0.0
        %507 = vmatprep.subr.mxu0 0.0
        %508 = vmatpush2.msra.mxu0 0.0
        %509 = vmatprep.subr.mxu0 0.0
        %510 = vmatpush2.msra.mxu0 0.0
        %511 = vmatprep.subr.mxu0 0.0
        %512 = vmatpush2.msra.mxu0 0.0
        %513 = vmatprep.subr.mxu0 0.0
        %514 = vmatpush2.msra.mxu0 0.0
        %515 = vmatprep.subr.mxu0 0.0
        %516 = vmatpush2.msra.mxu0 0.0
        %517 = vmatprep.subr.mxu0 0.0
        %518 = vmatpush2.msra.mxu0 0.0
        %519 = vmatprep.subr.mxu0 0.0
        %520 = vmatpush2.msra.mxu0 0.0
        %521 = vmatprep.subr.mxu0 0.0
        %522 = vmatpush2.msra.mxu0 0.0
        %523 = vmatprep.mubr.f32.mxu0 0.0
        %524 = vmatmul.mubr.f32.gmra.mxu0 %v387
        %v525 = vpop.f32.mrf.mxu0
        %v526 = vadd.f32 0.0, %v525
        %v527 = vpop.f32.mrf.mxu0
        %v528 = vadd.f32 0.0, %v527
        %529 = vmatprep.mubr.f32.mxu0 0.0
        %530 = vmatmul.mubr.f32.gmra.mxu0 %v388
        %v531 = vpop.f32.mrf.mxu0
        %v532 = vadd.f32 0.0, %v531
        %v533 = vpop.f32.mrf.mxu0
        %v534 = vadd.f32 0.0, %v533
        %535 = vmatprep.mubr.f32.mxu0 0.0
        %536 = vmatmul.mubr.f32.gmra.mxu0 %v389
        %v537 = vpop.f32.mrf.mxu0
        %v538 = vadd.f32 0.0, %v537
        %v539 = vpop.f32.mrf.mxu0
        %v540 = vadd.f32 0.0, %v539
        %541 = vmatprep.mubr.f32.mxu0 0.0
        %542 = vmatmul.mubr.f32.gmra.mxu0 %v390
        %v543 = vpop.f32.mrf.mxu0
        %v544 = vadd.f32 0.0, %v543
        %v545 = vpop.f32.mrf.mxu0
        %v546 = vadd.f32 0.0, %v545
        %547 = vmatprep.mubr.f32.mxu0 0.0
        %548 = vmatmul.mubr.f32.gmra.mxu0 %v391
        %v549 = vpop.f32.mrf.mxu0
        %v550 = vadd.f32 0.0, %v549
        %v551 = vpop.f32.mrf.mxu0
        %v552 = vadd.f32 0.0, %v551
        %553 = vmatprep.mubr.f32.mxu0 0.0
        %554 = vmatmul.mubr.f32.gmra.mxu0 %v392
        %v555 = vpop.f32.mrf.mxu0
        %v556 = vadd.f32 0.0, %v555
        %v557 = vpop.f32.mrf.mxu0
        %v558 = vadd.f32 0.0, %v557
        %559 = vmatprep.mubr.f32.mxu0 0.0
        %560 = vmatmul.mubr.f32.gmra.mxu0 %v393
        %v561 = vpop.f32.mrf.mxu0
        %v562 = vadd.f32 0.0, %v561
        %v563 = vpop.f32.mrf.mxu0
        %v564 = vadd.f32 0.0, %v563
        %565 = vmatprep.mubr.f32.mxu0 0.0
        %566 = vmatmul.mubr.f32.gmra.mxu0 %v394
        %v567 = vpop.f32.mrf.mxu0
        %v568 = vadd.f32 0.0, %v567
        %v569 = vpop.f32.mrf.mxu0
        %v570 = vadd.f32 0.0, %v569
        %571 = vmatprep.mubr.f32.mxu0 0.0
        %572 = vmatmul.mubr.f32.gmra.mxu0 %v395
        %v573 = vpop.f32.mrf.mxu0
        %v574 = vadd.f32 0.0, %v573
        %v575 = vpop.f32.mrf.mxu0
        %v576 = vadd.f32 0.0, %v575
        %577 = vmatprep.mubr.f32.mxu0 0.0
        %578 = vmatmul.mubr.f32.gmra.mxu0 %v396
        %v579 = vpop.f32.mrf.mxu0
        %v580 = vadd.f32 0.0, %v579
        %v581 = vpop.f32.mrf.mxu0
        %v582 = vadd.f32 0.0, %v581
        %583 = vmatprep.mubr.f32.mxu0 0.0
        %584 = vmatmul.mubr.f32.gmra.mxu0 %v397
        %v585 = vpop.f32.mrf.mxu0
        %v586 = vadd.f32 0.0, %v585
        %v587 = vpop.f32.mrf.mxu0
        %v588 = vadd.f32 0.0, %v587
        %589 = vmatprep.mubr.f32.mxu0 0.0
        %590 = vmatmul.mubr.f32.gmra.mxu0 %v398
        %v591 = vpop.f32.mrf.mxu0
        %v592 = vadd.f32 0.0, %v591
        %v593 = vpop.f32.mrf.mxu0
        %v594 = vadd.f32 0.0, %v593
        %595 = vmatprep.mubr.f32.mxu0 0.0
        %596 = vmatmul.mubr.f32.gmra.mxu0 %v399
        %v597 = vpop.f32.mrf.mxu0
        %v598 = vadd.f32 0.0, %v597
        %v599 = vpop.f32.mrf.mxu0
        %v600 = vadd.f32 0.0, %v599
        %601 = vmatprep.mubr.f32.mxu0 0.0
        %602 = vmatmul.mubr.f32.gmra.mxu0 %v400
        %v603 = vpop.f32.mrf.mxu0
        %v604 = vadd.f32 0.0, %v603
        %v605 = vpop.f32.mrf.mxu0
        %v606 = vadd.f32 0.0, %v605
        %607 = vmatprep.mubr.f32.mxu0 0.0
        %608 = vmatmul.mubr.f32.gmra.mxu0 %v401
        %v609 = vpop.f32.mrf.mxu0
        %v610 = vadd.f32 0.0, %v609
        %v611 = vpop.f32.mrf.mxu0
        %v612 = vadd.f32 0.0, %v611
        %613 = vmatprep.mubr.f32.mxu0 0.0
        %614 = vmatmul.mubr.f32.gmra.mxu0 %v402
        %v615 = vpop.f32.mrf.mxu0
        %v616 = vadd.f32 0.0, %v615
        %v617 = vpop.f32.mrf.mxu0
        %v618 = vadd.f32 0.0, %v617
        %619 = vmatprep.mubr.f32.mxu0 0.0
        %620 = vmatmul.mubr.f32.gmra.mxu0 %v403
        %v621 = vpop.f32.mrf.mxu0
        %v622 = vadd.f32 0.0, %v621
        %v623 = vpop.f32.mrf.mxu0
        %v624 = vadd.f32 0.0, %v623
        %625 = vmatprep.mubr.f32.mxu0 0.0
        %626 = vmatmul.mubr.f32.gmra.mxu0 %v404
        %v627 = vpop.f32.mrf.mxu0
        %v628 = vadd.f32 0.0, %v627
        %v629 = vpop.f32.mrf.mxu0
        %v630 = vadd.f32 0.0, %v629
        %631 = vmatprep.mubr.f32.mxu0 0.0
        %632 = vmatmul.mubr.f32.gmra.mxu0 %v405
        %v633 = vpop.f32.mrf.mxu0
        %v634 = vadd.f32 0.0, %v633
        %v635 = vpop.f32.mrf.mxu0
        %v636 = vadd.f32 0.0, %v635
        %637 = vmatprep.mubr.f32.mxu0 0.0
        %638 = vmatmul.mubr.f32.gmra.mxu0 %v406
        %v639 = vpop.f32.mrf.mxu0
        %v640 = vadd.f32 0.0, %v639
        %v641 = vpop.f32.mrf.mxu0
        %v642 = vadd.f32 0.0, %v641
        %643 = vmatprep.mubr.f32.mxu0 0.0
        %644 = vmatmul.mubr.f32.gmra.mxu0 %v407
        %v645 = vpop.f32.mrf.mxu0
        %v646 = vadd.f32 0.0, %v645
        %v647 = vpop.f32.mrf.mxu0
        %v648 = vadd.f32 0.0, %v647
        %649 = vmatprep.mubr.f32.mxu0 0.0
        %650 = vmatmul.mubr.f32.gmra.mxu0 %v408
        %v651 = vpop.f32.mrf.mxu0
        %v652 = vadd.f32 0.0, %v651
        %v653 = vpop.f32.mrf.mxu0
        %v654 = vadd.f32 0.0, %v653
        %655 = vmatprep.mubr.f32.mxu0 0.0
        %656 = vmatmul.mubr.f32.gmra.mxu0 %v409
        %v657 = vpop.f32.mrf.mxu0
        %v658 = vadd.f32 0.0, %v657
        %v659 = vpop.f32.mrf.mxu0
        %v660 = vadd.f32 0.0, %v659
        %661 = vmatprep.mubr.f32.mxu0 0.0
        %662 = vmatmul.mubr.f32.gmra.mxu0 %v410
        %v663 = vpop.f32.mrf.mxu0
        %v664 = vadd.f32 0.0, %v663
        %v665 = vpop.f32.mrf.mxu0
        %v666 = vadd.f32 0.0, %v665
        %667 = vmatprep.mubr.f32.mxu0 0.0
        %668 = vmatmul.mubr.f32.gmra.mxu0 %v411
        %v669 = vpop.f32.mrf.mxu0
        %v670 = vadd.f32 0.0, %v669
        %v671 = vpop.f32.mrf.mxu0
        %v672 = vadd.f32 0.0, %v671
        %673 = vmatprep.mubr.f32.mxu0 0.0
        %674 = vmatmul.mubr.f32.gmra.mxu0 %v412
        %v675 = vpop.f32.mrf.mxu0
        %v676 = vadd.f32 0.0, %v675
        %v677 = vpop.f32.mrf.mxu0
        %v678 = vadd.f32 0.0, %v677
        %679 = vmatprep.mubr.f32.mxu0 0.0
        %680 = vmatmul.mubr.f32.gmra.mxu0 %v413
        %v681 = vpop.f32.mrf.mxu0
        %v682 = vadd.f32 0.0, %v681
        %v683 = vpop.f32.mrf.mxu0
        %v684 = vadd.f32 0.0, %v683
        %685 = vmatprep.mubr.f32.mxu0 0.0
        %686 = vmatmul.mubr.f32.gmra.mxu0 %v414
        %v687 = vpop.f32.mrf.mxu0
        %v688 = vadd.f32 0.0, %v687
        %v689 = vpop.f32.mrf.mxu0
        %v690 = vadd.f32 0.0, %v689
        %691 = vmatprep.mubr.f32.mxu0 0.0
        %692 = vmatmul.mubr.f32.gmra.mxu0 %v415
        %v693 = vpop.f32.mrf.mxu0
        %v694 = vadd.f32 0.0, %v693
        %v695 = vpop.f32.mrf.mxu0
        %v696 = vadd.f32 0.0, %v695
        %697 = vmatprep.mubr.f32.mxu0 0.0
        %698 = vmatmul.mubr.f32.gmra.mxu0 %v416
        %v699 = vpop.f32.mrf.mxu0
        %v700 = vadd.f32 0.0, %v699
        %v701 = vpop.f32.mrf.mxu0
        %v702 = vadd.f32 0.0, %v701
        %703 = vmatprep.mubr.f32.mxu0 0.0
        %704 = vmatmul.mubr.f32.gmra.mxu0 %v417
        %v705 = vpop.f32.mrf.mxu0
        %v706 = vadd.f32 0.0, %v705
        %v707 = vpop.f32.mrf.mxu0
        %v708 = vadd.f32 0.0, %v707
        %709 = vmatprep.mubr.f32.mxu0 0.0
        %710 = vmatmul.mubr.f32.gmra.mxu0 %v418
        %v711 = vpop.f32.mrf.mxu0
        %v712 = vadd.f32 0.0, %v711
        %v713 = vpop.f32.mrf.mxu0
        %v714 = vadd.f32 0.0, %v713
        %715 = vmatprep.mubr.f32.mxu0 0.0
        %716 = vmatmul.mubr.f32.gmra.mxu0 %v419
        %v717 = vpop.f32.mrf.mxu0
        %v718 = vadd.f32 0.0, %v717
        %v719 = vpop.f32.mrf.mxu0
        %v720 = vadd.f32 0.0, %v719
        %721 = vmatprep.mubr.f32.mxu0 0.0
        %722 = vmatmul.mubr.f32.gmra.mxu0 %v420
        %v723 = vpop.f32.mrf.mxu0
        %v724 = vadd.f32 0.0, %v723
        %v725 = vpop.f32.mrf.mxu0
        %v726 = vadd.f32 0.0, %v725
        %727 = vmatprep.mubr.f32.mxu0 0.0
        %728 = vmatmul.mubr.f32.gmra.mxu0 %v421
        %v729 = vpop.f32.mrf.mxu0
        %v730 = vadd.f32 0.0, %v729
        %v731 = vpop.f32.mrf.mxu0
        %v732 = vadd.f32 0.0, %v731
        %733 = vmatprep.mubr.f32.mxu0 0.0
        %734 = vmatmul.mubr.f32.gmra.mxu0 %v422
        %v735 = vpop.f32.mrf.mxu0
        %v736 = vadd.f32 0.0, %v735
        %v737 = vpop.f32.mrf.mxu0
        %v738 = vadd.f32 0.0, %v737
        %739 = vmatprep.mubr.f32.mxu0 0.0
        %740 = vmatmul.mubr.f32.gmra.mxu0 %v423
        %v741 = vpop.f32.mrf.mxu0
        %v742 = vadd.f32 0.0, %v741
        %v743 = vpop.f32.mrf.mxu0
        %v744 = vadd.f32 0.0, %v743
        %745 = vmatprep.mubr.f32.mxu0 0.0
        %746 = vmatmul.mubr.f32.gmra.mxu0 %v424
        %v747 = vpop.f32.mrf.mxu0
        %v748 = vadd.f32 0.0, %v747
        %v749 = vpop.f32.mrf.mxu0
        %v750 = vadd.f32 0.0, %v749
        %751 = vmatprep.mubr.f32.mxu0 0.0
        %752 = vmatmul.mubr.f32.gmra.mxu0 %v425
        %v753 = vpop.f32.mrf.mxu0
        %v754 = vadd.f32 0.0, %v753
        %v755 = vpop.f32.mrf.mxu0
        %v756 = vadd.f32 0.0, %v755
        %757 = vmatprep.mubr.f32.mxu0 0.0
        %758 = vmatmul.mubr.f32.gmra.mxu0 %v426
        %v759 = vpop.f32.mrf.mxu0
        %v760 = vadd.f32 0.0, %v759
        %v761 = vpop.f32.mrf.mxu0
        %v762 = vadd.f32 0.0, %v761
        %763 = vdwg.mxu0
        %764 = vst [vmem:[#allocation2] sm:$0xff] %v526
        %765 = vst [vmem:[#allocation2 + $0x8] sm:$0xff] %v528
        %766 = vst [vmem:[#allocation2 + $0x10] sm:$0xff] %v532
        %767 = vst [vmem:[#allocation2 + $0x18] sm:$0xff] %v534
        %768 = vst [vmem:[#allocation2 + $0x20] sm:$0xff] %v538
        %769 = vst [vmem:[#allocation2 + $0x28] sm:$0xff] %v540
        %770 = vst [vmem:[#allocation2 + $0x30] sm:$0xff] %v544
        %771 = vst [vmem:[#allocation2 + $0x38] sm:$0xff] %v546
        %772 = vst [vmem:[#allocation2 + $0x40] sm:$0xff] %v550
        %773 = vst [vmem:[#allocation2 + $0x48] sm:$0xff] %v552
        %774 = vst [vmem:[#allocation2 + $0x50] sm:$0xff] %v556
        %775 = vst [vmem:[#allocation2 + $0x58] sm:$0xff] %v558
        %776 = vst [vmem:[#allocation2 + $0x60] sm:$0xff] %v562
        %777 = vst [vmem:[#allocation2 + $0x68] sm:$0xff] %v564
        %778 = vst [vmem:[#allocation2 + $0x70] sm:$0xff] %v568
        %779 = vst [vmem:[#allocation2 + $0x78] sm:$0xff] %v570
        %780 = vst [vmem:[#allocation2 + $0x80] sm:$0xff] %v574
        %781 = vst [vmem:[#allocation2 + $0x88] sm:$0xff] %v576
        %782 = vst [vmem:[#allocation2 + $0x90] sm:$0xff] %v580
        %783 = vst [vmem:[#allocation2 + $0x98] sm:$0xff] %v582
        %784 = vst [vmem:[#allocation2 + $0xa0] sm:$0xff] %v586
        %785 = vst [vmem:[#allocation2 + $0xa8] sm:$0xff] %v588
        %786 = vst [vmem:[#allocation2 + $0xb0] sm:$0xff] %v592
        %787 = vst [vmem:[#allocation2 + $0xb8] sm:$0xff] %v594
        %788 = vst [vmem:[#allocation2 + $0xc0] sm:$0xff] %v598
        %789 = vst [vmem:[#allocation2 + $0xc8] sm:$0xff] %v600
        %790 = vst [vmem:[#allocation2 + $0xd0] sm:$0xff] %v604
        %791 = vst [vmem:[#allocation2 + $0xd8] sm:$0xff] %v606
        %792 = vst [vmem:[#allocation2 + $0xe0] sm:$0xff] %v610
        %793 = vst [vmem:[#allocation2 + $0xe8] sm:$0xff] %v612
        %794 = vst [vmem:[#allocation2 + $0xf0] sm:$0xff] %v616
        %795 = vst [vmem:[#allocation2 + $0xf8] sm:$0xff] %v618
        %796 = vst [vmem:[#allocation2 + $0x100] sm:$0xff] %v622
        %797 = vst [vmem:[#allocation2 + $0x108] sm:$0xff] %v624
        %798 = vst [vmem:[#allocation2 + $0x110] sm:$0xff] %v628
        %799 = vst [vmem:[#allocation2 + $0x118] sm:$0xff] %v630
        %800 = vst [vmem:[#allocation2 + $0x120] sm:$0xff] %v634
        %801 = vst [vmem:[#allocation2 + $0x128] sm:$0xff] %v636
        %802 = vst [vmem:[#allocation2 + $0x130] sm:$0xff] %v640
        %803 = vst [vmem:[#allocation2 + $0x138] sm:$0xff] %v642
        %804 = vst [vmem:[#allocation2 + $0x140] sm:$0xff] %v646
        %805 = vst [vmem:[#allocation2 + $0x148] sm:$0xff] %v648
        %806 = vst [vmem:[#allocation2 + $0x150] sm:$0xff] %v652
        %807 = vst [vmem:[#allocation2 + $0x158] sm:$0xff] %v654
        %808 = vst [vmem:[#allocation2 + $0x160] sm:$0xff] %v658
        %809 = vst [vmem:[#allocation2 + $0x168] sm:$0xff] %v660
        %810 = vst [vmem:[#allocation2 + $0x170] sm:$0xff] %v664
        %811 = vst [vmem:[#allocation2 + $0x178] sm:$0xff] %v666
        %812 = vst [vmem:[#allocation2 + $0x180] sm:$0xff] %v670
        %813 = vst [vmem:[#allocation2 + $0x188] sm:$0xff] %v672
        %814 = vst [vmem:[#allocation2 + $0x190] sm:$0xff] %v676
        %815 = vst [vmem:[#allocation2 + $0x198] sm:$0xff] %v678
        %816 = vst [vmem:[#allocation2 + $0x1a0] sm:$0xff] %v682
        %817 = vst [vmem:[#allocation2 + $0x1a8] sm:$0xff] %v684
        %818 = vst [vmem:[#allocation2 + $0x1b0] sm:$0xff] %v688
        %819 = vst [vmem:[#allocation2 + $0x1b8] sm:$0xff] %v690
        %820 = vst [vmem:[#allocation2 + $0x1c0] sm:$0xff] %v694
        %821 = vst [vmem:[#allocation2 + $0x1c8] sm:$0xff] %v696
        %822 = vst [vmem:[#allocation2 + $0x1d0] sm:$0xff] %v700
        %823 = vst [vmem:[#allocation2 + $0x1d8] sm:$0xff] %v702
        %824 = vst [vmem:[#allocation2 + $0x1e0] sm:$0xff] %v706
        %825 = vst [vmem:[#allocation2 + $0x1e8] sm:$0xff] %v708
        %826 = vst [vmem:[#allocation2 + $0x1f0] sm:$0xff] %v712
        %827 = vst [vmem:[#allocation2 + $0x1f8] sm:$0xff] %v714
        %828 = vst [vmem:[#allocation2 + $0x200] sm:$0xff] %v718
        %829 = vst [vmem:[#allocation2 + $0x208] sm:$0xff] %v720
        %830 = vst [vmem:[#allocation2 + $0x210] sm:$0xff] %v724
        %831 = vst [vmem:[#allocation2 + $0x218] sm:$0xff] %v726
        %832 = vst [vmem:[#allocation2 + $0x220] sm:$0xff] %v730
        %833 = vst [vmem:[#allocation2 + $0x228] sm:$0xff] %v732
        %834 = vst [vmem:[#allocation2 + $0x230] sm:$0xff] %v736
        %835 = vst [vmem:[#allocation2 + $0x238] sm:$0xff] %v738
        %836 = vst [vmem:[#allocation2 + $0x240] sm:$0xff] %v742
        %837 = vst [vmem:[#allocation2 + $0x248] sm:$0xff] %v744
        %838 = vst [vmem:[#allocation2 + $0x250] sm:$0xff] %v748
        %839 = vst [vmem:[#allocation2 + $0x258] sm:$0xff] %v750
        %840 = vst [vmem:[#allocation2 + $0x260] sm:$0xff] %v754
        %841 = vst [vmem:[#allocation2 + $0x268] sm:$0xff] %v756
        %842 = vst [vmem:[#allocation2 + $0x270] sm:$0xf] %v760
        %843 = vst [vmem:[#allocation2 + $0x278] sm:$0xf] %v762
        %v844 = vld [vmem:[%s385 + $0x1] sm:$0xff]
        %v845 = vld [vmem:[%s385 + $0x9] sm:$0xff]
        %v846 = vld [vmem:[%s385 + $0x11] sm:$0xff]
        %v847 = vld [vmem:[%s385 + $0x19] sm:$0xff]
        %v848 = vld [vmem:[%s385 + $0x21] sm:$0xff]
        %v849 = vld [vmem:[%s385 + $0x29] sm:$0xff]
        %v850 = vld [vmem:[%s385 + $0x31] sm:$0xff]
        %v851 = vld [vmem:[%s385 + $0x39] sm:$0xff]
        %v852 = vld [vmem:[%s385 + $0x41] sm:$0xff]
        %v853 = vld [vmem:[%s385 + $0x49] sm:$0xff]
        %v854 = vld [vmem:[%s385 + $0x51] sm:$0xff]
        %v855 = vld [vmem:[%s385 + $0x59] sm:$0xff]
        %v856 = vld [vmem:[%s385 + $0x61] sm:$0xff]
        %v857 = vld [vmem:[%s385 + $0x69] sm:$0xff]
        %v858 = vld [vmem:[%s385 + $0x71] sm:$0xff]
        %v859 = vld [vmem:[%s385 + $0x79] sm:$0xff]
        %v860 = vld [vmem:[%s385 + $0x81] sm:$0xff]
        %v861 = vld [vmem:[%s385 + $0x89] sm:$0xff]
        %v862 = vld [vmem:[%s385 + $0x91] sm:$0xff]
        %v863 = vld [vmem:[%s385 + $0x99] sm:$0xff]
        %v864 = vld [vmem:[%s385 + $0xa1] sm:$0xff]
        %v865 = vld [vmem:[%s385 + $0xa9] sm:$0xff]
        %v866 = vld [vmem:[%s385 + $0xb1] sm:$0xff]
        %v867 = vld [vmem:[%s385 + $0xb9] sm:$0xff]
        %v868 = vld [vmem:[%s385 + $0xc1] sm:$0xff]
        %v869 = vld [vmem:[%s385 + $0xc9] sm:$0xff]
        %v870 = vld [vmem:[%s385 + $0xd1] sm:$0xff]
        %v871 = vld [vmem:[%s385 + $0xd9] sm:$0xff]
        %v872 = vld [vmem:[%s385 + $0xe1] sm:$0xff]
        %v873 = vld [vmem:[%s385 + $0xe9] sm:$0xff]
        %v874 = vld [vmem:[%s385 + $0xf1] sm:$0xff]
        %v875 = vld [vmem:[%s385 + $0xf9] sm:$0xff]
        %v876 = vld [vmem:[%s385 + $0x101] sm:$0xff]
        %v877 = vld [vmem:[%s385 + $0x109] sm:$0xff]
        %v878 = vld [vmem:[%s385 + $0x111] sm:$0xff]
        %v879 = vld [vmem:[%s385 + $0x119] sm:$0xff]
        %v880 = vld [vmem:[%s385 + $0x121] sm:$0xff]
        %v881 = vld [vmem:[%s385 + $0x129] sm:$0xff]
        %v882 = vld [vmem:[%s385 + $0x131] sm:$0xff]
        %v883 = vld [vmem:[%s385 + $0x139] sm:$0xf]
        %s884 = scalar_lea.vmem %s1, 256
        %v885 = vld [vmem:[%s884] sm:$0xff]
        %v886 = vld [vmem:[%s884 + $0x8] sm:$0xff]
        %v887 = vld [vmem:[%s884 + $0x10] sm:$0xff]
        %v888 = vld [vmem:[%s884 + $0x18] sm:$0xff]
        %v889 = vld [vmem:[%s884 + $0x20] sm:$0xff]
        %v890 = vld [vmem:[%s884 + $0x28] sm:$0xff]
        %v891 = vld [vmem:[%s884 + $0x30] sm:$0xff]
        %v892 = vld [vmem:[%s884 + $0x38] sm:$0xff]
        %v893 = vld [vmem:[%s884 + $0x40] sm:$0xff]
        %v894 = vld [vmem:[%s884 + $0x48] sm:$0xff]
        %v895 = vld [vmem:[%s884 + $0x50] sm:$0xff]
        %v896 = vld [vmem:[%s884 + $0x58] sm:$0xff]
        %v897 = vld [vmem:[%s884 + $0x60] sm:$0xff]
        %v898 = vld [vmem:[%s884 + $0x68] sm:$0xff]
        %v899 = vld [vmem:[%s884 + $0x70] sm:$0xff]
        %v900 = vld [vmem:[%s884 + $0x78] sm:$0xff]
        %v901 = vld [vmem:[%s884 + $0x80] sm:$0xff]
        %v902 = vld [vmem:[%s884 + $0x88] sm:$0xff]
        %v903 = vld [vmem:[%s884 + $0x90] sm:$0xff]
        %v904 = vld [vmem:[%s884 + $0x98] sm:$0xff]
        %v905 = vld [vmem:[%s884 + $0xa0] sm:$0xff]
        %v906 = vld [vmem:[%s884 + $0xa8] sm:$0xff]
        %v907 = vld [vmem:[%s884 + $0xb0] sm:$0xff]
        %v908 = vld [vmem:[%s884 + $0xb8] sm:$0xff]
        %v909 = vld [vmem:[%s884 + $0xc0] sm:$0xff]
        %v910 = vld [vmem:[%s884 + $0xc8] sm:$0xff]
        %v911 = vld [vmem:[%s884 + $0xd0] sm:$0xff]
        %v912 = vld [vmem:[%s884 + $0xd8] sm:$0xff]
        %v913 = vld [vmem:[%s884 + $0xe0] sm:$0xff]
        %v914 = vld [vmem:[%s884 + $0xe8] sm:$0xff]
        %v915 = vld [vmem:[%s884 + $0xf0] sm:$0xff]
        %v916 = vld [vmem:[%s884 + $0xf8] sm:$0xff]
        %917 = vmatprep.subr.mxu0 %v916
        %918 = vmatpush1.msra.mxu0 %v915
        %919 = vmatprep.subr.mxu0 %v914
        %920 = vmatpush1.msra.mxu0 %v913
        %921 = vmatprep.subr.mxu0 %v912
        %922 = vmatpush1.msra.mxu0 %v911
        %923 = vmatprep.subr.mxu0 %v910
        %924 = vmatpush1.msra.mxu0 %v909
        %925 = vmatprep.subr.mxu0 %v908
        %926 = vmatpush1.msra.mxu0 %v907
        %927 = vmatprep.subr.mxu0 %v906
        %928 = vmatpush1.msra.mxu0 %v905
        %929 = vmatprep.subr.mxu0 %v904
        %930 = vmatpush1.msra.mxu0 %v903
        %931 = vmatprep.subr.mxu0 %v902
        %932 = vmatpush1.msra.mxu0 %v901
        %933 = vmatprep.subr.mxu0 %v900
        %934 = vmatpush1.msra.mxu0 %v899
        %935 = vmatprep.subr.mxu0 %v898
        %936 = vmatpush1.msra.mxu0 %v897
        %937 = vmatprep.subr.mxu0 %v896
        %938 = vmatpush1.msra.mxu0 %v895
        %939 = vmatprep.subr.mxu0 %v894
        %940 = vmatpush1.msra.mxu0 %v893
        %941 = vmatprep.subr.mxu0 %v892
        %942 = vmatpush1.msra.mxu0 %v891
        %943 = vmatprep.subr.mxu0 %v890
        %944 = vmatpush1.msra.mxu0 %v889
        %945 = vmatprep.subr.mxu0 %v888
        %946 = vmatpush1.msra.mxu0 %v887
        %947 = vmatprep.subr.mxu0 %v886
        %948 = vmatpush1.msra.mxu0 %v885
        %949 = vmatprep.subr.mxu0 0.0
        %950 = vmatpush2.msra.mxu0 0.0
        %951 = vmatprep.subr.mxu0 0.0
        %952 = vmatpush2.msra.mxu0 0.0
        %953 = vmatprep.subr.mxu0 0.0
        %954 = vmatpush2.msra.mxu0 0.0
        %955 = vmatprep.subr.mxu0 0.0
        %956 = vmatpush2.msra.mxu0 0.0
        %957 = vmatprep.subr.mxu0 0.0
        %958 = vmatpush2.msra.mxu0 0.0
        %959 = vmatprep.subr.mxu0 0.0
        %960 = vmatpush2.msra.mxu0 0.0
        %961 = vmatprep.subr.mxu0 0.0
        %962 = vmatpush2.msra.mxu0 0.0
        %963 = vmatprep.subr.mxu0 0.0
        %964 = vmatpush2.msra.mxu0 0.0
        %965 = vmatprep.subr.mxu0 0.0
        %966 = vmatpush2.msra.mxu0 0.0
        %967 = vmatprep.subr.mxu0 0.0
        %968 = vmatpush2.msra.mxu0 0.0
        %969 = vmatprep.subr.mxu0 0.0
        %970 = vmatpush2.msra.mxu0 0.0
        %971 = vmatprep.subr.mxu0 0.0
        %972 = vmatpush2.msra.mxu0 0.0
        %973 = vmatprep.subr.mxu0 0.0
        %974 = vmatpush2.msra.mxu0 0.0
        %975 = vmatprep.subr.mxu0 0.0
        %976 = vmatpush2.msra.mxu0 0.0
        %977 = vmatprep.subr.mxu0 0.0
        %978 = vmatpush2.msra.mxu0 0.0
        %979 = vmatprep.subr.mxu0 0.0
        %980 = vmatpush2.msra.mxu0 0.0
        %981 = vmatprep.mubr.f32.mxu0 0.0
        %982 = vmatmul.mubr.f32.gmra.mxu0 %v844
        %v983 = vpop.f32.mrf.mxu0
        %v984 = vadd.f32 0.0, %v983
        %v985 = vpop.f32.mrf.mxu0
        %v986 = vadd.f32 0.0, %v985
        %987 = vmatprep.mubr.f32.mxu0 0.0
        %988 = vmatmul.mubr.f32.gmra.mxu0 %v845
        %v989 = vpop.f32.mrf.mxu0
        %v990 = vadd.f32 0.0, %v989
        %v991 = vpop.f32.mrf.mxu0
        %v992 = vadd.f32 0.0, %v991
        %993 = vmatprep.mubr.f32.mxu0 0.0
        %994 = vmatmul.mubr.f32.gmra.mxu0 %v846
        %v995 = vpop.f32.mrf.mxu0
        %v996 = vadd.f32 0.0, %v995
        %v997 = vpop.f32.mrf.mxu0
        %v998 = vadd.f32 0.0, %v997
        %999 = vmatprep.mubr.f32.mxu0 0.0
        %1000 = vmatmul.mubr.f32.gmra.mxu0 %v847
        %v1001 = vpop.f32.mrf.mxu0
        %v1002 = vadd.f32 0.0, %v1001
        %v1003 = vpop.f32.mrf.mxu0
        %v1004 = vadd.f32 0.0, %v1003
        %1005 = vmatprep.mubr.f32.mxu0 0.0
        %1006 = vmatmul.mubr.f32.gmra.mxu0 %v848
        %v1007 = vpop.f32.mrf.mxu0
        %v1008 = vadd.f32 0.0, %v1007
        %v1009 = vpop.f32.mrf.mxu0
        %v1010 = vadd.f32 0.0, %v1009
        %1011 = vmatprep.mubr.f32.mxu0 0.0
        %1012 = vmatmul.mubr.f32.gmra.mxu0 %v849
        %v1013 = vpop.f32.mrf.mxu0
        %v1014 = vadd.f32 0.0, %v1013
        %v1015 = vpop.f32.mrf.mxu0
        %v1016 = vadd.f32 0.0, %v1015
        %1017 = vmatprep.mubr.f32.mxu0 0.0
        %1018 = vmatmul.mubr.f32.gmra.mxu0 %v850
        %v1019 = vpop.f32.mrf.mxu0
        %v1020 = vadd.f32 0.0, %v1019
        %v1021 = vpop.f32.mrf.mxu0
        %v1022 = vadd.f32 0.0, %v1021
        %1023 = vmatprep.mubr.f32.mxu0 0.0
        %1024 = vmatmul.mubr.f32.gmra.mxu0 %v851
        %v1025 = vpop.f32.mrf.mxu0
        %v1026 = vadd.f32 0.0, %v1025
        %v1027 = vpop.f32.mrf.mxu0
        %v1028 = vadd.f32 0.0, %v1027
        %1029 = vmatprep.mubr.f32.mxu0 0.0
        %1030 = vmatmul.mubr.f32.gmra.mxu0 %v852
        %v1031 = vpop.f32.mrf.mxu0
        %v1032 = vadd.f32 0.0, %v1031
        %v1033 = vpop.f32.mrf.mxu0
        %v1034 = vadd.f32 0.0, %v1033
        %1035 = vmatprep.mubr.f32.mxu0 0.0
        %1036 = vmatmul.mubr.f32.gmra.mxu0 %v853
        %v1037 = vpop.f32.mrf.mxu0
        %v1038 = vadd.f32 0.0, %v1037
        %v1039 = vpop.f32.mrf.mxu0
        %v1040 = vadd.f32 0.0, %v1039
        %1041 = vmatprep.mubr.f32.mxu0 0.0
        %1042 = vmatmul.mubr.f32.gmra.mxu0 %v854
        %v1043 = vpop.f32.mrf.mxu0
        %v1044 = vadd.f32 0.0, %v1043
        %v1045 = vpop.f32.mrf.mxu0
        %v1046 = vadd.f32 0.0, %v1045
        %1047 = vmatprep.mubr.f32.mxu0 0.0
        %1048 = vmatmul.mubr.f32.gmra.mxu0 %v855
        %v1049 = vpop.f32.mrf.mxu0
        %v1050 = vadd.f32 0.0, %v1049
        %v1051 = vpop.f32.mrf.mxu0
        %v1052 = vadd.f32 0.0, %v1051
        %1053 = vmatprep.mubr.f32.mxu0 0.0
        %1054 = vmatmul.mubr.f32.gmra.mxu0 %v856
        %v1055 = vpop.f32.mrf.mxu0
        %v1056 = vadd.f32 0.0, %v1055
        %v1057 = vpop.f32.mrf.mxu0
        %v1058 = vadd.f32 0.0, %v1057
        %1059 = vmatprep.mubr.f32.mxu0 0.0
        %1060 = vmatmul.mubr.f32.gmra.mxu0 %v857
        %v1061 = vpop.f32.mrf.mxu0
        %v1062 = vadd.f32 0.0, %v1061
        %v1063 = vpop.f32.mrf.mxu0
        %v1064 = vadd.f32 0.0, %v1063
        %1065 = vmatprep.mubr.f32.mxu0 0.0
        %1066 = vmatmul.mubr.f32.gmra.mxu0 %v858
        %v1067 = vpop.f32.mrf.mxu0
        %v1068 = vadd.f32 0.0, %v1067
        %v1069 = vpop.f32.mrf.mxu0
        %v1070 = vadd.f32 0.0, %v1069
        %1071 = vmatprep.mubr.f32.mxu0 0.0
        %1072 = vmatmul.mubr.f32.gmra.mxu0 %v859
        %v1073 = vpop.f32.mrf.mxu0
        %v1074 = vadd.f32 0.0, %v1073
        %v1075 = vpop.f32.mrf.mxu0
        %v1076 = vadd.f32 0.0, %v1075
        %1077 = vmatprep.mubr.f32.mxu0 0.0
        %1078 = vmatmul.mubr.f32.gmra.mxu0 %v860
        %v1079 = vpop.f32.mrf.mxu0
        %v1080 = vadd.f32 0.0, %v1079
        %v1081 = vpop.f32.mrf.mxu0
        %v1082 = vadd.f32 0.0, %v1081
        %1083 = vmatprep.mubr.f32.mxu0 0.0
        %1084 = vmatmul.mubr.f32.gmra.mxu0 %v861
        %v1085 = vpop.f32.mrf.mxu0
        %v1086 = vadd.f32 0.0, %v1085
        %v1087 = vpop.f32.mrf.mxu0
        %v1088 = vadd.f32 0.0, %v1087
        %1089 = vmatprep.mubr.f32.mxu0 0.0
        %1090 = vmatmul.mubr.f32.gmra.mxu0 %v862
        %v1091 = vpop.f32.mrf.mxu0
        %v1092 = vadd.f32 0.0, %v1091
        %v1093 = vpop.f32.mrf.mxu0
        %v1094 = vadd.f32 0.0, %v1093
        %1095 = vmatprep.mubr.f32.mxu0 0.0
        %1096 = vmatmul.mubr.f32.gmra.mxu0 %v863
        %v1097 = vpop.f32.mrf.mxu0
        %v1098 = vadd.f32 0.0, %v1097
        %v1099 = vpop.f32.mrf.mxu0
        %v1100 = vadd.f32 0.0, %v1099
        %1101 = vmatprep.mubr.f32.mxu0 0.0
        %1102 = vmatmul.mubr.f32.gmra.mxu0 %v864
        %v1103 = vpop.f32.mrf.mxu0
        %v1104 = vadd.f32 0.0, %v1103
        %v1105 = vpop.f32.mrf.mxu0
        %v1106 = vadd.f32 0.0, %v1105
        %1107 = vmatprep.mubr.f32.mxu0 0.0
        %1108 = vmatmul.mubr.f32.gmra.mxu0 %v865
        %v1109 = vpop.f32.mrf.mxu0
        %v1110 = vadd.f32 0.0, %v1109
        %v1111 = vpop.f32.mrf.mxu0
        %v1112 = vadd.f32 0.0, %v1111
        %1113 = vmatprep.mubr.f32.mxu0 0.0
        %1114 = vmatmul.mubr.f32.gmra.mxu0 %v866
        %v1115 = vpop.f32.mrf.mxu0
        %v1116 = vadd.f32 0.0, %v1115
        %v1117 = vpop.f32.mrf.mxu0
        %v1118 = vadd.f32 0.0, %v1117
        %1119 = vmatprep.mubr.f32.mxu0 0.0
        %1120 = vmatmul.mubr.f32.gmra.mxu0 %v867
        %v1121 = vpop.f32.mrf.mxu0
        %v1122 = vadd.f32 0.0, %v1121
        %v1123 = vpop.f32.mrf.mxu0
        %v1124 = vadd.f32 0.0, %v1123
        %1125 = vmatprep.mubr.f32.mxu0 0.0
        %1126 = vmatmul.mubr.f32.gmra.mxu0 %v868
        %v1127 = vpop.f32.mrf.mxu0
        %v1128 = vadd.f32 0.0, %v1127
        %v1129 = vpop.f32.mrf.mxu0
        %v1130 = vadd.f32 0.0, %v1129
        %1131 = vmatprep.mubr.f32.mxu0 0.0
        %1132 = vmatmul.mubr.f32.gmra.mxu0 %v869
        %v1133 = vpop.f32.mrf.mxu0
        %v1134 = vadd.f32 0.0, %v1133
        %v1135 = vpop.f32.mrf.mxu0
        %v1136 = vadd.f32 0.0, %v1135
        %1137 = vmatprep.mubr.f32.mxu0 0.0
        %1138 = vmatmul.mubr.f32.gmra.mxu0 %v870
        %v1139 = vpop.f32.mrf.mxu0
        %v1140 = vadd.f32 0.0, %v1139
        %v1141 = vpop.f32.mrf.mxu0
        %v1142 = vadd.f32 0.0, %v1141
        %1143 = vmatprep.mubr.f32.mxu0 0.0
        %1144 = vmatmul.mubr.f32.gmra.mxu0 %v871
        %v1145 = vpop.f32.mrf.mxu0
        %v1146 = vadd.f32 0.0, %v1145
        %v1147 = vpop.f32.mrf.mxu0
        %v1148 = vadd.f32 0.0, %v1147
        %1149 = vmatprep.mubr.f32.mxu0 0.0
        %1150 = vmatmul.mubr.f32.gmra.mxu0 %v872
        %v1151 = vpop.f32.mrf.mxu0
        %v1152 = vadd.f32 0.0, %v1151
        %v1153 = vpop.f32.mrf.mxu0
        %v1154 = vadd.f32 0.0, %v1153
        %1155 = vmatprep.mubr.f32.mxu0 0.0
        %1156 = vmatmul.mubr.f32.gmra.mxu0 %v873
        %v1157 = vpop.f32.mrf.mxu0
        %v1158 = vadd.f32 0.0, %v1157
        %v1159 = vpop.f32.mrf.mxu0
        %v1160 = vadd.f32 0.0, %v1159
        %1161 = vmatprep.mubr.f32.mxu0 0.0
        %1162 = vmatmul.mubr.f32.gmra.mxu0 %v874
        %v1163 = vpop.f32.mrf.mxu0
        %v1164 = vadd.f32 0.0, %v1163
        %v1165 = vpop.f32.mrf.mxu0
        %v1166 = vadd.f32 0.0, %v1165
        %1167 = vmatprep.mubr.f32.mxu0 0.0
        %1168 = vmatmul.mubr.f32.gmra.mxu0 %v875
        %v1169 = vpop.f32.mrf.mxu0
        %v1170 = vadd.f32 0.0, %v1169
        %v1171 = vpop.f32.mrf.mxu0
        %v1172 = vadd.f32 0.0, %v1171
        %1173 = vmatprep.mubr.f32.mxu0 0.0
        %1174 = vmatmul.mubr.f32.gmra.mxu0 %v876
        %v1175 = vpop.f32.mrf.mxu0
        %v1176 = vadd.f32 0.0, %v1175
        %v1177 = vpop.f32.mrf.mxu0
        %v1178 = vadd.f32 0.0, %v1177
        %1179 = vmatprep.mubr.f32.mxu0 0.0
        %1180 = vmatmul.mubr.f32.gmra.mxu0 %v877
        %v1181 = vpop.f32.mrf.mxu0
        %v1182 = vadd.f32 0.0, %v1181
        %v1183 = vpop.f32.mrf.mxu0
        %v1184 = vadd.f32 0.0, %v1183
        %1185 = vmatprep.mubr.f32.mxu0 0.0
        %1186 = vmatmul.mubr.f32.gmra.mxu0 %v878
        %v1187 = vpop.f32.mrf.mxu0
        %v1188 = vadd.f32 0.0, %v1187
        %v1189 = vpop.f32.mrf.mxu0
        %v1190 = vadd.f32 0.0, %v1189
        %1191 = vmatprep.mubr.f32.mxu0 0.0
        %1192 = vmatmul.mubr.f32.gmra.mxu0 %v879
        %v1193 = vpop.f32.mrf.mxu0
        %v1194 = vadd.f32 0.0, %v1193
        %v1195 = vpop.f32.mrf.mxu0
        %v1196 = vadd.f32 0.0, %v1195
        %1197 = vmatprep.mubr.f32.mxu0 0.0
        %1198 = vmatmul.mubr.f32.gmra.mxu0 %v880
        %v1199 = vpop.f32.mrf.mxu0
        %v1200 = vadd.f32 0.0, %v1199
        %v1201 = vpop.f32.mrf.mxu0
        %v1202 = vadd.f32 0.0, %v1201
        %1203 = vmatprep.mubr.f32.mxu0 0.0
        %1204 = vmatmul.mubr.f32.gmra.mxu0 %v881
        %v1205 = vpop.f32.mrf.mxu0
        %v1206 = vadd.f32 0.0, %v1205
        %v1207 = vpop.f32.mrf.mxu0
        %v1208 = vadd.f32 0.0, %v1207
        %1209 = vmatprep.mubr.f32.mxu0 0.0
        %1210 = vmatmul.mubr.f32.gmra.mxu0 %v882
        %v1211 = vpop.f32.mrf.mxu0
        %v1212 = vadd.f32 0.0, %v1211
        %v1213 = vpop.f32.mrf.mxu0
        %v1214 = vadd.f32 0.0, %v1213
        %1215 = vmatprep.mubr.f32.mxu0 0.0
        %1216 = vmatmul.mubr.f32.gmra.mxu0 %v883
        %v1217 = vpop.f32.mrf.mxu0
        %v1218 = vadd.f32 0.0, %v1217
        %v1219 = vpop.f32.mrf.mxu0
        %v1220 = vadd.f32 0.0, %v1219
        %1221 = vdwg.mxu0
        %v1222 = vld [vmem:[#allocation2] sm:$0xff]
        %v1223 = vld [vmem:[#allocation2 + $0x8] sm:$0xff]
        %v1224 = vld [vmem:[#allocation2 + $0x10] sm:$0xff]
        %v1225 = vld [vmem:[#allocation2 + $0x18] sm:$0xff]
        %v1226 = vld [vmem:[#allocation2 + $0x20] sm:$0xff]
        %v1227 = vld [vmem:[#allocation2 + $0x28] sm:$0xff]
        %v1228 = vld [vmem:[#allocation2 + $0x30] sm:$0xff]
        %v1229 = vld [vmem:[#allocation2 + $0x38] sm:$0xff]
        %v1230 = vld [vmem:[#allocation2 + $0x40] sm:$0xff]
        %v1231 = vld [vmem:[#allocation2 + $0x48] sm:$0xff]
        %v1232 = vld [vmem:[#allocation2 + $0x50] sm:$0xff]
        %v1233 = vld [vmem:[#allocation2 + $0x58] sm:$0xff]
        %v1234 = vld [vmem:[#allocation2 + $0x60] sm:$0xff]
        %v1235 = vld [vmem:[#allocation2 + $0x68] sm:$0xff]
        %v1236 = vld [vmem:[#allocation2 + $0x70] sm:$0xff]
        %v1237 = vld [vmem:[#allocation2 + $0x78] sm:$0xff]
        %v1238 = vld [vmem:[#allocation2 + $0x80] sm:$0xff]
        %v1239 = vld [vmem:[#allocation2 + $0x88] sm:$0xff]
        %v1240 = vld [vmem:[#allocation2 + $0x90] sm:$0xff]
        %v1241 = vld [vmem:[#allocation2 + $0x98] sm:$0xff]
        %v1242 = vld [vmem:[#allocation2 + $0xa0] sm:$0xff]
        %v1243 = vld [vmem:[#allocation2 + $0xa8] sm:$0xff]
        %v1244 = vld [vmem:[#allocation2 + $0xb0] sm:$0xff]
        %v1245 = vld [vmem:[#allocation2 + $0xb8] sm:$0xff]
        %v1246 = vld [vmem:[#allocation2 + $0xc0] sm:$0xff]
        %v1247 = vld [vmem:[#allocation2 + $0xc8] sm:$0xff]
        %v1248 = vld [vmem:[#allocation2 + $0xd0] sm:$0xff]
        %v1249 = vld [vmem:[#allocation2 + $0xd8] sm:$0xff]
        %v1250 = vld [vmem:[#allocation2 + $0xe0] sm:$0xff]
        %v1251 = vld [vmem:[#allocation2 + $0xe8] sm:$0xff]
        %v1252 = vld [vmem:[#allocation2 + $0xf0] sm:$0xff]
        %v1253 = vld [vmem:[#allocation2 + $0xf8] sm:$0xff]
        %v1254 = vld [vmem:[#allocation2 + $0x100] sm:$0xff]
        %v1255 = vld [vmem:[#allocation2 + $0x108] sm:$0xff]
        %v1256 = vld [vmem:[#allocation2 + $0x110] sm:$0xff]
        %v1257 = vld [vmem:[#allocation2 + $0x118] sm:$0xff]
        %v1258 = vld [vmem:[#allocation2 + $0x120] sm:$0xff]
        %v1259 = vld [vmem:[#allocation2 + $0x128] sm:$0xff]
        %v1260 = vld [vmem:[#allocation2 + $0x130] sm:$0xff]
        %v1261 = vld [vmem:[#allocation2 + $0x138] sm:$0xff]
        %v1262 = vld [vmem:[#allocation2 + $0x140] sm:$0xff]
        %v1263 = vld [vmem:[#allocation2 + $0x148] sm:$0xff]
        %v1264 = vld [vmem:[#allocation2 + $0x150] sm:$0xff]
        %v1265 = vld [vmem:[#allocation2 + $0x158] sm:$0xff]
        %v1266 = vld [vmem:[#allocation2 + $0x160] sm:$0xff]
        %v1267 = vld [vmem:[#allocation2 + $0x168] sm:$0xff]
        %v1268 = vld [vmem:[#allocation2 + $0x170] sm:$0xff]
        %v1269 = vld [vmem:[#allocation2 + $0x178] sm:$0xff]
        %v1270 = vld [vmem:[#allocation2 + $0x180] sm:$0xff]
        %v1271 = vld [vmem:[#allocation2 + $0x188] sm:$0xff]
        %v1272 = vld [vmem:[#allocation2 + $0x190] sm:$0xff]
        %v1273 = vld [vmem:[#allocation2 + $0x198] sm:$0xff]
        %v1274 = vld [vmem:[#allocation2 + $0x1a0] sm:$0xff]
        %v1275 = vld [vmem:[#allocation2 + $0x1a8] sm:$0xff]
        %v1276 = vld [vmem:[#allocation2 + $0x1b0] sm:$0xff]
        %v1277 = vld [vmem:[#allocation2 + $0x1b8] sm:$0xff]
        %v1278 = vld [vmem:[#allocation2 + $0x1c0] sm:$0xff]
        %v1279 = vld [vmem:[#allocation2 + $0x1c8] sm:$0xff]
        %v1280 = vld [vmem:[#allocation2 + $0x1d0] sm:$0xff]
        %v1281 = vld [vmem:[#allocation2 + $0x1d8] sm:$0xff]
        %v1282 = vld [vmem:[#allocation2 + $0x1e0] sm:$0xff]
        %v1283 = vld [vmem:[#allocation2 + $0x1e8] sm:$0xff]
        %v1284 = vld [vmem:[#allocation2 + $0x1f0] sm:$0xff]
        %v1285 = vld [vmem:[#allocation2 + $0x1f8] sm:$0xff]
        %v1286 = vld [vmem:[#allocation2 + $0x200] sm:$0xff]
        %v1287 = vld [vmem:[#allocation2 + $0x208] sm:$0xff]
        %v1288 = vld [vmem:[#allocation2 + $0x210] sm:$0xff]
        %v1289 = vld [vmem:[#allocation2 + $0x218] sm:$0xff]
        %v1290 = vld [vmem:[#allocation2 + $0x220] sm:$0xff]
        %v1291 = vld [vmem:[#allocation2 + $0x228] sm:$0xff]
        %v1292 = vld [vmem:[#allocation2 + $0x230] sm:$0xff]
        %v1293 = vld [vmem:[#allocation2 + $0x238] sm:$0xff]
        %v1294 = vld [vmem:[#allocation2 + $0x240] sm:$0xff]
        %v1295 = vld [vmem:[#allocation2 + $0x248] sm:$0xff]
        %v1296 = vld [vmem:[#allocation2 + $0x250] sm:$0xff]
        %v1297 = vld [vmem:[#allocation2 + $0x258] sm:$0xff]
        %v1298 = vld [vmem:[#allocation2 + $0x260] sm:$0xff]
        %v1299 = vld [vmem:[#allocation2 + $0x268] sm:$0xff]
        %v1300 = vld [vmem:[#allocation2 + $0x270] sm:$0xf]
        %v1301 = vld [vmem:[#allocation2 + $0x278] sm:$0xf]
        %v1302 = vadd.f32 %v1222, %v984
        %v1303 = vadd.f32 %v1223, %v986
        %v1304 = vadd.f32 %v1224, %v990
        %v1305 = vadd.f32 %v1225, %v992
        %v1306 = vadd.f32 %v1226, %v996
        %v1307 = vadd.f32 %v1227, %v998
        %v1308 = vadd.f32 %v1228, %v1002
        %v1309 = vadd.f32 %v1229, %v1004
        %v1310 = vadd.f32 %v1230, %v1008
        %v1311 = vadd.f32 %v1231, %v1010
        %v1312 = vadd.f32 %v1232, %v1014
        %v1313 = vadd.f32 %v1233, %v1016
        %v1314 = vadd.f32 %v1234, %v1020
        %v1315 = vadd.f32 %v1235, %v1022
        %v1316 = vadd.f32 %v1236, %v1026
        %v1317 = vadd.f32 %v1237, %v1028
        %v1318 = vadd.f32 %v1238, %v1032
        %v1319 = vadd.f32 %v1239, %v1034
        %v1320 = vadd.f32 %v1240, %v1038
        %v1321 = vadd.f32 %v1241, %v1040
        %v1322 = vadd.f32 %v1242, %v1044
        %v1323 = vadd.f32 %v1243, %v1046
        %v1324 = vadd.f32 %v1244, %v1050
        %v1325 = vadd.f32 %v1245, %v1052
        %v1326 = vadd.f32 %v1246, %v1056
        %v1327 = vadd.f32 %v1247, %v1058
        %v1328 = vadd.f32 %v1248, %v1062
        %v1329 = vadd.f32 %v1249, %v1064
        %v1330 = vadd.f32 %v1250, %v1068
        %v1331 = vadd.f32 %v1251, %v1070
        %v1332 = vadd.f32 %v1252, %v1074
        %v1333 = vadd.f32 %v1253, %v1076
        %v1334 = vadd.f32 %v1254, %v1080
        %v1335 = vadd.f32 %v1255, %v1082
        %v1336 = vadd.f32 %v1256, %v1086
        %v1337 = vadd.f32 %v1257, %v1088
        %v1338 = vadd.f32 %v1258, %v1092
        %v1339 = vadd.f32 %v1259, %v1094
        %v1340 = vadd.f32 %v1260, %v1098
        %v1341 = vadd.f32 %v1261, %v1100
        %v1342 = vadd.f32 %v1262, %v1104
        %v1343 = vadd.f32 %v1263, %v1106
        %v1344 = vadd.f32 %v1264, %v1110
        %v1345 = vadd.f32 %v1265, %v1112
        %v1346 = vadd.f32 %v1266, %v1116
        %v1347 = vadd.f32 %v1267, %v1118
        %v1348 = vadd.f32 %v1268, %v1122
        %v1349 = vadd.f32 %v1269, %v1124
        %v1350 = vadd.f32 %v1270, %v1128
        %v1351 = vadd.f32 %v1271, %v1130
        %v1352 = vadd.f32 %v1272, %v1134
        %v1353 = vadd.f32 %v1273, %v1136
        %v1354 = vadd.f32 %v1274, %v1140
        %v1355 = vadd.f32 %v1275, %v1142
        %v1356 = vadd.f32 %v1276, %v1146
        %v1357 = vadd.f32 %v1277, %v1148
        %v1358 = vadd.f32 %v1278, %v1152
        %v1359 = vadd.f32 %v1279, %v1154
        %v1360 = vadd.f32 %v1280, %v1158
        %v1361 = vadd.f32 %v1281, %v1160
        %v1362 = vadd.f32 %v1282, %v1164
        %v1363 = vadd.f32 %v1283, %v1166
        %v1364 = vadd.f32 %v1284, %v1170
        %v1365 = vadd.f32 %v1285, %v1172
        %v1366 = vadd.f32 %v1286, %v1176
        %v1367 = vadd.f32 %v1287, %v1178
        %v1368 = vadd.f32 %v1288, %v1182
        %v1369 = vadd.f32 %v1289, %v1184
        %v1370 = vadd.f32 %v1290, %v1188
        %v1371 = vadd.f32 %v1291, %v1190
        %v1372 = vadd.f32 %v1292, %v1194
        %v1373 = vadd.f32 %v1293, %v1196
        %v1374 = vadd.f32 %v1294, %v1200
        %v1375 = vadd.f32 %v1295, %v1202
        %v1376 = vadd.f32 %v1296, %v1206
        %v1377 = vadd.f32 %v1297, %v1208
        %v1378 = vadd.f32 %v1298, %v1212
        %v1379 = vadd.f32 %v1299, %v1214
        %v1380 = vadd.f32 %v1300, %v1218
        %v1381 = vadd.f32 %v1301, %v1220
        %1382 = vst [vmem:[#allocation2] sm:$0xff] %v1302
        %1383 = vst [vmem:[#allocation2 + $0x8] sm:$0xff] %v1303
        %1384 = vst [vmem:[#allocation2 + $0x10] sm:$0xff] %v1304
        %1385 = vst [vmem:[#allocation2 + $0x18] sm:$0xff] %v1305
        %1386 = vst [vmem:[#allocation2 + $0x20] sm:$0xff] %v1306
        %1387 = vst [vmem:[#allocation2 + $0x28] sm:$0xff] %v1307
        %1388 = vst [vmem:[#allocation2 + $0x30] sm:$0xff] %v1308
        %1389 = vst [vmem:[#allocation2 + $0x38] sm:$0xff] %v1309
        %1390 = vst [vmem:[#allocation2 + $0x40] sm:$0xff] %v1310
        %1391 = vst [vmem:[#allocation2 + $0x48] sm:$0xff] %v1311
        %1392 = vst [vmem:[#allocation2 + $0x50] sm:$0xff] %v1312
        %1393 = vst [vmem:[#allocation2 + $0x58] sm:$0xff] %v1313
        %1394 = vst [vmem:[#allocation2 + $0x60] sm:$0xff] %v1314
        %1395 = vst [vmem:[#allocation2 + $0x68] sm:$0xff] %v1315
        %1396 = vst [vmem:[#allocation2 + $0x70] sm:$0xff] %v1316
        %1397 = vst [vmem:[#allocation2 + $0x78] sm:$0xff] %v1317
        %1398 = vst [vmem:[#allocation2 + $0x80] sm:$0xff] %v1318
        %1399 = vst [vmem:[#allocation2 + $0x88] sm:$0xff] %v1319
        %1400 = vst [vmem:[#allocation2 + $0x90] sm:$0xff] %v1320
        %1401 = vst [vmem:[#allocation2 + $0x98] sm:$0xff] %v1321
        %1402 = vst [vmem:[#allocation2 + $0xa0] sm:$0xff] %v1322
        %1403 = vst [vmem:[#allocation2 + $0xa8] sm:$0xff] %v1323
        %1404 = vst [vmem:[#allocation2 + $0xb0] sm:$0xff] %v1324
        %1405 = vst [vmem:[#allocation2 + $0xb8] sm:$0xff] %v1325
        %1406 = vst [vmem:[#allocation2 + $0xc0] sm:$0xff] %v1326
        %1407 = vst [vmem:[#allocation2 + $0xc8] sm:$0xff] %v1327
        %1408 = vst [vmem:[#allocation2 + $0xd0] sm:$0xff] %v1328
        %1409 = vst [vmem:[#allocation2 + $0xd8] sm:$0xff] %v1329
        %1410 = vst [vmem:[#allocation2 + $0xe0] sm:$0xff] %v1330
        %1411 = vst [vmem:[#allocation2 + $0xe8] sm:$0xff] %v1331
        %1412 = vst [vmem:[#allocation2 + $0xf0] sm:$0xff] %v1332
        %1413 = vst [vmem:[#allocation2 + $0xf8] sm:$0xff] %v1333
        %1414 = vst [vmem:[#allocation2 + $0x100] sm:$0xff] %v1334
        %1415 = vst [vmem:[#allocation2 + $0x108] sm:$0xff] %v1335
        %1416 = vst [vmem:[#allocation2 + $0x110] sm:$0xff] %v1336
        %1417 = vst [vmem:[#allocation2 + $0x118] sm:$0xff] %v1337
        %1418 = vst [vmem:[#allocation2 + $0x120] sm:$0xff] %v1338
        %1419 = vst [vmem:[#allocation2 + $0x128] sm:$0xff] %v1339
        %1420 = vst [vmem:[#allocation2 + $0x130] sm:$0xff] %v1340
        %1421 = vst [vmem:[#allocation2 + $0x138] sm:$0xff] %v1341
        %1422 = vst [vmem:[#allocation2 + $0x140] sm:$0xff] %v1342
        %1423 = vst [vmem:[#allocation2 + $0x148] sm:$0xff] %v1343
        %1424 = vst [vmem:[#allocation2 + $0x150] sm:$0xff] %v1344
        %1425 = vst [vmem:[#allocation2 + $0x158] sm:$0xff] %v1345
        %1426 = vst [vmem:[#allocation2 + $0x160] sm:$0xff] %v1346
        %1427 = vst [vmem:[#allocation2 + $0x168] sm:$0xff] %v1347
        %1428 = vst [vmem:[#allocation2 + $0x170] sm:$0xff] %v1348
        %1429 = vst [vmem:[#allocation2 + $0x178] sm:$0xff] %v1349
        %1430 = vst [vmem:[#allocation2 + $0x180] sm:$0xff] %v1350
        %1431 = vst [vmem:[#allocation2 + $0x188] sm:$0xff] %v1351
        %1432 = vst [vmem:[#allocation2 + $0x190] sm:$0xff] %v1352
        %1433 = vst [vmem:[#allocation2 + $0x198] sm:$0xff] %v1353
        %1434 = vst [vmem:[#allocation2 + $0x1a0] sm:$0xff] %v1354
        %1435 = vst [vmem:[#allocation2 + $0x1a8] sm:$0xff] %v1355
        %1436 = vst [vmem:[#allocation2 + $0x1b0] sm:$0xff] %v1356
        %1437 = vst [vmem:[#allocation2 + $0x1b8] sm:$0xff] %v1357
        %1438 = vst [vmem:[#allocation2 + $0x1c0] sm:$0xff] %v1358
        %1439 = vst [vmem:[#allocation2 + $0x1c8] sm:$0xff] %v1359
        %1440 = vst [vmem:[#allocation2 + $0x1d0] sm:$0xff] %v1360
        %1441 = vst [vmem:[#allocation2 + $0x1d8] sm:$0xff] %v1361
        %1442 = vst [vmem:[#allocation2 + $0x1e0] sm:$0xff] %v1362
        %1443 = vst [vmem:[#allocation2 + $0x1e8] sm:$0xff] %v1363
        %1444 = vst [vmem:[#allocation2 + $0x1f0] sm:$0xff] %v1364
        %1445 = vst [vmem:[#allocation2 + $0x1f8] sm:$0xff] %v1365
        %1446 = vst [vmem:[#allocation2 + $0x200] sm:$0xff] %v1366
        %1447 = vst [vmem:[#allocation2 + $0x208] sm:$0xff] %v1367
        %1448 = vst [vmem:[#allocation2 + $0x210] sm:$0xff] %v1368
        %1449 = vst [vmem:[#allocation2 + $0x218] sm:$0xff] %v1369
        %1450 = vst [vmem:[#allocation2 + $0x220] sm:$0xff] %v1370
        %1451 = vst [vmem:[#allocation2 + $0x228] sm:$0xff] %v1371
        %1452 = vst [vmem:[#allocation2 + $0x230] sm:$0xff] %v1372
        %1453 = vst [vmem:[#allocation2 + $0x238] sm:$0xff] %v1373
        %1454 = vst [vmem:[#allocation2 + $0x240] sm:$0xff] %v1374
        %1455 = vst [vmem:[#allocation2 + $0x248] sm:$0xff] %v1375
        %1456 = vst [vmem:[#allocation2 + $0x250] sm:$0xff] %v1376
        %1457 = vst [vmem:[#allocation2 + $0x258] sm:$0xff] %v1377
        %1458 = vst [vmem:[#allocation2 + $0x260] sm:$0xff] %v1378
        %1459 = vst [vmem:[#allocation2 + $0x268] sm:$0xff] %v1379
        %1460 = vst [vmem:[#allocation2 + $0x270] sm:$0xf] %v1380
        %1461 = vst [vmem:[#allocation2 + $0x278] sm:$0xf] %v1381
        %v1462 = vld [vmem:[%s385 + $0x2] sm:$0xff]
        %v1463 = vld [vmem:[%s385 + $0xa] sm:$0xff]
        %v1464 = vld [vmem:[%s385 + $0x12] sm:$0xff]
        %v1465 = vld [vmem:[%s385 + $0x1a] sm:$0xff]
        %v1466 = vld [vmem:[%s385 + $0x22] sm:$0xff]
        %v1467 = vld [vmem:[%s385 + $0x2a] sm:$0xff]
        %v1468 = vld [vmem:[%s385 + $0x32] sm:$0xff]
        %v1469 = vld [vmem:[%s385 + $0x3a] sm:$0xff]
        %v1470 = vld [vmem:[%s385 + $0x42] sm:$0xff]
        %v1471 = vld [vmem:[%s385 + $0x4a] sm:$0xff]
        %v1472 = vld [vmem:[%s385 + $0x52] sm:$0xff]
        %v1473 = vld [vmem:[%s385 + $0x5a] sm:$0xff]
        %v1474 = vld [vmem:[%s385 + $0x62] sm:$0xff]
        %v1475 = vld [vmem:[%s385 + $0x6a] sm:$0xff]
        %v1476 = vld [vmem:[%s385 + $0x72] sm:$0xff]
        %v1477 = vld [vmem:[%s385 + $0x7a] sm:$0xff]
        %v1478 = vld [vmem:[%s385 + $0x82] sm:$0xff]
        %v1479 = vld [vmem:[%s385 + $0x8a] sm:$0xff]
        %v1480 = vld [vmem:[%s385 + $0x92] sm:$0xff]
        %v1481 = vld [vmem:[%s385 + $0x9a] sm:$0xff]
        %v1482 = vld [vmem:[%s385 + $0xa2] sm:$0xff]
        %v1483 = vld [vmem:[%s385 + $0xaa] sm:$0xff]
        %v1484 = vld [vmem:[%s385 + $0xb2] sm:$0xff]
        %v1485 = vld [vmem:[%s385 + $0xba] sm:$0xff]
        %v1486 = vld [vmem:[%s385 + $0xc2] sm:$0xff]
        %v1487 = vld [vmem:[%s385 + $0xca] sm:$0xff]
        %v1488 = vld [vmem:[%s385 + $0xd2] sm:$0xff]
        %v1489 = vld [vmem:[%s385 + $0xda] sm:$0xff]
        %v1490 = vld [vmem:[%s385 + $0xe2] sm:$0xff]
        %v1491 = vld [vmem:[%s385 + $0xea] sm:$0xff]
        %v1492 = vld [vmem:[%s385 + $0xf2] sm:$0xff]
        %v1493 = vld [vmem:[%s385 + $0xfa] sm:$0xff]
        %v1494 = vld [vmem:[%s385 + $0x102] sm:$0xff]
        %v1495 = vld [vmem:[%s385 + $0x10a] sm:$0xff]
        %v1496 = vld [vmem:[%s385 + $0x112] sm:$0xff]
        %v1497 = vld [vmem:[%s385 + $0x11a] sm:$0xff]
        %v1498 = vld [vmem:[%s385 + $0x122] sm:$0xff]
        %v1499 = vld [vmem:[%s385 + $0x12a] sm:$0xff]
        %v1500 = vld [vmem:[%s385 + $0x132] sm:$0xff]
        %v1501 = vld [vmem:[%s385 + $0x13a] sm:$0xf]
        %s1502 = scalar_lea.vmem %s1, 512
        %v1503 = vld [vmem:[%s1502] sm:$0xff]
        %v1504 = vld [vmem:[%s1502 + $0x8] sm:$0xff]
        %v1505 = vld [vmem:[%s1502 + $0x10] sm:$0xff]
        %v1506 = vld [vmem:[%s1502 + $0x18] sm:$0xff]
        %v1507 = vld [vmem:[%s1502 + $0x20] sm:$0xff]
        %v1508 = vld [vmem:[%s1502 + $0x28] sm:$0xff]
        %v1509 = vld [vmem:[%s1502 + $0x30] sm:$0xff]
        %v1510 = vld [vmem:[%s1502 + $0x38] sm:$0xff]
        %v1511 = vld [vmem:[%s1502 + $0x40] sm:$0xff]
        %v1512 = vld [vmem:[%s1502 + $0x48] sm:$0xff]
        %v1513 = vld [vmem:[%s1502 + $0x50] sm:$0xff]
        %v1514 = vld [vmem:[%s1502 + $0x58] sm:$0xff]
        %v1515 = vld [vmem:[%s1502 + $0x60] sm:$0xff]
        %v1516 = vld [vmem:[%s1502 + $0x68] sm:$0xff]
        %v1517 = vld [vmem:[%s1502 + $0x70] sm:$0xff]
        %v1518 = vld [vmem:[%s1502 + $0x78] sm:$0xff]
        %v1519 = vld [vmem:[%s1502 + $0x80] sm:$0xff]
        %v1520 = vld [vmem:[%s1502 + $0x88] sm:$0xff]
        %v1521 = vld [vmem:[%s1502 + $0x90] sm:$0xff]
        %v1522 = vld [vmem:[%s1502 + $0x98] sm:$0xff]
        %v1523 = vld [vmem:[%s1502 + $0xa0] sm:$0xff]
        %v1524 = vld [vmem:[%s1502 + $0xa8] sm:$0xff]
        %v1525 = vld [vmem:[%s1502 + $0xb0] sm:$0xff]
        %v1526 = vld [vmem:[%s1502 + $0xb8] sm:$0xff]
        %v1527 = vld [vmem:[%s1502 + $0xc0] sm:$0xff]
        %v1528 = vld [vmem:[%s1502 + $0xc8] sm:$0xff]
        %v1529 = vld [vmem:[%s1502 + $0xd0] sm:$0xff]
        %v1530 = vld [vmem:[%s1502 + $0xd8] sm:$0xff]
        %v1531 = vld [vmem:[%s1502 + $0xe0] sm:$0xff]
        %v1532 = vld [vmem:[%s1502 + $0xe8] sm:$0xff]
        %v1533 = vld [vmem:[%s1502 + $0xf0] sm:$0xff]
        %v1534 = vld [vmem:[%s1502 + $0xf8] sm:$0xff]
        %1535 = vmatprep.subr.mxu0 %v1534
        %1536 = vmatpush1.msra.mxu0 %v1533
        %1537 = vmatprep.subr.mxu0 %v1532
        %1538 = vmatpush1.msra.mxu0 %v1531
        %1539 = vmatprep.subr.mxu0 %v1530
        %1540 = vmatpush1.msra.mxu0 %v1529
        %1541 = vmatprep.subr.mxu0 %v1528
        %1542 = vmatpush1.msra.mxu0 %v1527
        %1543 = vmatprep.subr.mxu0 %v1526
        %1544 = vmatpush1.msra.mxu0 %v1525
        %1545 = vmatprep.subr.mxu0 %v1524
        %1546 = vmatpush1.msra.mxu0 %v1523
        %1547 = vmatprep.subr.mxu0 %v1522
        %1548 = vmatpush1.msra.mxu0 %v1521
        %1549 = vmatprep.subr.mxu0 %v1520
        %1550 = vmatpush1.msra.mxu0 %v1519
        %1551 = vmatprep.subr.mxu0 %v1518
        %1552 = vmatpush1.msra.mxu0 %v1517
        %1553 = vmatprep.subr.mxu0 %v1516
        %1554 = vmatpush1.msra.mxu0 %v1515
        %1555 = vmatprep.subr.mxu0 %v1514
        %1556 = vmatpush1.msra.mxu0 %v1513
        %1557 = vmatprep.subr.mxu0 %v1512
        %1558 = vmatpush1.msra.mxu0 %v1511
        %1559 = vmatprep.subr.mxu0 %v1510
        %1560 = vmatpush1.msra.mxu0 %v1509
        %1561 = vmatprep.subr.mxu0 %v1508
        %1562 = vmatpush1.msra.mxu0 %v1507
        %1563 = vmatprep.subr.mxu0 %v1506
        %1564 = vmatpush1.msra.mxu0 %v1505
        %1565 = vmatprep.subr.mxu0 %v1504
        %1566 = vmatpush1.msra.mxu0 %v1503
        %1567 = vmatprep.subr.mxu0 0.0
        %1568 = vmatpush2.msra.mxu0 0.0
        %1569 = vmatprep.subr.mxu0 0.0
        %1570 = vmatpush2.msra.mxu0 0.0
        %1571 = vmatprep.subr.mxu0 0.0
        %1572 = vmatpush2.msra.mxu0 0.0
        %1573 = vmatprep.subr.mxu0 0.0
        %1574 = vmatpush2.msra.mxu0 0.0
        %1575 = vmatprep.subr.mxu0 0.0
        %1576 = vmatpush2.msra.mxu0 0.0
        %1577 = vmatprep.subr.mxu0 0.0
        %1578 = vmatpush2.msra.mxu0 0.0
        %1579 = vmatprep.subr.mxu0 0.0
        %1580 = vmatpush2.msra.mxu0 0.0
        %1581 = vmatprep.subr.mxu0 0.0
        %1582 = vmatpush2.msra.mxu0 0.0
        %1583 = vmatprep.subr.mxu0 0.0
        %1584 = vmatpush2.msra.mxu0 0.0
        %1585 = vmatprep.subr.mxu0 0.0
        %1586 = vmatpush2.msra.mxu0 0.0
        %1587 = vmatprep.subr.mxu0 0.0
        %1588 = vmatpush2.msra.mxu0 0.0
        %1589 = vmatprep.subr.mxu0 0.0
        %1590 = vmatpush2.msra.mxu0 0.0
        %1591 = vmatprep.subr.mxu0 0.0
        %1592 = vmatpush2.msra.mxu0 0.0
        %1593 = vmatprep.subr.mxu0 0.0
        %1594 = vmatpush2.msra.mxu0 0.0
        %1595 = vmatprep.subr.mxu0 0.0
        %1596 = vmatpush2.msra.mxu0 0.0
        %1597 = vmatprep.subr.mxu0 0.0
        %1598 = vmatpush2.msra.mxu0 0.0
        %1599 = vmatprep.mubr.f32.mxu0 0.0
        %1600 = vmatmul.mubr.f32.gmra.mxu0 %v1462
        %v1601 = vpop.f32.mrf.mxu0
        %v1602 = vadd.f32 0.0, %v1601
        %v1603 = vpop.f32.mrf.mxu0
        %v1604 = vadd.f32 0.0, %v1603
        %1605 = vmatprep.mubr.f32.mxu0 0.0
        %1606 = vmatmul.mubr.f32.gmra.mxu0 %v1463
        %v1607 = vpop.f32.mrf.mxu0
        %v1608 = vadd.f32 0.0, %v1607
        %v1609 = vpop.f32.mrf.mxu0
        %v1610 = vadd.f32 0.0, %v1609
        %1611 = vmatprep.mubr.f32.mxu0 0.0
        %1612 = vmatmul.mubr.f32.gmra.mxu0 %v1464
        %v1613 = vpop.f32.mrf.mxu0
        %v1614 = vadd.f32 0.0, %v1613
        %v1615 = vpop.f32.mrf.mxu0
        %v1616 = vadd.f32 0.0, %v1615
        %1617 = vmatprep.mubr.f32.mxu0 0.0
        %1618 = vmatmul.mubr.f32.gmra.mxu0 %v1465
        %v1619 = vpop.f32.mrf.mxu0
        %v1620 = vadd.f32 0.0, %v1619
        %v1621 = vpop.f32.mrf.mxu0
        %v1622 = vadd.f32 0.0, %v1621
        %1623 = vmatprep.mubr.f32.mxu0 0.0
        %1624 = vmatmul.mubr.f32.gmra.mxu0 %v1466
        %v1625 = vpop.f32.mrf.mxu0
        %v1626 = vadd.f32 0.0, %v1625
        %v1627 = vpop.f32.mrf.mxu0
        %v1628 = vadd.f32 0.0, %v1627
        %1629 = vmatprep.mubr.f32.mxu0 0.0
        %1630 = vmatmul.mubr.f32.gmra.mxu0 %v1467
        %v1631 = vpop.f32.mrf.mxu0
        %v1632 = vadd.f32 0.0, %v1631
        %v1633 = vpop.f32.mrf.mxu0
        %v1634 = vadd.f32 0.0, %v1633
        %1635 = vmatprep.mubr.f32.mxu0 0.0
        %1636 = vmatmul.mubr.f32.gmra.mxu0 %v1468
        %v1637 = vpop.f32.mrf.mxu0
        %v1638 = vadd.f32 0.0, %v1637
        %v1639 = vpop.f32.mrf.mxu0
        %v1640 = vadd.f32 0.0, %v1639
        %1641 = vmatprep.mubr.f32.mxu0 0.0
        %1642 = vmatmul.mubr.f32.gmra.mxu0 %v1469
        %v1643 = vpop.f32.mrf.mxu0
        %v1644 = vadd.f32 0.0, %v1643
        %v1645 = vpop.f32.mrf.mxu0
        %v1646 = vadd.f32 0.0, %v1645
        %1647 = vmatprep.mubr.f32.mxu0 0.0
        %1648 = vmatmul.mubr.f32.gmra.mxu0 %v1470
        %v1649 = vpop.f32.mrf.mxu0
        %v1650 = vadd.f32 0.0, %v1649
        %v1651 = vpop.f32.mrf.mxu0
        %v1652 = vadd.f32 0.0, %v1651
        %1653 = vmatprep.mubr.f32.mxu0 0.0
        %1654 = vmatmul.mubr.f32.gmra.mxu0 %v1471
        %v1655 = vpop.f32.mrf.mxu0
        %v1656 = vadd.f32 0.0, %v1655
        %v1657 = vpop.f32.mrf.mxu0
        %v1658 = vadd.f32 0.0, %v1657
        %1659 = vmatprep.mubr.f32.mxu0 0.0
        %1660 = vmatmul.mubr.f32.gmra.mxu0 %v1472
        %v1661 = vpop.f32.mrf.mxu0
        %v1662 = vadd.f32 0.0, %v1661
        %v1663 = vpop.f32.mrf.mxu0
        %v1664 = vadd.f32 0.0, %v1663
        %1665 = vmatprep.mubr.f32.mxu0 0.0
        %1666 = vmatmul.mubr.f32.gmra.mxu0 %v1473
        %v1667 = vpop.f32.mrf.mxu0
        %v1668 = vadd.f32 0.0, %v1667
        %v1669 = vpop.f32.mrf.mxu0
        %v1670 = vadd.f32 0.0, %v1669
        %1671 = vmatprep.mubr.f32.mxu0 0.0
        %1672 = vmatmul.mubr.f32.gmra.mxu0 %v1474
        %v1673 = vpop.f32.mrf.mxu0
        %v1674 = vadd.f32 0.0, %v1673
        %v1675 = vpop.f32.mrf.mxu0
        %v1676 = vadd.f32 0.0, %v1675
        %1677 = vmatprep.mubr.f32.mxu0 0.0
        %1678 = vmatmul.mubr.f32.gmra.mxu0 %v1475
        %v1679 = vpop.f32.mrf.mxu0
        %v1680 = vadd.f32 0.0, %v1679
        %v1681 = vpop.f32.mrf.mxu0
        %v1682 = vadd.f32 0.0, %v1681
        %1683 = vmatprep.mubr.f32.mxu0 0.0
        %1684 = vmatmul.mubr.f32.gmra.mxu0 %v1476
        %v1685 = vpop.f32.mrf.mxu0
        %v1686 = vadd.f32 0.0, %v1685
        %v1687 = vpop.f32.mrf.mxu0
        %v1688 = vadd.f32 0.0, %v1687
        %1689 = vmatprep.mubr.f32.mxu0 0.0
        %1690 = vmatmul.mubr.f32.gmra.mxu0 %v1477
        %v1691 = vpop.f32.mrf.mxu0
        %v1692 = vadd.f32 0.0, %v1691
        %v1693 = vpop.f32.mrf.mxu0
        %v1694 = vadd.f32 0.0, %v1693
        %1695 = vmatprep.mubr.f32.mxu0 0.0
        %1696 = vmatmul.mubr.f32.gmra.mxu0 %v1478
        %v1697 = vpop.f32.mrf.mxu0
        %v1698 = vadd.f32 0.0, %v1697
        %v1699 = vpop.f32.mrf.mxu0
        %v1700 = vadd.f32 0.0, %v1699
        %1701 = vmatprep.mubr.f32.mxu0 0.0
        %1702 = vmatmul.mubr.f32.gmra.mxu0 %v1479
        %v1703 = vpop.f32.mrf.mxu0
        %v1704 = vadd.f32 0.0, %v1703
        %v1705 = vpop.f32.mrf.mxu0
        %v1706 = vadd.f32 0.0, %v1705
        %1707 = vmatprep.mubr.f32.mxu0 0.0
        %1708 = vmatmul.mubr.f32.gmra.mxu0 %v1480
        %v1709 = vpop.f32.mrf.mxu0
        %v1710 = vadd.f32 0.0, %v1709
        %v1711 = vpop.f32.mrf.mxu0
        %v1712 = vadd.f32 0.0, %v1711
        %1713 = vmatprep.mubr.f32.mxu0 0.0
        %1714 = vmatmul.mubr.f32.gmra.mxu0 %v1481
        %v1715 = vpop.f32.mrf.mxu0
        %v1716 = vadd.f32 0.0, %v1715
        %v1717 = vpop.f32.mrf.mxu0
        %v1718 = vadd.f32 0.0, %v1717
        %1719 = vmatprep.mubr.f32.mxu0 0.0
        %1720 = vmatmul.mubr.f32.gmra.mxu0 %v1482
        %v1721 = vpop.f32.mrf.mxu0
        %v1722 = vadd.f32 0.0, %v1721
        %v1723 = vpop.f32.mrf.mxu0
        %v1724 = vadd.f32 0.0, %v1723
        %1725 = vmatprep.mubr.f32.mxu0 0.0
        %1726 = vmatmul.mubr.f32.gmra.mxu0 %v1483
        %v1727 = vpop.f32.mrf.mxu0
        %v1728 = vadd.f32 0.0, %v1727
        %v1729 = vpop.f32.mrf.mxu0
        %v1730 = vadd.f32 0.0, %v1729
        %1731 = vmatprep.mubr.f32.mxu0 0.0
        %1732 = vmatmul.mubr.f32.gmra.mxu0 %v1484
        %v1733 = vpop.f32.mrf.mxu0
        %v1734 = vadd.f32 0.0, %v1733
        %v1735 = vpop.f32.mrf.mxu0
        %v1736 = vadd.f32 0.0, %v1735
        %1737 = vmatprep.mubr.f32.mxu0 0.0
        %1738 = vmatmul.mubr.f32.gmra.mxu0 %v1485
        %v1739 = vpop.f32.mrf.mxu0
        %v1740 = vadd.f32 0.0, %v1739
        %v1741 = vpop.f32.mrf.mxu0
        %v1742 = vadd.f32 0.0, %v1741
        %1743 = vmatprep.mubr.f32.mxu0 0.0
        %1744 = vmatmul.mubr.f32.gmra.mxu0 %v1486
        %v1745 = vpop.f32.mrf.mxu0
        %v1746 = vadd.f32 0.0, %v1745
        %v1747 = vpop.f32.mrf.mxu0
        %v1748 = vadd.f32 0.0, %v1747
        %1749 = vmatprep.mubr.f32.mxu0 0.0
        %1750 = vmatmul.mubr.f32.gmra.mxu0 %v1487
        %v1751 = vpop.f32.mrf.mxu0
        %v1752 = vadd.f32 0.0, %v1751
        %v1753 = vpop.f32.mrf.mxu0
        %v1754 = vadd.f32 0.0, %v1753
        %1755 = vmatprep.mubr.f32.mxu0 0.0
        %1756 = vmatmul.mubr.f32.gmra.mxu0 %v1488
        %v1757 = vpop.f32.mrf.mxu0
        %v1758 = vadd.f32 0.0, %v1757
        %v1759 = vpop.f32.mrf.mxu0
        %v1760 = vadd.f32 0.0, %v1759
        %1761 = vmatprep.mubr.f32.mxu0 0.0
        %1762 = vmatmul.mubr.f32.gmra.mxu0 %v1489
        %v1763 = vpop.f32.mrf.mxu0
        %v1764 = vadd.f32 0.0, %v1763
        %v1765 = vpop.f32.mrf.mxu0
        %v1766 = vadd.f32 0.0, %v1765
        %1767 = vmatprep.mubr.f32.mxu0 0.0
        %1768 = vmatmul.mubr.f32.gmra.mxu0 %v1490
        %v1769 = vpop.f32.mrf.mxu0
        %v1770 = vadd.f32 0.0, %v1769
        %v1771 = vpop.f32.mrf.mxu0
        %v1772 = vadd.f32 0.0, %v1771
        %1773 = vmatprep.mubr.f32.mxu0 0.0
        %1774 = vmatmul.mubr.f32.gmra.mxu0 %v1491
        %v1775 = vpop.f32.mrf.mxu0
        %v1776 = vadd.f32 0.0, %v1775
        %v1777 = vpop.f32.mrf.mxu0
        %v1778 = vadd.f32 0.0, %v1777
        %1779 = vmatprep.mubr.f32.mxu0 0.0
        %1780 = vmatmul.mubr.f32.gmra.mxu0 %v1492
        %v1781 = vpop.f32.mrf.mxu0
        %v1782 = vadd.f32 0.0, %v1781
        %v1783 = vpop.f32.mrf.mxu0
        %v1784 = vadd.f32 0.0, %v1783
        %1785 = vmatprep.mubr.f32.mxu0 0.0
        %1786 = vmatmul.mubr.f32.gmra.mxu0 %v1493
        %v1787 = vpop.f32.mrf.mxu0
        %v1788 = vadd.f32 0.0, %v1787
        %v1789 = vpop.f32.mrf.mxu0
        %v1790 = vadd.f32 0.0, %v1789
        %1791 = vmatprep.mubr.f32.mxu0 0.0
        %1792 = vmatmul.mubr.f32.gmra.mxu0 %v1494
        %v1793 = vpop.f32.mrf.mxu0
        %v1794 = vadd.f32 0.0, %v1793
        %v1795 = vpop.f32.mrf.mxu0
        %v1796 = vadd.f32 0.0, %v1795
        %1797 = vmatprep.mubr.f32.mxu0 0.0
        %1798 = vmatmul.mubr.f32.gmra.mxu0 %v1495
        %v1799 = vpop.f32.mrf.mxu0
        %v1800 = vadd.f32 0.0, %v1799
        %v1801 = vpop.f32.mrf.mxu0
        %v1802 = vadd.f32 0.0, %v1801
        %1803 = vmatprep.mubr.f32.mxu0 0.0
        %1804 = vmatmul.mubr.f32.gmra.mxu0 %v1496
        %v1805 = vpop.f32.mrf.mxu0
        %v1806 = vadd.f32 0.0, %v1805
        %v1807 = vpop.f32.mrf.mxu0
        %v1808 = vadd.f32 0.0, %v1807
        %1809 = vmatprep.mubr.f32.mxu0 0.0
        %1810 = vmatmul.mubr.f32.gmra.mxu0 %v1497
        %v1811 = vpop.f32.mrf.mxu0
        %v1812 = vadd.f32 0.0, %v1811
        %v1813 = vpop.f32.mrf.mxu0
        %v1814 = vadd.f32 0.0, %v1813
        %1815 = vmatprep.mubr.f32.mxu0 0.0
        %1816 = vmatmul.mubr.f32.gmra.mxu0 %v1498
        %v1817 = vpop.f32.mrf.mxu0
        %v1818 = vadd.f32 0.0, %v1817
        %v1819 = vpop.f32.mrf.mxu0
        %v1820 = vadd.f32 0.0, %v1819
        %1821 = vmatprep.mubr.f32.mxu0 0.0
        %1822 = vmatmul.mubr.f32.gmra.mxu0 %v1499
        %v1823 = vpop.f32.mrf.mxu0
        %v1824 = vadd.f32 0.0, %v1823
        %v1825 = vpop.f32.mrf.mxu0
        %v1826 = vadd.f32 0.0, %v1825
        %1827 = vmatprep.mubr.f32.mxu0 0.0
        %1828 = vmatmul.mubr.f32.gmra.mxu0 %v1500
        %v1829 = vpop.f32.mrf.mxu0
        %v1830 = vadd.f32 0.0, %v1829
        %v1831 = vpop.f32.mrf.mxu0
        %v1832 = vadd.f32 0.0, %v1831
        %1833 = vmatprep.mubr.f32.mxu0 0.0
        %1834 = vmatmul.mubr.f32.gmra.mxu0 %v1501
        %v1835 = vpop.f32.mrf.mxu0
        %v1836 = vadd.f32 0.0, %v1835
        %v1837 = vpop.f32.mrf.mxu0
        %v1838 = vadd.f32 0.0, %v1837
        %1839 = vdwg.mxu0
        %v1840 = vld [vmem:[#allocation2] sm:$0xff]
        %v1841 = vld [vmem:[#allocation2 + $0x8] sm:$0xff]
        %v1842 = vld [vmem:[#allocation2 + $0x10] sm:$0xff]
        %v1843 = vld [vmem:[#allocation2 + $0x18] sm:$0xff]
        %v1844 = vld [vmem:[#allocation2 + $0x20] sm:$0xff]
        %v1845 = vld [vmem:[#allocation2 + $0x28] sm:$0xff]
        %v1846 = vld [vmem:[#allocation2 + $0x30] sm:$0xff]
        %v1847 = vld [vmem:[#allocation2 + $0x38] sm:$0xff]
        %v1848 = vld [vmem:[#allocation2 + $0x40] sm:$0xff]
        %v1849 = vld [vmem:[#allocation2 + $0x48] sm:$0xff]
        %v1850 = vld [vmem:[#allocation2 + $0x50] sm:$0xff]
        %v1851 = vld [vmem:[#allocation2 + $0x58] sm:$0xff]
        %v1852 = vld [vmem:[#allocation2 + $0x60] sm:$0xff]
        %v1853 = vld [vmem:[#allocation2 + $0x68] sm:$0xff]
        %v1854 = vld [vmem:[#allocation2 + $0x70] sm:$0xff]
        %v1855 = vld [vmem:[#allocation2 + $0x78] sm:$0xff]
        %v1856 = vld [vmem:[#allocation2 + $0x80] sm:$0xff]
        %v1857 = vld [vmem:[#allocation2 + $0x88] sm:$0xff]
        %v1858 = vld [vmem:[#allocation2 + $0x90] sm:$0xff]
        %v1859 = vld [vmem:[#allocation2 + $0x98] sm:$0xff]
        %v1860 = vld [vmem:[#allocation2 + $0xa0] sm:$0xff]
        %v1861 = vld [vmem:[#allocation2 + $0xa8] sm:$0xff]
        %v1862 = vld [vmem:[#allocation2 + $0xb0] sm:$0xff]
        %v1863 = vld [vmem:[#allocation2 + $0xb8] sm:$0xff]
        %v1864 = vld [vmem:[#allocation2 + $0xc0] sm:$0xff]
        %v1865 = vld [vmem:[#allocation2 + $0xc8] sm:$0xff]
        %v1866 = vld [vmem:[#allocation2 + $0xd0] sm:$0xff]
        %v1867 = vld [vmem:[#allocation2 + $0xd8] sm:$0xff]
        %v1868 = vld [vmem:[#allocation2 + $0xe0] sm:$0xff]
        %v1869 = vld [vmem:[#allocation2 + $0xe8] sm:$0xff]
        %v1870 = vld [vmem:[#allocation2 + $0xf0] sm:$0xff]
        %v1871 = vld [vmem:[#allocation2 + $0xf8] sm:$0xff]
        %v1872 = vld [vmem:[#allocation2 + $0x100] sm:$0xff]
        %v1873 = vld [vmem:[#allocation2 + $0x108] sm:$0xff]
        %v1874 = vld [vmem:[#allocation2 + $0x110] sm:$0xff]
        %v1875 = vld [vmem:[#allocation2 + $0x118] sm:$0xff]
        %v1876 = vld [vmem:[#allocation2 + $0x120] sm:$0xff]
        %v1877 = vld [vmem:[#allocation2 + $0x128] sm:$0xff]
        %v1878 = vld [vmem:[#allocation2 + $0x130] sm:$0xff]
        %v1879 = vld [vmem:[#allocation2 + $0x138] sm:$0xff]
        %v1880 = vld [vmem:[#allocation2 + $0x140] sm:$0xff]
        %v1881 = vld [vmem:[#allocation2 + $0x148] sm:$0xff]
        %v1882 = vld [vmem:[#allocation2 + $0x150] sm:$0xff]
        %v1883 = vld [vmem:[#allocation2 + $0x158] sm:$0xff]
        %v1884 = vld [vmem:[#allocation2 + $0x160] sm:$0xff]
        %v1885 = vld [vmem:[#allocation2 + $0x168] sm:$0xff]
        %v1886 = vld [vmem:[#allocation2 + $0x170] sm:$0xff]
        %v1887 = vld [vmem:[#allocation2 + $0x178] sm:$0xff]
        %v1888 = vld [vmem:[#allocation2 + $0x180] sm:$0xff]
        %v1889 = vld [vmem:[#allocation2 + $0x188] sm:$0xff]
        %v1890 = vld [vmem:[#allocation2 + $0x190] sm:$0xff]
        %v1891 = vld [vmem:[#allocation2 + $0x198] sm:$0xff]
        %v1892 = vld [vmem:[#allocation2 + $0x1a0] sm:$0xff]
        %v1893 = vld [vmem:[#allocation2 + $0x1a8] sm:$0xff]
        %v1894 = vld [vmem:[#allocation2 + $0x1b0] sm:$0xff]
        %v1895 = vld [vmem:[#allocation2 + $0x1b8] sm:$0xff]
        %v1896 = vld [vmem:[#allocation2 + $0x1c0] sm:$0xff]
        %v1897 = vld [vmem:[#allocation2 + $0x1c8] sm:$0xff]
        %v1898 = vld [vmem:[#allocation2 + $0x1d0] sm:$0xff]
        %v1899 = vld [vmem:[#allocation2 + $0x1d8] sm:$0xff]
        %v1900 = vld [vmem:[#allocation2 + $0x1e0] sm:$0xff]
        %v1901 = vld [vmem:[#allocation2 + $0x1e8] sm:$0xff]
        %v1902 = vld [vmem:[#allocation2 + $0x1f0] sm:$0xff]
        %v1903 = vld [vmem:[#allocation2 + $0x1f8] sm:$0xff]
        %v1904 = vld [vmem:[#allocation2 + $0x200] sm:$0xff]
        %v1905 = vld [vmem:[#allocation2 + $0x208] sm:$0xff]
        %v1906 = vld [vmem:[#allocation2 + $0x210] sm:$0xff]
        %v1907 = vld [vmem:[#allocation2 + $0x218] sm:$0xff]
        %v1908 = vld [vmem:[#allocation2 + $0x220] sm:$0xff]
        %v1909 = vld [vmem:[#allocation2 + $0x228] sm:$0xff]
        %v1910 = vld [vmem:[#allocation2 + $0x230] sm:$0xff]
        %v1911 = vld [vmem:[#allocation2 + $0x238] sm:$0xff]
        %v1912 = vld [vmem:[#allocation2 + $0x240] sm:$0xff]
        %v1913 = vld [vmem:[#allocation2 + $0x248] sm:$0xff]
        %v1914 = vld [vmem:[#allocation2 + $0x250] sm:$0xff]
        %v1915 = vld [vmem:[#allocation2 + $0x258] sm:$0xff]
        %v1916 = vld [vmem:[#allocation2 + $0x260] sm:$0xff]
        %v1917 = vld [vmem:[#allocation2 + $0x268] sm:$0xff]
        %v1918 = vld [vmem:[#allocation2 + $0x270] sm:$0xf]
        %v1919 = vld [vmem:[#allocation2 + $0x278] sm:$0xf]
        %v1920 = vadd.f32 %v1840, %v1602
        %v1921 = vadd.f32 %v1841, %v1604
        %v1922 = vadd.f32 %v1842, %v1608
        %v1923 = vadd.f32 %v1843, %v1610
        %v1924 = vadd.f32 %v1844, %v1614
        %v1925 = vadd.f32 %v1845, %v1616
        %v1926 = vadd.f32 %v1846, %v1620
        %v1927 = vadd.f32 %v1847, %v1622
        %v1928 = vadd.f32 %v1848, %v1626
        %v1929 = vadd.f32 %v1849, %v1628
        %v1930 = vadd.f32 %v1850, %v1632
        %v1931 = vadd.f32 %v1851, %v1634
        %v1932 = vadd.f32 %v1852, %v1638
        %v1933 = vadd.f32 %v1853, %v1640
        %v1934 = vadd.f32 %v1854, %v1644
        %v1935 = vadd.f32 %v1855, %v1646
        %v1936 = vadd.f32 %v1856, %v1650
        %v1937 = vadd.f32 %v1857, %v1652
        %v1938 = vadd.f32 %v1858, %v1656
        %v1939 = vadd.f32 %v1859, %v1658
        %v1940 = vadd.f32 %v1860, %v1662
        %v1941 = vadd.f32 %v1861, %v1664
        %v1942 = vadd.f32 %v1862, %v1668
        %v1943 = vadd.f32 %v1863, %v1670
        %v1944 = vadd.f32 %v1864, %v1674
        %v1945 = vadd.f32 %v1865, %v1676
        %v1946 = vadd.f32 %v1866, %v1680
        %v1947 = vadd.f32 %v1867, %v1682
        %v1948 = vadd.f32 %v1868, %v1686
        %v1949 = vadd.f32 %v1869, %v1688
        %v1950 = vadd.f32 %v1870, %v1692
        %v1951 = vadd.f32 %v1871, %v1694
        %v1952 = vadd.f32 %v1872, %v1698
        %v1953 = vadd.f32 %v1873, %v1700
        %v1954 = vadd.f32 %v1874, %v1704
        %v1955 = vadd.f32 %v1875, %v1706
        %v1956 = vadd.f32 %v1876, %v1710
        %v1957 = vadd.f32 %v1877, %v1712
        %v1958 = vadd.f32 %v1878, %v1716
        %v1959 = vadd.f32 %v1879, %v1718
        %v1960 = vadd.f32 %v1880, %v1722
        %v1961 = vadd.f32 %v1881, %v1724
        %v1962 = vadd.f32 %v1882, %v1728
        %v1963 = vadd.f32 %v1883, %v1730
        %v1964 = vadd.f32 %v1884, %v1734
        %v1965 = vadd.f32 %v1885, %v1736
        %v1966 = vadd.f32 %v1886, %v1740
        %v1967 = vadd.f32 %v1887, %v1742
        %v1968 = vadd.f32 %v1888, %v1746
        %v1969 = vadd.f32 %v1889, %v1748
        %v1970 = vadd.f32 %v1890, %v1752
        %v1971 = vadd.f32 %v1891, %v1754
        %v1972 = vadd.f32 %v1892, %v1758
        %v1973 = vadd.f32 %v1893, %v1760
        %v1974 = vadd.f32 %v1894, %v1764
        %v1975 = vadd.f32 %v1895, %v1766
        %v1976 = vadd.f32 %v1896, %v1770
        %v1977 = vadd.f32 %v1897, %v1772
        %v1978 = vadd.f32 %v1898, %v1776
        %v1979 = vadd.f32 %v1899, %v1778
        %v1980 = vadd.f32 %v1900, %v1782
        %v1981 = vadd.f32 %v1901, %v1784
        %v1982 = vadd.f32 %v1902, %v1788
        %v1983 = vadd.f32 %v1903, %v1790
        %v1984 = vadd.f32 %v1904, %v1794
        %v1985 = vadd.f32 %v1905, %v1796
        %v1986 = vadd.f32 %v1906, %v1800
        %v1987 = vadd.f32 %v1907, %v1802
        %v1988 = vadd.f32 %v1908, %v1806
        %v1989 = vadd.f32 %v1909, %v1808
        %v1990 = vadd.f32 %v1910, %v1812
        %v1991 = vadd.f32 %v1911, %v1814
        %v1992 = vadd.f32 %v1912, %v1818
        %v1993 = vadd.f32 %v1913, %v1820
        %v1994 = vadd.f32 %v1914, %v1824
        %v1995 = vadd.f32 %v1915, %v1826
        %v1996 = vadd.f32 %v1916, %v1830
        %v1997 = vadd.f32 %v1917, %v1832
        %v1998 = vadd.f32 %v1918, %v1836
        %v1999 = vadd.f32 %v1919, %v1838
        %2000 = vst [vmem:[#allocation2] sm:$0xff] %v1920
        %2001 = vst [vmem:[#allocation2 + $0x8] sm:$0xff] %v1921
        %2002 = vst [vmem:[#allocation2 + $0x10] sm:$0xff] %v1922
        %2003 = vst [vmem:[#allocation2 + $0x18] sm:$0xff] %v1923
        %2004 = vst [vmem:[#allocation2 + $0x20] sm:$0xff] %v1924
        %2005 = vst [vmem:[#allocation2 + $0x28] sm:$0xff] %v1925
        %2006 = vst [vmem:[#allocation2 + $0x30] sm:$0xff] %v1926
        %2007 = vst [vmem:[#allocation2 + $0x38] sm:$0xff] %v1927
        %2008 = vst [vmem:[#allocation2 + $0x40] sm:$0xff] %v1928
        %2009 = vst [vmem:[#allocation2 + $0x48] sm:$0xff] %v1929
        %2010 = vst [vmem:[#allocation2 + $0x50] sm:$0xff] %v1930
        %2011 = vst [vmem:[#allocation2 + $0x58] sm:$0xff] %v1931
        %2012 = vst [vmem:[#allocation2 + $0x60] sm:$0xff] %v1932
        %2013 = vst [vmem:[#allocation2 + $0x68] sm:$0xff] %v1933
        %2014 = vst [vmem:[#allocation2 + $0x70] sm:$0xff] %v1934
        %2015 = vst [vmem:[#allocation2 + $0x78] sm:$0xff] %v1935
        %2016 = vst [vmem:[#allocation2 + $0x80] sm:$0xff] %v1936
        %2017 = vst [vmem:[#allocation2 + $0x88] sm:$0xff] %v1937
        %2018 = vst [vmem:[#allocation2 + $0x90] sm:$0xff] %v1938
        %2019 = vst [vmem:[#allocation2 + $0x98] sm:$0xff] %v1939
        %2020 = vst [vmem:[#allocation2 + $0xa0] sm:$0xff] %v1940
        %2021 = vst [vmem:[#allocation2 + $0xa8] sm:$0xff] %v1941
        %2022 = vst [vmem:[#allocation2 + $0xb0] sm:$0xff] %v1942
        %2023 = vst [vmem:[#allocation2 + $0xb8] sm:$0xff] %v1943
        %2024 = vst [vmem:[#allocation2 + $0xc0] sm:$0xff] %v1944
        %2025 = vst [vmem:[#allocation2 + $0xc8] sm:$0xff] %v1945
        %2026 = vst [vmem:[#allocation2 + $0xd0] sm:$0xff] %v1946
        %2027 = vst [vmem:[#allocation2 + $0xd8] sm:$0xff] %v1947
        %2028 = vst [vmem:[#allocation2 + $0xe0] sm:$0xff] %v1948
        %2029 = vst [vmem:[#allocation2 + $0xe8] sm:$0xff] %v1949
        %2030 = vst [vmem:[#allocation2 + $0xf0] sm:$0xff] %v1950
        %2031 = vst [vmem:[#allocation2 + $0xf8] sm:$0xff] %v1951
        %2032 = vst [vmem:[#allocation2 + $0x100] sm:$0xff] %v1952
        %2033 = vst [vmem:[#allocation2 + $0x108] sm:$0xff] %v1953
        %2034 = vst [vmem:[#allocation2 + $0x110] sm:$0xff] %v1954
        %2035 = vst [vmem:[#allocation2 + $0x118] sm:$0xff] %v1955
        %2036 = vst [vmem:[#allocation2 + $0x120] sm:$0xff] %v1956
        %2037 = vst [vmem:[#allocation2 + $0x128] sm:$0xff] %v1957
        %2038 = vst [vmem:[#allocation2 + $0x130] sm:$0xff] %v1958
        %2039 = vst [vmem:[#allocation2 + $0x138] sm:$0xff] %v1959
        %2040 = vst [vmem:[#allocation2 + $0x140] sm:$0xff] %v1960
        %2041 = vst [vmem:[#allocation2 + $0x148] sm:$0xff] %v1961
        %2042 = vst [vmem:[#allocation2 + $0x150] sm:$0xff] %v1962
        %2043 = vst [vmem:[#allocation2 + $0x158] sm:$0xff] %v1963
        %2044 = vst [vmem:[#allocation2 + $0x160] sm:$0xff] %v1964
        %2045 = vst [vmem:[#allocation2 + $0x168] sm:$0xff] %v1965
        %2046 = vst [vmem:[#allocation2 + $0x170] sm:$0xff] %v1966
        %2047 = vst [vmem:[#allocation2 + $0x178] sm:$0xff] %v1967
        %2048 = vst [vmem:[#allocation2 + $0x180] sm:$0xff] %v1968
        %2049 = vst [vmem:[#allocation2 + $0x188] sm:$0xff] %v1969
        %2050 = vst [vmem:[#allocation2 + $0x190] sm:$0xff] %v1970
        %2051 = vst [vmem:[#allocation2 + $0x198] sm:$0xff] %v1971
        %2052 = vst [vmem:[#allocation2 + $0x1a0] sm:$0xff] %v1972
        %2053 = vst [vmem:[#allocation2 + $0x1a8] sm:$0xff] %v1973
        %2054 = vst [vmem:[#allocation2 + $0x1b0] sm:$0xff] %v1974
        %2055 = vst [vmem:[#allocation2 + $0x1b8] sm:$0xff] %v1975
        %2056 = vst [vmem:[#allocation2 + $0x1c0] sm:$0xff] %v1976
        %2057 = vst [vmem:[#allocation2 + $0x1c8] sm:$0xff] %v1977
        %2058 = vst [vmem:[#allocation2 + $0x1d0] sm:$0xff] %v1978
        %2059 = vst [vmem:[#allocation2 + $0x1d8] sm:$0xff] %v1979
        %2060 = vst [vmem:[#allocation2 + $0x1e0] sm:$0xff] %v1980
        %2061 = vst [vmem:[#allocation2 + $0x1e8] sm:$0xff] %v1981
        %2062 = vst [vmem:[#allocation2 + $0x1f0] sm:$0xff] %v1982
        %2063 = vst [vmem:[#allocation2 + $0x1f8] sm:$0xff] %v1983
        %2064 = vst [vmem:[#allocation2 + $0x200] sm:$0xff] %v1984
        %2065 = vst [vmem:[#allocation2 + $0x208] sm:$0xff] %v1985
        %2066 = vst [vmem:[#allocation2 + $0x210] sm:$0xff] %v1986
        %2067 = vst [vmem:[#allocation2 + $0x218] sm:$0xff] %v1987
        %2068 = vst [vmem:[#allocation2 + $0x220] sm:$0xff] %v1988
        %2069 = vst [vmem:[#allocation2 + $0x228] sm:$0xff] %v1989
        %2070 = vst [vmem:[#allocation2 + $0x230] sm:$0xff] %v1990
        %2071 = vst [vmem:[#allocation2 + $0x238] sm:$0xff] %v1991
        %2072 = vst [vmem:[#allocation2 + $0x240] sm:$0xff] %v1992
        %2073 = vst [vmem:[#allocation2 + $0x248] sm:$0xff] %v1993
        %2074 = vst [vmem:[#allocation2 + $0x250] sm:$0xff] %v1994
        %2075 = vst [vmem:[#allocation2 + $0x258] sm:$0xff] %v1995
        %2076 = vst [vmem:[#allocation2 + $0x260] sm:$0xff] %v1996
        %2077 = vst [vmem:[#allocation2 + $0x268] sm:$0xff] %v1997
        %2078 = vst [vmem:[#allocation2 + $0x270] sm:$0xf] %v1998
        %2079 = vst [vmem:[#allocation2 + $0x278] sm:$0xf] %v1999
        %v2080 = vld [vmem:[%s385 + $0x3] sm:$0xff]
        %v2081 = vld [vmem:[%s385 + $0xb] sm:$0xff]
        %v2082 = vld [vmem:[%s385 + $0x13] sm:$0xff]
        %v2083 = vld [vmem:[%s385 + $0x1b] sm:$0xff]
        %v2084 = vld [vmem:[%s385 + $0x23] sm:$0xff]
        %v2085 = vld [vmem:[%s385 + $0x2b] sm:$0xff]
        %v2086 = vld [vmem:[%s385 + $0x33] sm:$0xff]
        %v2087 = vld [vmem:[%s385 + $0x3b] sm:$0xff]
        %v2088 = vld [vmem:[%s385 + $0x43] sm:$0xff]
        %v2089 = vld [vmem:[%s385 + $0x4b] sm:$0xff]
        %v2090 = vld [vmem:[%s385 + $0x53] sm:$0xff]
        %v2091 = vld [vmem:[%s385 + $0x5b] sm:$0xff]
        %v2092 = vld [vmem:[%s385 + $0x63] sm:$0xff]
        %v2093 = vld [vmem:[%s385 + $0x6b] sm:$0xff]
        %v2094 = vld [vmem:[%s385 + $0x73] sm:$0xff]
        %v2095 = vld [vmem:[%s385 + $0x7b] sm:$0xff]
        %v2096 = vld [vmem:[%s385 + $0x83] sm:$0xff]
        %v2097 = vld [vmem:[%s385 + $0x8b] sm:$0xff]
        %v2098 = vld [vmem:[%s385 + $0x93] sm:$0xff]
        %v2099 = vld [vmem:[%s385 + $0x9b] sm:$0xff]
        %v2100 = vld [vmem:[%s385 + $0xa3] sm:$0xff]
        %v2101 = vld [vmem:[%s385 + $0xab] sm:$0xff]
        %v2102 = vld [vmem:[%s385 + $0xb3] sm:$0xff]
        %v2103 = vld [vmem:[%s385 + $0xbb] sm:$0xff]
        %v2104 = vld [vmem:[%s385 + $0xc3] sm:$0xff]
        %v2105 = vld [vmem:[%s385 + $0xcb] sm:$0xff]
        %v2106 = vld [vmem:[%s385 + $0xd3] sm:$0xff]
        %v2107 = vld [vmem:[%s385 + $0xdb] sm:$0xff]
        %v2108 = vld [vmem:[%s385 + $0xe3] sm:$0xff]
        %v2109 = vld [vmem:[%s385 + $0xeb] sm:$0xff]
        %v2110 = vld [vmem:[%s385 + $0xf3] sm:$0xff]
        %v2111 = vld [vmem:[%s385 + $0xfb] sm:$0xff]
        %v2112 = vld [vmem:[%s385 + $0x103] sm:$0xff]
        %v2113 = vld [vmem:[%s385 + $0x10b] sm:$0xff]
        %v2114 = vld [vmem:[%s385 + $0x113] sm:$0xff]
        %v2115 = vld [vmem:[%s385 + $0x11b] sm:$0xff]
        %v2116 = vld [vmem:[%s385 + $0x123] sm:$0xff]
        %v2117 = vld [vmem:[%s385 + $0x12b] sm:$0xff]
        %v2118 = vld [vmem:[%s385 + $0x133] sm:$0xff]
        %v2119 = vld [vmem:[%s385 + $0x13b] sm:$0xf]
        %s2120 = scalar_lea.vmem %s1, 768
        %v2121 = vld [vmem:[%s2120] sm:$0xff]
        %v2122 = vld [vmem:[%s2120 + $0x8] sm:$0xff]
        %v2123 = vld [vmem:[%s2120 + $0x10] sm:$0xff]
        %v2124 = vld [vmem:[%s2120 + $0x18] sm:$0xff]
        %v2125 = vld [vmem:[%s2120 + $0x20] sm:$0xff]
        %v2126 = vld [vmem:[%s2120 + $0x28] sm:$0xff]
        %v2127 = vld [vmem:[%s2120 + $0x30] sm:$0xff]
        %v2128 = vld [vmem:[%s2120 + $0x38] sm:$0xff]
        %v2129 = vld [vmem:[%s2120 + $0x40] sm:$0xff]
        %v2130 = vld [vmem:[%s2120 + $0x48] sm:$0xff]
        %v2131 = vld [vmem:[%s2120 + $0x50] sm:$0xff]
        %v2132 = vld [vmem:[%s2120 + $0x58] sm:$0xff]
        %v2133 = vld [vmem:[%s2120 + $0x60] sm:$0xff]
        %v2134 = vld [vmem:[%s2120 + $0x68] sm:$0xff]
        %v2135 = vld [vmem:[%s2120 + $0x70] sm:$0xff]
        %v2136 = vld [vmem:[%s2120 + $0x78] sm:$0xff]
        %v2137 = vld [vmem:[%s2120 + $0x80] sm:$0xff]
        %v2138 = vld [vmem:[%s2120 + $0x88] sm:$0xff]
        %v2139 = vld [vmem:[%s2120 + $0x90] sm:$0xff]
        %v2140 = vld [vmem:[%s2120 + $0x98] sm:$0xff]
        %v2141 = vld [vmem:[%s2120 + $0xa0] sm:$0xff]
        %v2142 = vld [vmem:[%s2120 + $0xa8] sm:$0xff]
        %v2143 = vld [vmem:[%s2120 + $0xb0] sm:$0xff]
        %v2144 = vld [vmem:[%s2120 + $0xb8] sm:$0xff]
        %v2145 = vld [vmem:[%s2120 + $0xc0] sm:$0xff]
        %v2146 = vld [vmem:[%s2120 + $0xc8] sm:$0xff]
        %v2147 = vld [vmem:[%s2120 + $0xd0] sm:$0xff]
        %v2148 = vld [vmem:[%s2120 + $0xd8] sm:$0xff]
        %v2149 = vld [vmem:[%s2120 + $0xe0] sm:$0xff]
        %v2150 = vld [vmem:[%s2120 + $0xe8] sm:$0xff]
        %v2151 = vld [vmem:[%s2120 + $0xf0] sm:$0xff]
        %v2152 = vld [vmem:[%s2120 + $0xf8] sm:$0xff]
        %2153 = vmatprep.subr.mxu0 %v2152
        %2154 = vmatpush1.msra.mxu0 %v2151
        %2155 = vmatprep.subr.mxu0 %v2150
        %2156 = vmatpush1.msra.mxu0 %v2149
        %2157 = vmatprep.subr.mxu0 %v2148
        %2158 = vmatpush1.msra.mxu0 %v2147
        %2159 = vmatprep.subr.mxu0 %v2146
        %2160 = vmatpush1.msra.mxu0 %v2145
        %2161 = vmatprep.subr.mxu0 %v2144
        %2162 = vmatpush1.msra.mxu0 %v2143
        %2163 = vmatprep.subr.mxu0 %v2142
        %2164 = vmatpush1.msra.mxu0 %v2141
        %2165 = vmatprep.subr.mxu0 %v2140
        %2166 = vmatpush1.msra.mxu0 %v2139
        %2167 = vmatprep.subr.mxu0 %v2138
        %2168 = vmatpush1.msra.mxu0 %v2137
        %2169 = vmatprep.subr.mxu0 %v2136
        %2170 = vmatpush1.msra.mxu0 %v2135
        %2171 = vmatprep.subr.mxu0 %v2134
        %2172 = vmatpush1.msra.mxu0 %v2133
        %2173 = vmatprep.subr.mxu0 %v2132
        %2174 = vmatpush1.msra.mxu0 %v2131
        %2175 = vmatprep.subr.mxu0 %v2130
        %2176 = vmatpush1.msra.mxu0 %v2129
        %2177 = vmatprep.subr.mxu0 %v2128
        %2178 = vmatpush1.msra.mxu0 %v2127
        %2179 = vmatprep.subr.mxu0 %v2126
        %2180 = vmatpush1.msra.mxu0 %v2125
        %2181 = vmatprep.subr.mxu0 %v2124
        %2182 = vmatpush1.msra.mxu0 %v2123
        %2183 = vmatprep.subr.mxu0 %v2122
        %2184 = vmatpush1.msra.mxu0 %v2121
        %2185 = vmatprep.subr.mxu0 0.0
        %2186 = vmatpush2.msra.mxu0 0.0
        %2187 = vmatprep.subr.mxu0 0.0
        %2188 = vmatpush2.msra.mxu0 0.0
        %2189 = vmatprep.subr.mxu0 0.0
        %2190 = vmatpush2.msra.mxu0 0.0
        %2191 = vmatprep.subr.mxu0 0.0
        %2192 = vmatpush2.msra.mxu0 0.0
        %2193 = vmatprep.subr.mxu0 0.0
        %2194 = vmatpush2.msra.mxu0 0.0
        %2195 = vmatprep.subr.mxu0 0.0
        %2196 = vmatpush2.msra.mxu0 0.0
        %2197 = vmatprep.subr.mxu0 0.0
        %2198 = vmatpush2.msra.mxu0 0.0
        %2199 = vmatprep.subr.mxu0 0.0
        %2200 = vmatpush2.msra.mxu0 0.0
        %2201 = vmatprep.subr.mxu0 0.0
        %2202 = vmatpush2.msra.mxu0 0.0
        %2203 = vmatprep.subr.mxu0 0.0
        %2204 = vmatpush2.msra.mxu0 0.0
        %2205 = vmatprep.subr.mxu0 0.0
        %2206 = vmatpush2.msra.mxu0 0.0
        %2207 = vmatprep.subr.mxu0 0.0
        %2208 = vmatpush2.msra.mxu0 0.0
        %2209 = vmatprep.subr.mxu0 0.0
        %2210 = vmatpush2.msra.mxu0 0.0
        %2211 = vmatprep.subr.mxu0 0.0
        %2212 = vmatpush2.msra.mxu0 0.0
        %2213 = vmatprep.subr.mxu0 0.0
        %2214 = vmatpush2.msra.mxu0 0.0
        %2215 = vmatprep.subr.mxu0 0.0
        %2216 = vmatpush2.msra.mxu0 0.0
        %2217 = vmatprep.mubr.f32.mxu0 0.0
        %2218 = vmatmul.mubr.f32.gmra.mxu0 %v2080
        %v2219 = vpop.f32.mrf.mxu0
        %v2220 = vadd.f32 0.0, %v2219
        %v2221 = vpop.f32.mrf.mxu0
        %v2222 = vadd.f32 0.0, %v2221
        %2223 = vmatprep.mubr.f32.mxu0 0.0
        %2224 = vmatmul.mubr.f32.gmra.mxu0 %v2081
        %v2225 = vpop.f32.mrf.mxu0
        %v2226 = vadd.f32 0.0, %v2225
        %v2227 = vpop.f32.mrf.mxu0
        %v2228 = vadd.f32 0.0, %v2227
        %2229 = vmatprep.mubr.f32.mxu0 0.0
        %2230 = vmatmul.mubr.f32.gmra.mxu0 %v2082
        %v2231 = vpop.f32.mrf.mxu0
        %v2232 = vadd.f32 0.0, %v2231
        %v2233 = vpop.f32.mrf.mxu0
        %v2234 = vadd.f32 0.0, %v2233
        %2235 = vmatprep.mubr.f32.mxu0 0.0
        %2236 = vmatmul.mubr.f32.gmra.mxu0 %v2083
        %v2237 = vpop.f32.mrf.mxu0
        %v2238 = vadd.f32 0.0, %v2237
        %v2239 = vpop.f32.mrf.mxu0
        %v2240 = vadd.f32 0.0, %v2239
        %2241 = vmatprep.mubr.f32.mxu0 0.0
        %2242 = vmatmul.mubr.f32.gmra.mxu0 %v2084
        %v2243 = vpop.f32.mrf.mxu0
        %v2244 = vadd.f32 0.0, %v2243
        %v2245 = vpop.f32.mrf.mxu0
        %v2246 = vadd.f32 0.0, %v2245
        %2247 = vmatprep.mubr.f32.mxu0 0.0
        %2248 = vmatmul.mubr.f32.gmra.mxu0 %v2085
        %v2249 = vpop.f32.mrf.mxu0
        %v2250 = vadd.f32 0.0, %v2249
        %v2251 = vpop.f32.mrf.mxu0
        %v2252 = vadd.f32 0.0, %v2251
        %2253 = vmatprep.mubr.f32.mxu0 0.0
        %2254 = vmatmul.mubr.f32.gmra.mxu0 %v2086
        %v2255 = vpop.f32.mrf.mxu0
        %v2256 = vadd.f32 0.0, %v2255
        %v2257 = vpop.f32.mrf.mxu0
        %v2258 = vadd.f32 0.0, %v2257
        %2259 = vmatprep.mubr.f32.mxu0 0.0
        %2260 = vmatmul.mubr.f32.gmra.mxu0 %v2087
        %v2261 = vpop.f32.mrf.mxu0
        %v2262 = vadd.f32 0.0, %v2261
        %v2263 = vpop.f32.mrf.mxu0
        %v2264 = vadd.f32 0.0, %v2263
        %2265 = vmatprep.mubr.f32.mxu0 0.0
        %2266 = vmatmul.mubr.f32.gmra.mxu0 %v2088
        %v2267 = vpop.f32.mrf.mxu0
        %v2268 = vadd.f32 0.0, %v2267
        %v2269 = vpop.f32.mrf.mxu0
        %v2270 = vadd.f32 0.0, %v2269
        %2271 = vmatprep.mubr.f32.mxu0 0.0
        %2272 = vmatmul.mubr.f32.gmra.mxu0 %v2089
        %v2273 = vpop.f32.mrf.mxu0
        %v2274 = vadd.f32 0.0, %v2273
        %v2275 = vpop.f32.mrf.mxu0
        %v2276 = vadd.f32 0.0, %v2275
        %2277 = vmatprep.mubr.f32.mxu0 0.0
        %2278 = vmatmul.mubr.f32.gmra.mxu0 %v2090
        %v2279 = vpop.f32.mrf.mxu0
        %v2280 = vadd.f32 0.0, %v2279
        %v2281 = vpop.f32.mrf.mxu0
        %v2282 = vadd.f32 0.0, %v2281
        %2283 = vmatprep.mubr.f32.mxu0 0.0
        %2284 = vmatmul.mubr.f32.gmra.mxu0 %v2091
        %v2285 = vpop.f32.mrf.mxu0
        %v2286 = vadd.f32 0.0, %v2285
        %v2287 = vpop.f32.mrf.mxu0
        %v2288 = vadd.f32 0.0, %v2287
        %2289 = vmatprep.mubr.f32.mxu0 0.0
        %2290 = vmatmul.mubr.f32.gmra.mxu0 %v2092
        %v2291 = vpop.f32.mrf.mxu0
        %v2292 = vadd.f32 0.0, %v2291
        %v2293 = vpop.f32.mrf.mxu0
        %v2294 = vadd.f32 0.0, %v2293
        %2295 = vmatprep.mubr.f32.mxu0 0.0
        %2296 = vmatmul.mubr.f32.gmra.mxu0 %v2093
        %v2297 = vpop.f32.mrf.mxu0
        %v2298 = vadd.f32 0.0, %v2297
        %v2299 = vpop.f32.mrf.mxu0
        %v2300 = vadd.f32 0.0, %v2299
        %2301 = vmatprep.mubr.f32.mxu0 0.0
        %2302 = vmatmul.mubr.f32.gmra.mxu0 %v2094
        %v2303 = vpop.f32.mrf.mxu0
        %v2304 = vadd.f32 0.0, %v2303
        %v2305 = vpop.f32.mrf.mxu0
        %v2306 = vadd.f32 0.0, %v2305
        %2307 = vmatprep.mubr.f32.mxu0 0.0
        %2308 = vmatmul.mubr.f32.gmra.mxu0 %v2095
        %v2309 = vpop.f32.mrf.mxu0
        %v2310 = vadd.f32 0.0, %v2309
        %v2311 = vpop.f32.mrf.mxu0
        %v2312 = vadd.f32 0.0, %v2311
        %2313 = vmatprep.mubr.f32.mxu0 0.0
        %2314 = vmatmul.mubr.f32.gmra.mxu0 %v2096
        %v2315 = vpop.f32.mrf.mxu0
        %v2316 = vadd.f32 0.0, %v2315
        %v2317 = vpop.f32.mrf.mxu0
        %v2318 = vadd.f32 0.0, %v2317
        %2319 = vmatprep.mubr.f32.mxu0 0.0
        %2320 = vmatmul.mubr.f32.gmra.mxu0 %v2097
        %v2321 = vpop.f32.mrf.mxu0
        %v2322 = vadd.f32 0.0, %v2321
        %v2323 = vpop.f32.mrf.mxu0
        %v2324 = vadd.f32 0.0, %v2323
        %2325 = vmatprep.mubr.f32.mxu0 0.0
        %2326 = vmatmul.mubr.f32.gmra.mxu0 %v2098
        %v2327 = vpop.f32.mrf.mxu0
        %v2328 = vadd.f32 0.0, %v2327
        %v2329 = vpop.f32.mrf.mxu0
        %v2330 = vadd.f32 0.0, %v2329
        %2331 = vmatprep.mubr.f32.mxu0 0.0
        %2332 = vmatmul.mubr.f32.gmra.mxu0 %v2099
        %v2333 = vpop.f32.mrf.mxu0
        %v2334 = vadd.f32 0.0, %v2333
        %v2335 = vpop.f32.mrf.mxu0
        %v2336 = vadd.f32 0.0, %v2335
        %2337 = vmatprep.mubr.f32.mxu0 0.0
        %2338 = vmatmul.mubr.f32.gmra.mxu0 %v2100
        %v2339 = vpop.f32.mrf.mxu0
        %v2340 = vadd.f32 0.0, %v2339
        %v2341 = vpop.f32.mrf.mxu0
        %v2342 = vadd.f32 0.0, %v2341
        %2343 = vmatprep.mubr.f32.mxu0 0.0
        %2344 = vmatmul.mubr.f32.gmra.mxu0 %v2101
        %v2345 = vpop.f32.mrf.mxu0
        %v2346 = vadd.f32 0.0, %v2345
        %v2347 = vpop.f32.mrf.mxu0
        %v2348 = vadd.f32 0.0, %v2347
        %2349 = vmatprep.mubr.f32.mxu0 0.0
        %2350 = vmatmul.mubr.f32.gmra.mxu0 %v2102
        %v2351 = vpop.f32.mrf.mxu0
        %v2352 = vadd.f32 0.0, %v2351
        %v2353 = vpop.f32.mrf.mxu0
        %v2354 = vadd.f32 0.0, %v2353
        %2355 = vmatprep.mubr.f32.mxu0 0.0
        %2356 = vmatmul.mubr.f32.gmra.mxu0 %v2103
        %v2357 = vpop.f32.mrf.mxu0
        %v2358 = vadd.f32 0.0, %v2357
        %v2359 = vpop.f32.mrf.mxu0
        %v2360 = vadd.f32 0.0, %v2359
        %2361 = vmatprep.mubr.f32.mxu0 0.0
        %2362 = vmatmul.mubr.f32.gmra.mxu0 %v2104
        %v2363 = vpop.f32.mrf.mxu0
        %v2364 = vadd.f32 0.0, %v2363
        %v2365 = vpop.f32.mrf.mxu0
        %v2366 = vadd.f32 0.0, %v2365
        %2367 = vmatprep.mubr.f32.mxu0 0.0
        %2368 = vmatmul.mubr.f32.gmra.mxu0 %v2105
        %v2369 = vpop.f32.mrf.mxu0
        %v2370 = vadd.f32 0.0, %v2369
        %v2371 = vpop.f32.mrf.mxu0
        %v2372 = vadd.f32 0.0, %v2371
        %2373 = vmatprep.mubr.f32.mxu0 0.0
        %2374 = vmatmul.mubr.f32.gmra.mxu0 %v2106
        %v2375 = vpop.f32.mrf.mxu0
        %v2376 = vadd.f32 0.0, %v2375
        %v2377 = vpop.f32.mrf.mxu0
        %v2378 = vadd.f32 0.0, %v2377
        %2379 = vmatprep.mubr.f32.mxu0 0.0
        %2380 = vmatmul.mubr.f32.gmra.mxu0 %v2107
        %v2381 = vpop.f32.mrf.mxu0
        %v2382 = vadd.f32 0.0, %v2381
        %v2383 = vpop.f32.mrf.mxu0
        %v2384 = vadd.f32 0.0, %v2383
        %2385 = vmatprep.mubr.f32.mxu0 0.0
        %2386 = vmatmul.mubr.f32.gmra.mxu0 %v2108
        %v2387 = vpop.f32.mrf.mxu0
        %v2388 = vadd.f32 0.0, %v2387
        %v2389 = vpop.f32.mrf.mxu0
        %v2390 = vadd.f32 0.0, %v2389
        %2391 = vmatprep.mubr.f32.mxu0 0.0
        %2392 = vmatmul.mubr.f32.gmra.mxu0 %v2109
        %v2393 = vpop.f32.mrf.mxu0
        %v2394 = vadd.f32 0.0, %v2393
        %v2395 = vpop.f32.mrf.mxu0
        %v2396 = vadd.f32 0.0, %v2395
        %2397 = vmatprep.mubr.f32.mxu0 0.0
        %2398 = vmatmul.mubr.f32.gmra.mxu0 %v2110
        %v2399 = vpop.f32.mrf.mxu0
        %v2400 = vadd.f32 0.0, %v2399
        %v2401 = vpop.f32.mrf.mxu0
        %v2402 = vadd.f32 0.0, %v2401
        %2403 = vmatprep.mubr.f32.mxu0 0.0
        %2404 = vmatmul.mubr.f32.gmra.mxu0 %v2111
        %v2405 = vpop.f32.mrf.mxu0
        %v2406 = vadd.f32 0.0, %v2405
        %v2407 = vpop.f32.mrf.mxu0
        %v2408 = vadd.f32 0.0, %v2407
        %2409 = vmatprep.mubr.f32.mxu0 0.0
        %2410 = vmatmul.mubr.f32.gmra.mxu0 %v2112
        %v2411 = vpop.f32.mrf.mxu0
        %v2412 = vadd.f32 0.0, %v2411
        %v2413 = vpop.f32.mrf.mxu0
        %v2414 = vadd.f32 0.0, %v2413
        %2415 = vmatprep.mubr.f32.mxu0 0.0
        %2416 = vmatmul.mubr.f32.gmra.mxu0 %v2113
        %v2417 = vpop.f32.mrf.mxu0
        %v2418 = vadd.f32 0.0, %v2417
        %v2419 = vpop.f32.mrf.mxu0
        %v2420 = vadd.f32 0.0, %v2419
        %2421 = vmatprep.mubr.f32.mxu0 0.0
        %2422 = vmatmul.mubr.f32.gmra.mxu0 %v2114
        %v2423 = vpop.f32.mrf.mxu0
        %v2424 = vadd.f32 0.0, %v2423
        %v2425 = vpop.f32.mrf.mxu0
        %v2426 = vadd.f32 0.0, %v2425
        %2427 = vmatprep.mubr.f32.mxu0 0.0
        %2428 = vmatmul.mubr.f32.gmra.mxu0 %v2115
        %v2429 = vpop.f32.mrf.mxu0
        %v2430 = vadd.f32 0.0, %v2429
        %v2431 = vpop.f32.mrf.mxu0
        %v2432 = vadd.f32 0.0, %v2431
        %2433 = vmatprep.mubr.f32.mxu0 0.0
        %2434 = vmatmul.mubr.f32.gmra.mxu0 %v2116
        %v2435 = vpop.f32.mrf.mxu0
        %v2436 = vadd.f32 0.0, %v2435
        %v2437 = vpop.f32.mrf.mxu0
        %v2438 = vadd.f32 0.0, %v2437
        %2439 = vmatprep.mubr.f32.mxu0 0.0
        %2440 = vmatmul.mubr.f32.gmra.mxu0 %v2117
        %v2441 = vpop.f32.mrf.mxu0
        %v2442 = vadd.f32 0.0, %v2441
        %v2443 = vpop.f32.mrf.mxu0
        %v2444 = vadd.f32 0.0, %v2443
        %2445 = vmatprep.mubr.f32.mxu0 0.0
        %2446 = vmatmul.mubr.f32.gmra.mxu0 %v2118
        %v2447 = vpop.f32.mrf.mxu0
        %v2448 = vadd.f32 0.0, %v2447
        %v2449 = vpop.f32.mrf.mxu0
        %v2450 = vadd.f32 0.0, %v2449
        %2451 = vmatprep.mubr.f32.mxu0 0.0
        %2452 = vmatmul.mubr.f32.gmra.mxu0 %v2119
        %v2453 = vpop.f32.mrf.mxu0
        %v2454 = vadd.f32 0.0, %v2453
        %v2455 = vpop.f32.mrf.mxu0
        %v2456 = vadd.f32 0.0, %v2455
        %2457 = vdwg.mxu0
        %v2458 = vld [vmem:[#allocation2] sm:$0xff]
        %v2459 = vld [vmem:[#allocation2 + $0x8] sm:$0xff]
        %v2460 = vld [vmem:[#allocation2 + $0x10] sm:$0xff]
        %v2461 = vld [vmem:[#allocation2 + $0x18] sm:$0xff]
        %v2462 = vld [vmem:[#allocation2 + $0x20] sm:$0xff]
        %v2463 = vld [vmem:[#allocation2 + $0x28] sm:$0xff]
        %v2464 = vld [vmem:[#allocation2 + $0x30] sm:$0xff]
        %v2465 = vld [vmem:[#allocation2 + $0x38] sm:$0xff]
        %v2466 = vld [vmem:[#allocation2 + $0x40] sm:$0xff]
        %v2467 = vld [vmem:[#allocation2 + $0x48] sm:$0xff]
        %v2468 = vld [vmem:[#allocation2 + $0x50] sm:$0xff]
        %v2469 = vld [vmem:[#allocation2 + $0x58] sm:$0xff]
        %v2470 = vld [vmem:[#allocation2 + $0x60] sm:$0xff]
        %v2471 = vld [vmem:[#allocation2 + $0x68] sm:$0xff]
        %v2472 = vld [vmem:[#allocation2 + $0x70] sm:$0xff]
        %v2473 = vld [vmem:[#allocation2 + $0x78] sm:$0xff]
        %v2474 = vld [vmem:[#allocation2 + $0x80] sm:$0xff]
        %v2475 = vld [vmem:[#allocation2 + $0x88] sm:$0xff]
        %v2476 = vld [vmem:[#allocation2 + $0x90] sm:$0xff]
        %v2477 = vld [vmem:[#allocation2 + $0x98] sm:$0xff]
        %v2478 = vld [vmem:[#allocation2 + $0xa0] sm:$0xff]
        %v2479 = vld [vmem:[#allocation2 + $0xa8] sm:$0xff]
        %v2480 = vld [vmem:[#allocation2 + $0xb0] sm:$0xff]
        %v2481 = vld [vmem:[#allocation2 + $0xb8] sm:$0xff]
        %v2482 = vld [vmem:[#allocation2 + $0xc0] sm:$0xff]
        %v2483 = vld [vmem:[#allocation2 + $0xc8] sm:$0xff]
        %v2484 = vld [vmem:[#allocation2 + $0xd0] sm:$0xff]
        %v2485 = vld [vmem:[#allocation2 + $0xd8] sm:$0xff]
        %v2486 = vld [vmem:[#allocation2 + $0xe0] sm:$0xff]
        %v2487 = vld [vmem:[#allocation2 + $0xe8] sm:$0xff]
        %v2488 = vld [vmem:[#allocation2 + $0xf0] sm:$0xff]
        %v2489 = vld [vmem:[#allocation2 + $0xf8] sm:$0xff]
        %v2490 = vld [vmem:[#allocation2 + $0x100] sm:$0xff]
        %v2491 = vld [vmem:[#allocation2 + $0x108] sm:$0xff]
        %v2492 = vld [vmem:[#allocation2 + $0x110] sm:$0xff]
        %v2493 = vld [vmem:[#allocation2 + $0x118] sm:$0xff]
        %v2494 = vld [vmem:[#allocation2 + $0x120] sm:$0xff]
        %v2495 = vld [vmem:[#allocation2 + $0x128] sm:$0xff]
        %v2496 = vld [vmem:[#allocation2 + $0x130] sm:$0xff]
        %v2497 = vld [vmem:[#allocation2 + $0x138] sm:$0xff]
        %v2498 = vld [vmem:[#allocation2 + $0x140] sm:$0xff]
        %v2499 = vld [vmem:[#allocation2 + $0x148] sm:$0xff]
        %v2500 = vld [vmem:[#allocation2 + $0x150] sm:$0xff]
        %v2501 = vld [vmem:[#allocation2 + $0x158] sm:$0xff]
        %v2502 = vld [vmem:[#allocation2 + $0x160] sm:$0xff]
        %v2503 = vld [vmem:[#allocation2 + $0x168] sm:$0xff]
        %v2504 = vld [vmem:[#allocation2 + $0x170] sm:$0xff]
        %v2505 = vld [vmem:[#allocation2 + $0x178] sm:$0xff]
        %v2506 = vld [vmem:[#allocation2 + $0x180] sm:$0xff]
        %v2507 = vld [vmem:[#allocation2 + $0x188] sm:$0xff]
        %v2508 = vld [vmem:[#allocation2 + $0x190] sm:$0xff]
        %v2509 = vld [vmem:[#allocation2 + $0x198] sm:$0xff]
        %v2510 = vld [vmem:[#allocation2 + $0x1a0] sm:$0xff]
        %v2511 = vld [vmem:[#allocation2 + $0x1a8] sm:$0xff]
        %v2512 = vld [vmem:[#allocation2 + $0x1b0] sm:$0xff]
        %v2513 = vld [vmem:[#allocation2 + $0x1b8] sm:$0xff]
        %v2514 = vld [vmem:[#allocation2 + $0x1c0] sm:$0xff]
        %v2515 = vld [vmem:[#allocation2 + $0x1c8] sm:$0xff]
        %v2516 = vld [vmem:[#allocation2 + $0x1d0] sm:$0xff]
        %v2517 = vld [vmem:[#allocation2 + $0x1d8] sm:$0xff]
        %v2518 = vld [vmem:[#allocation2 + $0x1e0] sm:$0xff]
        %v2519 = vld [vmem:[#allocation2 + $0x1e8] sm:$0xff]
        %v2520 = vld [vmem:[#allocation2 + $0x1f0] sm:$0xff]
        %v2521 = vld [vmem:[#allocation2 + $0x1f8] sm:$0xff]
        %v2522 = vld [vmem:[#allocation2 + $0x200] sm:$0xff]
        %v2523 = vld [vmem:[#allocation2 + $0x208] sm:$0xff]
        %v2524 = vld [vmem:[#allocation2 + $0x210] sm:$0xff]
        %v2525 = vld [vmem:[#allocation2 + $0x218] sm:$0xff]
        %v2526 = vld [vmem:[#allocation2 + $0x220] sm:$0xff]
        %v2527 = vld [vmem:[#allocation2 + $0x228] sm:$0xff]
        %v2528 = vld [vmem:[#allocation2 + $0x230] sm:$0xff]
        %v2529 = vld [vmem:[#allocation2 + $0x238] sm:$0xff]
        %v2530 = vld [vmem:[#allocation2 + $0x240] sm:$0xff]
        %v2531 = vld [vmem:[#allocation2 + $0x248] sm:$0xff]
        %v2532 = vld [vmem:[#allocation2 + $0x250] sm:$0xff]
        %v2533 = vld [vmem:[#allocation2 + $0x258] sm:$0xff]
        %v2534 = vld [vmem:[#allocation2 + $0x260] sm:$0xff]
        %v2535 = vld [vmem:[#allocation2 + $0x268] sm:$0xff]
        %v2536 = vld [vmem:[#allocation2 + $0x270] sm:$0xf]
        %v2537 = vld [vmem:[#allocation2 + $0x278] sm:$0xf]
        %v2538 = vadd.f32 %v2458, %v2220
        %v2539 = vadd.f32 %v2459, %v2222
        %v2540 = vadd.f32 %v2460, %v2226
        %v2541 = vadd.f32 %v2461, %v2228
        %v2542 = vadd.f32 %v2462, %v2232
        %v2543 = vadd.f32 %v2463, %v2234
        %v2544 = vadd.f32 %v2464, %v2238
        %v2545 = vadd.f32 %v2465, %v2240
        %v2546 = vadd.f32 %v2466, %v2244
        %v2547 = vadd.f32 %v2467, %v2246
        %v2548 = vadd.f32 %v2468, %v2250
        %v2549 = vadd.f32 %v2469, %v2252
        %v2550 = vadd.f32 %v2470, %v2256
        %v2551 = vadd.f32 %v2471, %v2258
        %v2552 = vadd.f32 %v2472, %v2262
        %v2553 = vadd.f32 %v2473, %v2264
        %v2554 = vadd.f32 %v2474, %v2268
        %v2555 = vadd.f32 %v2475, %v2270
        %v2556 = vadd.f32 %v2476, %v2274
        %v2557 = vadd.f32 %v2477, %v2276
        %v2558 = vadd.f32 %v2478, %v2280
        %v2559 = vadd.f32 %v2479, %v2282
        %v2560 = vadd.f32 %v2480, %v2286
        %v2561 = vadd.f32 %v2481, %v2288
        %v2562 = vadd.f32 %v2482, %v2292
        %v2563 = vadd.f32 %v2483, %v2294
        %v2564 = vadd.f32 %v2484, %v2298
        %v2565 = vadd.f32 %v2485, %v2300
        %v2566 = vadd.f32 %v2486, %v2304
        %v2567 = vadd.f32 %v2487, %v2306
        %v2568 = vadd.f32 %v2488, %v2310
        %v2569 = vadd.f32 %v2489, %v2312
        %v2570 = vadd.f32 %v2490, %v2316
        %v2571 = vadd.f32 %v2491, %v2318
        %v2572 = vadd.f32 %v2492, %v2322
        %v2573 = vadd.f32 %v2493, %v2324
        %v2574 = vadd.f32 %v2494, %v2328
        %v2575 = vadd.f32 %v2495, %v2330
        %v2576 = vadd.f32 %v2496, %v2334
        %v2577 = vadd.f32 %v2497, %v2336
        %v2578 = vadd.f32 %v2498, %v2340
        %v2579 = vadd.f32 %v2499, %v2342
        %v2580 = vadd.f32 %v2500, %v2346
        %v2581 = vadd.f32 %v2501, %v2348
        %v2582 = vadd.f32 %v2502, %v2352
        %v2583 = vadd.f32 %v2503, %v2354
        %v2584 = vadd.f32 %v2504, %v2358
        %v2585 = vadd.f32 %v2505, %v2360
        %v2586 = vadd.f32 %v2506, %v2364
        %v2587 = vadd.f32 %v2507, %v2366
        %v2588 = vadd.f32 %v2508, %v2370
        %v2589 = vadd.f32 %v2509, %v2372
        %v2590 = vadd.f32 %v2510, %v2376
        %v2591 = vadd.f32 %v2511, %v2378
        %v2592 = vadd.f32 %v2512, %v2382
        %v2593 = vadd.f32 %v2513, %v2384
        %v2594 = vadd.f32 %v2514, %v2388
        %v2595 = vadd.f32 %v2515, %v2390
        %v2596 = vadd.f32 %v2516, %v2394
        %v2597 = vadd.f32 %v2517, %v2396
        %v2598 = vadd.f32 %v2518, %v2400
        %v2599 = vadd.f32 %v2519, %v2402
        %v2600 = vadd.f32 %v2520, %v2406
        %v2601 = vadd.f32 %v2521, %v2408
        %v2602 = vadd.f32 %v2522, %v2412
        %v2603 = vadd.f32 %v2523, %v2414
        %v2604 = vadd.f32 %v2524, %v2418
        %v2605 = vadd.f32 %v2525, %v2420
        %v2606 = vadd.f32 %v2526, %v2424
        %v2607 = vadd.f32 %v2527, %v2426
        %v2608 = vadd.f32 %v2528, %v2430
        %v2609 = vadd.f32 %v2529, %v2432
        %v2610 = vadd.f32 %v2530, %v2436
        %v2611 = vadd.f32 %v2531, %v2438
        %v2612 = vadd.f32 %v2532, %v2442
        %v2613 = vadd.f32 %v2533, %v2444
        %v2614 = vadd.f32 %v2534, %v2448
        %v2615 = vadd.f32 %v2535, %v2450
        %v2616 = vadd.f32 %v2536, %v2454
        %v2617 = vadd.f32 %v2537, %v2456
        %2618 = vst [vmem:[#allocation2] sm:$0xff] %v2538
        %2619 = vst [vmem:[#allocation2 + $0x8] sm:$0xff] %v2539
        %2620 = vst [vmem:[#allocation2 + $0x10] sm:$0xff] %v2540
        %2621 = vst [vmem:[#allocation2 + $0x18] sm:$0xff] %v2541
        %2622 = vst [vmem:[#allocation2 + $0x20] sm:$0xff] %v2542
        %2623 = vst [vmem:[#allocation2 + $0x28] sm:$0xff] %v2543
        %2624 = vst [vmem:[#allocation2 + $0x30] sm:$0xff] %v2544
        %2625 = vst [vmem:[#allocation2 + $0x38] sm:$0xff] %v2545
        %2626 = vst [vmem:[#allocation2 + $0x40] sm:$0xff] %v2546
        %2627 = vst [vmem:[#allocation2 + $0x48] sm:$0xff] %v2547
        %2628 = vst [vmem:[#allocation2 + $0x50] sm:$0xff] %v2548
        %2629 = vst [vmem:[#allocation2 + $0x58] sm:$0xff] %v2549
        %2630 = vst [vmem:[#allocation2 + $0x60] sm:$0xff] %v2550
        %2631 = vst [vmem:[#allocation2 + $0x68] sm:$0xff] %v2551
        %2632 = vst [vmem:[#allocation2 + $0x70] sm:$0xff] %v2552
        %2633 = vst [vmem:[#allocation2 + $0x78] sm:$0xff] %v2553
        %2634 = vst [vmem:[#allocation2 + $0x80] sm:$0xff] %v2554
        %2635 = vst [vmem:[#allocation2 + $0x88] sm:$0xff] %v2555
        %2636 = vst [vmem:[#allocation2 + $0x90] sm:$0xff] %v2556
        %2637 = vst [vmem:[#allocation2 + $0x98] sm:$0xff] %v2557
        %2638 = vst [vmem:[#allocation2 + $0xa0] sm:$0xff] %v2558
        %2639 = vst [vmem:[#allocation2 + $0xa8] sm:$0xff] %v2559
        %2640 = vst [vmem:[#allocation2 + $0xb0] sm:$0xff] %v2560
        %2641 = vst [vmem:[#allocation2 + $0xb8] sm:$0xff] %v2561
        %2642 = vst [vmem:[#allocation2 + $0xc0] sm:$0xff] %v2562
        %2643 = vst [vmem:[#allocation2 + $0xc8] sm:$0xff] %v2563
        %2644 = vst [vmem:[#allocation2 + $0xd0] sm:$0xff] %v2564
        %2645 = vst [vmem:[#allocation2 + $0xd8] sm:$0xff] %v2565
        %2646 = vst [vmem:[#allocation2 + $0xe0] sm:$0xff] %v2566
        %2647 = vst [vmem:[#allocation2 + $0xe8] sm:$0xff] %v2567
        %2648 = vst [vmem:[#allocation2 + $0xf0] sm:$0xff] %v2568
        %2649 = vst [vmem:[#allocation2 + $0xf8] sm:$0xff] %v2569
        %2650 = vst [vmem:[#allocation2 + $0x100] sm:$0xff] %v2570
        %2651 = vst [vmem:[#allocation2 + $0x108] sm:$0xff] %v2571
        %2652 = vst [vmem:[#allocation2 + $0x110] sm:$0xff] %v2572
        %2653 = vst [vmem:[#allocation2 + $0x118] sm:$0xff] %v2573
        %2654 = vst [vmem:[#allocation2 + $0x120] sm:$0xff] %v2574
        %2655 = vst [vmem:[#allocation2 + $0x128] sm:$0xff] %v2575
        %2656 = vst [vmem:[#allocation2 + $0x130] sm:$0xff] %v2576
        %2657 = vst [vmem:[#allocation2 + $0x138] sm:$0xff] %v2577
        %2658 = vst [vmem:[#allocation2 + $0x140] sm:$0xff] %v2578
        %2659 = vst [vmem:[#allocation2 + $0x148] sm:$0xff] %v2579
        %2660 = vst [vmem:[#allocation2 + $0x150] sm:$0xff] %v2580
        %2661 = vst [vmem:[#allocation2 + $0x158] sm:$0xff] %v2581
        %2662 = vst [vmem:[#allocation2 + $0x160] sm:$0xff] %v2582
        %2663 = vst [vmem:[#allocation2 + $0x168] sm:$0xff] %v2583
        %2664 = vst [vmem:[#allocation2 + $0x170] sm:$0xff] %v2584
        %2665 = vst [vmem:[#allocation2 + $0x178] sm:$0xff] %v2585
        %2666 = vst [vmem:[#allocation2 + $0x180] sm:$0xff] %v2586
        %2667 = vst [vmem:[#allocation2 + $0x188] sm:$0xff] %v2587
        %2668 = vst [vmem:[#allocation2 + $0x190] sm:$0xff] %v2588
        %2669 = vst [vmem:[#allocation2 + $0x198] sm:$0xff] %v2589
        %2670 = vst [vmem:[#allocation2 + $0x1a0] sm:$0xff] %v2590
        %2671 = vst [vmem:[#allocation2 + $0x1a8] sm:$0xff] %v2591
        %2672 = vst [vmem:[#allocation2 + $0x1b0] sm:$0xff] %v2592
        %2673 = vst [vmem:[#allocation2 + $0x1b8] sm:$0xff] %v2593
        %2674 = vst [vmem:[#allocation2 + $0x1c0] sm:$0xff] %v2594
        %2675 = vst [vmem:[#allocation2 + $0x1c8] sm:$0xff] %v2595
        %2676 = vst [vmem:[#allocation2 + $0x1d0] sm:$0xff] %v2596
        %2677 = vst [vmem:[#allocation2 + $0x1d8] sm:$0xff] %v2597
        %2678 = vst [vmem:[#allocation2 + $0x1e0] sm:$0xff] %v2598
        %2679 = vst [vmem:[#allocation2 + $0x1e8] sm:$0xff] %v2599
        %2680 = vst [vmem:[#allocation2 + $0x1f0] sm:$0xff] %v2600
        %2681 = vst [vmem:[#allocation2 + $0x1f8] sm:$0xff] %v2601
        %2682 = vst [vmem:[#allocation2 + $0x200] sm:$0xff] %v2602
        %2683 = vst [vmem:[#allocation2 + $0x208] sm:$0xff] %v2603
        %2684 = vst [vmem:[#allocation2 + $0x210] sm:$0xff] %v2604
        %2685 = vst [vmem:[#allocation2 + $0x218] sm:$0xff] %v2605
        %2686 = vst [vmem:[#allocation2 + $0x220] sm:$0xff] %v2606
        %2687 = vst [vmem:[#allocation2 + $0x228] sm:$0xff] %v2607
        %2688 = vst [vmem:[#allocation2 + $0x230] sm:$0xff] %v2608
        %2689 = vst [vmem:[#allocation2 + $0x238] sm:$0xff] %v2609
        %2690 = vst [vmem:[#allocation2 + $0x240] sm:$0xff] %v2610
        %2691 = vst [vmem:[#allocation2 + $0x248] sm:$0xff] %v2611
        %2692 = vst [vmem:[#allocation2 + $0x250] sm:$0xff] %v2612
        %2693 = vst [vmem:[#allocation2 + $0x258] sm:$0xff] %v2613
        %2694 = vst [vmem:[#allocation2 + $0x260] sm:$0xff] %v2614
        %2695 = vst [vmem:[#allocation2 + $0x268] sm:$0xff] %v2615
        %2696 = vst [vmem:[#allocation2 + $0x270] sm:$0xf] %v2616
        %2697 = vst [vmem:[#allocation2 + $0x278] sm:$0xf] %v2617
        %v2698 = vld [vmem:[%s385 + $0x4] sm:$0xff]
        %v2699 = vld [vmem:[%s385 + $0xc] sm:$0xff]
        %v2700 = vld [vmem:[%s385 + $0x14] sm:$0xff]
        %v2701 = vld [vmem:[%s385 + $0x1c] sm:$0xff]
        %v2702 = vld [vmem:[%s385 + $0x24] sm:$0xff]
        %v2703 = vld [vmem:[%s385 + $0x2c] sm:$0xff]
        %v2704 = vld [vmem:[%s385 + $0x34] sm:$0xff]
        %v2705 = vld [vmem:[%s385 + $0x3c] sm:$0xff]
        %v2706 = vld [vmem:[%s385 + $0x44] sm:$0xff]
        %v2707 = vld [vmem:[%s385 + $0x4c] sm:$0xff]
        %v2708 = vld [vmem:[%s385 + $0x54] sm:$0xff]
        %v2709 = vld [vmem:[%s385 + $0x5c] sm:$0xff]
        %v2710 = vld [vmem:[%s385 + $0x64] sm:$0xff]
        %v2711 = vld [vmem:[%s385 + $0x6c] sm:$0xff]
        %v2712 = vld [vmem:[%s385 + $0x74] sm:$0xff]
        %v2713 = vld [vmem:[%s385 + $0x7c] sm:$0xff]
        %v2714 = vld [vmem:[%s385 + $0x84] sm:$0xff]
        %v2715 = vld [vmem:[%s385 + $0x8c] sm:$0xff]
        %v2716 = vld [vmem:[%s385 + $0x94] sm:$0xff]
        %v2717 = vld [vmem:[%s385 + $0x9c] sm:$0xff]
        %v2718 = vld [vmem:[%s385 + $0xa4] sm:$0xff]
        %v2719 = vld [vmem:[%s385 + $0xac] sm:$0xff]
        %v2720 = vld [vmem:[%s385 + $0xb4] sm:$0xff]
        %v2721 = vld [vmem:[%s385 + $0xbc] sm:$0xff]
        %v2722 = vld [vmem:[%s385 + $0xc4] sm:$0xff]
        %v2723 = vld [vmem:[%s385 + $0xcc] sm:$0xff]
        %v2724 = vld [vmem:[%s385 + $0xd4] sm:$0xff]
        %v2725 = vld [vmem:[%s385 + $0xdc] sm:$0xff]
        %v2726 = vld [vmem:[%s385 + $0xe4] sm:$0xff]
        %v2727 = vld [vmem:[%s385 + $0xec] sm:$0xff]
        %v2728 = vld [vmem:[%s385 + $0xf4] sm:$0xff]
        %v2729 = vld [vmem:[%s385 + $0xfc] sm:$0xff]
        %v2730 = vld [vmem:[%s385 + $0x104] sm:$0xff]
        %v2731 = vld [vmem:[%s385 + $0x10c] sm:$0xff]
        %v2732 = vld [vmem:[%s385 + $0x114] sm:$0xff]
        %v2733 = vld [vmem:[%s385 + $0x11c] sm:$0xff]
        %v2734 = vld [vmem:[%s385 + $0x124] sm:$0xff]
        %v2735 = vld [vmem:[%s385 + $0x12c] sm:$0xff]
        %v2736 = vld [vmem:[%s385 + $0x134] sm:$0xff]
        %v2737 = vld [vmem:[%s385 + $0x13c] sm:$0xf]
        %s2738 = scalar_lea.vmem %s1, 1024
        %v2739 = vld [vmem:[%s2738] sm:$0xff]
        %v2740 = vld [vmem:[%s2738 + $0x8] sm:$0xff]
        %v2741 = vld [vmem:[%s2738 + $0x10] sm:$0xff]
        %v2742 = vld [vmem:[%s2738 + $0x18] sm:$0xff]
        %v2743 = vld [vmem:[%s2738 + $0x20] sm:$0xff]
        %v2744 = vld [vmem:[%s2738 + $0x28] sm:$0xff]
        %v2745 = vld [vmem:[%s2738 + $0x30] sm:$0xff]
        %v2746 = vld [vmem:[%s2738 + $0x38] sm:$0xff]
        %v2747 = vld [vmem:[%s2738 + $0x40] sm:$0xff]
        %v2748 = vld [vmem:[%s2738 + $0x48] sm:$0xff]
        %v2749 = vld [vmem:[%s2738 + $0x50] sm:$0xff]
        %v2750 = vld [vmem:[%s2738 + $0x58] sm:$0xff]
        %v2751 = vld [vmem:[%s2738 + $0x60] sm:$0xff]
        %v2752 = vld [vmem:[%s2738 + $0x68] sm:$0xff]
        %v2753 = vld [vmem:[%s2738 + $0x70] sm:$0xff]
        %v2754 = vld [vmem:[%s2738 + $0x78] sm:$0xff]
        %v2755 = vld [vmem:[%s2738 + $0x80] sm:$0xff]
        %v2756 = vld [vmem:[%s2738 + $0x88] sm:$0xff]
        %v2757 = vld [vmem:[%s2738 + $0x90] sm:$0xff]
        %v2758 = vld [vmem:[%s2738 + $0x98] sm:$0xff]
        %v2759 = vld [vmem:[%s2738 + $0xa0] sm:$0xff]
        %v2760 = vld [vmem:[%s2738 + $0xa8] sm:$0xff]
        %v2761 = vld [vmem:[%s2738 + $0xb0] sm:$0xff]
        %v2762 = vld [vmem:[%s2738 + $0xb8] sm:$0xff]
        %v2763 = vld [vmem:[%s2738 + $0xc0] sm:$0xff]
        %v2764 = vld [vmem:[%s2738 + $0xc8] sm:$0xff]
        %v2765 = vld [vmem:[%s2738 + $0xd0] sm:$0xff]
        %v2766 = vld [vmem:[%s2738 + $0xd8] sm:$0xff]
        %v2767 = vld [vmem:[%s2738 + $0xe0] sm:$0xff]
        %v2768 = vld [vmem:[%s2738 + $0xe8] sm:$0xff]
        %v2769 = vld [vmem:[%s2738 + $0xf0] sm:$0xff]
        %v2770 = vld [vmem:[%s2738 + $0xf8] sm:$0xff]
        %2771 = vmatprep.subr.mxu0 %v2770
        %2772 = vmatpush1.msra.mxu0 %v2769
        %2773 = vmatprep.subr.mxu0 %v2768
        %2774 = vmatpush1.msra.mxu0 %v2767
        %2775 = vmatprep.subr.mxu0 %v2766
        %2776 = vmatpush1.msra.mxu0 %v2765
        %2777 = vmatprep.subr.mxu0 %v2764
        %2778 = vmatpush1.msra.mxu0 %v2763
        %2779 = vmatprep.subr.mxu0 %v2762
        %2780 = vmatpush1.msra.mxu0 %v2761
        %2781 = vmatprep.subr.mxu0 %v2760
        %2782 = vmatpush1.msra.mxu0 %v2759
        %2783 = vmatprep.subr.mxu0 %v2758
        %2784 = vmatpush1.msra.mxu0 %v2757
        %2785 = vmatprep.subr.mxu0 %v2756
        %2786 = vmatpush1.msra.mxu0 %v2755
        %2787 = vmatprep.subr.mxu0 %v2754
        %2788 = vmatpush1.msra.mxu0 %v2753
        %2789 = vmatprep.subr.mxu0 %v2752
        %2790 = vmatpush1.msra.mxu0 %v2751
        %2791 = vmatprep.subr.mxu0 %v2750
        %2792 = vmatpush1.msra.mxu0 %v2749
        %2793 = vmatprep.subr.mxu0 %v2748
        %2794 = vmatpush1.msra.mxu0 %v2747
        %2795 = vmatprep.subr.mxu0 %v2746
        %2796 = vmatpush1.msra.mxu0 %v2745
        %2797 = vmatprep.subr.mxu0 %v2744
        %2798 = vmatpush1.msra.mxu0 %v2743
        %2799 = vmatprep.subr.mxu0 %v2742
        %2800 = vmatpush1.msra.mxu0 %v2741
        %2801 = vmatprep.subr.mxu0 %v2740
        %2802 = vmatpush1.msra.mxu0 %v2739
        %2803 = vmatprep.subr.mxu0 0.0
        %2804 = vmatpush2.msra.mxu0 0.0
        %2805 = vmatprep.subr.mxu0 0.0
        %2806 = vmatpush2.msra.mxu0 0.0
        %2807 = vmatprep.subr.mxu0 0.0
        %2808 = vmatpush2.msra.mxu0 0.0
        %2809 = vmatprep.subr.mxu0 0.0
        %2810 = vmatpush2.msra.mxu0 0.0
        %2811 = vmatprep.subr.mxu0 0.0
        %2812 = vmatpush2.msra.mxu0 0.0
        %2813 = vmatprep.subr.mxu0 0.0
        %2814 = vmatpush2.msra.mxu0 0.0
        %2815 = vmatprep.subr.mxu0 0.0
        %2816 = vmatpush2.msra.mxu0 0.0
        %2817 = vmatprep.subr.mxu0 0.0
        %2818 = vmatpush2.msra.mxu0 0.0
        %2819 = vmatprep.subr.mxu0 0.0
        %2820 = vmatpush2.msra.mxu0 0.0
        %2821 = vmatprep.subr.mxu0 0.0
        %2822 = vmatpush2.msra.mxu0 0.0
        %2823 = vmatprep.subr.mxu0 0.0
        %2824 = vmatpush2.msra.mxu0 0.0
        %2825 = vmatprep.subr.mxu0 0.0
        %2826 = vmatpush2.msra.mxu0 0.0
        %2827 = vmatprep.subr.mxu0 0.0
        %2828 = vmatpush2.msra.mxu0 0.0
        %2829 = vmatprep.subr.mxu0 0.0
        %2830 = vmatpush2.msra.mxu0 0.0
        %2831 = vmatprep.subr.mxu0 0.0
        %2832 = vmatpush2.msra.mxu0 0.0
        %2833 = vmatprep.subr.mxu0 0.0
        %2834 = vmatpush2.msra.mxu0 0.0
        %2835 = vmatprep.mubr.f32.mxu0 0.0
        %2836 = vmatmul.mubr.f32.gmra.mxu0 %v2698
        %v2837 = vpop.f32.mrf.mxu0
        %v2838 = vadd.f32 0.0, %v2837
        %v2839 = vpop.f32.mrf.mxu0
        %v2840 = vadd.f32 0.0, %v2839
        %2841 = vmatprep.mubr.f32.mxu0 0.0
        %2842 = vmatmul.mubr.f32.gmra.mxu0 %v2699
        %v2843 = vpop.f32.mrf.mxu0
        %v2844 = vadd.f32 0.0, %v2843
        %v2845 = vpop.f32.mrf.mxu0
        %v2846 = vadd.f32 0.0, %v2845
        %2847 = vmatprep.mubr.f32.mxu0 0.0
        %2848 = vmatmul.mubr.f32.gmra.mxu0 %v2700
        %v2849 = vpop.f32.mrf.mxu0
        %v2850 = vadd.f32 0.0, %v2849
        %v2851 = vpop.f32.mrf.mxu0
        %v2852 = vadd.f32 0.0, %v2851
        %2853 = vmatprep.mubr.f32.mxu0 0.0
        %2854 = vmatmul.mubr.f32.gmra.mxu0 %v2701
        %v2855 = vpop.f32.mrf.mxu0
        %v2856 = vadd.f32 0.0, %v2855
        %v2857 = vpop.f32.mrf.mxu0
        %v2858 = vadd.f32 0.0, %v2857
        %2859 = vmatprep.mubr.f32.mxu0 0.0
        %2860 = vmatmul.mubr.f32.gmra.mxu0 %v2702
        %v2861 = vpop.f32.mrf.mxu0
        %v2862 = vadd.f32 0.0, %v2861
        %v2863 = vpop.f32.mrf.mxu0
        %v2864 = vadd.f32 0.0, %v2863
        %2865 = vmatprep.mubr.f32.mxu0 0.0
        %2866 = vmatmul.mubr.f32.gmra.mxu0 %v2703
        %v2867 = vpop.f32.mrf.mxu0
        %v2868 = vadd.f32 0.0, %v2867
        %v2869 = vpop.f32.mrf.mxu0
        %v2870 = vadd.f32 0.0, %v2869
        %2871 = vmatprep.mubr.f32.mxu0 0.0
        %2872 = vmatmul.mubr.f32.gmra.mxu0 %v2704
        %v2873 = vpop.f32.mrf.mxu0
        %v2874 = vadd.f32 0.0, %v2873
        %v2875 = vpop.f32.mrf.mxu0
        %v2876 = vadd.f32 0.0, %v2875
        %2877 = vmatprep.mubr.f32.mxu0 0.0
        %2878 = vmatmul.mubr.f32.gmra.mxu0 %v2705
        %v2879 = vpop.f32.mrf.mxu0
        %v2880 = vadd.f32 0.0, %v2879
        %v2881 = vpop.f32.mrf.mxu0
        %v2882 = vadd.f32 0.0, %v2881
        %2883 = vmatprep.mubr.f32.mxu0 0.0
        %2884 = vmatmul.mubr.f32.gmra.mxu0 %v2706
        %v2885 = vpop.f32.mrf.mxu0
        %v2886 = vadd.f32 0.0, %v2885
        %v2887 = vpop.f32.mrf.mxu0
        %v2888 = vadd.f32 0.0, %v2887
        %2889 = vmatprep.mubr.f32.mxu0 0.0
        %2890 = vmatmul.mubr.f32.gmra.mxu0 %v2707
        %v2891 = vpop.f32.mrf.mxu0
        %v2892 = vadd.f32 0.0, %v2891
        %v2893 = vpop.f32.mrf.mxu0
        %v2894 = vadd.f32 0.0, %v2893
        %2895 = vmatprep.mubr.f32.mxu0 0.0
        %2896 = vmatmul.mubr.f32.gmra.mxu0 %v2708
        %v2897 = vpop.f32.mrf.mxu0
        %v2898 = vadd.f32 0.0, %v2897
        %v2899 = vpop.f32.mrf.mxu0
        %v2900 = vadd.f32 0.0, %v2899
        %2901 = vmatprep.mubr.f32.mxu0 0.0
        %2902 = vmatmul.mubr.f32.gmra.mxu0 %v2709
        %v2903 = vpop.f32.mrf.mxu0
        %v2904 = vadd.f32 0.0, %v2903
        %v2905 = vpop.f32.mrf.mxu0
        %v2906 = vadd.f32 0.0, %v2905
        %2907 = vmatprep.mubr.f32.mxu0 0.0
        %2908 = vmatmul.mubr.f32.gmra.mxu0 %v2710
        %v2909 = vpop.f32.mrf.mxu0
        %v2910 = vadd.f32 0.0, %v2909
        %v2911 = vpop.f32.mrf.mxu0
        %v2912 = vadd.f32 0.0, %v2911
        %2913 = vmatprep.mubr.f32.mxu0 0.0
        %2914 = vmatmul.mubr.f32.gmra.mxu0 %v2711
        %v2915 = vpop.f32.mrf.mxu0
        %v2916 = vadd.f32 0.0, %v2915
        %v2917 = vpop.f32.mrf.mxu0
        %v2918 = vadd.f32 0.0, %v2917
        %2919 = vmatprep.mubr.f32.mxu0 0.0
        %2920 = vmatmul.mubr.f32.gmra.mxu0 %v2712
        %v2921 = vpop.f32.mrf.mxu0
        %v2922 = vadd.f32 0.0, %v2921
        %v2923 = vpop.f32.mrf.mxu0
        %v2924 = vadd.f32 0.0, %v2923
        %2925 = vmatprep.mubr.f32.mxu0 0.0
        %2926 = vmatmul.mubr.f32.gmra.mxu0 %v2713
        %v2927 = vpop.f32.mrf.mxu0
        %v2928 = vadd.f32 0.0, %v2927
        %v2929 = vpop.f32.mrf.mxu0
        %v2930 = vadd.f32 0.0, %v2929
        %2931 = vmatprep.mubr.f32.mxu0 0.0
        %2932 = vmatmul.mubr.f32.gmra.mxu0 %v2714
        %v2933 = vpop.f32.mrf.mxu0
        %v2934 = vadd.f32 0.0, %v2933
        %v2935 = vpop.f32.mrf.mxu0
        %v2936 = vadd.f32 0.0, %v2935
        %2937 = vmatprep.mubr.f32.mxu0 0.0
        %2938 = vmatmul.mubr.f32.gmra.mxu0 %v2715
        %v2939 = vpop.f32.mrf.mxu0
        %v2940 = vadd.f32 0.0, %v2939
        %v2941 = vpop.f32.mrf.mxu0
        %v2942 = vadd.f32 0.0, %v2941
        %2943 = vmatprep.mubr.f32.mxu0 0.0
        %2944 = vmatmul.mubr.f32.gmra.mxu0 %v2716
        %v2945 = vpop.f32.mrf.mxu0
        %v2946 = vadd.f32 0.0, %v2945
        %v2947 = vpop.f32.mrf.mxu0
        %v2948 = vadd.f32 0.0, %v2947
        %2949 = vmatprep.mubr.f32.mxu0 0.0
        %2950 = vmatmul.mubr.f32.gmra.mxu0 %v2717
        %v2951 = vpop.f32.mrf.mxu0
        %v2952 = vadd.f32 0.0, %v2951
        %v2953 = vpop.f32.mrf.mxu0
        %v2954 = vadd.f32 0.0, %v2953
        %2955 = vmatprep.mubr.f32.mxu0 0.0
        %2956 = vmatmul.mubr.f32.gmra.mxu0 %v2718
        %v2957 = vpop.f32.mrf.mxu0
        %v2958 = vadd.f32 0.0, %v2957
        %v2959 = vpop.f32.mrf.mxu0
        %v2960 = vadd.f32 0.0, %v2959
        %2961 = vmatprep.mubr.f32.mxu0 0.0
        %2962 = vmatmul.mubr.f32.gmra.mxu0 %v2719
        %v2963 = vpop.f32.mrf.mxu0
        %v2964 = vadd.f32 0.0, %v2963
        %v2965 = vpop.f32.mrf.mxu0
        %v2966 = vadd.f32 0.0, %v2965
        %2967 = vmatprep.mubr.f32.mxu0 0.0
        %2968 = vmatmul.mubr.f32.gmra.mxu0 %v2720
        %v2969 = vpop.f32.mrf.mxu0
        %v2970 = vadd.f32 0.0, %v2969
        %v2971 = vpop.f32.mrf.mxu0
        %v2972 = vadd.f32 0.0, %v2971
        %2973 = vmatprep.mubr.f32.mxu0 0.0
        %2974 = vmatmul.mubr.f32.gmra.mxu0 %v2721
        %v2975 = vpop.f32.mrf.mxu0
        %v2976 = vadd.f32 0.0, %v2975
        %v2977 = vpop.f32.mrf.mxu0
        %v2978 = vadd.f32 0.0, %v2977
        %2979 = vmatprep.mubr.f32.mxu0 0.0
        %2980 = vmatmul.mubr.f32.gmra.mxu0 %v2722
        %v2981 = vpop.f32.mrf.mxu0
        %v2982 = vadd.f32 0.0, %v2981
        %v2983 = vpop.f32.mrf.mxu0
        %v2984 = vadd.f32 0.0, %v2983
        %2985 = vmatprep.mubr.f32.mxu0 0.0
        %2986 = vmatmul.mubr.f32.gmra.mxu0 %v2723
        %v2987 = vpop.f32.mrf.mxu0
        %v2988 = vadd.f32 0.0, %v2987
        %v2989 = vpop.f32.mrf.mxu0
        %v2990 = vadd.f32 0.0, %v2989
        %2991 = vmatprep.mubr.f32.mxu0 0.0
        %2992 = vmatmul.mubr.f32.gmra.mxu0 %v2724
        %v2993 = vpop.f32.mrf.mxu0
        %v2994 = vadd.f32 0.0, %v2993
        %v2995 = vpop.f32.mrf.mxu0
        %v2996 = vadd.f32 0.0, %v2995
        %2997 = vmatprep.mubr.f32.mxu0 0.0
        %2998 = vmatmul.mubr.f32.gmra.mxu0 %v2725
        %v2999 = vpop.f32.mrf.mxu0
        %v3000 = vadd.f32 0.0, %v2999
        %v3001 = vpop.f32.mrf.mxu0
        %v3002 = vadd.f32 0.0, %v3001
        %3003 = vmatprep.mubr.f32.mxu0 0.0
        %3004 = vmatmul.mubr.f32.gmra.mxu0 %v2726
        %v3005 = vpop.f32.mrf.mxu0
        %v3006 = vadd.f32 0.0, %v3005
        %v3007 = vpop.f32.mrf.mxu0
        %v3008 = vadd.f32 0.0, %v3007
        %3009 = vmatprep.mubr.f32.mxu0 0.0
        %3010 = vmatmul.mubr.f32.gmra.mxu0 %v2727
        %v3011 = vpop.f32.mrf.mxu0
        %v3012 = vadd.f32 0.0, %v3011
        %v3013 = vpop.f32.mrf.mxu0
        %v3014 = vadd.f32 0.0, %v3013
        %3015 = vmatprep.mubr.f32.mxu0 0.0
        %3016 = vmatmul.mubr.f32.gmra.mxu0 %v2728
        %v3017 = vpop.f32.mrf.mxu0
        %v3018 = vadd.f32 0.0, %v3017
        %v3019 = vpop.f32.mrf.mxu0
        %v3020 = vadd.f32 0.0, %v3019
        %3021 = vmatprep.mubr.f32.mxu0 0.0
        %3022 = vmatmul.mubr.f32.gmra.mxu0 %v2729
        %v3023 = vpop.f32.mrf.mxu0
        %v3024 = vadd.f32 0.0, %v3023
        %v3025 = vpop.f32.mrf.mxu0
        %v3026 = vadd.f32 0.0, %v3025
        %3027 = vmatprep.mubr.f32.mxu0 0.0
        %3028 = vmatmul.mubr.f32.gmra.mxu0 %v2730
        %v3029 = vpop.f32.mrf.mxu0
        %v3030 = vadd.f32 0.0, %v3029
        %v3031 = vpop.f32.mrf.mxu0
        %v3032 = vadd.f32 0.0, %v3031
        %3033 = vmatprep.mubr.f32.mxu0 0.0
        %3034 = vmatmul.mubr.f32.gmra.mxu0 %v2731
        %v3035 = vpop.f32.mrf.mxu0
        %v3036 = vadd.f32 0.0, %v3035
        %v3037 = vpop.f32.mrf.mxu0
        %v3038 = vadd.f32 0.0, %v3037
        %3039 = vmatprep.mubr.f32.mxu0 0.0
        %3040 = vmatmul.mubr.f32.gmra.mxu0 %v2732
        %v3041 = vpop.f32.mrf.mxu0
        %v3042 = vadd.f32 0.0, %v3041
        %v3043 = vpop.f32.mrf.mxu0
        %v3044 = vadd.f32 0.0, %v3043
        %3045 = vmatprep.mubr.f32.mxu0 0.0
        %3046 = vmatmul.mubr.f32.gmra.mxu0 %v2733
        %v3047 = vpop.f32.mrf.mxu0
        %v3048 = vadd.f32 0.0, %v3047
        %v3049 = vpop.f32.mrf.mxu0
        %v3050 = vadd.f32 0.0, %v3049
        %3051 = vmatprep.mubr.f32.mxu0 0.0
        %3052 = vmatmul.mubr.f32.gmra.mxu0 %v2734
        %v3053 = vpop.f32.mrf.mxu0
        %v3054 = vadd.f32 0.0, %v3053
        %v3055 = vpop.f32.mrf.mxu0
        %v3056 = vadd.f32 0.0, %v3055
        %3057 = vmatprep.mubr.f32.mxu0 0.0
        %3058 = vmatmul.mubr.f32.gmra.mxu0 %v2735
        %v3059 = vpop.f32.mrf.mxu0
        %v3060 = vadd.f32 0.0, %v3059
        %v3061 = vpop.f32.mrf.mxu0
        %v3062 = vadd.f32 0.0, %v3061
        %3063 = vmatprep.mubr.f32.mxu0 0.0
        %3064 = vmatmul.mubr.f32.gmra.mxu0 %v2736
        %v3065 = vpop.f32.mrf.mxu0
        %v3066 = vadd.f32 0.0, %v3065
        %v3067 = vpop.f32.mrf.mxu0
        %v3068 = vadd.f32 0.0, %v3067
        %3069 = vmatprep.mubr.f32.mxu0 0.0
        %3070 = vmatmul.mubr.f32.gmra.mxu0 %v2737
        %v3071 = vpop.f32.mrf.mxu0
        %v3072 = vadd.f32 0.0, %v3071
        %v3073 = vpop.f32.mrf.mxu0
        %v3074 = vadd.f32 0.0, %v3073
        %3075 = vdwg.mxu0
        %v3076 = vld [vmem:[#allocation2] sm:$0xff]
        %v3077 = vld [vmem:[#allocation2 + $0x8] sm:$0xff]
        %v3078 = vld [vmem:[#allocation2 + $0x10] sm:$0xff]
        %v3079 = vld [vmem:[#allocation2 + $0x18] sm:$0xff]
        %v3080 = vld [vmem:[#allocation2 + $0x20] sm:$0xff]
        %v3081 = vld [vmem:[#allocation2 + $0x28] sm:$0xff]
        %v3082 = vld [vmem:[#allocation2 + $0x30] sm:$0xff]
        %v3083 = vld [vmem:[#allocation2 + $0x38] sm:$0xff]
        %v3084 = vld [vmem:[#allocation2 + $0x40] sm:$0xff]
        %v3085 = vld [vmem:[#allocation2 + $0x48] sm:$0xff]
        %v3086 = vld [vmem:[#allocation2 + $0x50] sm:$0xff]
        %v3087 = vld [vmem:[#allocation2 + $0x58] sm:$0xff]
        %v3088 = vld [vmem:[#allocation2 + $0x60] sm:$0xff]
        %v3089 = vld [vmem:[#allocation2 + $0x68] sm:$0xff]
        %v3090 = vld [vmem:[#allocation2 + $0x70] sm:$0xff]
        %v3091 = vld [vmem:[#allocation2 + $0x78] sm:$0xff]
        %v3092 = vld [vmem:[#allocation2 + $0x80] sm:$0xff]
        %v3093 = vld [vmem:[#allocation2 + $0x88] sm:$0xff]
        %v3094 = vld [vmem:[#allocation2 + $0x90] sm:$0xff]
        %v3095 = vld [vmem:[#allocation2 + $0x98] sm:$0xff]
        %v3096 = vld [vmem:[#allocation2 + $0xa0] sm:$0xff]
        %v3097 = vld [vmem:[#allocation2 + $0xa8] sm:$0xff]
        %v3098 = vld [vmem:[#allocation2 + $0xb0] sm:$0xff]
        %v3099 = vld [vmem:[#allocation2 + $0xb8] sm:$0xff]
        %v3100 = vld [vmem:[#allocation2 + $0xc0] sm:$0xff]
        %v3101 = vld [vmem:[#allocation2 + $0xc8] sm:$0xff]
        %v3102 = vld [vmem:[#allocation2 + $0xd0] sm:$0xff]
        %v3103 = vld [vmem:[#allocation2 + $0xd8] sm:$0xff]
        %v3104 = vld [vmem:[#allocation2 + $0xe0] sm:$0xff]
        %v3105 = vld [vmem:[#allocation2 + $0xe8] sm:$0xff]
        %v3106 = vld [vmem:[#allocation2 + $0xf0] sm:$0xff]
        %v3107 = vld [vmem:[#allocation2 + $0xf8] sm:$0xff]
        %v3108 = vld [vmem:[#allocation2 + $0x100] sm:$0xff]
        %v3109 = vld [vmem:[#allocation2 + $0x108] sm:$0xff]
        %v3110 = vld [vmem:[#allocation2 + $0x110] sm:$0xff]
        %v3111 = vld [vmem:[#allocation2 + $0x118] sm:$0xff]
        %v3112 = vld [vmem:[#allocation2 + $0x120] sm:$0xff]
        %v3113 = vld [vmem:[#allocation2 + $0x128] sm:$0xff]
        %v3114 = vld [vmem:[#allocation2 + $0x130] sm:$0xff]
        %v3115 = vld [vmem:[#allocation2 + $0x138] sm:$0xff]
        %v3116 = vld [vmem:[#allocation2 + $0x140] sm:$0xff]
        %v3117 = vld [vmem:[#allocation2 + $0x148] sm:$0xff]
        %v3118 = vld [vmem:[#allocation2 + $0x150] sm:$0xff]
        %v3119 = vld [vmem:[#allocation2 + $0x158] sm:$0xff]
        %v3120 = vld [vmem:[#allocation2 + $0x160] sm:$0xff]
        %v3121 = vld [vmem:[#allocation2 + $0x168] sm:$0xff]
        %v3122 = vld [vmem:[#allocation2 + $0x170] sm:$0xff]
        %v3123 = vld [vmem:[#allocation2 + $0x178] sm:$0xff]
        %v3124 = vld [vmem:[#allocation2 + $0x180] sm:$0xff]
        %v3125 = vld [vmem:[#allocation2 + $0x188] sm:$0xff]
        %v3126 = vld [vmem:[#allocation2 + $0x190] sm:$0xff]
        %v3127 = vld [vmem:[#allocation2 + $0x198] sm:$0xff]
        %v3128 = vld [vmem:[#allocation2 + $0x1a0] sm:$0xff]
        %v3129 = vld [vmem:[#allocation2 + $0x1a8] sm:$0xff]
        %v3130 = vld [vmem:[#allocation2 + $0x1b0] sm:$0xff]
        %v3131 = vld [vmem:[#allocation2 + $0x1b8] sm:$0xff]
        %v3132 = vld [vmem:[#allocation2 + $0x1c0] sm:$0xff]
        %v3133 = vld [vmem:[#allocation2 + $0x1c8] sm:$0xff]
        %v3134 = vld [vmem:[#allocation2 + $0x1d0] sm:$0xff]
        %v3135 = vld [vmem:[#allocation2 + $0x1d8] sm:$0xff]
        %v3136 = vld [vmem:[#allocation2 + $0x1e0] sm:$0xff]
        %v3137 = vld [vmem:[#allocation2 + $0x1e8] sm:$0xff]
        %v3138 = vld [vmem:[#allocation2 + $0x1f0] sm:$0xff]
        %v3139 = vld [vmem:[#allocation2 + $0x1f8] sm:$0xff]
        %v3140 = vld [vmem:[#allocation2 + $0x200] sm:$0xff]
        %v3141 = vld [vmem:[#allocation2 + $0x208] sm:$0xff]
        %v3142 = vld [vmem:[#allocation2 + $0x210] sm:$0xff]
        %v3143 = vld [vmem:[#allocation2 + $0x218] sm:$0xff]
        %v3144 = vld [vmem:[#allocation2 + $0x220] sm:$0xff]
        %v3145 = vld [vmem:[#allocation2 + $0x228] sm:$0xff]
        %v3146 = vld [vmem:[#allocation2 + $0x230] sm:$0xff]
        %v3147 = vld [vmem:[#allocation2 + $0x238] sm:$0xff]
        %v3148 = vld [vmem:[#allocation2 + $0x240] sm:$0xff]
        %v3149 = vld [vmem:[#allocation2 + $0x248] sm:$0xff]
        %v3150 = vld [vmem:[#allocation2 + $0x250] sm:$0xff]
        %v3151 = vld [vmem:[#allocation2 + $0x258] sm:$0xff]
        %v3152 = vld [vmem:[#allocation2 + $0x260] sm:$0xff]
        %v3153 = vld [vmem:[#allocation2 + $0x268] sm:$0xff]
        %v3154 = vld [vmem:[#allocation2 + $0x270] sm:$0xf]
        %v3155 = vld [vmem:[#allocation2 + $0x278] sm:$0xf]
        %v3156 = vadd.f32 %v3076, %v2838
        %v3157 = vadd.f32 %v3077, %v2840
        %v3158 = vadd.f32 %v3078, %v2844
        %v3159 = vadd.f32 %v3079, %v2846
        %v3160 = vadd.f32 %v3080, %v2850
        %v3161 = vadd.f32 %v3081, %v2852
        %v3162 = vadd.f32 %v3082, %v2856
        %v3163 = vadd.f32 %v3083, %v2858
        %v3164 = vadd.f32 %v3084, %v2862
        %v3165 = vadd.f32 %v3085, %v2864
        %v3166 = vadd.f32 %v3086, %v2868
        %v3167 = vadd.f32 %v3087, %v2870
        %v3168 = vadd.f32 %v3088, %v2874
        %v3169 = vadd.f32 %v3089, %v2876
        %v3170 = vadd.f32 %v3090, %v2880
        %v3171 = vadd.f32 %v3091, %v2882
        %v3172 = vadd.f32 %v3092, %v2886
        %v3173 = vadd.f32 %v3093, %v2888
        %v3174 = vadd.f32 %v3094, %v2892
        %v3175 = vadd.f32 %v3095, %v2894
        %v3176 = vadd.f32 %v3096, %v2898
        %v3177 = vadd.f32 %v3097, %v2900
        %v3178 = vadd.f32 %v3098, %v2904
        %v3179 = vadd.f32 %v3099, %v2906
        %v3180 = vadd.f32 %v3100, %v2910
        %v3181 = vadd.f32 %v3101, %v2912
        %v3182 = vadd.f32 %v3102, %v2916
        %v3183 = vadd.f32 %v3103, %v2918
        %v3184 = vadd.f32 %v3104, %v2922
        %v3185 = vadd.f32 %v3105, %v2924
        %v3186 = vadd.f32 %v3106, %v2928
        %v3187 = vadd.f32 %v3107, %v2930
        %v3188 = vadd.f32 %v3108, %v2934
        %v3189 = vadd.f32 %v3109, %v2936
        %v3190 = vadd.f32 %v3110, %v2940
        %v3191 = vadd.f32 %v3111, %v2942
        %v3192 = vadd.f32 %v3112, %v2946
        %v3193 = vadd.f32 %v3113, %v2948
        %v3194 = vadd.f32 %v3114, %v2952
        %v3195 = vadd.f32 %v3115, %v2954
        %v3196 = vadd.f32 %v3116, %v2958
        %v3197 = vadd.f32 %v3117, %v2960
        %v3198 = vadd.f32 %v3118, %v2964
        %v3199 = vadd.f32 %v3119, %v2966
        %v3200 = vadd.f32 %v3120, %v2970
        %v3201 = vadd.f32 %v3121, %v2972
        %v3202 = vadd.f32 %v3122, %v2976
        %v3203 = vadd.f32 %v3123, %v2978
        %v3204 = vadd.f32 %v3124, %v2982
        %v3205 = vadd.f32 %v3125, %v2984
        %v3206 = vadd.f32 %v3126, %v2988
        %v3207 = vadd.f32 %v3127, %v2990
        %v3208 = vadd.f32 %v3128, %v2994
        %v3209 = vadd.f32 %v3129, %v2996
        %v3210 = vadd.f32 %v3130, %v3000
        %v3211 = vadd.f32 %v3131, %v3002
        %v3212 = vadd.f32 %v3132, %v3006
        %v3213 = vadd.f32 %v3133, %v3008
        %v3214 = vadd.f32 %v3134, %v3012
        %v3215 = vadd.f32 %v3135, %v3014
        %v3216 = vadd.f32 %v3136, %v3018
        %v3217 = vadd.f32 %v3137, %v3020
        %v3218 = vadd.f32 %v3138, %v3024
        %v3219 = vadd.f32 %v3139, %v3026
        %v3220 = vadd.f32 %v3140, %v3030
        %v3221 = vadd.f32 %v3141, %v3032
        %v3222 = vadd.f32 %v3142, %v3036
        %v3223 = vadd.f32 %v3143, %v3038
        %v3224 = vadd.f32 %v3144, %v3042
        %v3225 = vadd.f32 %v3145, %v3044
        %v3226 = vadd.f32 %v3146, %v3048
        %v3227 = vadd.f32 %v3147, %v3050
        %v3228 = vadd.f32 %v3148, %v3054
        %v3229 = vadd.f32 %v3149, %v3056
        %v3230 = vadd.f32 %v3150, %v3060
        %v3231 = vadd.f32 %v3151, %v3062
        %v3232 = vadd.f32 %v3152, %v3066
        %v3233 = vadd.f32 %v3153, %v3068
        %v3234 = vadd.f32 %v3154, %v3072
        %v3235 = vadd.f32 %v3155, %v3074
        %v3236 = vld [vmem:[%s2] sm:$0x3]
        %v3238 = vlaneseq
        %v3239 = vshrl.u32 %v3238, 7
        %v3240 = vsub.s32 0, %v3239
        %v3241 = vrot.slane %v3236, %v3240
        %v3242 = vlaneseq
        %v3243 = vshrl.u32 %v3242, 7
        %v3244 = vsub.s32 1, %v3243
        %v3245 = vrot.slane %v3236, %v3244
        %v3248 = vadd.f32 %v3156, %v3241
        %v3249 = vadd.f32 %v3157, %v3245
        %v3250 = vadd.f32 %v3158, %v3241
        %v3251 = vadd.f32 %v3159, %v3245
        %v3252 = vadd.f32 %v3160, %v3241
        %v3253 = vadd.f32 %v3161, %v3245
        %v3254 = vadd.f32 %v3162, %v3241
        %v3255 = vadd.f32 %v3163, %v3245
        %v3256 = vadd.f32 %v3164, %v3241
        %v3257 = vadd.f32 %v3165, %v3245
        %v3258 = vadd.f32 %v3166, %v3241
        %v3259 = vadd.f32 %v3167, %v3245
        %v3260 = vadd.f32 %v3168, %v3241
        %v3261 = vadd.f32 %v3169, %v3245
        %v3262 = vadd.f32 %v3170, %v3241
        %v3263 = vadd.f32 %v3171, %v3245
        %v3264 = vadd.f32 %v3172, %v3241
        %v3265 = vadd.f32 %v3173, %v3245
        %v3266 = vadd.f32 %v3174, %v3241
        %v3267 = vadd.f32 %v3175, %v3245
        %v3268 = vadd.f32 %v3176, %v3241
        %v3269 = vadd.f32 %v3177, %v3245
        %v3270 = vadd.f32 %v3178, %v3241
        %v3271 = vadd.f32 %v3179, %v3245
        %v3272 = vadd.f32 %v3180, %v3241
        %v3273 = vadd.f32 %v3181, %v3245
        %v3274 = vadd.f32 %v3182, %v3241
        %v3275 = vadd.f32 %v3183, %v3245
        %v3276 = vadd.f32 %v3184, %v3241
        %v3277 = vadd.f32 %v3185, %v3245
        %v3278 = vadd.f32 %v3186, %v3241
        %v3279 = vadd.f32 %v3187, %v3245
        %v3280 = vadd.f32 %v3188, %v3241
        %v3281 = vadd.f32 %v3189, %v3245
        %v3282 = vadd.f32 %v3190, %v3241
        %v3283 = vadd.f32 %v3191, %v3245
        %v3284 = vadd.f32 %v3192, %v3241
        %v3285 = vadd.f32 %v3193, %v3245
        %v3286 = vadd.f32 %v3194, %v3241
        %v3287 = vadd.f32 %v3195, %v3245
        %v3288 = vadd.f32 %v3196, %v3241
        %v3289 = vadd.f32 %v3197, %v3245
        %v3290 = vadd.f32 %v3198, %v3241
        %v3291 = vadd.f32 %v3199, %v3245
        %v3292 = vadd.f32 %v3200, %v3241
        %v3293 = vadd.f32 %v3201, %v3245
        %v3294 = vadd.f32 %v3202, %v3241
        %v3295 = vadd.f32 %v3203, %v3245
        %v3296 = vadd.f32 %v3204, %v3241
        %v3297 = vadd.f32 %v3205, %v3245
        %v3298 = vadd.f32 %v3206, %v3241
        %v3299 = vadd.f32 %v3207, %v3245
        %v3300 = vadd.f32 %v3208, %v3241
        %v3301 = vadd.f32 %v3209, %v3245
        %v3302 = vadd.f32 %v3210, %v3241
        %v3303 = vadd.f32 %v3211, %v3245
        %v3304 = vadd.f32 %v3212, %v3241
        %v3305 = vadd.f32 %v3213, %v3245
        %v3306 = vadd.f32 %v3214, %v3241
        %v3307 = vadd.f32 %v3215, %v3245
        %v3308 = vadd.f32 %v3216, %v3241
        %v3309 = vadd.f32 %v3217, %v3245
        %v3310 = vadd.f32 %v3218, %v3241
        %v3311 = vadd.f32 %v3219, %v3245
        %v3312 = vadd.f32 %v3220, %v3241
        %v3313 = vadd.f32 %v3221, %v3245
        %v3314 = vadd.f32 %v3222, %v3241
        %v3315 = vadd.f32 %v3223, %v3245
        %v3316 = vadd.f32 %v3224, %v3241
        %v3317 = vadd.f32 %v3225, %v3245
        %v3318 = vadd.f32 %v3226, %v3241
        %v3319 = vadd.f32 %v3227, %v3245
        %v3320 = vadd.f32 %v3228, %v3241
        %v3321 = vadd.f32 %v3229, %v3245
        %v3322 = vadd.f32 %v3230, %v3241
        %v3323 = vadd.f32 %v3231, %v3245
        %v3324 = vadd.f32 %v3232, %v3241
        %v3325 = vadd.f32 %v3233, %v3245
        %v3326 = vadd.f32 %v3234, %v3241
        %v3327 = vadd.f32 %v3235, %v3245
        %v3328 = vmax.f32 %v3248, 0.0
        %v3329 = vmax.f32 %v3249, 0.0
        %v3330 = vmax.f32 %v3250, 0.0
        %v3331 = vmax.f32 %v3251, 0.0
        %v3332 = vmax.f32 %v3252, 0.0
        %v3333 = vmax.f32 %v3253, 0.0
        %v3334 = vmax.f32 %v3254, 0.0
        %v3335 = vmax.f32 %v3255, 0.0
        %v3336 = vmax.f32 %v3256, 0.0
        %v3337 = vmax.f32 %v3257, 0.0
        %v3338 = vmax.f32 %v3258, 0.0
        %v3339 = vmax.f32 %v3259, 0.0
        %v3340 = vmax.f32 %v3260, 0.0
        %v3341 = vmax.f32 %v3261, 0.0
        %v3342 = vmax.f32 %v3262, 0.0
        %v3343 = vmax.f32 %v3263, 0.0
        %v3344 = vmax.f32 %v3264, 0.0
        %v3345 = vmax.f32 %v3265, 0.0
        %v3346 = vmax.f32 %v3266, 0.0
        %v3347 = vmax.f32 %v3267, 0.0
        %v3348 = vmax.f32 %v3268, 0.0
        %v3349 = vmax.f32 %v3269, 0.0
        %v3350 = vmax.f32 %v3270, 0.0
        %v3351 = vmax.f32 %v3271, 0.0
        %v3352 = vmax.f32 %v3272, 0.0
        %v3353 = vmax.f32 %v3273, 0.0
        %v3354 = vmax.f32 %v3274, 0.0
        %v3355 = vmax.f32 %v3275, 0.0
        %v3356 = vmax.f32 %v3276, 0.0
        %v3357 = vmax.f32 %v3277, 0.0
        %v3358 = vmax.f32 %v3278, 0.0
        %v3359 = vmax.f32 %v3279, 0.0
        %v3360 = vmax.f32 %v3280, 0.0
        %v3361 = vmax.f32 %v3281, 0.0
        %v3362 = vmax.f32 %v3282, 0.0
        %v3363 = vmax.f32 %v3283, 0.0
        %v3364 = vmax.f32 %v3284, 0.0
        %v3365 = vmax.f32 %v3285, 0.0
        %v3366 = vmax.f32 %v3286, 0.0
        %v3367 = vmax.f32 %v3287, 0.0
        %v3368 = vmax.f32 %v3288, 0.0
        %v3369 = vmax.f32 %v3289, 0.0
        %v3370 = vmax.f32 %v3290, 0.0
        %v3371 = vmax.f32 %v3291, 0.0
        %v3372 = vmax.f32 %v3292, 0.0
        %v3373 = vmax.f32 %v3293, 0.0
        %v3374 = vmax.f32 %v3294, 0.0
        %v3375 = vmax.f32 %v3295, 0.0
        %v3376 = vmax.f32 %v3296, 0.0
        %v3377 = vmax.f32 %v3297, 0.0
        %v3378 = vmax.f32 %v3298, 0.0
        %v3379 = vmax.f32 %v3299, 0.0
        %v3380 = vmax.f32 %v3300, 0.0
        %v3381 = vmax.f32 %v3301, 0.0
        %v3382 = vmax.f32 %v3302, 0.0
        %v3383 = vmax.f32 %v3303, 0.0
        %v3384 = vmax.f32 %v3304, 0.0
        %v3385 = vmax.f32 %v3305, 0.0
        %v3386 = vmax.f32 %v3306, 0.0
        %v3387 = vmax.f32 %v3307, 0.0
        %v3388 = vmax.f32 %v3308, 0.0
        %v3389 = vmax.f32 %v3309, 0.0
        %v3390 = vmax.f32 %v3310, 0.0
        %v3391 = vmax.f32 %v3311, 0.0
        %v3392 = vmax.f32 %v3312, 0.0
        %v3393 = vmax.f32 %v3313, 0.0
        %v3394 = vmax.f32 %v3314, 0.0
        %v3395 = vmax.f32 %v3315, 0.0
        %v3396 = vmax.f32 %v3316, 0.0
        %v3397 = vmax.f32 %v3317, 0.0
        %v3398 = vmax.f32 %v3318, 0.0
        %v3399 = vmax.f32 %v3319, 0.0
        %v3400 = vmax.f32 %v3320, 0.0
        %v3401 = vmax.f32 %v3321, 0.0
        %v3402 = vmax.f32 %v3322, 0.0
        %v3403 = vmax.f32 %v3323, 0.0
        %v3404 = vmax.f32 %v3324, 0.0
        %v3405 = vmax.f32 %v3325, 0.0
        %v3406 = vmax.f32 %v3326, 0.0
        %v3407 = vmax.f32 %v3327, 0.0
        %3408 = vst [vmem:[#allocation2] sm:$0xff] %v3328
        %3409 = vst [vmem:[#allocation2 + $0x8] sm:$0xff] %v3329
        %3410 = vst [vmem:[#allocation2 + $0x10] sm:$0xff] %v3330
        %3411 = vst [vmem:[#allocation2 + $0x18] sm:$0xff] %v3331
        %3412 = vst [vmem:[#allocation2 + $0x20] sm:$0xff] %v3332
        %3413 = vst [vmem:[#allocation2 + $0x28] sm:$0xff] %v3333
        %3414 = vst [vmem:[#allocation2 + $0x30] sm:$0xff] %v3334
        %3415 = vst [vmem:[#allocation2 + $0x38] sm:$0xff] %v3335
        %3416 = vst [vmem:[#allocation2 + $0x40] sm:$0xff] %v3336
        %3417 = vst [vmem:[#allocation2 + $0x48] sm:$0xff] %v3337
        %3418 = vst [vmem:[#allocation2 + $0x50] sm:$0xff] %v3338
        %3419 = vst [vmem:[#allocation2 + $0x58] sm:$0xff] %v3339
        %3420 = vst [vmem:[#allocation2 + $0x60] sm:$0xff] %v3340
        %3421 = vst [vmem:[#allocation2 + $0x68] sm:$0xff] %v3341
        %3422 = vst [vmem:[#allocation2 + $0x70] sm:$0xff] %v3342
        %3423 = vst [vmem:[#allocation2 + $0x78] sm:$0xff] %v3343
        %3424 = vst [vmem:[#allocation2 + $0x80] sm:$0xff] %v3344
        %3425 = vst [vmem:[#allocation2 + $0x88] sm:$0xff] %v3345
        %3426 = vst [vmem:[#allocation2 + $0x90] sm:$0xff] %v3346
        %3427 = vst [vmem:[#allocation2 + $0x98] sm:$0xff] %v3347
        %3428 = vst [vmem:[#allocation2 + $0xa0] sm:$0xff] %v3348
        %3429 = vst [vmem:[#allocation2 + $0xa8] sm:$0xff] %v3349
        %3430 = vst [vmem:[#allocation2 + $0xb0] sm:$0xff] %v3350
        %3431 = vst [vmem:[#allocation2 + $0xb8] sm:$0xff] %v3351
        %3432 = vst [vmem:[#allocation2 + $0xc0] sm:$0xff] %v3352
        %3433 = vst [vmem:[#allocation2 + $0xc8] sm:$0xff] %v3353
        %3434 = vst [vmem:[#allocation2 + $0xd0] sm:$0xff] %v3354
        %3435 = vst [vmem:[#allocation2 + $0xd8] sm:$0xff] %v3355
        %3436 = vst [vmem:[#allocation2 + $0xe0] sm:$0xff] %v3356
        %3437 = vst [vmem:[#allocation2 + $0xe8] sm:$0xff] %v3357
        %3438 = vst [vmem:[#allocation2 + $0xf0] sm:$0xff] %v3358
        %3439 = vst [vmem:[#allocation2 + $0xf8] sm:$0xff] %v3359
        %3440 = vst [vmem:[#allocation2 + $0x100] sm:$0xff] %v3360
        %3441 = vst [vmem:[#allocation2 + $0x108] sm:$0xff] %v3361
        %3442 = vst [vmem:[#allocation2 + $0x110] sm:$0xff] %v3362
        %3443 = vst [vmem:[#allocation2 + $0x118] sm:$0xff] %v3363
        %3444 = vst [vmem:[#allocation2 + $0x120] sm:$0xff] %v3364
        %3445 = vst [vmem:[#allocation2 + $0x128] sm:$0xff] %v3365
        %3446 = vst [vmem:[#allocation2 + $0x130] sm:$0xff] %v3366
        %3447 = vst [vmem:[#allocation2 + $0x138] sm:$0xff] %v3367
        %3448 = vst [vmem:[#allocation2 + $0x140] sm:$0xff] %v3368
        %3449 = vst [vmem:[#allocation2 + $0x148] sm:$0xff] %v3369
        %3450 = vst [vmem:[#allocation2 + $0x150] sm:$0xff] %v3370
        %3451 = vst [vmem:[#allocation2 + $0x158] sm:$0xff] %v3371
        %3452 = vst [vmem:[#allocation2 + $0x160] sm:$0xff] %v3372
        %3453 = vst [vmem:[#allocation2 + $0x168] sm:$0xff] %v3373
        %3454 = vst [vmem:[#allocation2 + $0x170] sm:$0xff] %v3374
        %3455 = vst [vmem:[#allocation2 + $0x178] sm:$0xff] %v3375
        %3456 = vst [vmem:[#allocation2 + $0x180] sm:$0xff] %v3376
        %3457 = vst [vmem:[#allocation2 + $0x188] sm:$0xff] %v3377
        %3458 = vst [vmem:[#allocation2 + $0x190] sm:$0xff] %v3378
        %3459 = vst [vmem:[#allocation2 + $0x198] sm:$0xff] %v3379
        %3460 = vst [vmem:[#allocation2 + $0x1a0] sm:$0xff] %v3380
        %3461 = vst [vmem:[#allocation2 + $0x1a8] sm:$0xff] %v3381
        %3462 = vst [vmem:[#allocation2 + $0x1b0] sm:$0xff] %v3382
        %3463 = vst [vmem:[#allocation2 + $0x1b8] sm:$0xff] %v3383
        %3464 = vst [vmem:[#allocation2 + $0x1c0] sm:$0xff] %v3384
        %3465 = vst [vmem:[#allocation2 + $0x1c8] sm:$0xff] %v3385
        %3466 = vst [vmem:[#allocation2 + $0x1d0] sm:$0xff] %v3386
        %3467 = vst [vmem:[#allocation2 + $0x1d8] sm:$0xff] %v3387
        %3468 = vst [vmem:[#allocation2 + $0x1e0] sm:$0xff] %v3388
        %3469 = vst [vmem:[#allocation2 + $0x1e8] sm:$0xff] %v3389
        %3470 = vst [vmem:[#allocation2 + $0x1f0] sm:$0xff] %v3390
        %3471 = vst [vmem:[#allocation2 + $0x1f8] sm:$0xff] %v3391
        %3472 = vst [vmem:[#allocation2 + $0x200] sm:$0xff] %v3392
        %3473 = vst [vmem:[#allocation2 + $0x208] sm:$0xff] %v3393
        %3474 = vst [vmem:[#allocation2 + $0x210] sm:$0xff] %v3394
        %3475 = vst [vmem:[#allocation2 + $0x218] sm:$0xff] %v3395
        %3476 = vst [vmem:[#allocation2 + $0x220] sm:$0xff] %v3396
        %3477 = vst [vmem:[#allocation2 + $0x228] sm:$0xff] %v3397
        %3478 = vst [vmem:[#allocation2 + $0x230] sm:$0xff] %v3398
        %3479 = vst [vmem:[#allocation2 + $0x238] sm:$0xff] %v3399
        %3480 = vst [vmem:[#allocation2 + $0x240] sm:$0xff] %v3400
        %3481 = vst [vmem:[#allocation2 + $0x248] sm:$0xff] %v3401
        %3482 = vst [vmem:[#allocation2 + $0x250] sm:$0xff] %v3402
        %3483 = vst [vmem:[#allocation2 + $0x258] sm:$0xff] %v3403
        %3484 = vst [vmem:[#allocation2 + $0x260] sm:$0xff] %v3404
        %3485 = vst [vmem:[#allocation2 + $0x268] sm:$0xff] %v3405
        %3486 = vst [vmem:[#allocation2 + $0x270] sm:$0xf] %v3406
        %3487 = vst [vmem:[#allocation2 + $0x278] sm:$0xf] %v3407
        %v3488 = vld [vmem:[#allocation2] sm:$0xff]
        %v3489 = vld [vmem:[#allocation2 + $0x8] sm:$0xff]
        %v3490 = vld [vmem:[#allocation2 + $0x10] sm:$0xff]
        %v3491 = vld [vmem:[#allocation2 + $0x18] sm:$0xff]
        %v3492 = vld [vmem:[#allocation2 + $0x20] sm:$0xff]
        %v3493 = vld [vmem:[#allocation2 + $0x28] sm:$0xff]
        %v3494 = vld [vmem:[#allocation2 + $0x30] sm:$0xff]
        %v3495 = vld [vmem:[#allocation2 + $0x38] sm:$0xff]
        %v3496 = vld [vmem:[#allocation2 + $0x40] sm:$0xff]
        %v3497 = vld [vmem:[#allocation2 + $0x48] sm:$0xff]
        %v3498 = vld [vmem:[#allocation2 + $0x50] sm:$0xff]
        %v3499 = vld [vmem:[#allocation2 + $0x58] sm:$0xff]
        %v3500 = vld [vmem:[#allocation2 + $0x60] sm:$0xff]
        %v3501 = vld [vmem:[#allocation2 + $0x68] sm:$0xff]
        %v3502 = vld [vmem:[#allocation2 + $0x70] sm:$0xff]
        %v3503 = vld [vmem:[#allocation2 + $0x78] sm:$0xff]
        %v3504 = vld [vmem:[#allocation2 + $0x80] sm:$0xff]
        %v3505 = vld [vmem:[#allocation2 + $0x88] sm:$0xff]
        %v3506 = vld [vmem:[#allocation2 + $0x90] sm:$0xff]
        %v3507 = vld [vmem:[#allocation2 + $0x98] sm:$0xff]
        %v3508 = vld [vmem:[#allocation2 + $0xa0] sm:$0xff]
        %v3509 = vld [vmem:[#allocation2 + $0xa8] sm:$0xff]
        %v3510 = vld [vmem:[#allocation2 + $0xb0] sm:$0xff]
        %v3511 = vld [vmem:[#allocation2 + $0xb8] sm:$0xff]
        %v3512 = vld [vmem:[#allocation2 + $0xc0] sm:$0xff]
        %v3513 = vld [vmem:[#allocation2 + $0xc8] sm:$0xff]
        %v3514 = vld [vmem:[#allocation2 + $0xd0] sm:$0xff]
        %v3515 = vld [vmem:[#allocation2 + $0xd8] sm:$0xff]
        %v3516 = vld [vmem:[#allocation2 + $0xe0] sm:$0xff]
        %v3517 = vld [vmem:[#allocation2 + $0xe8] sm:$0xff]
        %v3518 = vld [vmem:[#allocation2 + $0xf0] sm:$0xff]
        %v3519 = vld [vmem:[#allocation2 + $0xf8] sm:$0xff]
        %v3520 = vld [vmem:[#allocation2 + $0x100] sm:$0xff]
        %v3521 = vld [vmem:[#allocation2 + $0x108] sm:$0xff]
        %v3522 = vld [vmem:[#allocation2 + $0x110] sm:$0xff]
        %v3523 = vld [vmem:[#allocation2 + $0x118] sm:$0xff]
        %v3524 = vld [vmem:[#allocation2 + $0x120] sm:$0xff]
        %v3525 = vld [vmem:[#allocation2 + $0x128] sm:$0xff]
        %v3526 = vld [vmem:[#allocation2 + $0x130] sm:$0xff]
        %v3527 = vld [vmem:[#allocation2 + $0x138] sm:$0xff]
        %v3528 = vld [vmem:[#allocation2 + $0x140] sm:$0xff]
        %v3529 = vld [vmem:[#allocation2 + $0x148] sm:$0xff]
        %v3530 = vld [vmem:[#allocation2 + $0x150] sm:$0xff]
        %v3531 = vld [vmem:[#allocation2 + $0x158] sm:$0xff]
        %v3532 = vld [vmem:[#allocation2 + $0x160] sm:$0xff]
        %v3533 = vld [vmem:[#allocation2 + $0x168] sm:$0xff]
        %v3534 = vld [vmem:[#allocation2 + $0x170] sm:$0xff]
        %v3535 = vld [vmem:[#allocation2 + $0x178] sm:$0xff]
        %v3536 = vld [vmem:[#allocation2 + $0x180] sm:$0xff]
        %v3537 = vld [vmem:[#allocation2 + $0x188] sm:$0xff]
        %v3538 = vld [vmem:[#allocation2 + $0x190] sm:$0xff]
        %v3539 = vld [vmem:[#allocation2 + $0x198] sm:$0xff]
        %v3540 = vld [vmem:[#allocation2 + $0x1a0] sm:$0xff]
        %v3541 = vld [vmem:[#allocation2 + $0x1a8] sm:$0xff]
        %v3542 = vld [vmem:[#allocation2 + $0x1b0] sm:$0xff]
        %v3543 = vld [vmem:[#allocation2 + $0x1b8] sm:$0xff]
        %v3544 = vld [vmem:[#allocation2 + $0x1c0] sm:$0xff]
        %v3545 = vld [vmem:[#allocation2 + $0x1c8] sm:$0xff]
        %v3546 = vld [vmem:[#allocation2 + $0x1d0] sm:$0xff]
        %v3547 = vld [vmem:[#allocation2 + $0x1d8] sm:$0xff]
        %v3548 = vld [vmem:[#allocation2 + $0x1e0] sm:$0xff]
        %v3549 = vld [vmem:[#allocation2 + $0x1e8] sm:$0xff]
        %v3550 = vld [vmem:[#allocation2 + $0x1f0] sm:$0xff]
        %v3551 = vld [vmem:[#allocation2 + $0x1f8] sm:$0xff]
        %v3552 = vld [vmem:[#allocation2 + $0x200] sm:$0xff]
        %v3553 = vld [vmem:[#allocation2 + $0x208] sm:$0xff]
        %v3554 = vld [vmem:[#allocation2 + $0x210] sm:$0xff]
        %v3555 = vld [vmem:[#allocation2 + $0x218] sm:$0xff]
        %v3556 = vld [vmem:[#allocation2 + $0x220] sm:$0xff]
        %v3557 = vld [vmem:[#allocation2 + $0x228] sm:$0xff]
        %v3558 = vld [vmem:[#allocation2 + $0x230] sm:$0xff]
        %v3559 = vld [vmem:[#allocation2 + $0x238] sm:$0xff]
        %v3560 = vld [vmem:[#allocation2 + $0x240] sm:$0xff]
        %v3561 = vld [vmem:[#allocation2 + $0x248] sm:$0xff]
        %v3562 = vld [vmem:[#allocation2 + $0x250] sm:$0xff]
        %v3563 = vld [vmem:[#allocation2 + $0x258] sm:$0xff]
        %v3564 = vld [vmem:[#allocation2 + $0x260] sm:$0xff]
        %v3565 = vld [vmem:[#allocation2 + $0x268] sm:$0xff]
        %v3566 = vld [vmem:[#allocation2 + $0x270] sm:$0x7]
        %v3567 = vld [vmem:[#allocation2 + $0x278] sm:$0x7]
        %v3568 = vld [vmem:[#allocation2] sm:$0xfe]
        %v3569 = vld [vmem:[#allocation2 + $0x8] sm:$0xfe]
        %v3570 = vld [vmem:[#allocation2 + $0x270] sm:$0xf]
        %v3571 = vld [vmem:[#allocation2 + $0x278] sm:$0xf]
        %vm3652 = vcmask 1046528
        %v3653 = vrot.slane %v3568, 1
        %v3654 = vrot.slane %v3490, 1
        %v3655 = vsel %vm3652, %v3653, %v3654
        %v3656 = vrot.slane %v3569, 1
        %v3657 = vrot.slane %v3491, 1
        %v3658 = vsel %vm3652, %v3656, %v3657
        %v3659 = vrot.slane %v3492, 1
        %v3660 = vsel %vm3652, %v3654, %v3659
        %v3661 = vrot.slane %v3493, 1
        %v3662 = vsel %vm3652, %v3657, %v3661
        %v3663 = vrot.slane %v3494, 1
        %v3664 = vsel %vm3652, %v3659, %v3663
        %v3665 = vrot.slane %v3495, 1
        %v3666 = vsel %vm3652, %v3661, %v3665
        %v3667 = vrot.slane %v3496, 1
        %v3668 = vsel %vm3652, %v3663, %v3667
        %v3669 = vrot.slane %v3497, 1
        %v3670 = vsel %vm3652, %v3665, %v3669
        %v3671 = vrot.slane %v3498, 1
        %v3672 = vsel %vm3652, %v3667, %v3671
        %v3673 = vrot.slane %v3499, 1
        %v3674 = vsel %vm3652, %v3669, %v3673
        %v3675 = vrot.slane %v3500, 1
        %v3676 = vsel %vm3652, %v3671, %v3675
        %v3677 = vrot.slane %v3501, 1
        %v3678 = vsel %vm3652, %v3673, %v3677
        %v3679 = vrot.slane %v3502, 1
        %v3680 = vsel %vm3652, %v3675, %v3679
        %v3681 = vrot.slane %v3503, 1
        %v3682 = vsel %vm3652, %v3677, %v3681
        %v3683 = vrot.slane %v3504, 1
        %v3684 = vsel %vm3652, %v3679, %v3683
        %v3685 = vrot.slane %v3505, 1
        %v3686 = vsel %vm3652, %v3681, %v3685
        %v3687 = vrot.slane %v3506, 1
        %v3688 = vsel %vm3652, %v3683, %v3687
        %v3689 = vrot.slane %v3507, 1
        %v3690 = vsel %vm3652, %v3685, %v3689
        %v3691 = vrot.slane %v3508, 1
        %v3692 = vsel %vm3652, %v3687, %v3691
        %v3693 = vrot.slane %v3509, 1
        %v3694 = vsel %vm3652, %v3689, %v3693
        %v3695 = vrot.slane %v3510, 1
        %v3696 = vsel %vm3652, %v3691, %v3695
        %v3697 = vrot.slane %v3511, 1
        %v3698 = vsel %vm3652, %v3693, %v3697
        %v3699 = vrot.slane %v3512, 1
        %v3700 = vsel %vm3652, %v3695, %v3699
        %v3701 = vrot.slane %v3513, 1
        %v3702 = vsel %vm3652, %v3697, %v3701
        %v3703 = vrot.slane %v3514, 1
        %v3704 = vsel %vm3652, %v3699, %v3703
        %v3705 = vrot.slane %v3515, 1
        %v3706 = vsel %vm3652, %v3701, %v3705
        %v3707 = vrot.slane %v3516, 1
        %v3708 = vsel %vm3652, %v3703, %v3707
        %v3709 = vrot.slane %v3517, 1
        %v3710 = vsel %vm3652, %v3705, %v3709
        %v3711 = vrot.slane %v3518, 1
        %v3712 = vsel %vm3652, %v3707, %v3711
        %v3713 = vrot.slane %v3519, 1
        %v3714 = vsel %vm3652, %v3709, %v3713
        %v3715 = vrot.slane %v3520, 1
        %v3716 = vsel %vm3652, %v3711, %v3715
        %v3717 = vrot.slane %v3521, 1
        %v3718 = vsel %vm3652, %v3713, %v3717
        %v3719 = vrot.slane %v3522, 1
        %v3720 = vsel %vm3652, %v3715, %v3719
        %v3721 = vrot.slane %v3523, 1
        %v3722 = vsel %vm3652, %v3717, %v3721
        %v3723 = vrot.slane %v3524, 1
        %v3724 = vsel %vm3652, %v3719, %v3723
        %v3725 = vrot.slane %v3525, 1
        %v3726 = vsel %vm3652, %v3721, %v3725
        %v3727 = vrot.slane %v3526, 1
        %v3728 = vsel %vm3652, %v3723, %v3727
        %v3729 = vrot.slane %v3527, 1
        %v3730 = vsel %vm3652, %v3725, %v3729
        %v3731 = vrot.slane %v3528, 1
        %v3732 = vsel %vm3652, %v3727, %v3731
        %v3733 = vrot.slane %v3529, 1
        %v3734 = vsel %vm3652, %v3729, %v3733
        %v3735 = vrot.slane %v3530, 1
        %v3736 = vsel %vm3652, %v3731, %v3735
        %v3737 = vrot.slane %v3531, 1
        %v3738 = vsel %vm3652, %v3733, %v3737
        %v3739 = vrot.slane %v3532, 1
        %v3740 = vsel %vm3652, %v3735, %v3739
        %v3741 = vrot.slane %v3533, 1
        %v3742 = vsel %vm3652, %v3737, %v3741
        %v3743 = vrot.slane %v3534, 1
        %v3744 = vsel %vm3652, %v3739, %v3743
        %v3745 = vrot.slane %v3535, 1
        %v3746 = vsel %vm3652, %v3741, %v3745
        %v3747 = vrot.slane %v3536, 1
        %v3748 = vsel %vm3652, %v3743, %v3747
        %v3749 = vrot.slane %v3537, 1
        %v3750 = vsel %vm3652, %v3745, %v3749
        %v3751 = vrot.slane %v3538, 1
        %v3752 = vsel %vm3652, %v3747, %v3751
        %v3753 = vrot.slane %v3539, 1
        %v3754 = vsel %vm3652, %v3749, %v3753
        %v3755 = vrot.slane %v3540, 1
        %v3756 = vsel %vm3652, %v3751, %v3755
        %v3757 = vrot.slane %v3541, 1
        %v3758 = vsel %vm3652, %v3753, %v3757
        %v3759 = vrot.slane %v3542, 1
        %v3760 = vsel %vm3652, %v3755, %v3759
        %v3761 = vrot.slane %v3543, 1
        %v3762 = vsel %vm3652, %v3757, %v3761
        %v3763 = vrot.slane %v3544, 1
        %v3764 = vsel %vm3652, %v3759, %v3763
        %v3765 = vrot.slane %v3545, 1
        %v3766 = vsel %vm3652, %v3761, %v3765
        %v3767 = vrot.slane %v3546, 1
        %v3768 = vsel %vm3652, %v3763, %v3767
        %v3769 = vrot.slane %v3547, 1
        %v3770 = vsel %vm3652, %v3765, %v3769
        %v3771 = vrot.slane %v3548, 1
        %v3772 = vsel %vm3652, %v3767, %v3771
        %v3773 = vrot.slane %v3549, 1
        %v3774 = vsel %vm3652, %v3769, %v3773
        %v3775 = vrot.slane %v3550, 1
        %v3776 = vsel %vm3652, %v3771, %v3775
        %v3777 = vrot.slane %v3551, 1
        %v3778 = vsel %vm3652, %v3773, %v3777
        %v3779 = vrot.slane %v3552, 1
        %v3780 = vsel %vm3652, %v3775, %v3779
        %v3781 = vrot.slane %v3553, 1
        %v3782 = vsel %vm3652, %v3777, %v3781
        %v3783 = vrot.slane %v3554, 1
        %v3784 = vsel %vm3652, %v3779, %v3783
        %v3785 = vrot.slane %v3555, 1
        %v3786 = vsel %vm3652, %v3781, %v3785
        %v3787 = vrot.slane %v3556, 1
        %v3788 = vsel %vm3652, %v3783, %v3787
        %v3789 = vrot.slane %v3557, 1
        %v3790 = vsel %vm3652, %v3785, %v3789
        %v3791 = vrot.slane %v3558, 1
        %v3792 = vsel %vm3652, %v3787, %v3791
        %v3793 = vrot.slane %v3559, 1
        %v3794 = vsel %vm3652, %v3789, %v3793
        %v3795 = vrot.slane %v3560, 1
        %v3796 = vsel %vm3652, %v3791, %v3795
        %v3797 = vrot.slane %v3561, 1
        %v3798 = vsel %vm3652, %v3793, %v3797
        %v3799 = vrot.slane %v3562, 1
        %v3800 = vsel %vm3652, %v3795, %v3799
        %v3801 = vrot.slane %v3563, 1
        %v3802 = vsel %vm3652, %v3797, %v3801
        %v3803 = vrot.slane %v3564, 1
        %v3804 = vsel %vm3652, %v3799, %v3803
        %v3805 = vrot.slane %v3565, 1
        %v3806 = vsel %vm3652, %v3801, %v3805
        %v3807 = vrot.slane %v3570, 1
        %v3808 = vsel %vm3652, %v3803, %v3807
        %v3809 = vrot.slane %v3571, 1
        %v3810 = vsel %vm3652, %v3805, %v3809
        %v3891 = vmax.f32 %v3488, %v3655
        %v3892 = vmax.f32 %v3489, %v3658
        %v3893 = vmax.f32 %v3490, %v3660
        %v3894 = vmax.f32 %v3491, %v3662
        %v3895 = vmax.f32 %v3492, %v3664
        %v3896 = vmax.f32 %v3493, %v3666
        %v3897 = vmax.f32 %v3494, %v3668
        %v3898 = vmax.f32 %v3495, %v3670
        %v3899 = vmax.f32 %v3496, %v3672
        %v3900 = vmax.f32 %v3497, %v3674
        %v3901 = vmax.f32 %v3498, %v3676
        %v3902 = vmax.f32 %v3499, %v3678
        %v3903 = vmax.f32 %v3500, %v3680
        %v3904 = vmax.f32 %v3501, %v3682
        %v3905 = vmax.f32 %v3502, %v3684
        %v3906 = vmax.f32 %v3503, %v3686
        %v3907 = vmax.f32 %v3504, %v3688
        %v3908 = vmax.f32 %v3505, %v3690
        %v3909 = vmax.f32 %v3506, %v3692
        %v3910 = vmax.f32 %v3507, %v3694
        %v3911 = vmax.f32 %v3508, %v3696
        %v3912 = vmax.f32 %v3509, %v3698
        %v3913 = vmax.f32 %v3510, %v3700
        %v3914 = vmax.f32 %v3511, %v3702
        %v3915 = vmax.f32 %v3512, %v3704
        %v3916 = vmax.f32 %v3513, %v3706
        %v3917 = vmax.f32 %v3514, %v3708
        %v3918 = vmax.f32 %v3515, %v3710
        %v3919 = vmax.f32 %v3516, %v3712
        %v3920 = vmax.f32 %v3517, %v3714
        %v3921 = vmax.f32 %v3518, %v3716
        %v3922 = vmax.f32 %v3519, %v3718
        %v3923 = vmax.f32 %v3520, %v3720
        %v3924 = vmax.f32 %v3521, %v3722
        %v3925 = vmax.f32 %v3522, %v3724
        %v3926 = vmax.f32 %v3523, %v3726
        %v3927 = vmax.f32 %v3524, %v3728
        %v3928 = vmax.f32 %v3525, %v3730
        %v3929 = vmax.f32 %v3526, %v3732
        %v3930 = vmax.f32 %v3527, %v3734
        %v3931 = vmax.f32 %v3528, %v3736
        %v3932 = vmax.f32 %v3529, %v3738
        %v3933 = vmax.f32 %v3530, %v3740
        %v3934 = vmax.f32 %v3531, %v3742
        %v3935 = vmax.f32 %v3532, %v3744
        %v3936 = vmax.f32 %v3533, %v3746
        %v3937 = vmax.f32 %v3534, %v3748
        %v3938 = vmax.f32 %v3535, %v3750
        %v3939 = vmax.f32 %v3536, %v3752
        %v3940 = vmax.f32 %v3537, %v3754
        %v3941 = vmax.f32 %v3538, %v3756
        %v3942 = vmax.f32 %v3539, %v3758
        %v3943 = vmax.f32 %v3540, %v3760
        %v3944 = vmax.f32 %v3541, %v3762
        %v3945 = vmax.f32 %v3542, %v3764
        %v3946 = vmax.f32 %v3543, %v3766
        %v3947 = vmax.f32 %v3544, %v3768
        %v3948 = vmax.f32 %v3545, %v3770
        %v3949 = vmax.f32 %v3546, %v3772
        %v3950 = vmax.f32 %v3547, %v3774
        %v3951 = vmax.f32 %v3548, %v3776
        %v3952 = vmax.f32 %v3549, %v3778
        %v3953 = vmax.f32 %v3550, %v3780
        %v3954 = vmax.f32 %v3551, %v3782
        %v3955 = vmax.f32 %v3552, %v3784
        %v3956 = vmax.f32 %v3553, %v3786
        %v3957 = vmax.f32 %v3554, %v3788
        %v3958 = vmax.f32 %v3555, %v3790
        %v3959 = vmax.f32 %v3556, %v3792
        %v3960 = vmax.f32 %v3557, %v3794
        %v3961 = vmax.f32 %v3558, %v3796
        %v3962 = vmax.f32 %v3559, %v3798
        %v3963 = vmax.f32 %v3560, %v3800
        %v3964 = vmax.f32 %v3561, %v3802
        %v3965 = vmax.f32 %v3562, %v3804
        %v3966 = vmax.f32 %v3563, %v3806
        %v3967 = vmax.f32 %v3564, %v3808
        %v3968 = vmax.f32 %v3565, %v3810
        %v3969 = vmax.f32 %v3566, %v3807
        %v3970 = vmax.f32 %v3567, %v3809
        %v3971 = vmax.f32 %v3891, %v3892
        %v3972 = vmax.f32 %v3893, %v3894
        %v3973 = vmax.f32 %v3895, %v3896
        %v3974 = vmax.f32 %v3897, %v3898
        %v3975 = vmax.f32 %v3899, %v3900
        %v3976 = vmax.f32 %v3901, %v3902
        %v3977 = vmax.f32 %v3903, %v3904
        %v3978 = vmax.f32 %v3905, %v3906
        %v3979 = vmax.f32 %v3907, %v3908
        %v3980 = vmax.f32 %v3909, %v3910
        %v3981 = vmax.f32 %v3911, %v3912
        %v3982 = vmax.f32 %v3913, %v3914
        %v3983 = vmax.f32 %v3915, %v3916
        %v3984 = vmax.f32 %v3917, %v3918
        %v3985 = vmax.f32 %v3919, %v3920
        %v3986 = vmax.f32 %v3921, %v3922
        %v3987 = vmax.f32 %v3923, %v3924
        %v3988 = vmax.f32 %v3925, %v3926
        %v3989 = vmax.f32 %v3927, %v3928
        %v3990 = vmax.f32 %v3929, %v3930
        %v3991 = vmax.f32 %v3931, %v3932
        %v3992 = vmax.f32 %v3933, %v3934
        %v3993 = vmax.f32 %v3935, %v3936
        %v3994 = vmax.f32 %v3937, %v3938
        %v3995 = vmax.f32 %v3939, %v3940
        %v3996 = vmax.f32 %v3941, %v3942
        %v3997 = vmax.f32 %v3943, %v3944
        %v3998 = vmax.f32 %v3945, %v3946
        %v3999 = vmax.f32 %v3947, %v3948
        %v4000 = vmax.f32 %v3949, %v3950
        %v4001 = vmax.f32 %v3951, %v3952
        %v4002 = vmax.f32 %v3953, %v3954
        %v4003 = vmax.f32 %v3955, %v3956
        %v4004 = vmax.f32 %v3957, %v3958
        %v4005 = vmax.f32 %v3959, %v3960
        %v4006 = vmax.f32 %v3961, %v3962
        %v4007 = vmax.f32 %v3963, %v3964
        %v4008 = vmax.f32 %v3965, %v3966
        %v4009 = vmax.f32 %v3967, %v3968
        %v4010 = vmax.f32 %v3969, %v3970
        %4011 = vst [vmem:[#allocation3] sm:$0xff] %v3971
        %4012 = vst [vmem:[#allocation3 + $0x8] sm:$0xff] %v3972
        %4013 = vst [vmem:[#allocation3 + $0x10] sm:$0xff] %v3973
        %4014 = vst [vmem:[#allocation3 + $0x18] sm:$0xff] %v3974
        %4015 = vst [vmem:[#allocation3 + $0x20] sm:$0xff] %v3975
        %4016 = vst [vmem:[#allocation3 + $0x28] sm:$0xff] %v3976
        %4017 = vst [vmem:[#allocation3 + $0x30] sm:$0xff] %v3977
        %4018 = vst [vmem:[#allocation3 + $0x38] sm:$0xff] %v3978
        %4019 = vst [vmem:[#allocation3 + $0x40] sm:$0xff] %v3979
        %4020 = vst [vmem:[#allocation3 + $0x48] sm:$0xff] %v3980
        %4021 = vst [vmem:[#allocation3 + $0x50] sm:$0xff] %v3981
        %4022 = vst [vmem:[#allocation3 + $0x58] sm:$0xff] %v3982
        %4023 = vst [vmem:[#allocation3 + $0x60] sm:$0xff] %v3983
        %4024 = vst [vmem:[#allocation3 + $0x68] sm:$0xff] %v3984
        %4025 = vst [vmem:[#allocation3 + $0x70] sm:$0xff] %v3985
        %4026 = vst [vmem:[#allocation3 + $0x78] sm:$0xff] %v3986
        %4027 = vst [vmem:[#allocation3 + $0x80] sm:$0xff] %v3987
        %4028 = vst [vmem:[#allocation3 + $0x88] sm:$0xff] %v3988
        %4029 = vst [vmem:[#allocation3 + $0x90] sm:$0xff] %v3989
        %4030 = vst [vmem:[#allocation3 + $0x98] sm:$0xff] %v3990
        %4031 = vst [vmem:[#allocation3 + $0xa0] sm:$0xff] %v3991
        %4032 = vst [vmem:[#allocation3 + $0xa8] sm:$0xff] %v3992
        %4033 = vst [vmem:[#allocation3 + $0xb0] sm:$0xff] %v3993
        %4034 = vst [vmem:[#allocation3 + $0xb8] sm:$0xff] %v3994
        %4035 = vst [vmem:[#allocation3 + $0xc0] sm:$0xff] %v3995
        %4036 = vst [vmem:[#allocation3 + $0xc8] sm:$0xff] %v3996
        %4037 = vst [vmem:[#allocation3 + $0xd0] sm:$0xff] %v3997
        %4038 = vst [vmem:[#allocation3 + $0xd8] sm:$0xff] %v3998
        %4039 = vst [vmem:[#allocation3 + $0xe0] sm:$0xff] %v3999
        %4040 = vst [vmem:[#allocation3 + $0xe8] sm:$0xff] %v4000
        %4041 = vst [vmem:[#allocation3 + $0xf0] sm:$0xff] %v4001
        %4042 = vst [vmem:[#allocation3 + $0xf8] sm:$0xff] %v4002
        %4043 = vst [vmem:[#allocation3 + $0x100] sm:$0xff] %v4003
        %4044 = vst [vmem:[#allocation3 + $0x108] sm:$0xff] %v4004
        %4045 = vst [vmem:[#allocation3 + $0x110] sm:$0xff] %v4005
        %4046 = vst [vmem:[#allocation3 + $0x118] sm:$0xff] %v4006
        %4047 = vst [vmem:[#allocation3 + $0x120] sm:$0xff] %v4007
        %4048 = vst [vmem:[#allocation3 + $0x128] sm:$0xff] %v4008
        %4049 = vst [vmem:[#allocation3 + $0x130] sm:$0xff] %v4009
        %4050 = vst [vmem:[#allocation3 + $0x138] sm:$0x7] %v4010
        %v4051 = vld [vmem:[#allocation3] sm:$0xff]
        %v4052 = vld [vmem:[#allocation3 + $0x8] sm:$0xff]
        %v4053 = vld [vmem:[#allocation3 + $0x10] sm:$0xff]
        %v4054 = vld [vmem:[#allocation3 + $0x18] sm:$0xff]
        %v4055 = vld [vmem:[#allocation3 + $0x20] sm:$0xff]
        %v4056 = vld [vmem:[#allocation3 + $0x28] sm:$0xff]
        %v4057 = vld [vmem:[#allocation3 + $0x30] sm:$0xff]
        %v4058 = vld [vmem:[#allocation3 + $0x38] sm:$0xff]
        %v4059 = vld [vmem:[#allocation3 + $0x40] sm:$0xff]
        %v4060 = vld [vmem:[#allocation3 + $0x48] sm:$0xff]
        %v4061 = vld [vmem:[#allocation3 + $0x50] sm:$0xff]
        %v4062 = vld [vmem:[#allocation3 + $0x58] sm:$0xff]
        %v4063 = vld [vmem:[#allocation3 + $0x60] sm:$0xff]
        %v4064 = vld [vmem:[#allocation3 + $0x68] sm:$0xff]
        %v4065 = vld [vmem:[#allocation3 + $0x70] sm:$0xff]
        %v4066 = vld [vmem:[#allocation3 + $0x78] sm:$0xff]
        %v4067 = vld [vmem:[#allocation3 + $0x80] sm:$0xff]
        %v4068 = vld [vmem:[#allocation3 + $0x88] sm:$0xff]
        %v4069 = vld [vmem:[#allocation3 + $0x90] sm:$0xff]
        %v4070 = vld [vmem:[#allocation3 + $0x98] sm:$0xff]
        %v4071 = vld [vmem:[#allocation3 + $0xa0] sm:$0xff]
        %v4072 = vld [vmem:[#allocation3 + $0xa8] sm:$0xff]
        %v4073 = vld [vmem:[#allocation3 + $0xb0] sm:$0xff]
        %v4074 = vld [vmem:[#allocation3 + $0xb8] sm:$0xff]
        %v4075 = vld [vmem:[#allocation3 + $0xc0] sm:$0xff]
        %v4076 = vld [vmem:[#allocation3 + $0xc8] sm:$0xff]
        %v4077 = vld [vmem:[#allocation3 + $0xd0] sm:$0xff]
        %v4078 = vld [vmem:[#allocation3 + $0xd8] sm:$0xff]
        %v4079 = vld [vmem:[#allocation3 + $0xe0] sm:$0xff]
        %v4080 = vld [vmem:[#allocation3 + $0xe8] sm:$0xff]
        %v4081 = vld [vmem:[#allocation3 + $0xf0] sm:$0xff]
        %v4082 = vld [vmem:[#allocation3 + $0xf8] sm:$0xff]
        %v4083 = vld [vmem:[#allocation3 + $0x100] sm:$0xff]
        %v4084 = vld [vmem:[#allocation3 + $0x108] sm:$0xff]
        %v4085 = vld [vmem:[#allocation3 + $0x110] sm:$0xff]
        %v4086 = vld [vmem:[#allocation3 + $0x118] sm:$0xff]
        %v4087 = vld [vmem:[#allocation3 + $0x120] sm:$0xff]
        %v4088 = vld [vmem:[#allocation3 + $0x128] sm:$0xff]
        %v4089 = vld [vmem:[#allocation3 + $0x130] sm:$0x7]
        %v4090 = vld [vmem:[%s3] sm:$0xff]
        %v4091 = vld [vmem:[%s3 + $0x8] sm:$0xff]
        %v4092 = vld [vmem:[%s3 + $0x10] sm:$0xff]
        %v4093 = vld [vmem:[%s3 + $0x18] sm:$0xff]
        %v4094 = vld [vmem:[%s3 + $0x20] sm:$0xff]
        %v4095 = vld [vmem:[%s3 + $0x28] sm:$0xff]
        %v4096 = vld [vmem:[%s3 + $0x30] sm:$0xff]
        %v4097 = vld [vmem:[%s3 + $0x38] sm:$0xff]
        %v4098 = vld [vmem:[%s3 + $0x40] sm:$0xff]
        %v4099 = vld [vmem:[%s3 + $0x48] sm:$0xff]
        %v4100 = vld [vmem:[%s3 + $0x50] sm:$0xff]
        %v4101 = vld [vmem:[%s3 + $0x58] sm:$0xff]
        %v4102 = vld [vmem:[%s3 + $0x60] sm:$0xff]
        %v4103 = vld [vmem:[%s3 + $0x68] sm:$0xff]
        %v4104 = vld [vmem:[%s3 + $0x70] sm:$0xff]
        %v4105 = vld [vmem:[%s3 + $0x78] sm:$0xff]
        %v4106 = vld [vmem:[%s3 + $0x80] sm:$0xff]
        %v4107 = vld [vmem:[%s3 + $0x88] sm:$0xff]
        %v4108 = vld [vmem:[%s3 + $0x90] sm:$0xff]
        %v4109 = vld [vmem:[%s3 + $0x98] sm:$0xff]
        %v4110 = vld [vmem:[%s3 + $0xa0] sm:$0xff]
        %v4111 = vld [vmem:[%s3 + $0xa8] sm:$0xff]
        %v4112 = vld [vmem:[%s3 + $0xb0] sm:$0xff]
        %v4113 = vld [vmem:[%s3 + $0xb8] sm:$0xff]
        %v4114 = vld [vmem:[%s3 + $0xc0] sm:$0xff]
        %v4115 = vld [vmem:[%s3 + $0xc8] sm:$0xff]
        %v4116 = vld [vmem:[%s3 + $0xd0] sm:$0xff]
        %v4117 = vld [vmem:[%s3 + $0xd8] sm:$0xff]
        %v4118 = vld [vmem:[%s3 + $0xe0] sm:$0xff]
        %v4119 = vld [vmem:[%s3 + $0xe8] sm:$0xff]
        %v4120 = vld [vmem:[%s3 + $0xf0] sm:$0xff]
        %v4121 = vld [vmem:[%s3 + $0xf8] sm:$0xff]
        %4122 = vmatprep.subr.mxu0 %v4121
        %4123 = vmatpush1.msra.mxu0 %v4120
        %4124 = vmatprep.subr.mxu0 %v4119
        %4125 = vmatpush1.msra.mxu0 %v4118
        %4126 = vmatprep.subr.mxu0 %v4117
        %4127 = vmatpush1.msra.mxu0 %v4116
        %4128 = vmatprep.subr.mxu0 %v4115
        %4129 = vmatpush1.msra.mxu0 %v4114
        %4130 = vmatprep.subr.mxu0 %v4113
        %4131 = vmatpush1.msra.mxu0 %v4112
        %4132 = vmatprep.subr.mxu0 %v4111
        %4133 = vmatpush1.msra.mxu0 %v4110
        %4134 = vmatprep.subr.mxu0 %v4109
        %4135 = vmatpush1.msra.mxu0 %v4108
        %4136 = vmatprep.subr.mxu0 %v4107
        %4137 = vmatpush1.msra.mxu0 %v4106
        %4138 = vmatprep.subr.mxu0 %v4105
        %4139 = vmatpush1.msra.mxu0 %v4104
        %4140 = vmatprep.subr.mxu0 %v4103
        %4141 = vmatpush1.msra.mxu0 %v4102
        %4142 = vmatprep.subr.mxu0 %v4101
        %4143 = vmatpush1.msra.mxu0 %v4100
        %4144 = vmatprep.subr.mxu0 %v4099
        %4145 = vmatpush1.msra.mxu0 %v4098
        %4146 = vmatprep.subr.mxu0 %v4097
        %4147 = vmatpush1.msra.mxu0 %v4096
        %4148 = vmatprep.subr.mxu0 %v4095
        %4149 = vmatpush1.msra.mxu0 %v4094
        %4150 = vmatprep.subr.mxu0 %v4093
        %4151 = vmatpush1.msra.mxu0 %v4092
        %4152 = vmatprep.subr.mxu0 %v4091
        %4153 = vmatpush1.msra.mxu0 %v4090
        %4154 = vmatprep.subr.mxu0 0.0
        %4155 = vmatpush2.msra.mxu0 0.0
        %4156 = vmatprep.subr.mxu0 0.0
        %4157 = vmatpush2.msra.mxu0 0.0
        %4158 = vmatprep.subr.mxu0 0.0
        %4159 = vmatpush2.msra.mxu0 0.0
        %4160 = vmatprep.subr.mxu0 0.0
        %4161 = vmatpush2.msra.mxu0 0.0
        %4162 = vmatprep.subr.mxu0 0.0
        %4163 = vmatpush2.msra.mxu0 0.0
        %4164 = vmatprep.subr.mxu0 0.0
        %4165 = vmatpush2.msra.mxu0 0.0
        %4166 = vmatprep.subr.mxu0 0.0
        %4167 = vmatpush2.msra.mxu0 0.0
        %4168 = vmatprep.subr.mxu0 0.0
        %4169 = vmatpush2.msra.mxu0 0.0
        %4170 = vmatprep.subr.mxu0 0.0
        %4171 = vmatpush2.msra.mxu0 0.0
        %4172 = vmatprep.subr.mxu0 0.0
        %4173 = vmatpush2.msra.mxu0 0.0
        %4174 = vmatprep.subr.mxu0 0.0
        %4175 = vmatpush2.msra.mxu0 0.0
        %4176 = vmatprep.subr.mxu0 0.0
        %4177 = vmatpush2.msra.mxu0 0.0
        %4178 = vmatprep.subr.mxu0 0.0
        %4179 = vmatpush2.msra.mxu0 0.0
        %4180 = vmatprep.subr.mxu0 0.0
        %4181 = vmatpush2.msra.mxu0 0.0
        %4182 = vmatprep.subr.mxu0 0.0
        %4183 = vmatpush2.msra.mxu0 0.0
        %4184 = vmatprep.subr.mxu0 0.0
        %4185 = vmatpush2.msra.mxu0 0.0
        %4186 = vmatprep.mubr.f32.mxu0 0.0
        %4187 = vmatmul.mubr.f32.gmra.mxu0 %v4051
        %v4188 = vpop.f32.mrf.mxu0
        %v4189 = vadd.f32 0.0, %v4188
        %v4190 = vpop.f32.mrf.mxu0
        %v4191 = vadd.f32 0.0, %v4190
        %4192 = vmatprep.mubr.f32.mxu0 0.0
        %4193 = vmatmul.mubr.f32.gmra.mxu0 %v4052
        %v4194 = vpop.f32.mrf.mxu0
        %v4195 = vadd.f32 0.0, %v4194
        %v4196 = vpop.f32.mrf.mxu0
        %v4197 = vadd.f32 0.0, %v4196
        %4198 = vmatprep.mubr.f32.mxu0 0.0
        %4199 = vmatmul.mubr.f32.gmra.mxu0 %v4053
        %v4200 = vpop.f32.mrf.mxu0
        %v4201 = vadd.f32 0.0, %v4200
        %v4202 = vpop.f32.mrf.mxu0
        %v4203 = vadd.f32 0.0, %v4202
        %4204 = vmatprep.mubr.f32.mxu0 0.0
        %4205 = vmatmul.mubr.f32.gmra.mxu0 %v4054
        %v4206 = vpop.f32.mrf.mxu0
        %v4207 = vadd.f32 0.0, %v4206
        %v4208 = vpop.f32.mrf.mxu0
        %v4209 = vadd.f32 0.0, %v4208
        %4210 = vmatprep.mubr.f32.mxu0 0.0
        %4211 = vmatmul.mubr.f32.gmra.mxu0 %v4055
        %v4212 = vpop.f32.mrf.mxu0
        %v4213 = vadd.f32 0.0, %v4212
        %v4214 = vpop.f32.mrf.mxu0
        %v4215 = vadd.f32 0.0, %v4214
        %4216 = vmatprep.mubr.f32.mxu0 0.0
        %4217 = vmatmul.mubr.f32.gmra.mxu0 %v4056
        %v4218 = vpop.f32.mrf.mxu0
        %v4219 = vadd.f32 0.0, %v4218
        %v4220 = vpop.f32.mrf.mxu0
        %v4221 = vadd.f32 0.0, %v4220
        %4222 = vmatprep.mubr.f32.mxu0 0.0
        %4223 = vmatmul.mubr.f32.gmra.mxu0 %v4057
        %v4224 = vpop.f32.mrf.mxu0
        %v4225 = vadd.f32 0.0, %v4224
        %v4226 = vpop.f32.mrf.mxu0
        %v4227 = vadd.f32 0.0, %v4226
        %4228 = vmatprep.mubr.f32.mxu0 0.0
        %4229 = vmatmul.mubr.f32.gmra.mxu0 %v4058
        %v4230 = vpop.f32.mrf.mxu0
        %v4231 = vadd.f32 0.0, %v4230
        %v4232 = vpop.f32.mrf.mxu0
        %v4233 = vadd.f32 0.0, %v4232
        %4234 = vmatprep.mubr.f32.mxu0 0.0
        %4235 = vmatmul.mubr.f32.gmra.mxu0 %v4059
        %v4236 = vpop.f32.mrf.mxu0
        %v4237 = vadd.f32 0.0, %v4236
        %v4238 = vpop.f32.mrf.mxu0
        %v4239 = vadd.f32 0.0, %v4238
        %4240 = vmatprep.mubr.f32.mxu0 0.0
        %4241 = vmatmul.mubr.f32.gmra.mxu0 %v4060
        %v4242 = vpop.f32.mrf.mxu0
        %v4243 = vadd.f32 0.0, %v4242
        %v4244 = vpop.f32.mrf.mxu0
        %v4245 = vadd.f32 0.0, %v4244
        %4246 = vmatprep.mubr.f32.mxu0 0.0
        %4247 = vmatmul.mubr.f32.gmra.mxu0 %v4061
        %v4248 = vpop.f32.mrf.mxu0
        %v4249 = vadd.f32 0.0, %v4248
        %v4250 = vpop.f32.mrf.mxu0
        %v4251 = vadd.f32 0.0, %v4250
        %4252 = vmatprep.mubr.f32.mxu0 0.0
        %4253 = vmatmul.mubr.f32.gmra.mxu0 %v4062
        %v4254 = vpop.f32.mrf.mxu0
        %v4255 = vadd.f32 0.0, %v4254
        %v4256 = vpop.f32.mrf.mxu0
        %v4257 = vadd.f32 0.0, %v4256
        %4258 = vmatprep.mubr.f32.mxu0 0.0
        %4259 = vmatmul.mubr.f32.gmra.mxu0 %v4063
        %v4260 = vpop.f32.mrf.mxu0
        %v4261 = vadd.f32 0.0, %v4260
        %v4262 = vpop.f32.mrf.mxu0
        %v4263 = vadd.f32 0.0, %v4262
        %4264 = vmatprep.mubr.f32.mxu0 0.0
        %4265 = vmatmul.mubr.f32.gmra.mxu0 %v4064
        %v4266 = vpop.f32.mrf.mxu0
        %v4267 = vadd.f32 0.0, %v4266
        %v4268 = vpop.f32.mrf.mxu0
        %v4269 = vadd.f32 0.0, %v4268
        %4270 = vmatprep.mubr.f32.mxu0 0.0
        %4271 = vmatmul.mubr.f32.gmra.mxu0 %v4065
        %v4272 = vpop.f32.mrf.mxu0
        %v4273 = vadd.f32 0.0, %v4272
        %v4274 = vpop.f32.mrf.mxu0
        %v4275 = vadd.f32 0.0, %v4274
        %4276 = vmatprep.mubr.f32.mxu0 0.0
        %4277 = vmatmul.mubr.f32.gmra.mxu0 %v4066
        %v4278 = vpop.f32.mrf.mxu0
        %v4279 = vadd.f32 0.0, %v4278
        %v4280 = vpop.f32.mrf.mxu0
        %v4281 = vadd.f32 0.0, %v4280
        %4282 = vmatprep.mubr.f32.mxu0 0.0
        %4283 = vmatmul.mubr.f32.gmra.mxu0 %v4067
        %v4284 = vpop.f32.mrf.mxu0
        %v4285 = vadd.f32 0.0, %v4284
        %v4286 = vpop.f32.mrf.mxu0
        %v4287 = vadd.f32 0.0, %v4286
        %4288 = vmatprep.mubr.f32.mxu0 0.0
        %4289 = vmatmul.mubr.f32.gmra.mxu0 %v4068
        %v4290 = vpop.f32.mrf.mxu0
        %v4291 = vadd.f32 0.0, %v4290
        %v4292 = vpop.f32.mrf.mxu0
        %v4293 = vadd.f32 0.0, %v4292
        %4294 = vmatprep.mubr.f32.mxu0 0.0
        %4295 = vmatmul.mubr.f32.gmra.mxu0 %v4069
        %v4296 = vpop.f32.mrf.mxu0
        %v4297 = vadd.f32 0.0, %v4296
        %v4298 = vpop.f32.mrf.mxu0
        %v4299 = vadd.f32 0.0, %v4298
        %4300 = vmatprep.mubr.f32.mxu0 0.0
        %4301 = vmatmul.mubr.f32.gmra.mxu0 %v4070
        %v4302 = vpop.f32.mrf.mxu0
        %v4303 = vadd.f32 0.0, %v4302
        %v4304 = vpop.f32.mrf.mxu0
        %v4305 = vadd.f32 0.0, %v4304
        %4306 = vmatprep.mubr.f32.mxu0 0.0
        %4307 = vmatmul.mubr.f32.gmra.mxu0 %v4071
        %v4308 = vpop.f32.mrf.mxu0
        %v4309 = vadd.f32 0.0, %v4308
        %v4310 = vpop.f32.mrf.mxu0
        %v4311 = vadd.f32 0.0, %v4310
        %4312 = vmatprep.mubr.f32.mxu0 0.0
        %4313 = vmatmul.mubr.f32.gmra.mxu0 %v4072
        %v4314 = vpop.f32.mrf.mxu0
        %v4315 = vadd.f32 0.0, %v4314
        %v4316 = vpop.f32.mrf.mxu0
        %v4317 = vadd.f32 0.0, %v4316
        %4318 = vmatprep.mubr.f32.mxu0 0.0
        %4319 = vmatmul.mubr.f32.gmra.mxu0 %v4073
        %v4320 = vpop.f32.mrf.mxu0
        %v4321 = vadd.f32 0.0, %v4320
        %v4322 = vpop.f32.mrf.mxu0
        %v4323 = vadd.f32 0.0, %v4322
        %4324 = vmatprep.mubr.f32.mxu0 0.0
        %4325 = vmatmul.mubr.f32.gmra.mxu0 %v4074
        %v4326 = vpop.f32.mrf.mxu0
        %v4327 = vadd.f32 0.0, %v4326
        %v4328 = vpop.f32.mrf.mxu0
        %v4329 = vadd.f32 0.0, %v4328
        %4330 = vmatprep.mubr.f32.mxu0 0.0
        %4331 = vmatmul.mubr.f32.gmra.mxu0 %v4075
        %v4332 = vpop.f32.mrf.mxu0
        %v4333 = vadd.f32 0.0, %v4332
        %v4334 = vpop.f32.mrf.mxu0
        %v4335 = vadd.f32 0.0, %v4334
        %4336 = vmatprep.mubr.f32.mxu0 0.0
        %4337 = vmatmul.mubr.f32.gmra.mxu0 %v4076
        %v4338 = vpop.f32.mrf.mxu0
        %v4339 = vadd.f32 0.0, %v4338
        %v4340 = vpop.f32.mrf.mxu0
        %v4341 = vadd.f32 0.0, %v4340
        %4342 = vmatprep.mubr.f32.mxu0 0.0
        %4343 = vmatmul.mubr.f32.gmra.mxu0 %v4077
        %v4344 = vpop.f32.mrf.mxu0
        %v4345 = vadd.f32 0.0, %v4344
        %v4346 = vpop.f32.mrf.mxu0
        %v4347 = vadd.f32 0.0, %v4346
        %4348 = vmatprep.mubr.f32.mxu0 0.0
        %4349 = vmatmul.mubr.f32.gmra.mxu0 %v4078
        %v4350 = vpop.f32.mrf.mxu0
        %v4351 = vadd.f32 0.0, %v4350
        %v4352 = vpop.f32.mrf.mxu0
        %v4353 = vadd.f32 0.0, %v4352
        %4354 = vmatprep.mubr.f32.mxu0 0.0
        %4355 = vmatmul.mubr.f32.gmra.mxu0 %v4079
        %v4356 = vpop.f32.mrf.mxu0
        %v4357 = vadd.f32 0.0, %v4356
        %v4358 = vpop.f32.mrf.mxu0
        %v4359 = vadd.f32 0.0, %v4358
        %4360 = vmatprep.mubr.f32.mxu0 0.0
        %4361 = vmatmul.mubr.f32.gmra.mxu0 %v4080
        %v4362 = vpop.f32.mrf.mxu0
        %v4363 = vadd.f32 0.0, %v4362
        %v4364 = vpop.f32.mrf.mxu0
        %v4365 = vadd.f32 0.0, %v4364
        %4366 = vmatprep.mubr.f32.mxu0 0.0
        %4367 = vmatmul.mubr.f32.gmra.mxu0 %v4081
        %v4368 = vpop.f32.mrf.mxu0
        %v4369 = vadd.f32 0.0, %v4368
        %v4370 = vpop.f32.mrf.mxu0
        %v4371 = vadd.f32 0.0, %v4370
        %4372 = vmatprep.mubr.f32.mxu0 0.0
        %4373 = vmatmul.mubr.f32.gmra.mxu0 %v4082
        %v4374 = vpop.f32.mrf.mxu0
        %v4375 = vadd.f32 0.0, %v4374
        %v4376 = vpop.f32.mrf.mxu0
        %v4377 = vadd.f32 0.0, %v4376
        %4378 = vmatprep.mubr.f32.mxu0 0.0
        %4379 = vmatmul.mubr.f32.gmra.mxu0 %v4083
        %v4380 = vpop.f32.mrf.mxu0
        %v4381 = vadd.f32 0.0, %v4380
        %v4382 = vpop.f32.mrf.mxu0
        %v4383 = vadd.f32 0.0, %v4382
        %4384 = vmatprep.mubr.f32.mxu0 0.0
        %4385 = vmatmul.mubr.f32.gmra.mxu0 %v4084
        %v4386 = vpop.f32.mrf.mxu0
        %v4387 = vadd.f32 0.0, %v4386
        %v4388 = vpop.f32.mrf.mxu0
        %v4389 = vadd.f32 0.0, %v4388
        %4390 = vmatprep.mubr.f32.mxu0 0.0
        %4391 = vmatmul.mubr.f32.gmra.mxu0 %v4085
        %v4392 = vpop.f32.mrf.mxu0
        %v4393 = vadd.f32 0.0, %v4392
        %v4394 = vpop.f32.mrf.mxu0
        %v4395 = vadd.f32 0.0, %v4394
        %4396 = vmatprep.mubr.f32.mxu0 0.0
        %4397 = vmatmul.mubr.f32.gmra.mxu0 %v4086
        %v4398 = vpop.f32.mrf.mxu0
        %v4399 = vadd.f32 0.0, %v4398
        %v4400 = vpop.f32.mrf.mxu0
        %v4401 = vadd.f32 0.0, %v4400
        %4402 = vmatprep.mubr.f32.mxu0 0.0
        %4403 = vmatmul.mubr.f32.gmra.mxu0 %v4087
        %v4404 = vpop.f32.mrf.mxu0
        %v4405 = vadd.f32 0.0, %v4404
        %v4406 = vpop.f32.mrf.mxu0
        %v4407 = vadd.f32 0.0, %v4406
        %4408 = vmatprep.mubr.f32.mxu0 0.0
        %4409 = vmatmul.mubr.f32.gmra.mxu0 %v4088
        %v4410 = vpop.f32.mrf.mxu0
        %v4411 = vadd.f32 0.0, %v4410
        %v4412 = vpop.f32.mrf.mxu0
        %v4413 = vadd.f32 0.0, %v4412
        %4414 = vmatprep.mubr.f32.mxu0 0.0
        %4415 = vmatmul.mubr.f32.gmra.mxu0 %v4089
        %v4416 = vpop.f32.mrf.mxu0
        %v4417 = vadd.f32 0.0, %v4416
        %v4418 = vpop.f32.mrf.mxu0
        %v4419 = vadd.f32 0.0, %v4418
        %4420 = vdwg.mxu0
        %4421 = vst [vmem:[#allocation4] sm:$0xff] %v4189
        %4422 = vst [vmem:[#allocation4 + $0x8] sm:$0xff] %v4191
        %4423 = vst [vmem:[#allocation4 + $0x10] sm:$0xff] %v4195
        %4424 = vst [vmem:[#allocation4 + $0x18] sm:$0xff] %v4197
        %4425 = vst [vmem:[#allocation4 + $0x20] sm:$0xff] %v4201
        %4426 = vst [vmem:[#allocation4 + $0x28] sm:$0xff] %v4203
        %4427 = vst [vmem:[#allocation4 + $0x30] sm:$0xff] %v4207
        %4428 = vst [vmem:[#allocation4 + $0x38] sm:$0xff] %v4209
        %4429 = vst [vmem:[#allocation4 + $0x40] sm:$0xff] %v4213
        %4430 = vst [vmem:[#allocation4 + $0x48] sm:$0xff] %v4215
        %4431 = vst [vmem:[#allocation4 + $0x50] sm:$0xff] %v4219
        %4432 = vst [vmem:[#allocation4 + $0x58] sm:$0xff] %v4221
        %4433 = vst [vmem:[#allocation4 + $0x60] sm:$0xff] %v4225
        %4434 = vst [vmem:[#allocation4 + $0x68] sm:$0xff] %v4227
        %4435 = vst [vmem:[#allocation4 + $0x70] sm:$0xff] %v4231
        %4436 = vst [vmem:[#allocation4 + $0x78] sm:$0xff] %v4233
        %4437 = vst [vmem:[#allocation4 + $0x80] sm:$0xff] %v4237
        %4438 = vst [vmem:[#allocation4 + $0x88] sm:$0xff] %v4239
        %4439 = vst [vmem:[#allocation4 + $0x90] sm:$0xff] %v4243
        %4440 = vst [vmem:[#allocation4 + $0x98] sm:$0xff] %v4245
        %4441 = vst [vmem:[#allocation4 + $0xa0] sm:$0xff] %v4249
        %4442 = vst [vmem:[#allocation4 + $0xa8] sm:$0xff] %v4251
        %4443 = vst [vmem:[#allocation4 + $0xb0] sm:$0xff] %v4255
        %4444 = vst [vmem:[#allocation4 + $0xb8] sm:$0xff] %v4257
        %4445 = vst [vmem:[#allocation4 + $0xc0] sm:$0xff] %v4261
        %4446 = vst [vmem:[#allocation4 + $0xc8] sm:$0xff] %v4263
        %4447 = vst [vmem:[#allocation4 + $0xd0] sm:$0xff] %v4267
        %4448 = vst [vmem:[#allocation4 + $0xd8] sm:$0xff] %v4269
        %4449 = vst [vmem:[#allocation4 + $0xe0] sm:$0xff] %v4273
        %4450 = vst [vmem:[#allocation4 + $0xe8] sm:$0xff] %v4275
        %4451 = vst [vmem:[#allocation4 + $0xf0] sm:$0xff] %v4279
        %4452 = vst [vmem:[#allocation4 + $0xf8] sm:$0xff] %v4281
        %4453 = vst [vmem:[#allocation4 + $0x100] sm:$0xff] %v4285
        %4454 = vst [vmem:[#allocation4 + $0x108] sm:$0xff] %v4287
        %4455 = vst [vmem:[#allocation4 + $0x110] sm:$0xff] %v4291
        %4456 = vst [vmem:[#allocation4 + $0x118] sm:$0xff] %v4293
        %4457 = vst [vmem:[#allocation4 + $0x120] sm:$0xff] %v4297
        %4458 = vst [vmem:[#allocation4 + $0x128] sm:$0xff] %v4299
        %4459 = vst [vmem:[#allocation4 + $0x130] sm:$0xff] %v4303
        %4460 = vst [vmem:[#allocation4 + $0x138] sm:$0xff] %v4305
        %4461 = vst [vmem:[#allocation4 + $0x140] sm:$0xff] %v4309
        %4462 = vst [vmem:[#allocation4 + $0x148] sm:$0xff] %v4311
        %4463 = vst [vmem:[#allocation4 + $0x150] sm:$0xff] %v4315
        %4464 = vst [vmem:[#allocation4 + $0x158] sm:$0xff] %v4317
        %4465 = vst [vmem:[#allocation4 + $0x160] sm:$0xff] %v4321
        %4466 = vst [vmem:[#allocation4 + $0x168] sm:$0xff] %v4323
        %4467 = vst [vmem:[#allocation4 + $0x170] sm:$0xff] %v4327
        %4468 = vst [vmem:[#allocation4 + $0x178] sm:$0xff] %v4329
        %4469 = vst [vmem:[#allocation4 + $0x180] sm:$0xff] %v4333
        %4470 = vst [vmem:[#allocation4 + $0x188] sm:$0xff] %v4335
        %4471 = vst [vmem:[#allocation4 + $0x190] sm:$0xff] %v4339
        %4472 = vst [vmem:[#allocation4 + $0x198] sm:$0xff] %v4341
        %4473 = vst [vmem:[#allocation4 + $0x1a0] sm:$0xff] %v4345
        %4474 = vst [vmem:[#allocation4 + $0x1a8] sm:$0xff] %v4347
        %4475 = vst [vmem:[#allocation4 + $0x1b0] sm:$0xff] %v4351
        %4476 = vst [vmem:[#allocation4 + $0x1b8] sm:$0xff] %v4353
        %4477 = vst [vmem:[#allocation4 + $0x1c0] sm:$0xff] %v4357
        %4478 = vst [vmem:[#allocation4 + $0x1c8] sm:$0xff] %v4359
        %4479 = vst [vmem:[#allocation4 + $0x1d0] sm:$0xff] %v4363
        %4480 = vst [vmem:[#allocation4 + $0x1d8] sm:$0xff] %v4365
        %4481 = vst [vmem:[#allocation4 + $0x1e0] sm:$0xff] %v4369
        %4482 = vst [vmem:[#allocation4 + $0x1e8] sm:$0xff] %v4371
        %4483 = vst [vmem:[#allocation4 + $0x1f0] sm:$0xff] %v4375
        %4484 = vst [vmem:[#allocation4 + $0x1f8] sm:$0xff] %v4377
        %4485 = vst [vmem:[#allocation4 + $0x200] sm:$0xff] %v4381
        %4486 = vst [vmem:[#allocation4 + $0x208] sm:$0xff] %v4383
        %4487 = vst [vmem:[#allocation4 + $0x210] sm:$0xff] %v4387
        %4488 = vst [vmem:[#allocation4 + $0x218] sm:$0xff] %v4389
        %4489 = vst [vmem:[#allocation4 + $0x220] sm:$0xff] %v4393
        %4490 = vst [vmem:[#allocation4 + $0x228] sm:$0xff] %v4395
        %4491 = vst [vmem:[#allocation4 + $0x230] sm:$0xff] %v4399
        %4492 = vst [vmem:[#allocation4 + $0x238] sm:$0xff] %v4401
        %4493 = vst [vmem:[#allocation4 + $0x240] sm:$0xff] %v4405
        %4494 = vst [vmem:[#allocation4 + $0x248] sm:$0xff] %v4407
        %4495 = vst [vmem:[#allocation4 + $0x250] sm:$0xff] %v4411
        %4496 = vst [vmem:[#allocation4 + $0x258] sm:$0xff] %v4413
        %4497 = vst [vmem:[#allocation4 + $0x260] sm:$0x7] %v4417
        %4498 = vst [vmem:[#allocation4 + $0x268] sm:$0x7] %v4419
        %v4499 = vld [vmem:[#allocation3 + $0x2] sm:$0xff]
        %v4500 = vld [vmem:[#allocation3 + $0xa] sm:$0xff]
        %v4501 = vld [vmem:[#allocation3 + $0x12] sm:$0xff]
        %v4502 = vld [vmem:[#allocation3 + $0x1a] sm:$0xff]
        %v4503 = vld [vmem:[#allocation3 + $0x22] sm:$0xff]
        %v4504 = vld [vmem:[#allocation3 + $0x2a] sm:$0xff]
        %v4505 = vld [vmem:[#allocation3 + $0x32] sm:$0xff]
        %v4506 = vld [vmem:[#allocation3 + $0x3a] sm:$0xff]
        %v4507 = vld [vmem:[#allocation3 + $0x42] sm:$0xff]
        %v4508 = vld [vmem:[#allocation3 + $0x4a] sm:$0xff]
        %v4509 = vld [vmem:[#allocation3 + $0x52] sm:$0xff]
        %v4510 = vld [vmem:[#allocation3 + $0x5a] sm:$0xff]
        %v4511 = vld [vmem:[#allocation3 + $0x62] sm:$0xff]
        %v4512 = vld [vmem:[#allocation3 + $0x6a] sm:$0xff]
        %v4513 = vld [vmem:[#allocation3 + $0x72] sm:$0xff]
        %v4514 = vld [vmem:[#allocation3 + $0x7a] sm:$0xff]
        %v4515 = vld [vmem:[#allocation3 + $0x82] sm:$0xff]
        %v4516 = vld [vmem:[#allocation3 + $0x8a] sm:$0xff]
        %v4517 = vld [vmem:[#allocation3 + $0x92] sm:$0xff]
        %v4518 = vld [vmem:[#allocation3 + $0x9a] sm:$0xff]
        %v4519 = vld [vmem:[#allocation3 + $0xa2] sm:$0xff]
        %v4520 = vld [vmem:[#allocation3 + $0xaa] sm:$0xff]
        %v4521 = vld [vmem:[#allocation3 + $0xb2] sm:$0xff]
        %v4522 = vld [vmem:[#allocation3 + $0xba] sm:$0xff]
        %v4523 = vld [vmem:[#allocation3 + $0xc2] sm:$0xff]
        %v4524 = vld [vmem:[#allocation3 + $0xca] sm:$0xff]
        %v4525 = vld [vmem:[#allocation3 + $0xd2] sm:$0xff]
        %v4526 = vld [vmem:[#allocation3 + $0xda] sm:$0xff]
        %v4527 = vld [vmem:[#allocation3 + $0xe2] sm:$0xff]
        %v4528 = vld [vmem:[#allocation3 + $0xea] sm:$0xff]
        %v4529 = vld [vmem:[#allocation3 + $0xf2] sm:$0xff]
        %v4530 = vld [vmem:[#allocation3 + $0xfa] sm:$0xff]
        %v4531 = vld [vmem:[#allocation3 + $0x102] sm:$0xff]
        %v4532 = vld [vmem:[#allocation3 + $0x10a] sm:$0xff]
        %v4533 = vld [vmem:[#allocation3 + $0x112] sm:$0xff]
        %v4534 = vld [vmem:[#allocation3 + $0x11a] sm:$0xff]
        %v4535 = vld [vmem:[#allocation3 + $0x122] sm:$0xff]
        %v4536 = vld [vmem:[#allocation3 + $0x12a] sm:$0xff]
        %v4537 = vld [vmem:[#allocation3 + $0x132] sm:$0x7]
        %s4538 = scalar_lea.vmem %s3, 256
        %v4539 = vld [vmem:[%s4538] sm:$0xff]
        %v4540 = vld [vmem:[%s4538 + $0x8] sm:$0xff]
        %v4541 = vld [vmem:[%s4538 + $0x10] sm:$0xff]
        %v4542 = vld [vmem:[%s4538 + $0x18] sm:$0xff]
        %v4543 = vld [vmem:[%s4538 + $0x20] sm:$0xff]
        %v4544 = vld [vmem:[%s4538 + $0x28] sm:$0xff]
        %v4545 = vld [vmem:[%s4538 + $0x30] sm:$0xff]
        %v4546 = vld [vmem:[%s4538 + $0x38] sm:$0xff]
        %v4547 = vld [vmem:[%s4538 + $0x40] sm:$0xff]
        %v4548 = vld [vmem:[%s4538 + $0x48] sm:$0xff]
        %v4549 = vld [vmem:[%s4538 + $0x50] sm:$0xff]
        %v4550 = vld [vmem:[%s4538 + $0x58] sm:$0xff]
        %v4551 = vld [vmem:[%s4538 + $0x60] sm:$0xff]
        %v4552 = vld [vmem:[%s4538 + $0x68] sm:$0xff]
        %v4553 = vld [vmem:[%s4538 + $0x70] sm:$0xff]
        %v4554 = vld [vmem:[%s4538 + $0x78] sm:$0xff]
        %v4555 = vld [vmem:[%s4538 + $0x80] sm:$0xff]
        %v4556 = vld [vmem:[%s4538 + $0x88] sm:$0xff]
        %v4557 = vld [vmem:[%s4538 + $0x90] sm:$0xff]
        %v4558 = vld [vmem:[%s4538 + $0x98] sm:$0xff]
        %v4559 = vld [vmem:[%s4538 + $0xa0] sm:$0xff]
        %v4560 = vld [vmem:[%s4538 + $0xa8] sm:$0xff]
        %v4561 = vld [vmem:[%s4538 + $0xb0] sm:$0xff]
        %v4562 = vld [vmem:[%s4538 + $0xb8] sm:$0xff]
        %v4563 = vld [vmem:[%s4538 + $0xc0] sm:$0xff]
        %v4564 = vld [vmem:[%s4538 + $0xc8] sm:$0xff]
        %v4565 = vld [vmem:[%s4538 + $0xd0] sm:$0xff]
        %v4566 = vld [vmem:[%s4538 + $0xd8] sm:$0xff]
        %v4567 = vld [vmem:[%s4538 + $0xe0] sm:$0xff]
        %v4568 = vld [vmem:[%s4538 + $0xe8] sm:$0xff]
        %v4569 = vld [vmem:[%s4538 + $0xf0] sm:$0xff]
        %v4570 = vld [vmem:[%s4538 + $0xf8] sm:$0xff]
        %4571 = vmatprep.subr.mxu0 %v4570
        %4572 = vmatpush1.msra.mxu0 %v4569
        %4573 = vmatprep.subr.mxu0 %v4568
        %4574 = vmatpush1.msra.mxu0 %v4567
        %4575 = vmatprep.subr.mxu0 %v4566
        %4576 = vmatpush1.msra.mxu0 %v4565
        %4577 = vmatprep.subr.mxu0 %v4564
        %4578 = vmatpush1.msra.mxu0 %v4563
        %4579 = vmatprep.subr.mxu0 %v4562
        %4580 = vmatpush1.msra.mxu0 %v4561
        %4581 = vmatprep.subr.mxu0 %v4560
        %4582 = vmatpush1.msra.mxu0 %v4559
        %4583 = vmatprep.subr.mxu0 %v4558
        %4584 = vmatpush1.msra.mxu0 %v4557
        %4585 = vmatprep.subr.mxu0 %v4556
        %4586 = vmatpush1.msra.mxu0 %v4555
        %4587 = vmatprep.subr.mxu0 %v4554
        %4588 = vmatpush1.msra.mxu0 %v4553
        %4589 = vmatprep.subr.mxu0 %v4552
        %4590 = vmatpush1.msra.mxu0 %v4551
        %4591 = vmatprep.subr.mxu0 %v4550
        %4592 = vmatpush1.msra.mxu0 %v4549
        %4593 = vmatprep.subr.mxu0 %v4548
        %4594 = vmatpush1.msra.mxu0 %v4547
        %4595 = vmatprep.subr.mxu0 %v4546
        %4596 = vmatpush1.msra.mxu0 %v4545
        %4597 = vmatprep.subr.mxu0 %v4544
        %4598 = vmatpush1.msra.mxu0 %v4543
        %4599 = vmatprep.subr.mxu0 %v4542
        %4600 = vmatpush1.msra.mxu0 %v4541
        %4601 = vmatprep.subr.mxu0 %v4540
        %4602 = vmatpush1.msra.mxu0 %v4539
        %4603 = vmatprep.subr.mxu0 0.0
        %4604 = vmatpush2.msra.mxu0 0.0
        %4605 = vmatprep.subr.mxu0 0.0
        %4606 = vmatpush2.msra.mxu0 0.0
        %4607 = vmatprep.subr.mxu0 0.0
        %4608 = vmatpush2.msra.mxu0 0.0
        %4609 = vmatprep.subr.mxu0 0.0
        %4610 = vmatpush2.msra.mxu0 0.0
        %4611 = vmatprep.subr.mxu0 0.0
        %4612 = vmatpush2.msra.mxu0 0.0
        %4613 = vmatprep.subr.mxu0 0.0
        %4614 = vmatpush2.msra.mxu0 0.0
        %4615 = vmatprep.subr.mxu0 0.0
        %4616 = vmatpush2.msra.mxu0 0.0
        %4617 = vmatprep.subr.mxu0 0.0
        %4618 = vmatpush2.msra.mxu0 0.0
        %4619 = vmatprep.subr.mxu0 0.0
        %4620 = vmatpush2.msra.mxu0 0.0
        %4621 = vmatprep.subr.mxu0 0.0
        %4622 = vmatpush2.msra.mxu0 0.0
        %4623 = vmatprep.subr.mxu0 0.0
        %4624 = vmatpush2.msra.mxu0 0.0
        %4625 = vmatprep.subr.mxu0 0.0
        %4626 = vmatpush2.msra.mxu0 0.0
        %4627 = vmatprep.subr.mxu0 0.0
        %4628 = vmatpush2.msra.mxu0 0.0
        %4629 = vmatprep.subr.mxu0 0.0
        %4630 = vmatpush2.msra.mxu0 0.0
        %4631 = vmatprep.subr.mxu0 0.0
        %4632 = vmatpush2.msra.mxu0 0.0
        %4633 = vmatprep.subr.mxu0 0.0
        %4634 = vmatpush2.msra.mxu0 0.0
        %4635 = vmatprep.mubr.f32.mxu0 0.0
        %4636 = vmatmul.mubr.f32.gmra.mxu0 %v4499
        %v4637 = vpop.f32.mrf.mxu0
        %v4638 = vadd.f32 0.0, %v4637
        %v4639 = vpop.f32.mrf.mxu0
        %v4640 = vadd.f32 0.0, %v4639
        %4641 = vmatprep.mubr.f32.mxu0 0.0
        %4642 = vmatmul.mubr.f32.gmra.mxu0 %v4500
        %v4643 = vpop.f32.mrf.mxu0
        %v4644 = vadd.f32 0.0, %v4643
        %v4645 = vpop.f32.mrf.mxu0
        %v4646 = vadd.f32 0.0, %v4645
        %4647 = vmatprep.mubr.f32.mxu0 0.0
        %4648 = vmatmul.mubr.f32.gmra.mxu0 %v4501
        %v4649 = vpop.f32.mrf.mxu0
        %v4650 = vadd.f32 0.0, %v4649
        %v4651 = vpop.f32.mrf.mxu0
        %v4652 = vadd.f32 0.0, %v4651
        %4653 = vmatprep.mubr.f32.mxu0 0.0
        %4654 = vmatmul.mubr.f32.gmra.mxu0 %v4502
        %v4655 = vpop.f32.mrf.mxu0
        %v4656 = vadd.f32 0.0, %v4655
        %v4657 = vpop.f32.mrf.mxu0
        %v4658 = vadd.f32 0.0, %v4657
        %4659 = vmatprep.mubr.f32.mxu0 0.0
        %4660 = vmatmul.mubr.f32.gmra.mxu0 %v4503
        %v4661 = vpop.f32.mrf.mxu0
        %v4662 = vadd.f32 0.0, %v4661
        %v4663 = vpop.f32.mrf.mxu0
        %v4664 = vadd.f32 0.0, %v4663
        %4665 = vmatprep.mubr.f32.mxu0 0.0
        %4666 = vmatmul.mubr.f32.gmra.mxu0 %v4504
        %v4667 = vpop.f32.mrf.mxu0
        %v4668 = vadd.f32 0.0, %v4667
        %v4669 = vpop.f32.mrf.mxu0
        %v4670 = vadd.f32 0.0, %v4669
        %4671 = vmatprep.mubr.f32.mxu0 0.0
        %4672 = vmatmul.mubr.f32.gmra.mxu0 %v4505
        %v4673 = vpop.f32.mrf.mxu0
        %v4674 = vadd.f32 0.0, %v4673
        %v4675 = vpop.f32.mrf.mxu0
        %v4676 = vadd.f32 0.0, %v4675
        %4677 = vmatprep.mubr.f32.mxu0 0.0
        %4678 = vmatmul.mubr.f32.gmra.mxu0 %v4506
        %v4679 = vpop.f32.mrf.mxu0
        %v4680 = vadd.f32 0.0, %v4679
        %v4681 = vpop.f32.mrf.mxu0
        %v4682 = vadd.f32 0.0, %v4681
        %4683 = vmatprep.mubr.f32.mxu0 0.0
        %4684 = vmatmul.mubr.f32.gmra.mxu0 %v4507
        %v4685 = vpop.f32.mrf.mxu0
        %v4686 = vadd.f32 0.0, %v4685
        %v4687 = vpop.f32.mrf.mxu0
        %v4688 = vadd.f32 0.0, %v4687
        %4689 = vmatprep.mubr.f32.mxu0 0.0
        %4690 = vmatmul.mubr.f32.gmra.mxu0 %v4508
        %v4691 = vpop.f32.mrf.mxu0
        %v4692 = vadd.f32 0.0, %v4691
        %v4693 = vpop.f32.mrf.mxu0
        %v4694 = vadd.f32 0.0, %v4693
        %4695 = vmatprep.mubr.f32.mxu0 0.0
        %4696 = vmatmul.mubr.f32.gmra.mxu0 %v4509
        %v4697 = vpop.f32.mrf.mxu0
        %v4698 = vadd.f32 0.0, %v4697
        %v4699 = vpop.f32.mrf.mxu0
        %v4700 = vadd.f32 0.0, %v4699
        %4701 = vmatprep.mubr.f32.mxu0 0.0
        %4702 = vmatmul.mubr.f32.gmra.mxu0 %v4510
        %v4703 = vpop.f32.mrf.mxu0
        %v4704 = vadd.f32 0.0, %v4703
        %v4705 = vpop.f32.mrf.mxu0
        %v4706 = vadd.f32 0.0, %v4705
        %4707 = vmatprep.mubr.f32.mxu0 0.0
        %4708 = vmatmul.mubr.f32.gmra.mxu0 %v4511
        %v4709 = vpop.f32.mrf.mxu0
        %v4710 = vadd.f32 0.0, %v4709
        %v4711 = vpop.f32.mrf.mxu0
        %v4712 = vadd.f32 0.0, %v4711
        %4713 = vmatprep.mubr.f32.mxu0 0.0
        %4714 = vmatmul.mubr.f32.gmra.mxu0 %v4512
        %v4715 = vpop.f32.mrf.mxu0
        %v4716 = vadd.f32 0.0, %v4715
        %v4717 = vpop.f32.mrf.mxu0
        %v4718 = vadd.f32 0.0, %v4717
        %4719 = vmatprep.mubr.f32.mxu0 0.0
        %4720 = vmatmul.mubr.f32.gmra.mxu0 %v4513
        %v4721 = vpop.f32.mrf.mxu0
        %v4722 = vadd.f32 0.0, %v4721
        %v4723 = vpop.f32.mrf.mxu0
        %v4724 = vadd.f32 0.0, %v4723
        %4725 = vmatprep.mubr.f32.mxu0 0.0
        %4726 = vmatmul.mubr.f32.gmra.mxu0 %v4514
        %v4727 = vpop.f32.mrf.mxu0
        %v4728 = vadd.f32 0.0, %v4727
        %v4729 = vpop.f32.mrf.mxu0
        %v4730 = vadd.f32 0.0, %v4729
        %4731 = vmatprep.mubr.f32.mxu0 0.0
        %4732 = vmatmul.mubr.f32.gmra.mxu0 %v4515
        %v4733 = vpop.f32.mrf.mxu0
        %v4734 = vadd.f32 0.0, %v4733
        %v4735 = vpop.f32.mrf.mxu0
        %v4736 = vadd.f32 0.0, %v4735
        %4737 = vmatprep.mubr.f32.mxu0 0.0
        %4738 = vmatmul.mubr.f32.gmra.mxu0 %v4516
        %v4739 = vpop.f32.mrf.mxu0
        %v4740 = vadd.f32 0.0, %v4739
        %v4741 = vpop.f32.mrf.mxu0
        %v4742 = vadd.f32 0.0, %v4741
        %4743 = vmatprep.mubr.f32.mxu0 0.0
        %4744 = vmatmul.mubr.f32.gmra.mxu0 %v4517
        %v4745 = vpop.f32.mrf.mxu0
        %v4746 = vadd.f32 0.0, %v4745
        %v4747 = vpop.f32.mrf.mxu0
        %v4748 = vadd.f32 0.0, %v4747
        %4749 = vmatprep.mubr.f32.mxu0 0.0
        %4750 = vmatmul.mubr.f32.gmra.mxu0 %v4518
        %v4751 = vpop.f32.mrf.mxu0
        %v4752 = vadd.f32 0.0, %v4751
        %v4753 = vpop.f32.mrf.mxu0
        %v4754 = vadd.f32 0.0, %v4753
        %4755 = vmatprep.mubr.f32.mxu0 0.0
        %4756 = vmatmul.mubr.f32.gmra.mxu0 %v4519
        %v4757 = vpop.f32.mrf.mxu0
        %v4758 = vadd.f32 0.0, %v4757
        %v4759 = vpop.f32.mrf.mxu0
        %v4760 = vadd.f32 0.0, %v4759
        %4761 = vmatprep.mubr.f32.mxu0 0.0
        %4762 = vmatmul.mubr.f32.gmra.mxu0 %v4520
        %v4763 = vpop.f32.mrf.mxu0
        %v4764 = vadd.f32 0.0, %v4763
        %v4765 = vpop.f32.mrf.mxu0
        %v4766 = vadd.f32 0.0, %v4765
        %4767 = vmatprep.mubr.f32.mxu0 0.0
        %4768 = vmatmul.mubr.f32.gmra.mxu0 %v4521
        %v4769 = vpop.f32.mrf.mxu0
        %v4770 = vadd.f32 0.0, %v4769
        %v4771 = vpop.f32.mrf.mxu0
        %v4772 = vadd.f32 0.0, %v4771
        %4773 = vmatprep.mubr.f32.mxu0 0.0
        %4774 = vmatmul.mubr.f32.gmra.mxu0 %v4522
        %v4775 = vpop.f32.mrf.mxu0
        %v4776 = vadd.f32 0.0, %v4775
        %v4777 = vpop.f32.mrf.mxu0
        %v4778 = vadd.f32 0.0, %v4777
        %4779 = vmatprep.mubr.f32.mxu0 0.0
        %4780 = vmatmul.mubr.f32.gmra.mxu0 %v4523
        %v4781 = vpop.f32.mrf.mxu0
        %v4782 = vadd.f32 0.0, %v4781
        %v4783 = vpop.f32.mrf.mxu0
        %v4784 = vadd.f32 0.0, %v4783
        %4785 = vmatprep.mubr.f32.mxu0 0.0
        %4786 = vmatmul.mubr.f32.gmra.mxu0 %v4524
        %v4787 = vpop.f32.mrf.mxu0
        %v4788 = vadd.f32 0.0, %v4787
        %v4789 = vpop.f32.mrf.mxu0
        %v4790 = vadd.f32 0.0, %v4789
        %4791 = vmatprep.mubr.f32.mxu0 0.0
        %4792 = vmatmul.mubr.f32.gmra.mxu0 %v4525
        %v4793 = vpop.f32.mrf.mxu0
        %v4794 = vadd.f32 0.0, %v4793
        %v4795 = vpop.f32.mrf.mxu0
        %v4796 = vadd.f32 0.0, %v4795
        %4797 = vmatprep.mubr.f32.mxu0 0.0
        %4798 = vmatmul.mubr.f32.gmra.mxu0 %v4526
        %v4799 = vpop.f32.mrf.mxu0
        %v4800 = vadd.f32 0.0, %v4799
        %v4801 = vpop.f32.mrf.mxu0
        %v4802 = vadd.f32 0.0, %v4801
        %4803 = vmatprep.mubr.f32.mxu0 0.0
        %4804 = vmatmul.mubr.f32.gmra.mxu0 %v4527
        %v4805 = vpop.f32.mrf.mxu0
        %v4806 = vadd.f32 0.0, %v4805
        %v4807 = vpop.f32.mrf.mxu0
        %v4808 = vadd.f32 0.0, %v4807
        %4809 = vmatprep.mubr.f32.mxu0 0.0
        %4810 = vmatmul.mubr.f32.gmra.mxu0 %v4528
        %v4811 = vpop.f32.mrf.mxu0
        %v4812 = vadd.f32 0.0, %v4811
        %v4813 = vpop.f32.mrf.mxu0
        %v4814 = vadd.f32 0.0, %v4813
        %4815 = vmatprep.mubr.f32.mxu0 0.0
        %4816 = vmatmul.mubr.f32.gmra.mxu0 %v4529
        %v4817 = vpop.f32.mrf.mxu0
        %v4818 = vadd.f32 0.0, %v4817
        %v4819 = vpop.f32.mrf.mxu0
        %v4820 = vadd.f32 0.0, %v4819
        %4821 = vmatprep.mubr.f32.mxu0 0.0
        %4822 = vmatmul.mubr.f32.gmra.mxu0 %v4530
        %v4823 = vpop.f32.mrf.mxu0
        %v4824 = vadd.f32 0.0, %v4823
        %v4825 = vpop.f32.mrf.mxu0
        %v4826 = vadd.f32 0.0, %v4825
        %4827 = vmatprep.mubr.f32.mxu0 0.0
        %4828 = vmatmul.mubr.f32.gmra.mxu0 %v4531
        %v4829 = vpop.f32.mrf.mxu0
        %v4830 = vadd.f32 0.0, %v4829
        %v4831 = vpop.f32.mrf.mxu0
        %v4832 = vadd.f32 0.0, %v4831
        %4833 = vmatprep.mubr.f32.mxu0 0.0
        %4834 = vmatmul.mubr.f32.gmra.mxu0 %v4532
        %v4835 = vpop.f32.mrf.mxu0
        %v4836 = vadd.f32 0.0, %v4835
        %v4837 = vpop.f32.mrf.mxu0
        %v4838 = vadd.f32 0.0, %v4837
        %4839 = vmatprep.mubr.f32.mxu0 0.0
        %4840 = vmatmul.mubr.f32.gmra.mxu0 %v4533
        %v4841 = vpop.f32.mrf.mxu0
        %v4842 = vadd.f32 0.0, %v4841
        %v4843 = vpop.f32.mrf.mxu0
        %v4844 = vadd.f32 0.0, %v4843
        %4845 = vmatprep.mubr.f32.mxu0 0.0
        %4846 = vmatmul.mubr.f32.gmra.mxu0 %v4534
        %v4847 = vpop.f32.mrf.mxu0
        %v4848 = vadd.f32 0.0, %v4847
        %v4849 = vpop.f32.mrf.mxu0
        %v4850 = vadd.f32 0.0, %v4849
        %4851 = vmatprep.mubr.f32.mxu0 0.0
        %4852 = vmatmul.mubr.f32.gmra.mxu0 %v4535
        %v4853 = vpop.f32.mrf.mxu0
        %v4854 = vadd.f32 0.0, %v4853
        %v4855 = vpop.f32.mrf.mxu0
        %v4856 = vadd.f32 0.0, %v4855
        %4857 = vmatprep.mubr.f32.mxu0 0.0
        %4858 = vmatmul.mubr.f32.gmra.mxu0 %v4536
        %v4859 = vpop.f32.mrf.mxu0
        %v4860 = vadd.f32 0.0, %v4859
        %v4861 = vpop.f32.mrf.mxu0
        %v4862 = vadd.f32 0.0, %v4861
        %4863 = vmatprep.mubr.f32.mxu0 0.0
        %4864 = vmatmul.mubr.f32.gmra.mxu0 %v4537
        %v4865 = vpop.f32.mrf.mxu0
        %v4866 = vadd.f32 0.0, %v4865
        %v4867 = vpop.f32.mrf.mxu0
        %v4868 = vadd.f32 0.0, %v4867
        %4869 = vdwg.mxu0
        %v4870 = vld [vmem:[#allocation4] sm:$0xff]
        %v4871 = vld [vmem:[#allocation4 + $0x8] sm:$0xff]
        %v4872 = vld [vmem:[#allocation4 + $0x10] sm:$0xff]
        %v4873 = vld [vmem:[#allocation4 + $0x18] sm:$0xff]
        %v4874 = vld [vmem:[#allocation4 + $0x20] sm:$0xff]
        %v4875 = vld [vmem:[#allocation4 + $0x28] sm:$0xff]
        %v4876 = vld [vmem:[#allocation4 + $0x30] sm:$0xff]
        %v4877 = vld [vmem:[#allocation4 + $0x38] sm:$0xff]
        %v4878 = vld [vmem:[#allocation4 + $0x40] sm:$0xff]
        %v4879 = vld [vmem:[#allocation4 + $0x48] sm:$0xff]
        %v4880 = vld [vmem:[#allocation4 + $0x50] sm:$0xff]
        %v4881 = vld [vmem:[#allocation4 + $0x58] sm:$0xff]
        %v4882 = vld [vmem:[#allocation4 + $0x60] sm:$0xff]
        %v4883 = vld [vmem:[#allocation4 + $0x68] sm:$0xff]
        %v4884 = vld [vmem:[#allocation4 + $0x70] sm:$0xff]
        %v4885 = vld [vmem:[#allocation4 + $0x78] sm:$0xff]
        %v4886 = vld [vmem:[#allocation4 + $0x80] sm:$0xff]
        %v4887 = vld [vmem:[#allocation4 + $0x88] sm:$0xff]
        %v4888 = vld [vmem:[#allocation4 + $0x90] sm:$0xff]
        %v4889 = vld [vmem:[#allocation4 + $0x98] sm:$0xff]
        %v4890 = vld [vmem:[#allocation4 + $0xa0] sm:$0xff]
        %v4891 = vld [vmem:[#allocation4 + $0xa8] sm:$0xff]
        %v4892 = vld [vmem:[#allocation4 + $0xb0] sm:$0xff]
        %v4893 = vld [vmem:[#allocation4 + $0xb8] sm:$0xff]
        %v4894 = vld [vmem:[#allocation4 + $0xc0] sm:$0xff]
        %v4895 = vld [vmem:[#allocation4 + $0xc8] sm:$0xff]
        %v4896 = vld [vmem:[#allocation4 + $0xd0] sm:$0xff]
        %v4897 = vld [vmem:[#allocation4 + $0xd8] sm:$0xff]
        %v4898 = vld [vmem:[#allocation4 + $0xe0] sm:$0xff]
        %v4899 = vld [vmem:[#allocation4 + $0xe8] sm:$0xff]
        %v4900 = vld [vmem:[#allocation4 + $0xf0] sm:$0xff]
        %v4901 = vld [vmem:[#allocation4 + $0xf8] sm:$0xff]
        %v4902 = vld [vmem:[#allocation4 + $0x100] sm:$0xff]
        %v4903 = vld [vmem:[#allocation4 + $0x108] sm:$0xff]
        %v4904 = vld [vmem:[#allocation4 + $0x110] sm:$0xff]
        %v4905 = vld [vmem:[#allocation4 + $0x118] sm:$0xff]
        %v4906 = vld [vmem:[#allocation4 + $0x120] sm:$0xff]
        %v4907 = vld [vmem:[#allocation4 + $0x128] sm:$0xff]
        %v4908 = vld [vmem:[#allocation4 + $0x130] sm:$0xff]
        %v4909 = vld [vmem:[#allocation4 + $0x138] sm:$0xff]
        %v4910 = vld [vmem:[#allocation4 + $0x140] sm:$0xff]
        %v4911 = vld [vmem:[#allocation4 + $0x148] sm:$0xff]
        %v4912 = vld [vmem:[#allocation4 + $0x150] sm:$0xff]
        %v4913 = vld [vmem:[#allocation4 + $0x158] sm:$0xff]
        %v4914 = vld [vmem:[#allocation4 + $0x160] sm:$0xff]
        %v4915 = vld [vmem:[#allocation4 + $0x168] sm:$0xff]
        %v4916 = vld [vmem:[#allocation4 + $0x170] sm:$0xff]
        %v4917 = vld [vmem:[#allocation4 + $0x178] sm:$0xff]
        %v4918 = vld [vmem:[#allocation4 + $0x180] sm:$0xff]
        %v4919 = vld [vmem:[#allocation4 + $0x188] sm:$0xff]
        %v4920 = vld [vmem:[#allocation4 + $0x190] sm:$0xff]
        %v4921 = vld [vmem:[#allocation4 + $0x198] sm:$0xff]
        %v4922 = vld [vmem:[#allocation4 + $0x1a0] sm:$0xff]
        %v4923 = vld [vmem:[#allocation4 + $0x1a8] sm:$0xff]
        %v4924 = vld [vmem:[#allocation4 + $0x1b0] sm:$0xff]
        %v4925 = vld [vmem:[#allocation4 + $0x1b8] sm:$0xff]
        %v4926 = vld [vmem:[#allocation4 + $0x1c0] sm:$0xff]
        %v4927 = vld [vmem:[#allocation4 + $0x1c8] sm:$0xff]
        %v4928 = vld [vmem:[#allocation4 + $0x1d0] sm:$0xff]
        %v4929 = vld [vmem:[#allocation4 + $0x1d8] sm:$0xff]
        %v4930 = vld [vmem:[#allocation4 + $0x1e0] sm:$0xff]
        %v4931 = vld [vmem:[#allocation4 + $0x1e8] sm:$0xff]
        %v4932 = vld [vmem:[#allocation4 + $0x1f0] sm:$0xff]
        %v4933 = vld [vmem:[#allocation4 + $0x1f8] sm:$0xff]
        %v4934 = vld [vmem:[#allocation4 + $0x200] sm:$0xff]
        %v4935 = vld [vmem:[#allocation4 + $0x208] sm:$0xff]
        %v4936 = vld [vmem:[#allocation4 + $0x210] sm:$0xff]
        %v4937 = vld [vmem:[#allocation4 + $0x218] sm:$0xff]
        %v4938 = vld [vmem:[#allocation4 + $0x220] sm:$0xff]
        %v4939 = vld [vmem:[#allocation4 + $0x228] sm:$0xff]
        %v4940 = vld [vmem:[#allocation4 + $0x230] sm:$0xff]
        %v4941 = vld [vmem:[#allocation4 + $0x238] sm:$0xff]
        %v4942 = vld [vmem:[#allocation4 + $0x240] sm:$0xff]
        %v4943 = vld [vmem:[#allocation4 + $0x248] sm:$0xff]
        %v4944 = vld [vmem:[#allocation4 + $0x250] sm:$0xff]
        %v4945 = vld [vmem:[#allocation4 + $0x258] sm:$0xff]
        %v4946 = vld [vmem:[#allocation4 + $0x260] sm:$0x7]
        %v4947 = vld [vmem:[#allocation4 + $0x268] sm:$0x7]
        %v4948 = vadd.f32 %v4870, %v4638
        %v4949 = vadd.f32 %v4871, %v4640
        %v4950 = vadd.f32 %v4872, %v4644
        %v4951 = vadd.f32 %v4873, %v4646
        %v4952 = vadd.f32 %v4874, %v4650
        %v4953 = vadd.f32 %v4875, %v4652
        %v4954 = vadd.f32 %v4876, %v4656
        %v4955 = vadd.f32 %v4877, %v4658
        %v4956 = vadd.f32 %v4878, %v4662
        %v4957 = vadd.f32 %v4879, %v4664
        %v4958 = vadd.f32 %v4880, %v4668
        %v4959 = vadd.f32 %v4881, %v4670
        %v4960 = vadd.f32 %v4882, %v4674
        %v4961 = vadd.f32 %v4883, %v4676
        %v4962 = vadd.f32 %v4884, %v4680
        %v4963 = vadd.f32 %v4885, %v4682
        %v4964 = vadd.f32 %v4886, %v4686
        %v4965 = vadd.f32 %v4887, %v4688
        %v4966 = vadd.f32 %v4888, %v4692
        %v4967 = vadd.f32 %v4889, %v4694
        %v4968 = vadd.f32 %v4890, %v4698
        %v4969 = vadd.f32 %v4891, %v4700
        %v4970 = vadd.f32 %v4892, %v4704
        %v4971 = vadd.f32 %v4893, %v4706
        %v4972 = vadd.f32 %v4894, %v4710
        %v4973 = vadd.f32 %v4895, %v4712
        %v4974 = vadd.f32 %v4896, %v4716
        %v4975 = vadd.f32 %v4897, %v4718
        %v4976 = vadd.f32 %v4898, %v4722
        %v4977 = vadd.f32 %v4899, %v4724
        %v4978 = vadd.f32 %v4900, %v4728
        %v4979 = vadd.f32 %v4901, %v4730
        %v4980 = vadd.f32 %v4902, %v4734
        %v4981 = vadd.f32 %v4903, %v4736
        %v4982 = vadd.f32 %v4904, %v4740
        %v4983 = vadd.f32 %v4905, %v4742
        %v4984 = vadd.f32 %v4906, %v4746
        %v4985 = vadd.f32 %v4907, %v4748
        %v4986 = vadd.f32 %v4908, %v4752
        %v4987 = vadd.f32 %v4909, %v4754
        %v4988 = vadd.f32 %v4910, %v4758
        %v4989 = vadd.f32 %v4911, %v4760
        %v4990 = vadd.f32 %v4912, %v4764
        %v4991 = vadd.f32 %v4913, %v4766
        %v4992 = vadd.f32 %v4914, %v4770
        %v4993 = vadd.f32 %v4915, %v4772
        %v4994 = vadd.f32 %v4916, %v4776
        %v4995 = vadd.f32 %v4917, %v4778
        %v4996 = vadd.f32 %v4918, %v4782
        %v4997 = vadd.f32 %v4919, %v4784
        %v4998 = vadd.f32 %v4920, %v4788
        %v4999 = vadd.f32 %v4921, %v4790
        %v5000 = vadd.f32 %v4922, %v4794
        %v5001 = vadd.f32 %v4923, %v4796
        %v5002 = vadd.f32 %v4924, %v4800
        %v5003 = vadd.f32 %v4925, %v4802
        %v5004 = vadd.f32 %v4926, %v4806
        %v5005 = vadd.f32 %v4927, %v4808
        %v5006 = vadd.f32 %v4928, %v4812
        %v5007 = vadd.f32 %v4929, %v4814
        %v5008 = vadd.f32 %v4930, %v4818
        %v5009 = vadd.f32 %v4931, %v4820
        %v5010 = vadd.f32 %v4932, %v4824
        %v5011 = vadd.f32 %v4933, %v4826
        %v5012 = vadd.f32 %v4934, %v4830
        %v5013 = vadd.f32 %v4935, %v4832
        %v5014 = vadd.f32 %v4936, %v4836
        %v5015 = vadd.f32 %v4937, %v4838
        %v5016 = vadd.f32 %v4938, %v4842
        %v5017 = vadd.f32 %v4939, %v4844
        %v5018 = vadd.f32 %v4940, %v4848
        %v5019 = vadd.f32 %v4941, %v4850
        %v5020 = vadd.f32 %v4942, %v4854
        %v5021 = vadd.f32 %v4943, %v4856
        %v5022 = vadd.f32 %v4944, %v4860
        %v5023 = vadd.f32 %v4945, %v4862
        %v5024 = vadd.f32 %v4946, %v4866
        %v5025 = vadd.f32 %v4947, %v4868
        %5026 = vst [vmem:[#allocation4] sm:$0xff] %v4948
        %5027 = vst [vmem:[#allocation4 + $0x8] sm:$0xff] %v4949
        %5028 = vst [vmem:[#allocation4 + $0x10] sm:$0xff] %v4950
        %5029 = vst [vmem:[#allocation4 + $0x18] sm:$0xff] %v4951
        %5030 = vst [vmem:[#allocation4 + $0x20] sm:$0xff] %v4952
        %5031 = vst [vmem:[#allocation4 + $0x28] sm:$0xff] %v4953
        %5032 = vst [vmem:[#allocation4 + $0x30] sm:$0xff] %v4954
        %5033 = vst [vmem:[#allocation4 + $0x38] sm:$0xff] %v4955
        %5034 = vst [vmem:[#allocation4 + $0x40] sm:$0xff] %v4956
        %5035 = vst [vmem:[#allocation4 + $0x48] sm:$0xff] %v4957
        %5036 = vst [vmem:[#allocation4 + $0x50] sm:$0xff] %v4958
        %5037 = vst [vmem:[#allocation4 + $0x58] sm:$0xff] %v4959
        %5038 = vst [vmem:[#allocation4 + $0x60] sm:$0xff] %v4960
        %5039 = vst [vmem:[#allocation4 + $0x68] sm:$0xff] %v4961
        %5040 = vst [vmem:[#allocation4 + $0x70] sm:$0xff] %v4962
        %5041 = vst [vmem:[#allocation4 + $0x78] sm:$0xff] %v4963
        %5042 = vst [vmem:[#allocation4 + $0x80] sm:$0xff] %v4964
        %5043 = vst [vmem:[#allocation4 + $0x88] sm:$0xff] %v4965
        %5044 = vst [vmem:[#allocation4 + $0x90] sm:$0xff] %v4966
        %5045 = vst [vmem:[#allocation4 + $0x98] sm:$0xff] %v4967
        %5046 = vst [vmem:[#allocation4 + $0xa0] sm:$0xff] %v4968
        %5047 = vst [vmem:[#allocation4 + $0xa8] sm:$0xff] %v4969
        %5048 = vst [vmem:[#allocation4 + $0xb0] sm:$0xff] %v4970
        %5049 = vst [vmem:[#allocation4 + $0xb8] sm:$0xff] %v4971
        %5050 = vst [vmem:[#allocation4 + $0xc0] sm:$0xff] %v4972
        %5051 = vst [vmem:[#allocation4 + $0xc8] sm:$0xff] %v4973
        %5052 = vst [vmem:[#allocation4 + $0xd0] sm:$0xff] %v4974
        %5053 = vst [vmem:[#allocation4 + $0xd8] sm:$0xff] %v4975
        %5054 = vst [vmem:[#allocation4 + $0xe0] sm:$0xff] %v4976
        %5055 = vst [vmem:[#allocation4 + $0xe8] sm:$0xff] %v4977
        %5056 = vst [vmem:[#allocation4 + $0xf0] sm:$0xff] %v4978
        %5057 = vst [vmem:[#allocation4 + $0xf8] sm:$0xff] %v4979
        %5058 = vst [vmem:[#allocation4 + $0x100] sm:$0xff] %v4980
        %5059 = vst [vmem:[#allocation4 + $0x108] sm:$0xff] %v4981
        %5060 = vst [vmem:[#allocation4 + $0x110] sm:$0xff] %v4982
        %5061 = vst [vmem:[#allocation4 + $0x118] sm:$0xff] %v4983
        %5062 = vst [vmem:[#allocation4 + $0x120] sm:$0xff] %v4984
        %5063 = vst [vmem:[#allocation4 + $0x128] sm:$0xff] %v4985
        %5064 = vst [vmem:[#allocation4 + $0x130] sm:$0xff] %v4986
        %5065 = vst [vmem:[#allocation4 + $0x138] sm:$0xff] %v4987
        %5066 = vst [vmem:[#allocation4 + $0x140] sm:$0xff] %v4988
        %5067 = vst [vmem:[#allocation4 + $0x148] sm:$0xff] %v4989
        %5068 = vst [vmem:[#allocation4 + $0x150] sm:$0xff] %v4990
        %5069 = vst [vmem:[#allocation4 + $0x158] sm:$0xff] %v4991
        %5070 = vst [vmem:[#allocation4 + $0x160] sm:$0xff] %v4992
        %5071 = vst [vmem:[#allocation4 + $0x168] sm:$0xff] %v4993
        %5072 = vst [vmem:[#allocation4 + $0x170] sm:$0xff] %v4994
        %5073 = vst [vmem:[#allocation4 + $0x178] sm:$0xff] %v4995
        %5074 = vst [vmem:[#allocation4 + $0x180] sm:$0xff] %v4996
        %5075 = vst [vmem:[#allocation4 + $0x188] sm:$0xff] %v4997
        %5076 = vst [vmem:[#allocation4 + $0x190] sm:$0xff] %v4998
        %5077 = vst [vmem:[#allocation4 + $0x198] sm:$0xff] %v4999
        %5078 = vst [vmem:[#allocation4 + $0x1a0] sm:$0xff] %v5000
        %5079 = vst [vmem:[#allocation4 + $0x1a8] sm:$0xff] %v5001
        %5080 = vst [vmem:[#allocation4 + $0x1b0] sm:$0xff] %v5002
        %5081 = vst [vmem:[#allocation4 + $0x1b8] sm:$0xff] %v5003
        %5082 = vst [vmem:[#allocation4 + $0x1c0] sm:$0xff] %v5004
        %5083 = vst [vmem:[#allocation4 + $0x1c8] sm:$0xff] %v5005
        %5084 = vst [vmem:[#allocation4 + $0x1d0] sm:$0xff] %v5006
        %5085 = vst [vmem:[#allocation4 + $0x1d8] sm:$0xff] %v5007
        %5086 = vst [vmem:[#allocation4 + $0x1e0] sm:$0xff] %v5008
        %5087 = vst [vmem:[#allocation4 + $0x1e8] sm:$0xff] %v5009
        %5088 = vst [vmem:[#allocation4 + $0x1f0] sm:$0xff] %v5010
        %5089 = vst [vmem:[#allocation4 + $0x1f8] sm:$0xff] %v5011
        %5090 = vst [vmem:[#allocation4 + $0x200] sm:$0xff] %v5012
        %5091 = vst [vmem:[#allocation4 + $0x208] sm:$0xff] %v5013
        %5092 = vst [vmem:[#allocation4 + $0x210] sm:$0xff] %v5014
        %5093 = vst [vmem:[#allocation4 + $0x218] sm:$0xff] %v5015
        %5094 = vst [vmem:[#allocation4 + $0x220] sm:$0xff] %v5016
        %5095 = vst [vmem:[#allocation4 + $0x228] sm:$0xff] %v5017
        %5096 = vst [vmem:[#allocation4 + $0x230] sm:$0xff] %v5018
        %5097 = vst [vmem:[#allocation4 + $0x238] sm:$0xff] %v5019
        %5098 = vst [vmem:[#allocation4 + $0x240] sm:$0xff] %v5020
        %5099 = vst [vmem:[#allocation4 + $0x248] sm:$0xff] %v5021
        %5100 = vst [vmem:[#allocation4 + $0x250] sm:$0xff] %v5022
        %5101 = vst [vmem:[#allocation4 + $0x258] sm:$0xff] %v5023
        %5102 = vst [vmem:[#allocation4 + $0x260] sm:$0x7] %v5024
        %5103 = vst [vmem:[#allocation4 + $0x268] sm:$0x7] %v5025
        %v5104 = vld [vmem:[#allocation3 + $0x4] sm:$0xff]
        %v5105 = vld [vmem:[#allocation3 + $0xc] sm:$0xff]
        %v5106 = vld [vmem:[#allocation3 + $0x14] sm:$0xff]
        %v5107 = vld [vmem:[#allocation3 + $0x1c] sm:$0xff]
        %v5108 = vld [vmem:[#allocation3 + $0x24] sm:$0xff]
        %v5109 = vld [vmem:[#allocation3 + $0x2c] sm:$0xff]
        %v5110 = vld [vmem:[#allocation3 + $0x34] sm:$0xff]
        %v5111 = vld [vmem:[#allocation3 + $0x3c] sm:$0xff]
        %v5112 = vld [vmem:[#allocation3 + $0x44] sm:$0xff]
        %v5113 = vld [vmem:[#allocation3 + $0x4c] sm:$0xff]
        %v5114 = vld [vmem:[#allocation3 + $0x54] sm:$0xff]
        %v5115 = vld [vmem:[#allocation3 + $0x5c] sm:$0xff]
        %v5116 = vld [vmem:[#allocation3 + $0x64] sm:$0xff]
        %v5117 = vld [vmem:[#allocation3 + $0x6c] sm:$0xff]
        %v5118 = vld [vmem:[#allocation3 + $0x74] sm:$0xff]
        %v5119 = vld [vmem:[#allocation3 + $0x7c] sm:$0xff]
        %v5120 = vld [vmem:[#allocation3 + $0x84] sm:$0xff]
        %v5121 = vld [vmem:[#allocation3 + $0x8c] sm:$0xff]
        %v5122 = vld [vmem:[#allocation3 + $0x94] sm:$0xff]
        %v5123 = vld [vmem:[#allocation3 + $0x9c] sm:$0xff]
        %v5124 = vld [vmem:[#allocation3 + $0xa4] sm:$0xff]
        %v5125 = vld [vmem:[#allocation3 + $0xac] sm:$0xff]
        %v5126 = vld [vmem:[#allocation3 + $0xb4] sm:$0xff]
        %v5127 = vld [vmem:[#allocation3 + $0xbc] sm:$0xff]
        %v5128 = vld [vmem:[#allocation3 + $0xc4] sm:$0xff]
        %v5129 = vld [vmem:[#allocation3 + $0xcc] sm:$0xff]
        %v5130 = vld [vmem:[#allocation3 + $0xd4] sm:$0xff]
        %v5131 = vld [vmem:[#allocation3 + $0xdc] sm:$0xff]
        %v5132 = vld [vmem:[#allocation3 + $0xe4] sm:$0xff]
        %v5133 = vld [vmem:[#allocation3 + $0xec] sm:$0xff]
        %v5134 = vld [vmem:[#allocation3 + $0xf4] sm:$0xff]
        %v5135 = vld [vmem:[#allocation3 + $0xfc] sm:$0xff]
        %v5136 = vld [vmem:[#allocation3 + $0x104] sm:$0xff]
        %v5137 = vld [vmem:[#allocation3 + $0x10c] sm:$0xff]
        %v5138 = vld [vmem:[#allocation3 + $0x114] sm:$0xff]
        %v5139 = vld [vmem:[#allocation3 + $0x11c] sm:$0xff]
        %v5140 = vld [vmem:[#allocation3 + $0x124] sm:$0xff]
        %v5141 = vld [vmem:[#allocation3 + $0x12c] sm:$0xff]
        %v5142 = vld [vmem:[#allocation3 + $0x134] sm:$0x7]
        %s5143 = scalar_lea.vmem %s3, 512
        %v5144 = vld [vmem:[%s5143] sm:$0xff]
        %v5145 = vld [vmem:[%s5143 + $0x8] sm:$0xff]
        %v5146 = vld [vmem:[%s5143 + $0x10] sm:$0xff]
        %v5147 = vld [vmem:[%s5143 + $0x18] sm:$0xff]
        %v5148 = vld [vmem:[%s5143 + $0x20] sm:$0xff]
        %v5149 = vld [vmem:[%s5143 + $0x28] sm:$0xff]
        %v5150 = vld [vmem:[%s5143 + $0x30] sm:$0xff]
        %v5151 = vld [vmem:[%s5143 + $0x38] sm:$0xff]
        %v5152 = vld [vmem:[%s5143 + $0x40] sm:$0xff]
        %v5153 = vld [vmem:[%s5143 + $0x48] sm:$0xff]
        %v5154 = vld [vmem:[%s5143 + $0x50] sm:$0xff]
        %v5155 = vld [vmem:[%s5143 + $0x58] sm:$0xff]
        %v5156 = vld [vmem:[%s5143 + $0x60] sm:$0xff]
        %v5157 = vld [vmem:[%s5143 + $0x68] sm:$0xff]
        %v5158 = vld [vmem:[%s5143 + $0x70] sm:$0xff]
        %v5159 = vld [vmem:[%s5143 + $0x78] sm:$0xff]
        %v5160 = vld [vmem:[%s5143 + $0x80] sm:$0xff]
        %v5161 = vld [vmem:[%s5143 + $0x88] sm:$0xff]
        %v5162 = vld [vmem:[%s5143 + $0x90] sm:$0xff]
        %v5163 = vld [vmem:[%s5143 + $0x98] sm:$0xff]
        %v5164 = vld [vmem:[%s5143 + $0xa0] sm:$0xff]
        %v5165 = vld [vmem:[%s5143 + $0xa8] sm:$0xff]
        %v5166 = vld [vmem:[%s5143 + $0xb0] sm:$0xff]
        %v5167 = vld [vmem:[%s5143 + $0xb8] sm:$0xff]
        %v5168 = vld [vmem:[%s5143 + $0xc0] sm:$0xff]
        %v5169 = vld [vmem:[%s5143 + $0xc8] sm:$0xff]
        %v5170 = vld [vmem:[%s5143 + $0xd0] sm:$0xff]
        %v5171 = vld [vmem:[%s5143 + $0xd8] sm:$0xff]
        %v5172 = vld [vmem:[%s5143 + $0xe0] sm:$0xff]
        %v5173 = vld [vmem:[%s5143 + $0xe8] sm:$0xff]
        %v5174 = vld [vmem:[%s5143 + $0xf0] sm:$0xff]
        %v5175 = vld [vmem:[%s5143 + $0xf8] sm:$0xff]
        %5176 = vmatprep.subr.mxu0 %v5175
        %5177 = vmatpush1.msra.mxu0 %v5174
        %5178 = vmatprep.subr.mxu0 %v5173
        %5179 = vmatpush1.msra.mxu0 %v5172
        %5180 = vmatprep.subr.mxu0 %v5171
        %5181 = vmatpush1.msra.mxu0 %v5170
        %5182 = vmatprep.subr.mxu0 %v5169
        %5183 = vmatpush1.msra.mxu0 %v5168
        %5184 = vmatprep.subr.mxu0 %v5167
        %5185 = vmatpush1.msra.mxu0 %v5166
        %5186 = vmatprep.subr.mxu0 %v5165
        %5187 = vmatpush1.msra.mxu0 %v5164
        %5188 = vmatprep.subr.mxu0 %v5163
        %5189 = vmatpush1.msra.mxu0 %v5162
        %5190 = vmatprep.subr.mxu0 %v5161
        %5191 = vmatpush1.msra.mxu0 %v5160
        %5192 = vmatprep.subr.mxu0 %v5159
        %5193 = vmatpush1.msra.mxu0 %v5158
        %5194 = vmatprep.subr.mxu0 %v5157
        %5195 = vmatpush1.msra.mxu0 %v5156
        %5196 = vmatprep.subr.mxu0 %v5155
        %5197 = vmatpush1.msra.mxu0 %v5154
        %5198 = vmatprep.subr.mxu0 %v5153
        %5199 = vmatpush1.msra.mxu0 %v5152
        %5200 = vmatprep.subr.mxu0 %v5151
        %5201 = vmatpush1.msra.mxu0 %v5150
        %5202 = vmatprep.subr.mxu0 %v5149
        %5203 = vmatpush1.msra.mxu0 %v5148
        %5204 = vmatprep.subr.mxu0 %v5147
        %5205 = vmatpush1.msra.mxu0 %v5146
        %5206 = vmatprep.subr.mxu0 %v5145
        %5207 = vmatpush1.msra.mxu0 %v5144
        %5208 = vmatprep.subr.mxu0 0.0
        %5209 = vmatpush2.msra.mxu0 0.0
        %5210 = vmatprep.subr.mxu0 0.0
        %5211 = vmatpush2.msra.mxu0 0.0
        %5212 = vmatprep.subr.mxu0 0.0
        %5213 = vmatpush2.msra.mxu0 0.0
        %5214 = vmatprep.subr.mxu0 0.0
        %5215 = vmatpush2.msra.mxu0 0.0
        %5216 = vmatprep.subr.mxu0 0.0
        %5217 = vmatpush2.msra.mxu0 0.0
        %5218 = vmatprep.subr.mxu0 0.0
        %5219 = vmatpush2.msra.mxu0 0.0
        %5220 = vmatprep.subr.mxu0 0.0
        %5221 = vmatpush2.msra.mxu0 0.0
        %5222 = vmatprep.subr.mxu0 0.0
        %5223 = vmatpush2.msra.mxu0 0.0
        %5224 = vmatprep.subr.mxu0 0.0
        %5225 = vmatpush2.msra.mxu0 0.0
        %5226 = vmatprep.subr.mxu0 0.0
        %5227 = vmatpush2.msra.mxu0 0.0
        %5228 = vmatprep.subr.mxu0 0.0
        %5229 = vmatpush2.msra.mxu0 0.0
        %5230 = vmatprep.subr.mxu0 0.0
        %5231 = vmatpush2.msra.mxu0 0.0
        %5232 = vmatprep.subr.mxu0 0.0
        %5233 = vmatpush2.msra.mxu0 0.0
        %5234 = vmatprep.subr.mxu0 0.0
        %5235 = vmatpush2.msra.mxu0 0.0
        %5236 = vmatprep.subr.mxu0 0.0
        %5237 = vmatpush2.msra.mxu0 0.0
        %5238 = vmatprep.subr.mxu0 0.0
        %5239 = vmatpush2.msra.mxu0 0.0
        %5240 = vmatprep.mubr.f32.mxu0 0.0
        %5241 = vmatmul.mubr.f32.gmra.mxu0 %v5104
        %v5242 = vpop.f32.mrf.mxu0
        %v5243 = vadd.f32 0.0, %v5242
        %v5244 = vpop.f32.mrf.mxu0
        %v5245 = vadd.f32 0.0, %v5244
        %5246 = vmatprep.mubr.f32.mxu0 0.0
        %5247 = vmatmul.mubr.f32.gmra.mxu0 %v5105
        %v5248 = vpop.f32.mrf.mxu0
        %v5249 = vadd.f32 0.0, %v5248
        %v5250 = vpop.f32.mrf.mxu0
        %v5251 = vadd.f32 0.0, %v5250
        %5252 = vmatprep.mubr.f32.mxu0 0.0
        %5253 = vmatmul.mubr.f32.gmra.mxu0 %v5106
        %v5254 = vpop.f32.mrf.mxu0
        %v5255 = vadd.f32 0.0, %v5254
        %v5256 = vpop.f32.mrf.mxu0
        %v5257 = vadd.f32 0.0, %v5256
        %5258 = vmatprep.mubr.f32.mxu0 0.0
        %5259 = vmatmul.mubr.f32.gmra.mxu0 %v5107
        %v5260 = vpop.f32.mrf.mxu0
        %v5261 = vadd.f32 0.0, %v5260
        %v5262 = vpop.f32.mrf.mxu0
        %v5263 = vadd.f32 0.0, %v5262
        %5264 = vmatprep.mubr.f32.mxu0 0.0
        %5265 = vmatmul.mubr.f32.gmra.mxu0 %v5108
        %v5266 = vpop.f32.mrf.mxu0
        %v5267 = vadd.f32 0.0, %v5266
        %v5268 = vpop.f32.mrf.mxu0
        %v5269 = vadd.f32 0.0, %v5268
        %5270 = vmatprep.mubr.f32.mxu0 0.0
        %5271 = vmatmul.mubr.f32.gmra.mxu0 %v5109
        %v5272 = vpop.f32.mrf.mxu0
        %v5273 = vadd.f32 0.0, %v5272
        %v5274 = vpop.f32.mrf.mxu0
        %v5275 = vadd.f32 0.0, %v5274
        %5276 = vmatprep.mubr.f32.mxu0 0.0
        %5277 = vmatmul.mubr.f32.gmra.mxu0 %v5110
        %v5278 = vpop.f32.mrf.mxu0
        %v5279 = vadd.f32 0.0, %v5278
        %v5280 = vpop.f32.mrf.mxu0
        %v5281 = vadd.f32 0.0, %v5280
        %5282 = vmatprep.mubr.f32.mxu0 0.0
        %5283 = vmatmul.mubr.f32.gmra.mxu0 %v5111
        %v5284 = vpop.f32.mrf.mxu0
        %v5285 = vadd.f32 0.0, %v5284
        %v5286 = vpop.f32.mrf.mxu0
        %v5287 = vadd.f32 0.0, %v5286
        %5288 = vmatprep.mubr.f32.mxu0 0.0
        %5289 = vmatmul.mubr.f32.gmra.mxu0 %v5112
        %v5290 = vpop.f32.mrf.mxu0
        %v5291 = vadd.f32 0.0, %v5290
        %v5292 = vpop.f32.mrf.mxu0
        %v5293 = vadd.f32 0.0, %v5292
        %5294 = vmatprep.mubr.f32.mxu0 0.0
        %5295 = vmatmul.mubr.f32.gmra.mxu0 %v5113
        %v5296 = vpop.f32.mrf.mxu0
        %v5297 = vadd.f32 0.0, %v5296
        %v5298 = vpop.f32.mrf.mxu0
        %v5299 = vadd.f32 0.0, %v5298
        %5300 = vmatprep.mubr.f32.mxu0 0.0
        %5301 = vmatmul.mubr.f32.gmra.mxu0 %v5114
        %v5302 = vpop.f32.mrf.mxu0
        %v5303 = vadd.f32 0.0, %v5302
        %v5304 = vpop.f32.mrf.mxu0
        %v5305 = vadd.f32 0.0, %v5304
        %5306 = vmatprep.mubr.f32.mxu0 0.0
        %5307 = vmatmul.mubr.f32.gmra.mxu0 %v5115
        %v5308 = vpop.f32.mrf.mxu0
        %v5309 = vadd.f32 0.0, %v5308
        %v5310 = vpop.f32.mrf.mxu0
        %v5311 = vadd.f32 0.0, %v5310
        %5312 = vmatprep.mubr.f32.mxu0 0.0
        %5313 = vmatmul.mubr.f32.gmra.mxu0 %v5116
        %v5314 = vpop.f32.mrf.mxu0
        %v5315 = vadd.f32 0.0, %v5314
        %v5316 = vpop.f32.mrf.mxu0
        %v5317 = vadd.f32 0.0, %v5316
        %5318 = vmatprep.mubr.f32.mxu0 0.0
        %5319 = vmatmul.mubr.f32.gmra.mxu0 %v5117
        %v5320 = vpop.f32.mrf.mxu0
        %v5321 = vadd.f32 0.0, %v5320
        %v5322 = vpop.f32.mrf.mxu0
        %v5323 = vadd.f32 0.0, %v5322
        %5324 = vmatprep.mubr.f32.mxu0 0.0
        %5325 = vmatmul.mubr.f32.gmra.mxu0 %v5118
        %v5326 = vpop.f32.mrf.mxu0
        %v5327 = vadd.f32 0.0, %v5326
        %v5328 = vpop.f32.mrf.mxu0
        %v5329 = vadd.f32 0.0, %v5328
        %5330 = vmatprep.mubr.f32.mxu0 0.0
        %5331 = vmatmul.mubr.f32.gmra.mxu0 %v5119
        %v5332 = vpop.f32.mrf.mxu0
        %v5333 = vadd.f32 0.0, %v5332
        %v5334 = vpop.f32.mrf.mxu0
        %v5335 = vadd.f32 0.0, %v5334
        %5336 = vmatprep.mubr.f32.mxu0 0.0
        %5337 = vmatmul.mubr.f32.gmra.mxu0 %v5120
        %v5338 = vpop.f32.mrf.mxu0
        %v5339 = vadd.f32 0.0, %v5338
        %v5340 = vpop.f32.mrf.mxu0
        %v5341 = vadd.f32 0.0, %v5340
        %5342 = vmatprep.mubr.f32.mxu0 0.0
        %5343 = vmatmul.mubr.f32.gmra.mxu0 %v5121
        %v5344 = vpop.f32.mrf.mxu0
        %v5345 = vadd.f32 0.0, %v5344
        %v5346 = vpop.f32.mrf.mxu0
        %v5347 = vadd.f32 0.0, %v5346
        %5348 = vmatprep.mubr.f32.mxu0 0.0
        %5349 = vmatmul.mubr.f32.gmra.mxu0 %v5122
        %v5350 = vpop.f32.mrf.mxu0
        %v5351 = vadd.f32 0.0, %v5350
        %v5352 = vpop.f32.mrf.mxu0
        %v5353 = vadd.f32 0.0, %v5352
        %5354 = vmatprep.mubr.f32.mxu0 0.0
        %5355 = vmatmul.mubr.f32.gmra.mxu0 %v5123
        %v5356 = vpop.f32.mrf.mxu0
        %v5357 = vadd.f32 0.0, %v5356
        %v5358 = vpop.f32.mrf.mxu0
        %v5359 = vadd.f32 0.0, %v5358
        %5360 = vmatprep.mubr.f32.mxu0 0.0
        %5361 = vmatmul.mubr.f32.gmra.mxu0 %v5124
        %v5362 = vpop.f32.mrf.mxu0
        %v5363 = vadd.f32 0.0, %v5362
        %v5364 = vpop.f32.mrf.mxu0
        %v5365 = vadd.f32 0.0, %v5364
        %5366 = vmatprep.mubr.f32.mxu0 0.0
        %5367 = vmatmul.mubr.f32.gmra.mxu0 %v5125
        %v5368 = vpop.f32.mrf.mxu0
        %v5369 = vadd.f32 0.0, %v5368
        %v5370 = vpop.f32.mrf.mxu0
        %v5371 = vadd.f32 0.0, %v5370
        %5372 = vmatprep.mubr.f32.mxu0 0.0
        %5373 = vmatmul.mubr.f32.gmra.mxu0 %v5126
        %v5374 = vpop.f32.mrf.mxu0
        %v5375 = vadd.f32 0.0, %v5374
        %v5376 = vpop.f32.mrf.mxu0
        %v5377 = vadd.f32 0.0, %v5376
        %5378 = vmatprep.mubr.f32.mxu0 0.0
        %5379 = vmatmul.mubr.f32.gmra.mxu0 %v5127
        %v5380 = vpop.f32.mrf.mxu0
        %v5381 = vadd.f32 0.0, %v5380
        %v5382 = vpop.f32.mrf.mxu0
        %v5383 = vadd.f32 0.0, %v5382
        %5384 = vmatprep.mubr.f32.mxu0 0.0
        %5385 = vmatmul.mubr.f32.gmra.mxu0 %v5128
        %v5386 = vpop.f32.mrf.mxu0
        %v5387 = vadd.f32 0.0, %v5386
        %v5388 = vpop.f32.mrf.mxu0
        %v5389 = vadd.f32 0.0, %v5388
        %5390 = vmatprep.mubr.f32.mxu0 0.0
        %5391 = vmatmul.mubr.f32.gmra.mxu0 %v5129
        %v5392 = vpop.f32.mrf.mxu0
        %v5393 = vadd.f32 0.0, %v5392
        %v5394 = vpop.f32.mrf.mxu0
        %v5395 = vadd.f32 0.0, %v5394
        %5396 = vmatprep.mubr.f32.mxu0 0.0
        %5397 = vmatmul.mubr.f32.gmra.mxu0 %v5130
        %v5398 = vpop.f32.mrf.mxu0
        %v5399 = vadd.f32 0.0, %v5398
        %v5400 = vpop.f32.mrf.mxu0
        %v5401 = vadd.f32 0.0, %v5400
        %5402 = vmatprep.mubr.f32.mxu0 0.0
        %5403 = vmatmul.mubr.f32.gmra.mxu0 %v5131
        %v5404 = vpop.f32.mrf.mxu0
        %v5405 = vadd.f32 0.0, %v5404
        %v5406 = vpop.f32.mrf.mxu0
        %v5407 = vadd.f32 0.0, %v5406
        %5408 = vmatprep.mubr.f32.mxu0 0.0
        %5409 = vmatmul.mubr.f32.gmra.mxu0 %v5132
        %v5410 = vpop.f32.mrf.mxu0
        %v5411 = vadd.f32 0.0, %v5410
        %v5412 = vpop.f32.mrf.mxu0
        %v5413 = vadd.f32 0.0, %v5412
        %5414 = vmatprep.mubr.f32.mxu0 0.0
        %5415 = vmatmul.mubr.f32.gmra.mxu0 %v5133
        %v5416 = vpop.f32.mrf.mxu0
        %v5417 = vadd.f32 0.0, %v5416
        %v5418 = vpop.f32.mrf.mxu0
        %v5419 = vadd.f32 0.0, %v5418
        %5420 = vmatprep.mubr.f32.mxu0 0.0
        %5421 = vmatmul.mubr.f32.gmra.mxu0 %v5134
        %v5422 = vpop.f32.mrf.mxu0
        %v5423 = vadd.f32 0.0, %v5422
        %v5424 = vpop.f32.mrf.mxu0
        %v5425 = vadd.f32 0.0, %v5424
        %5426 = vmatprep.mubr.f32.mxu0 0.0
        %5427 = vmatmul.mubr.f32.gmra.mxu0 %v5135
        %v5428 = vpop.f32.mrf.mxu0
        %v5429 = vadd.f32 0.0, %v5428
        %v5430 = vpop.f32.mrf.mxu0
        %v5431 = vadd.f32 0.0, %v5430
        %5432 = vmatprep.mubr.f32.mxu0 0.0
        %5433 = vmatmul.mubr.f32.gmra.mxu0 %v5136
        %v5434 = vpop.f32.mrf.mxu0
        %v5435 = vadd.f32 0.0, %v5434
        %v5436 = vpop.f32.mrf.mxu0
        %v5437 = vadd.f32 0.0, %v5436
        %5438 = vmatprep.mubr.f32.mxu0 0.0
        %5439 = vmatmul.mubr.f32.gmra.mxu0 %v5137
        %v5440 = vpop.f32.mrf.mxu0
        %v5441 = vadd.f32 0.0, %v5440
        %v5442 = vpop.f32.mrf.mxu0
        %v5443 = vadd.f32 0.0, %v5442
        %5444 = vmatprep.mubr.f32.mxu0 0.0
        %5445 = vmatmul.mubr.f32.gmra.mxu0 %v5138
        %v5446 = vpop.f32.mrf.mxu0
        %v5447 = vadd.f32 0.0, %v5446
        %v5448 = vpop.f32.mrf.mxu0
        %v5449 = vadd.f32 0.0, %v5448
        %5450 = vmatprep.mubr.f32.mxu0 0.0
        %5451 = vmatmul.mubr.f32.gmra.mxu0 %v5139
        %v5452 = vpop.f32.mrf.mxu0
        %v5453 = vadd.f32 0.0, %v5452
        %v5454 = vpop.f32.mrf.mxu0
        %v5455 = vadd.f32 0.0, %v5454
        %5456 = vmatprep.mubr.f32.mxu0 0.0
        %5457 = vmatmul.mubr.f32.gmra.mxu0 %v5140
        %v5458 = vpop.f32.mrf.mxu0
        %v5459 = vadd.f32 0.0, %v5458
        %v5460 = vpop.f32.mrf.mxu0
        %v5461 = vadd.f32 0.0, %v5460
        %5462 = vmatprep.mubr.f32.mxu0 0.0
        %5463 = vmatmul.mubr.f32.gmra.mxu0 %v5141
        %v5464 = vpop.f32.mrf.mxu0
        %v5465 = vadd.f32 0.0, %v5464
        %v5466 = vpop.f32.mrf.mxu0
        %v5467 = vadd.f32 0.0, %v5466
        %5468 = vmatprep.mubr.f32.mxu0 0.0
        %5469 = vmatmul.mubr.f32.gmra.mxu0 %v5142
        %v5470 = vpop.f32.mrf.mxu0
        %v5471 = vadd.f32 0.0, %v5470
        %v5472 = vpop.f32.mrf.mxu0
        %v5473 = vadd.f32 0.0, %v5472
        %5474 = vdwg.mxu0
        %v5475 = vld [vmem:[#allocation4] sm:$0xff]
        %v5476 = vld [vmem:[#allocation4 + $0x8] sm:$0xff]
        %v5477 = vld [vmem:[#allocation4 + $0x10] sm:$0xff]
        %v5478 = vld [vmem:[#allocation4 + $0x18] sm:$0xff]
        %v5479 = vld [vmem:[#allocation4 + $0x20] sm:$0xff]
        %v5480 = vld [vmem:[#allocation4 + $0x28] sm:$0xff]
        %v5481 = vld [vmem:[#allocation4 + $0x30] sm:$0xff]
        %v5482 = vld [vmem:[#allocation4 + $0x38] sm:$0xff]
        %v5483 = vld [vmem:[#allocation4 + $0x40] sm:$0xff]
        %v5484 = vld [vmem:[#allocation4 + $0x48] sm:$0xff]
        %v5485 = vld [vmem:[#allocation4 + $0x50] sm:$0xff]
        %v5486 = vld [vmem:[#allocation4 + $0x58] sm:$0xff]
        %v5487 = vld [vmem:[#allocation4 + $0x60] sm:$0xff]
        %v5488 = vld [vmem:[#allocation4 + $0x68] sm:$0xff]
        %v5489 = vld [vmem:[#allocation4 + $0x70] sm:$0xff]
        %v5490 = vld [vmem:[#allocation4 + $0x78] sm:$0xff]
        %v5491 = vld [vmem:[#allocation4 + $0x80] sm:$0xff]
        %v5492 = vld [vmem:[#allocation4 + $0x88] sm:$0xff]
        %v5493 = vld [vmem:[#allocation4 + $0x90] sm:$0xff]
        %v5494 = vld [vmem:[#allocation4 + $0x98] sm:$0xff]
        %v5495 = vld [vmem:[#allocation4 + $0xa0] sm:$0xff]
        %v5496 = vld [vmem:[#allocation4 + $0xa8] sm:$0xff]
        %v5497 = vld [vmem:[#allocation4 + $0xb0] sm:$0xff]
        %v5498 = vld [vmem:[#allocation4 + $0xb8] sm:$0xff]
        %v5499 = vld [vmem:[#allocation4 + $0xc0] sm:$0xff]
        %v5500 = vld [vmem:[#allocation4 + $0xc8] sm:$0xff]
        %v5501 = vld [vmem:[#allocation4 + $0xd0] sm:$0xff]
        %v5502 = vld [vmem:[#allocation4 + $0xd8] sm:$0xff]
        %v5503 = vld [vmem:[#allocation4 + $0xe0] sm:$0xff]
        %v5504 = vld [vmem:[#allocation4 + $0xe8] sm:$0xff]
        %v5505 = vld [vmem:[#allocation4 + $0xf0] sm:$0xff]
        %v5506 = vld [vmem:[#allocation4 + $0xf8] sm:$0xff]
        %v5507 = vld [vmem:[#allocation4 + $0x100] sm:$0xff]
        %v5508 = vld [vmem:[#allocation4 + $0x108] sm:$0xff]
        %v5509 = vld [vmem:[#allocation4 + $0x110] sm:$0xff]
        %v5510 = vld [vmem:[#allocation4 + $0x118] sm:$0xff]
        %v5511 = vld [vmem:[#allocation4 + $0x120] sm:$0xff]
        %v5512 = vld [vmem:[#allocation4 + $0x128] sm:$0xff]
        %v5513 = vld [vmem:[#allocation4 + $0x130] sm:$0xff]
        %v5514 = vld [vmem:[#allocation4 + $0x138] sm:$0xff]
        %v5515 = vld [vmem:[#allocation4 + $0x140] sm:$0xff]
        %v5516 = vld [vmem:[#allocation4 + $0x148] sm:$0xff]
        %v5517 = vld [vmem:[#allocation4 + $0x150] sm:$0xff]
        %v5518 = vld [vmem:[#allocation4 + $0x158] sm:$0xff]
        %v5519 = vld [vmem:[#allocation4 + $0x160] sm:$0xff]
        %v5520 = vld [vmem:[#allocation4 + $0x168] sm:$0xff]
        %v5521 = vld [vmem:[#allocation4 + $0x170] sm:$0xff]
        %v5522 = vld [vmem:[#allocation4 + $0x178] sm:$0xff]
        %v5523 = vld [vmem:[#allocation4 + $0x180] sm:$0xff]
        %v5524 = vld [vmem:[#allocation4 + $0x188] sm:$0xff]
        %v5525 = vld [vmem:[#allocation4 + $0x190] sm:$0xff]
        %v5526 = vld [vmem:[#allocation4 + $0x198] sm:$0xff]
        %v5527 = vld [vmem:[#allocation4 + $0x1a0] sm:$0xff]
        %v5528 = vld [vmem:[#allocation4 + $0x1a8] sm:$0xff]
        %v5529 = vld [vmem:[#allocation4 + $0x1b0] sm:$0xff]
        %v5530 = vld [vmem:[#allocation4 + $0x1b8] sm:$0xff]
        %v5531 = vld [vmem:[#allocation4 + $0x1c0] sm:$0xff]
        %v5532 = vld [vmem:[#allocation4 + $0x1c8] sm:$0xff]
        %v5533 = vld [vmem:[#allocation4 + $0x1d0] sm:$0xff]
        %v5534 = vld [vmem:[#allocation4 + $0x1d8] sm:$0xff]
        %v5535 = vld [vmem:[#allocation4 + $0x1e0] sm:$0xff]
        %v5536 = vld [vmem:[#allocation4 + $0x1e8] sm:$0xff]
        %v5537 = vld [vmem:[#allocation4 + $0x1f0] sm:$0xff]
        %v5538 = vld [vmem:[#allocation4 + $0x1f8] sm:$0xff]
        %v5539 = vld [vmem:[#allocation4 + $0x200] sm:$0xff]
        %v5540 = vld [vmem:[#allocation4 + $0x208] sm:$0xff]
        %v5541 = vld [vmem:[#allocation4 + $0x210] sm:$0xff]
        %v5542 = vld [vmem:[#allocation4 + $0x218] sm:$0xff]
        %v5543 = vld [vmem:[#allocation4 + $0x220] sm:$0xff]
        %v5544 = vld [vmem:[#allocation4 + $0x228] sm:$0xff]
        %v5545 = vld [vmem:[#allocation4 + $0x230] sm:$0xff]
        %v5546 = vld [vmem:[#allocation4 + $0x238] sm:$0xff]
        %v5547 = vld [vmem:[#allocation4 + $0x240] sm:$0xff]
        %v5548 = vld [vmem:[#allocation4 + $0x248] sm:$0xff]
        %v5549 = vld [vmem:[#allocation4 + $0x250] sm:$0xff]
        %v5550 = vld [vmem:[#allocation4 + $0x258] sm:$0xff]
        %v5551 = vld [vmem:[#allocation4 + $0x260] sm:$0x7]
        %v5552 = vld [vmem:[#allocation4 + $0x268] sm:$0x7]
        %v5553 = vadd.f32 %v5475, %v5243
        %v5554 = vadd.f32 %v5476, %v5245
        %v5555 = vadd.f32 %v5477, %v5249
        %v5556 = vadd.f32 %v5478, %v5251
        %v5557 = vadd.f32 %v5479, %v5255
        %v5558 = vadd.f32 %v5480, %v5257
        %v5559 = vadd.f32 %v5481, %v5261
        %v5560 = vadd.f32 %v5482, %v5263
        %v5561 = vadd.f32 %v5483, %v5267
        %v5562 = vadd.f32 %v5484, %v5269
        %v5563 = vadd.f32 %v5485, %v5273
        %v5564 = vadd.f32 %v5486, %v5275
        %v5565 = vadd.f32 %v5487, %v5279
        %v5566 = vadd.f32 %v5488, %v5281
        %v5567 = vadd.f32 %v5489, %v5285
        %v5568 = vadd.f32 %v5490, %v5287
        %v5569 = vadd.f32 %v5491, %v5291
        %v5570 = vadd.f32 %v5492, %v5293
        %v5571 = vadd.f32 %v5493, %v5297
        %v5572 = vadd.f32 %v5494, %v5299
        %v5573 = vadd.f32 %v5495, %v5303
        %v5574 = vadd.f32 %v5496, %v5305
        %v5575 = vadd.f32 %v5497, %v5309
        %v5576 = vadd.f32 %v5498, %v5311
        %v5577 = vadd.f32 %v5499, %v5315
        %v5578 = vadd.f32 %v5500, %v5317
        %v5579 = vadd.f32 %v5501, %v5321
        %v5580 = vadd.f32 %v5502, %v5323
        %v5581 = vadd.f32 %v5503, %v5327
        %v5582 = vadd.f32 %v5504, %v5329
        %v5583 = vadd.f32 %v5505, %v5333
        %v5584 = vadd.f32 %v5506, %v5335
        %v5585 = vadd.f32 %v5507, %v5339
        %v5586 = vadd.f32 %v5508, %v5341
        %v5587 = vadd.f32 %v5509, %v5345
        %v5588 = vadd.f32 %v5510, %v5347
        %v5589 = vadd.f32 %v5511, %v5351
        %v5590 = vadd.f32 %v5512, %v5353
        %v5591 = vadd.f32 %v5513, %v5357
        %v5592 = vadd.f32 %v5514, %v5359
        %v5593 = vadd.f32 %v5515, %v5363
        %v5594 = vadd.f32 %v5516, %v5365
        %v5595 = vadd.f32 %v5517, %v5369
        %v5596 = vadd.f32 %v5518, %v5371
        %v5597 = vadd.f32 %v5519, %v5375
        %v5598 = vadd.f32 %v5520, %v5377
        %v5599 = vadd.f32 %v5521, %v5381
        %v5600 = vadd.f32 %v5522, %v5383
        %v5601 = vadd.f32 %v5523, %v5387
        %v5602 = vadd.f32 %v5524, %v5389
        %v5603 = vadd.f32 %v5525, %v5393
        %v5604 = vadd.f32 %v5526, %v5395
        %v5605 = vadd.f32 %v5527, %v5399
        %v5606 = vadd.f32 %v5528, %v5401
        %v5607 = vadd.f32 %v5529, %v5405
        %v5608 = vadd.f32 %v5530, %v5407
        %v5609 = vadd.f32 %v5531, %v5411
        %v5610 = vadd.f32 %v5532, %v5413
        %v5611 = vadd.f32 %v5533, %v5417
        %v5612 = vadd.f32 %v5534, %v5419
        %v5613 = vadd.f32 %v5535, %v5423
        %v5614 = vadd.f32 %v5536, %v5425
        %v5615 = vadd.f32 %v5537, %v5429
        %v5616 = vadd.f32 %v5538, %v5431
        %v5617 = vadd.f32 %v5539, %v5435
        %v5618 = vadd.f32 %v5540, %v5437
        %v5619 = vadd.f32 %v5541, %v5441
        %v5620 = vadd.f32 %v5542, %v5443
        %v5621 = vadd.f32 %v5543, %v5447
        %v5622 = vadd.f32 %v5544, %v5449
        %v5623 = vadd.f32 %v5545, %v5453
        %v5624 = vadd.f32 %v5546, %v5455
        %v5625 = vadd.f32 %v5547, %v5459
        %v5626 = vadd.f32 %v5548, %v5461
        %v5627 = vadd.f32 %v5549, %v5465
        %v5628 = vadd.f32 %v5550, %v5467
        %v5629 = vadd.f32 %v5551, %v5471
        %v5630 = vadd.f32 %v5552, %v5473
        %5631 = vst [vmem:[#allocation4] sm:$0xff] %v5553
        %5632 = vst [vmem:[#allocation4 + $0x8] sm:$0xff] %v5554
        %5633 = vst [vmem:[#allocation4 + $0x10] sm:$0xff] %v5555
        %5634 = vst [vmem:[#allocation4 + $0x18] sm:$0xff] %v5556
        %5635 = vst [vmem:[#allocation4 + $0x20] sm:$0xff] %v5557
        %5636 = vst [vmem:[#allocation4 + $0x28] sm:$0xff] %v5558
        %5637 = vst [vmem:[#allocation4 + $0x30] sm:$0xff] %v5559
        %5638 = vst [vmem:[#allocation4 + $0x38] sm:$0xff] %v5560
        %5639 = vst [vmem:[#allocation4 + $0x40] sm:$0xff] %v5561
        %5640 = vst [vmem:[#allocation4 + $0x48] sm:$0xff] %v5562
        %5641 = vst [vmem:[#allocation4 + $0x50] sm:$0xff] %v5563
        %5642 = vst [vmem:[#allocation4 + $0x58] sm:$0xff] %v5564
        %5643 = vst [vmem:[#allocation4 + $0x60] sm:$0xff] %v5565
        %5644 = vst [vmem:[#allocation4 + $0x68] sm:$0xff] %v5566
        %5645 = vst [vmem:[#allocation4 + $0x70] sm:$0xff] %v5567
        %5646 = vst [vmem:[#allocation4 + $0x78] sm:$0xff] %v5568
        %5647 = vst [vmem:[#allocation4 + $0x80] sm:$0xff] %v5569
        %5648 = vst [vmem:[#allocation4 + $0x88] sm:$0xff] %v5570
        %5649 = vst [vmem:[#allocation4 + $0x90] sm:$0xff] %v5571
        %5650 = vst [vmem:[#allocation4 + $0x98] sm:$0xff] %v5572
        %5651 = vst [vmem:[#allocation4 + $0xa0] sm:$0xff] %v5573
        %5652 = vst [vmem:[#allocation4 + $0xa8] sm:$0xff] %v5574
        %5653 = vst [vmem:[#allocation4 + $0xb0] sm:$0xff] %v5575
        %5654 = vst [vmem:[#allocation4 + $0xb8] sm:$0xff] %v5576
        %5655 = vst [vmem:[#allocation4 + $0xc0] sm:$0xff] %v5577
        %5656 = vst [vmem:[#allocation4 + $0xc8] sm:$0xff] %v5578
        %5657 = vst [vmem:[#allocation4 + $0xd0] sm:$0xff] %v5579
        %5658 = vst [vmem:[#allocation4 + $0xd8] sm:$0xff] %v5580
        %5659 = vst [vmem:[#allocation4 + $0xe0] sm:$0xff] %v5581
        %5660 = vst [vmem:[#allocation4 + $0xe8] sm:$0xff] %v5582
        %5661 = vst [vmem:[#allocation4 + $0xf0] sm:$0xff] %v5583
        %5662 = vst [vmem:[#allocation4 + $0xf8] sm:$0xff] %v5584
        %5663 = vst [vmem:[#allocation4 + $0x100] sm:$0xff] %v5585
        %5664 = vst [vmem:[#allocation4 + $0x108] sm:$0xff] %v5586
        %5665 = vst [vmem:[#allocation4 + $0x110] sm:$0xff] %v5587
        %5666 = vst [vmem:[#allocation4 + $0x118] sm:$0xff] %v5588
        %5667 = vst [vmem:[#allocation4 + $0x120] sm:$0xff] %v5589
        %5668 = vst [vmem:[#allocation4 + $0x128] sm:$0xff] %v5590
        %5669 = vst [vmem:[#allocation4 + $0x130] sm:$0xff] %v5591
        %5670 = vst [vmem:[#allocation4 + $0x138] sm:$0xff] %v5592
        %5671 = vst [vmem:[#allocation4 + $0x140] sm:$0xff] %v5593
        %5672 = vst [vmem:[#allocation4 + $0x148] sm:$0xff] %v5594
        %5673 = vst [vmem:[#allocation4 + $0x150] sm:$0xff] %v5595
        %5674 = vst [vmem:[#allocation4 + $0x158] sm:$0xff] %v5596
        %5675 = vst [vmem:[#allocation4 + $0x160] sm:$0xff] %v5597
        %5676 = vst [vmem:[#allocation4 + $0x168] sm:$0xff] %v5598
        %5677 = vst [vmem:[#allocation4 + $0x170] sm:$0xff] %v5599
        %5678 = vst [vmem:[#allocation4 + $0x178] sm:$0xff] %v5600
        %5679 = vst [vmem:[#allocation4 + $0x180] sm:$0xff] %v5601
        %5680 = vst [vmem:[#allocation4 + $0x188] sm:$0xff] %v5602
        %5681 = vst [vmem:[#allocation4 + $0x190] sm:$0xff] %v5603
        %5682 = vst [vmem:[#allocation4 + $0x198] sm:$0xff] %v5604
        %5683 = vst [vmem:[#allocation4 + $0x1a0] sm:$0xff] %v5605
        %5684 = vst [vmem:[#allocation4 + $0x1a8] sm:$0xff] %v5606
        %5685 = vst [vmem:[#allocation4 + $0x1b0] sm:$0xff] %v5607
        %5686 = vst [vmem:[#allocation4 + $0x1b8] sm:$0xff] %v5608
        %5687 = vst [vmem:[#allocation4 + $0x1c0] sm:$0xff] %v5609
        %5688 = vst [vmem:[#allocation4 + $0x1c8] sm:$0xff] %v5610
        %5689 = vst [vmem:[#allocation4 + $0x1d0] sm:$0xff] %v5611
        %5690 = vst [vmem:[#allocation4 + $0x1d8] sm:$0xff] %v5612
        %5691 = vst [vmem:[#allocation4 + $0x1e0] sm:$0xff] %v5613
        %5692 = vst [vmem:[#allocation4 + $0x1e8] sm:$0xff] %v5614
        %5693 = vst [vmem:[#allocation4 + $0x1f0] sm:$0xff] %v5615
        %5694 = vst [vmem:[#allocation4 + $0x1f8] sm:$0xff] %v5616
        %5695 = vst [vmem:[#allocation4 + $0x200] sm:$0xff] %v5617
        %5696 = vst [vmem:[#allocation4 + $0x208] sm:$0xff] %v5618
        %5697 = vst [vmem:[#allocation4 + $0x210] sm:$0xff] %v5619
        %5698 = vst [vmem:[#allocation4 + $0x218] sm:$0xff] %v5620
        %5699 = vst [vmem:[#allocation4 + $0x220] sm:$0xff] %v5621
        %5700 = vst [vmem:[#allocation4 + $0x228] sm:$0xff] %v5622
        %5701 = vst [vmem:[#allocation4 + $0x230] sm:$0xff] %v5623
        %5702 = vst [vmem:[#allocation4 + $0x238] sm:$0xff] %v5624
        %5703 = vst [vmem:[#allocation4 + $0x240] sm:$0xff] %v5625
        %5704 = vst [vmem:[#allocation4 + $0x248] sm:$0xff] %v5626
        %5705 = vst [vmem:[#allocation4 + $0x250] sm:$0xff] %v5627
        %5706 = vst [vmem:[#allocation4 + $0x258] sm:$0xff] %v5628
        %5707 = vst [vmem:[#allocation4 + $0x260] sm:$0x7] %v5629
        %5708 = vst [vmem:[#allocation4 + $0x268] sm:$0x7] %v5630
        %v5709 = vld [vmem:[#allocation3 + $0x6] sm:$0xff]
        %v5710 = vld [vmem:[#allocation3 + $0xe] sm:$0xff]
        %v5711 = vld [vmem:[#allocation3 + $0x16] sm:$0xff]
        %v5712 = vld [vmem:[#allocation3 + $0x1e] sm:$0xff]
        %v5713 = vld [vmem:[#allocation3 + $0x26] sm:$0xff]
        %v5714 = vld [vmem:[#allocation3 + $0x2e] sm:$0xff]
        %v5715 = vld [vmem:[#allocation3 + $0x36] sm:$0xff]
        %v5716 = vld [vmem:[#allocation3 + $0x3e] sm:$0xff]
        %v5717 = vld [vmem:[#allocation3 + $0x46] sm:$0xff]
        %v5718 = vld [vmem:[#allocation3 + $0x4e] sm:$0xff]
        %v5719 = vld [vmem:[#allocation3 + $0x56] sm:$0xff]
        %v5720 = vld [vmem:[#allocation3 + $0x5e] sm:$0xff]
        %v5721 = vld [vmem:[#allocation3 + $0x66] sm:$0xff]
        %v5722 = vld [vmem:[#allocation3 + $0x6e] sm:$0xff]
        %v5723 = vld [vmem:[#allocation3 + $0x76] sm:$0xff]
        %v5724 = vld [vmem:[#allocation3 + $0x7e] sm:$0xff]
        %v5725 = vld [vmem:[#allocation3 + $0x86] sm:$0xff]
        %v5726 = vld [vmem:[#allocation3 + $0x8e] sm:$0xff]
        %v5727 = vld [vmem:[#allocation3 + $0x96] sm:$0xff]
        %v5728 = vld [vmem:[#allocation3 + $0x9e] sm:$0xff]
        %v5729 = vld [vmem:[#allocation3 + $0xa6] sm:$0xff]
        %v5730 = vld [vmem:[#allocation3 + $0xae] sm:$0xff]
        %v5731 = vld [vmem:[#allocation3 + $0xb6] sm:$0xff]
        %v5732 = vld [vmem:[#allocation3 + $0xbe] sm:$0xff]
        %v5733 = vld [vmem:[#allocation3 + $0xc6] sm:$0xff]
        %v5734 = vld [vmem:[#allocation3 + $0xce] sm:$0xff]
        %v5735 = vld [vmem:[#allocation3 + $0xd6] sm:$0xff]
        %v5736 = vld [vmem:[#allocation3 + $0xde] sm:$0xff]
        %v5737 = vld [vmem:[#allocation3 + $0xe6] sm:$0xff]
        %v5738 = vld [vmem:[#allocation3 + $0xee] sm:$0xff]
        %v5739 = vld [vmem:[#allocation3 + $0xf6] sm:$0xff]
        %v5740 = vld [vmem:[#allocation3 + $0xfe] sm:$0xff]
        %v5741 = vld [vmem:[#allocation3 + $0x106] sm:$0xff]
        %v5742 = vld [vmem:[#allocation3 + $0x10e] sm:$0xff]
        %v5743 = vld [vmem:[#allocation3 + $0x116] sm:$0xff]
        %v5744 = vld [vmem:[#allocation3 + $0x11e] sm:$0xff]
        %v5745 = vld [vmem:[#allocation3 + $0x126] sm:$0xff]
        %v5746 = vld [vmem:[#allocation3 + $0x12e] sm:$0xff]
        %v5747 = vld [vmem:[#allocation3 + $0x136] sm:$0x7]
        %s5748 = scalar_lea.vmem %s3, 768
        %v5749 = vld [vmem:[%s5748] sm:$0xff]
        %v5750 = vld [vmem:[%s5748 + $0x8] sm:$0xff]
        %v5751 = vld [vmem:[%s5748 + $0x10] sm:$0xff]
        %v5752 = vld [vmem:[%s5748 + $0x18] sm:$0xff]
        %v5753 = vld [vmem:[%s5748 + $0x20] sm:$0xff]
        %v5754 = vld [vmem:[%s5748 + $0x28] sm:$0xff]
        %v5755 = vld [vmem:[%s5748 + $0x30] sm:$0xff]
        %v5756 = vld [vmem:[%s5748 + $0x38] sm:$0xff]
        %v5757 = vld [vmem:[%s5748 + $0x40] sm:$0xff]
        %v5758 = vld [vmem:[%s5748 + $0x48] sm:$0xff]
        %v5759 = vld [vmem:[%s5748 + $0x50] sm:$0xff]
        %v5760 = vld [vmem:[%s5748 + $0x58] sm:$0xff]
        %v5761 = vld [vmem:[%s5748 + $0x60] sm:$0xff]
        %v5762 = vld [vmem:[%s5748 + $0x68] sm:$0xff]
        %v5763 = vld [vmem:[%s5748 + $0x70] sm:$0xff]
        %v5764 = vld [vmem:[%s5748 + $0x78] sm:$0xff]
        %v5765 = vld [vmem:[%s5748 + $0x80] sm:$0xff]
        %v5766 = vld [vmem:[%s5748 + $0x88] sm:$0xff]
        %v5767 = vld [vmem:[%s5748 + $0x90] sm:$0xff]
        %v5768 = vld [vmem:[%s5748 + $0x98] sm:$0xff]
        %v5769 = vld [vmem:[%s5748 + $0xa0] sm:$0xff]
        %v5770 = vld [vmem:[%s5748 + $0xa8] sm:$0xff]
        %v5771 = vld [vmem:[%s5748 + $0xb0] sm:$0xff]
        %v5772 = vld [vmem:[%s5748 + $0xb8] sm:$0xff]
        %v5773 = vld [vmem:[%s5748 + $0xc0] sm:$0xff]
        %v5774 = vld [vmem:[%s5748 + $0xc8] sm:$0xff]
        %v5775 = vld [vmem:[%s5748 + $0xd0] sm:$0xff]
        %v5776 = vld [vmem:[%s5748 + $0xd8] sm:$0xff]
        %v5777 = vld [vmem:[%s5748 + $0xe0] sm:$0xff]
        %v5778 = vld [vmem:[%s5748 + $0xe8] sm:$0xff]
        %v5779 = vld [vmem:[%s5748 + $0xf0] sm:$0xff]
        %v5780 = vld [vmem:[%s5748 + $0xf8] sm:$0xff]
        %5781 = vmatprep.subr.mxu0 %v5780
        %5782 = vmatpush1.msra.mxu0 %v5779
        %5783 = vmatprep.subr.mxu0 %v5778
        %5784 = vmatpush1.msra.mxu0 %v5777
        %5785 = vmatprep.subr.mxu0 %v5776
        %5786 = vmatpush1.msra.mxu0 %v5775
        %5787 = vmatprep.subr.mxu0 %v5774
        %5788 = vmatpush1.msra.mxu0 %v5773
        %5789 = vmatprep.subr.mxu0 %v5772
        %5790 = vmatpush1.msra.mxu0 %v5771
        %5791 = vmatprep.subr.mxu0 %v5770
        %5792 = vmatpush1.msra.mxu0 %v5769
        %5793 = vmatprep.subr.mxu0 %v5768
        %5794 = vmatpush1.msra.mxu0 %v5767
        %5795 = vmatprep.subr.mxu0 %v5766
        %5796 = vmatpush1.msra.mxu0 %v5765
        %5797 = vmatprep.subr.mxu0 %v5764
        %5798 = vmatpush1.msra.mxu0 %v5763
        %5799 = vmatprep.subr.mxu0 %v5762
        %5800 = vmatpush1.msra.mxu0 %v5761
        %5801 = vmatprep.subr.mxu0 %v5760
        %5802 = vmatpush1.msra.mxu0 %v5759
        %5803 = vmatprep.subr.mxu0 %v5758
        %5804 = vmatpush1.msra.mxu0 %v5757
        %5805 = vmatprep.subr.mxu0 %v5756
        %5806 = vmatpush1.msra.mxu0 %v5755
        %5807 = vmatprep.subr.mxu0 %v5754
        %5808 = vmatpush1.msra.mxu0 %v5753
        %5809 = vmatprep.subr.mxu0 %v5752
        %5810 = vmatpush1.msra.mxu0 %v5751
        %5811 = vmatprep.subr.mxu0 %v5750
        %5812 = vmatpush1.msra.mxu0 %v5749
        %5813 = vmatprep.subr.mxu0 0.0
        %5814 = vmatpush2.msra.mxu0 0.0
        %5815 = vmatprep.subr.mxu0 0.0
        %5816 = vmatpush2.msra.mxu0 0.0
        %5817 = vmatprep.subr.mxu0 0.0
        %5818 = vmatpush2.msra.mxu0 0.0
        %5819 = vmatprep.subr.mxu0 0.0
        %5820 = vmatpush2.msra.mxu0 0.0
        %5821 = vmatprep.subr.mxu0 0.0
        %5822 = vmatpush2.msra.mxu0 0.0
        %5823 = vmatprep.subr.mxu0 0.0
        %5824 = vmatpush2.msra.mxu0 0.0
        %5825 = vmatprep.subr.mxu0 0.0
        %5826 = vmatpush2.msra.mxu0 0.0
        %5827 = vmatprep.subr.mxu0 0.0
        %5828 = vmatpush2.msra.mxu0 0.0
        %5829 = vmatprep.subr.mxu0 0.0
        %5830 = vmatpush2.msra.mxu0 0.0
        %5831 = vmatprep.subr.mxu0 0.0
        %5832 = vmatpush2.msra.mxu0 0.0
        %5833 = vmatprep.subr.mxu0 0.0
        %5834 = vmatpush2.msra.mxu0 0.0
        %5835 = vmatprep.subr.mxu0 0.0
        %5836 = vmatpush2.msra.mxu0 0.0
        %5837 = vmatprep.subr.mxu0 0.0
        %5838 = vmatpush2.msra.mxu0 0.0
        %5839 = vmatprep.subr.mxu0 0.0
        %5840 = vmatpush2.msra.mxu0 0.0
        %5841 = vmatprep.subr.mxu0 0.0
        %5842 = vmatpush2.msra.mxu0 0.0
        %5843 = vmatprep.subr.mxu0 0.0
        %5844 = vmatpush2.msra.mxu0 0.0
        %5845 = vmatprep.mubr.f32.mxu0 0.0
        %5846 = vmatmul.mubr.f32.gmra.mxu0 %v5709
        %v5847 = vpop.f32.mrf.mxu0
        %v5848 = vadd.f32 0.0, %v5847
        %v5849 = vpop.f32.mrf.mxu0
        %v5850 = vadd.f32 0.0, %v5849
        %5851 = vmatprep.mubr.f32.mxu0 0.0
        %5852 = vmatmul.mubr.f32.gmra.mxu0 %v5710
        %v5853 = vpop.f32.mrf.mxu0
        %v5854 = vadd.f32 0.0, %v5853
        %v5855 = vpop.f32.mrf.mxu0
        %v5856 = vadd.f32 0.0, %v5855
        %5857 = vmatprep.mubr.f32.mxu0 0.0
        %5858 = vmatmul.mubr.f32.gmra.mxu0 %v5711
        %v5859 = vpop.f32.mrf.mxu0
        %v5860 = vadd.f32 0.0, %v5859
        %v5861 = vpop.f32.mrf.mxu0
        %v5862 = vadd.f32 0.0, %v5861
        %5863 = vmatprep.mubr.f32.mxu0 0.0
        %5864 = vmatmul.mubr.f32.gmra.mxu0 %v5712
        %v5865 = vpop.f32.mrf.mxu0
        %v5866 = vadd.f32 0.0, %v5865
        %v5867 = vpop.f32.mrf.mxu0
        %v5868 = vadd.f32 0.0, %v5867
        %5869 = vmatprep.mubr.f32.mxu0 0.0
        %5870 = vmatmul.mubr.f32.gmra.mxu0 %v5713
        %v5871 = vpop.f32.mrf.mxu0
        %v5872 = vadd.f32 0.0, %v5871
        %v5873 = vpop.f32.mrf.mxu0
        %v5874 = vadd.f32 0.0, %v5873
        %5875 = vmatprep.mubr.f32.mxu0 0.0
        %5876 = vmatmul.mubr.f32.gmra.mxu0 %v5714
        %v5877 = vpop.f32.mrf.mxu0
        %v5878 = vadd.f32 0.0, %v5877
        %v5879 = vpop.f32.mrf.mxu0
        %v5880 = vadd.f32 0.0, %v5879
        %5881 = vmatprep.mubr.f32.mxu0 0.0
        %5882 = vmatmul.mubr.f32.gmra.mxu0 %v5715
        %v5883 = vpop.f32.mrf.mxu0
        %v5884 = vadd.f32 0.0, %v5883
        %v5885 = vpop.f32.mrf.mxu0
        %v5886 = vadd.f32 0.0, %v5885
        %5887 = vmatprep.mubr.f32.mxu0 0.0
        %5888 = vmatmul.mubr.f32.gmra.mxu0 %v5716
        %v5889 = vpop.f32.mrf.mxu0
        %v5890 = vadd.f32 0.0, %v5889
        %v5891 = vpop.f32.mrf.mxu0
        %v5892 = vadd.f32 0.0, %v5891
        %5893 = vmatprep.mubr.f32.mxu0 0.0
        %5894 = vmatmul.mubr.f32.gmra.mxu0 %v5717
        %v5895 = vpop.f32.mrf.mxu0
        %v5896 = vadd.f32 0.0, %v5895
        %v5897 = vpop.f32.mrf.mxu0
        %v5898 = vadd.f32 0.0, %v5897
        %5899 = vmatprep.mubr.f32.mxu0 0.0
        %5900 = vmatmul.mubr.f32.gmra.mxu0 %v5718
        %v5901 = vpop.f32.mrf.mxu0
        %v5902 = vadd.f32 0.0, %v5901
        %v5903 = vpop.f32.mrf.mxu0
        %v5904 = vadd.f32 0.0, %v5903
        %5905 = vmatprep.mubr.f32.mxu0 0.0
        %5906 = vmatmul.mubr.f32.gmra.mxu0 %v5719
        %v5907 = vpop.f32.mrf.mxu0
        %v5908 = vadd.f32 0.0, %v5907
        %v5909 = vpop.f32.mrf.mxu0
        %v5910 = vadd.f32 0.0, %v5909
        %5911 = vmatprep.mubr.f32.mxu0 0.0
        %5912 = vmatmul.mubr.f32.gmra.mxu0 %v5720
        %v5913 = vpop.f32.mrf.mxu0
        %v5914 = vadd.f32 0.0, %v5913
        %v5915 = vpop.f32.mrf.mxu0
        %v5916 = vadd.f32 0.0, %v5915
        %5917 = vmatprep.mubr.f32.mxu0 0.0
        %5918 = vmatmul.mubr.f32.gmra.mxu0 %v5721
        %v5919 = vpop.f32.mrf.mxu0
        %v5920 = vadd.f32 0.0, %v5919
        %v5921 = vpop.f32.mrf.mxu0
        %v5922 = vadd.f32 0.0, %v5921
        %5923 = vmatprep.mubr.f32.mxu0 0.0
        %5924 = vmatmul.mubr.f32.gmra.mxu0 %v5722
        %v5925 = vpop.f32.mrf.mxu0
        %v5926 = vadd.f32 0.0, %v5925
        %v5927 = vpop.f32.mrf.mxu0
        %v5928 = vadd.f32 0.0, %v5927
        %5929 = vmatprep.mubr.f32.mxu0 0.0
        %5930 = vmatmul.mubr.f32.gmra.mxu0 %v5723
        %v5931 = vpop.f32.mrf.mxu0
        %v5932 = vadd.f32 0.0, %v5931
        %v5933 = vpop.f32.mrf.mxu0
        %v5934 = vadd.f32 0.0, %v5933
        %5935 = vmatprep.mubr.f32.mxu0 0.0
        %5936 = vmatmul.mubr.f32.gmra.mxu0 %v5724
        %v5937 = vpop.f32.mrf.mxu0
        %v5938 = vadd.f32 0.0, %v5937
        %v5939 = vpop.f32.mrf.mxu0
        %v5940 = vadd.f32 0.0, %v5939
        %5941 = vmatprep.mubr.f32.mxu0 0.0
        %5942 = vmatmul.mubr.f32.gmra.mxu0 %v5725
        %v5943 = vpop.f32.mrf.mxu0
        %v5944 = vadd.f32 0.0, %v5943
        %v5945 = vpop.f32.mrf.mxu0
        %v5946 = vadd.f32 0.0, %v5945
        %5947 = vmatprep.mubr.f32.mxu0 0.0
        %5948 = vmatmul.mubr.f32.gmra.mxu0 %v5726
        %v5949 = vpop.f32.mrf.mxu0
        %v5950 = vadd.f32 0.0, %v5949
        %v5951 = vpop.f32.mrf.mxu0
        %v5952 = vadd.f32 0.0, %v5951
        %5953 = vmatprep.mubr.f32.mxu0 0.0
        %5954 = vmatmul.mubr.f32.gmra.mxu0 %v5727
        %v5955 = vpop.f32.mrf.mxu0
        %v5956 = vadd.f32 0.0, %v5955
        %v5957 = vpop.f32.mrf.mxu0
        %v5958 = vadd.f32 0.0, %v5957
        %5959 = vmatprep.mubr.f32.mxu0 0.0
        %5960 = vmatmul.mubr.f32.gmra.mxu0 %v5728
        %v5961 = vpop.f32.mrf.mxu0
        %v5962 = vadd.f32 0.0, %v5961
        %v5963 = vpop.f32.mrf.mxu0
        %v5964 = vadd.f32 0.0, %v5963
        %5965 = vmatprep.mubr.f32.mxu0 0.0
        %5966 = vmatmul.mubr.f32.gmra.mxu0 %v5729
        %v5967 = vpop.f32.mrf.mxu0
        %v5968 = vadd.f32 0.0, %v5967
        %v5969 = vpop.f32.mrf.mxu0
        %v5970 = vadd.f32 0.0, %v5969
        %5971 = vmatprep.mubr.f32.mxu0 0.0
        %5972 = vmatmul.mubr.f32.gmra.mxu0 %v5730
        %v5973 = vpop.f32.mrf.mxu0
        %v5974 = vadd.f32 0.0, %v5973
        %v5975 = vpop.f32.mrf.mxu0
        %v5976 = vadd.f32 0.0, %v5975
        %5977 = vmatprep.mubr.f32.mxu0 0.0
        %5978 = vmatmul.mubr.f32.gmra.mxu0 %v5731
        %v5979 = vpop.f32.mrf.mxu0
        %v5980 = vadd.f32 0.0, %v5979
        %v5981 = vpop.f32.mrf.mxu0
        %v5982 = vadd.f32 0.0, %v5981
        %5983 = vmatprep.mubr.f32.mxu0 0.0
        %5984 = vmatmul.mubr.f32.gmra.mxu0 %v5732
        %v5985 = vpop.f32.mrf.mxu0
        %v5986 = vadd.f32 0.0, %v5985
        %v5987 = vpop.f32.mrf.mxu0
        %v5988 = vadd.f32 0.0, %v5987
        %5989 = vmatprep.mubr.f32.mxu0 0.0
        %5990 = vmatmul.mubr.f32.gmra.mxu0 %v5733
        %v5991 = vpop.f32.mrf.mxu0
        %v5992 = vadd.f32 0.0, %v5991
        %v5993 = vpop.f32.mrf.mxu0
        %v5994 = vadd.f32 0.0, %v5993
        %5995 = vmatprep.mubr.f32.mxu0 0.0
        %5996 = vmatmul.mubr.f32.gmra.mxu0 %v5734
        %v5997 = vpop.f32.mrf.mxu0
        %v5998 = vadd.f32 0.0, %v5997
        %v5999 = vpop.f32.mrf.mxu0
        %v6000 = vadd.f32 0.0, %v5999
        %6001 = vmatprep.mubr.f32.mxu0 0.0
        %6002 = vmatmul.mubr.f32.gmra.mxu0 %v5735
        %v6003 = vpop.f32.mrf.mxu0
        %v6004 = vadd.f32 0.0, %v6003
        %v6005 = vpop.f32.mrf.mxu0
        %v6006 = vadd.f32 0.0, %v6005
        %6007 = vmatprep.mubr.f32.mxu0 0.0
        %6008 = vmatmul.mubr.f32.gmra.mxu0 %v5736
        %v6009 = vpop.f32.mrf.mxu0
        %v6010 = vadd.f32 0.0, %v6009
        %v6011 = vpop.f32.mrf.mxu0
        %v6012 = vadd.f32 0.0, %v6011
        %6013 = vmatprep.mubr.f32.mxu0 0.0
        %6014 = vmatmul.mubr.f32.gmra.mxu0 %v5737
        %v6015 = vpop.f32.mrf.mxu0
        %v6016 = vadd.f32 0.0, %v6015
        %v6017 = vpop.f32.mrf.mxu0
        %v6018 = vadd.f32 0.0, %v6017
        %6019 = vmatprep.mubr.f32.mxu0 0.0
        %6020 = vmatmul.mubr.f32.gmra.mxu0 %v5738
        %v6021 = vpop.f32.mrf.mxu0
        %v6022 = vadd.f32 0.0, %v6021
        %v6023 = vpop.f32.mrf.mxu0
        %v6024 = vadd.f32 0.0, %v6023
        %6025 = vmatprep.mubr.f32.mxu0 0.0
        %6026 = vmatmul.mubr.f32.gmra.mxu0 %v5739
        %v6027 = vpop.f32.mrf.mxu0
        %v6028 = vadd.f32 0.0, %v6027
        %v6029 = vpop.f32.mrf.mxu0
        %v6030 = vadd.f32 0.0, %v6029
        %6031 = vmatprep.mubr.f32.mxu0 0.0
        %6032 = vmatmul.mubr.f32.gmra.mxu0 %v5740
        %v6033 = vpop.f32.mrf.mxu0
        %v6034 = vadd.f32 0.0, %v6033
        %v6035 = vpop.f32.mrf.mxu0
        %v6036 = vadd.f32 0.0, %v6035
        %6037 = vmatprep.mubr.f32.mxu0 0.0
        %6038 = vmatmul.mubr.f32.gmra.mxu0 %v5741
        %v6039 = vpop.f32.mrf.mxu0
        %v6040 = vadd.f32 0.0, %v6039
        %v6041 = vpop.f32.mrf.mxu0
        %v6042 = vadd.f32 0.0, %v6041
        %6043 = vmatprep.mubr.f32.mxu0 0.0
        %6044 = vmatmul.mubr.f32.gmra.mxu0 %v5742
        %v6045 = vpop.f32.mrf.mxu0
        %v6046 = vadd.f32 0.0, %v6045
        %v6047 = vpop.f32.mrf.mxu0
        %v6048 = vadd.f32 0.0, %v6047
        %6049 = vmatprep.mubr.f32.mxu0 0.0
        %6050 = vmatmul.mubr.f32.gmra.mxu0 %v5743
        %v6051 = vpop.f32.mrf.mxu0
        %v6052 = vadd.f32 0.0, %v6051
        %v6053 = vpop.f32.mrf.mxu0
        %v6054 = vadd.f32 0.0, %v6053
        %6055 = vmatprep.mubr.f32.mxu0 0.0
        %6056 = vmatmul.mubr.f32.gmra.mxu0 %v5744
        %v6057 = vpop.f32.mrf.mxu0
        %v6058 = vadd.f32 0.0, %v6057
        %v6059 = vpop.f32.mrf.mxu0
        %v6060 = vadd.f32 0.0, %v6059
        %6061 = vmatprep.mubr.f32.mxu0 0.0
        %6062 = vmatmul.mubr.f32.gmra.mxu0 %v5745
        %v6063 = vpop.f32.mrf.mxu0
        %v6064 = vadd.f32 0.0, %v6063
        %v6065 = vpop.f32.mrf.mxu0
        %v6066 = vadd.f32 0.0, %v6065
        %6067 = vmatprep.mubr.f32.mxu0 0.0
        %6068 = vmatmul.mubr.f32.gmra.mxu0 %v5746
        %v6069 = vpop.f32.mrf.mxu0
        %v6070 = vadd.f32 0.0, %v6069
        %v6071 = vpop.f32.mrf.mxu0
        %v6072 = vadd.f32 0.0, %v6071
        %6073 = vmatprep.mubr.f32.mxu0 0.0
        %6074 = vmatmul.mubr.f32.gmra.mxu0 %v5747
        %v6075 = vpop.f32.mrf.mxu0
        %v6076 = vadd.f32 0.0, %v6075
        %v6077 = vpop.f32.mrf.mxu0
        %v6078 = vadd.f32 0.0, %v6077
        %6079 = vdwg.mxu0
        %v6080 = vld [vmem:[#allocation4] sm:$0xff]
        %v6081 = vld [vmem:[#allocation4 + $0x8] sm:$0xff]
        %v6082 = vld [vmem:[#allocation4 + $0x10] sm:$0xff]
        %v6083 = vld [vmem:[#allocation4 + $0x18] sm:$0xff]
        %v6084 = vld [vmem:[#allocation4 + $0x20] sm:$0xff]
        %v6085 = vld [vmem:[#allocation4 + $0x28] sm:$0xff]
        %v6086 = vld [vmem:[#allocation4 + $0x30] sm:$0xff]
        %v6087 = vld [vmem:[#allocation4 + $0x38] sm:$0xff]
        %v6088 = vld [vmem:[#allocation4 + $0x40] sm:$0xff]
        %v6089 = vld [vmem:[#allocation4 + $0x48] sm:$0xff]
        %v6090 = vld [vmem:[#allocation4 + $0x50] sm:$0xff]
        %v6091 = vld [vmem:[#allocation4 + $0x58] sm:$0xff]
        %v6092 = vld [vmem:[#allocation4 + $0x60] sm:$0xff]
        %v6093 = vld [vmem:[#allocation4 + $0x68] sm:$0xff]
        %v6094 = vld [vmem:[#allocation4 + $0x70] sm:$0xff]
        %v6095 = vld [vmem:[#allocation4 + $0x78] sm:$0xff]
        %v6096 = vld [vmem:[#allocation4 + $0x80] sm:$0xff]
        %v6097 = vld [vmem:[#allocation4 + $0x88] sm:$0xff]
        %v6098 = vld [vmem:[#allocation4 + $0x90] sm:$0xff]
        %v6099 = vld [vmem:[#allocation4 + $0x98] sm:$0xff]
        %v6100 = vld [vmem:[#allocation4 + $0xa0] sm:$0xff]
        %v6101 = vld [vmem:[#allocation4 + $0xa8] sm:$0xff]
        %v6102 = vld [vmem:[#allocation4 + $0xb0] sm:$0xff]
        %v6103 = vld [vmem:[#allocation4 + $0xb8] sm:$0xff]
        %v6104 = vld [vmem:[#allocation4 + $0xc0] sm:$0xff]
        %v6105 = vld [vmem:[#allocation4 + $0xc8] sm:$0xff]
        %v6106 = vld [vmem:[#allocation4 + $0xd0] sm:$0xff]
        %v6107 = vld [vmem:[#allocation4 + $0xd8] sm:$0xff]
        %v6108 = vld [vmem:[#allocation4 + $0xe0] sm:$0xff]
        %v6109 = vld [vmem:[#allocation4 + $0xe8] sm:$0xff]
        %v6110 = vld [vmem:[#allocation4 + $0xf0] sm:$0xff]
        %v6111 = vld [vmem:[#allocation4 + $0xf8] sm:$0xff]
        %v6112 = vld [vmem:[#allocation4 + $0x100] sm:$0xff]
        %v6113 = vld [vmem:[#allocation4 + $0x108] sm:$0xff]
        %v6114 = vld [vmem:[#allocation4 + $0x110] sm:$0xff]
        %v6115 = vld [vmem:[#allocation4 + $0x118] sm:$0xff]
        %v6116 = vld [vmem:[#allocation4 + $0x120] sm:$0xff]
        %v6117 = vld [vmem:[#allocation4 + $0x128] sm:$0xff]
        %v6118 = vld [vmem:[#allocation4 + $0x130] sm:$0xff]
        %v6119 = vld [vmem:[#allocation4 + $0x138] sm:$0xff]
        %v6120 = vld [vmem:[#allocation4 + $0x140] sm:$0xff]
        %v6121 = vld [vmem:[#allocation4 + $0x148] sm:$0xff]
        %v6122 = vld [vmem:[#allocation4 + $0x150] sm:$0xff]
        %v6123 = vld [vmem:[#allocation4 + $0x158] sm:$0xff]
        %v6124 = vld [vmem:[#allocation4 + $0x160] sm:$0xff]
        %v6125 = vld [vmem:[#allocation4 + $0x168] sm:$0xff]
        %v6126 = vld [vmem:[#allocation4 + $0x170] sm:$0xff]
        %v6127 = vld [vmem:[#allocation4 + $0x178] sm:$0xff]
        %v6128 = vld [vmem:[#allocation4 + $0x180] sm:$0xff]
        %v6129 = vld [vmem:[#allocation4 + $0x188] sm:$0xff]
        %v6130 = vld [vmem:[#allocation4 + $0x190] sm:$0xff]
        %v6131 = vld [vmem:[#allocation4 + $0x198] sm:$0xff]
        %v6132 = vld [vmem:[#allocation4 + $0x1a0] sm:$0xff]
        %v6133 = vld [vmem:[#allocation4 + $0x1a8] sm:$0xff]
        %v6134 = vld [vmem:[#allocation4 + $0x1b0] sm:$0xff]
        %v6135 = vld [vmem:[#allocation4 + $0x1b8] sm:$0xff]
        %v6136 = vld [vmem:[#allocation4 + $0x1c0] sm:$0xff]
        %v6137 = vld [vmem:[#allocation4 + $0x1c8] sm:$0xff]
        %v6138 = vld [vmem:[#allocation4 + $0x1d0] sm:$0xff]
        %v6139 = vld [vmem:[#allocation4 + $0x1d8] sm:$0xff]
        %v6140 = vld [vmem:[#allocation4 + $0x1e0] sm:$0xff]
        %v6141 = vld [vmem:[#allocation4 + $0x1e8] sm:$0xff]
        %v6142 = vld [vmem:[#allocation4 + $0x1f0] sm:$0xff]
        %v6143 = vld [vmem:[#allocation4 + $0x1f8] sm:$0xff]
        %v6144 = vld [vmem:[#allocation4 + $0x200] sm:$0xff]
        %v6145 = vld [vmem:[#allocation4 + $0x208] sm:$0xff]
        %v6146 = vld [vmem:[#allocation4 + $0x210] sm:$0xff]
        %v6147 = vld [vmem:[#allocation4 + $0x218] sm:$0xff]
        %v6148 = vld [vmem:[#allocation4 + $0x220] sm:$0xff]
        %v6149 = vld [vmem:[#allocation4 + $0x228] sm:$0xff]
        %v6150 = vld [vmem:[#allocation4 + $0x230] sm:$0xff]
        %v6151 = vld [vmem:[#allocation4 + $0x238] sm:$0xff]
        %v6152 = vld [vmem:[#allocation4 + $0x240] sm:$0xff]
        %v6153 = vld [vmem:[#allocation4 + $0x248] sm:$0xff]
        %v6154 = vld [vmem:[#allocation4 + $0x250] sm:$0xff]
        %v6155 = vld [vmem:[#allocation4 + $0x258] sm:$0xff]
        %v6156 = vld [vmem:[#allocation4 + $0x260] sm:$0x7]
        %v6157 = vld [vmem:[#allocation4 + $0x268] sm:$0x7]
        %v6158 = vadd.f32 %v6080, %v5848
        %v6159 = vadd.f32 %v6081, %v5850
        %v6160 = vadd.f32 %v6082, %v5854
        %v6161 = vadd.f32 %v6083, %v5856
        %v6162 = vadd.f32 %v6084, %v5860
        %v6163 = vadd.f32 %v6085, %v5862
        %v6164 = vadd.f32 %v6086, %v5866
        %v6165 = vadd.f32 %v6087, %v5868
        %v6166 = vadd.f32 %v6088, %v5872
        %v6167 = vadd.f32 %v6089, %v5874
        %v6168 = vadd.f32 %v6090, %v5878
        %v6169 = vadd.f32 %v6091, %v5880
        %v6170 = vadd.f32 %v6092, %v5884
        %v6171 = vadd.f32 %v6093, %v5886
        %v6172 = vadd.f32 %v6094, %v5890
        %v6173 = vadd.f32 %v6095, %v5892
        %v6174 = vadd.f32 %v6096, %v5896
        %v6175 = vadd.f32 %v6097, %v5898
        %v6176 = vadd.f32 %v6098, %v5902
        %v6177 = vadd.f32 %v6099, %v5904
        %v6178 = vadd.f32 %v6100, %v5908
        %v6179 = vadd.f32 %v6101, %v5910
        %v6180 = vadd.f32 %v6102, %v5914
        %v6181 = vadd.f32 %v6103, %v5916
        %v6182 = vadd.f32 %v6104, %v5920
        %v6183 = vadd.f32 %v6105, %v5922
        %v6184 = vadd.f32 %v6106, %v5926
        %v6185 = vadd.f32 %v6107, %v5928
        %v6186 = vadd.f32 %v6108, %v5932
        %v6187 = vadd.f32 %v6109, %v5934
        %v6188 = vadd.f32 %v6110, %v5938
        %v6189 = vadd.f32 %v6111, %v5940
        %v6190 = vadd.f32 %v6112, %v5944
        %v6191 = vadd.f32 %v6113, %v5946
        %v6192 = vadd.f32 %v6114, %v5950
        %v6193 = vadd.f32 %v6115, %v5952
        %v6194 = vadd.f32 %v6116, %v5956
        %v6195 = vadd.f32 %v6117, %v5958
        %v6196 = vadd.f32 %v6118, %v5962
        %v6197 = vadd.f32 %v6119, %v5964
        %v6198 = vadd.f32 %v6120, %v5968
        %v6199 = vadd.f32 %v6121, %v5970
        %v6200 = vadd.f32 %v6122, %v5974
        %v6201 = vadd.f32 %v6123, %v5976
        %v6202 = vadd.f32 %v6124, %v5980
        %v6203 = vadd.f32 %v6125, %v5982
        %v6204 = vadd.f32 %v6126, %v5986
        %v6205 = vadd.f32 %v6127, %v5988
        %v6206 = vadd.f32 %v6128, %v5992
        %v6207 = vadd.f32 %v6129, %v5994
        %v6208 = vadd.f32 %v6130, %v5998
        %v6209 = vadd.f32 %v6131, %v6000
        %v6210 = vadd.f32 %v6132, %v6004
        %v6211 = vadd.f32 %v6133, %v6006
        %v6212 = vadd.f32 %v6134, %v6010
        %v6213 = vadd.f32 %v6135, %v6012
        %v6214 = vadd.f32 %v6136, %v6016
        %v6215 = vadd.f32 %v6137, %v6018
        %v6216 = vadd.f32 %v6138, %v6022
        %v6217 = vadd.f32 %v6139, %v6024
        %v6218 = vadd.f32 %v6140, %v6028
        %v6219 = vadd.f32 %v6141, %v6030
        %v6220 = vadd.f32 %v6142, %v6034
        %v6221 = vadd.f32 %v6143, %v6036
        %v6222 = vadd.f32 %v6144, %v6040
        %v6223 = vadd.f32 %v6145, %v6042
        %v6224 = vadd.f32 %v6146, %v6046
        %v6225 = vadd.f32 %v6147, %v6048
        %v6226 = vadd.f32 %v6148, %v6052
        %v6227 = vadd.f32 %v6149, %v6054
        %v6228 = vadd.f32 %v6150, %v6058
        %v6229 = vadd.f32 %v6151, %v6060
        %v6230 = vadd.f32 %v6152, %v6064
        %v6231 = vadd.f32 %v6153, %v6066
        %v6232 = vadd.f32 %v6154, %v6070
        %v6233 = vadd.f32 %v6155, %v6072
        %v6234 = vadd.f32 %v6156, %v6076
        %v6235 = vadd.f32 %v6157, %v6078
        %6236 = vst [vmem:[#allocation4] sm:$0xff] %v6158
        %6237 = vst [vmem:[#allocation4 + $0x8] sm:$0xff] %v6159
        %6238 = vst [vmem:[#allocation4 + $0x10] sm:$0xff] %v6160
        %6239 = vst [vmem:[#allocation4 + $0x18] sm:$0xff] %v6161
        %6240 = vst [vmem:[#allocation4 + $0x20] sm:$0xff] %v6162
        %6241 = vst [vmem:[#allocation4 + $0x28] sm:$0xff] %v6163
        %6242 = vst [vmem:[#allocation4 + $0x30] sm:$0xff] %v6164
        %6243 = vst [vmem:[#allocation4 + $0x38] sm:$0xff] %v6165
        %6244 = vst [vmem:[#allocation4 + $0x40] sm:$0xff] %v6166
        %6245 = vst [vmem:[#allocation4 + $0x48] sm:$0xff] %v6167
        %6246 = vst [vmem:[#allocation4 + $0x50] sm:$0xff] %v6168
        %6247 = vst [vmem:[#allocation4 + $0x58] sm:$0xff] %v6169
        %6248 = vst [vmem:[#allocation4 + $0x60] sm:$0xff] %v6170
        %6249 = vst [vmem:[#allocation4 + $0x68] sm:$0xff] %v6171
        %6250 = vst [vmem:[#allocation4 + $0x70] sm:$0xff] %v6172
        %6251 = vst [vmem:[#allocation4 + $0x78] sm:$0xff] %v6173
        %6252 = vst [vmem:[#allocation4 + $0x80] sm:$0xff] %v6174
        %6253 = vst [vmem:[#allocation4 + $0x88] sm:$0xff] %v6175
        %6254 = vst [vmem:[#allocation4 + $0x90] sm:$0xff] %v6176
        %6255 = vst [vmem:[#allocation4 + $0x98] sm:$0xff] %v6177
        %6256 = vst [vmem:[#allocation4 + $0xa0] sm:$0xff] %v6178
        %6257 = vst [vmem:[#allocation4 + $0xa8] sm:$0xff] %v6179
        %6258 = vst [vmem:[#allocation4 + $0xb0] sm:$0xff] %v6180
        %6259 = vst [vmem:[#allocation4 + $0xb8] sm:$0xff] %v6181
        %6260 = vst [vmem:[#allocation4 + $0xc0] sm:$0xff] %v6182
        %6261 = vst [vmem:[#allocation4 + $0xc8] sm:$0xff] %v6183
        %6262 = vst [vmem:[#allocation4 + $0xd0] sm:$0xff] %v6184
        %6263 = vst [vmem:[#allocation4 + $0xd8] sm:$0xff] %v6185
        %6264 = vst [vmem:[#allocation4 + $0xe0] sm:$0xff] %v6186
        %6265 = vst [vmem:[#allocation4 + $0xe8] sm:$0xff] %v6187
        %6266 = vst [vmem:[#allocation4 + $0xf0] sm:$0xff] %v6188
        %6267 = vst [vmem:[#allocation4 + $0xf8] sm:$0xff] %v6189
        %6268 = vst [vmem:[#allocation4 + $0x100] sm:$0xff] %v6190
        %6269 = vst [vmem:[#allocation4 + $0x108] sm:$0xff] %v6191
        %6270 = vst [vmem:[#allocation4 + $0x110] sm:$0xff] %v6192
        %6271 = vst [vmem:[#allocation4 + $0x118] sm:$0xff] %v6193
        %6272 = vst [vmem:[#allocation4 + $0x120] sm:$0xff] %v6194
        %6273 = vst [vmem:[#allocation4 + $0x128] sm:$0xff] %v6195
        %6274 = vst [vmem:[#allocation4 + $0x130] sm:$0xff] %v6196
        %6275 = vst [vmem:[#allocation4 + $0x138] sm:$0xff] %v6197
        %6276 = vst [vmem:[#allocation4 + $0x140] sm:$0xff] %v6198
        %6277 = vst [vmem:[#allocation4 + $0x148] sm:$0xff] %v6199
        %6278 = vst [vmem:[#allocation4 + $0x150] sm:$0xff] %v6200
        %6279 = vst [vmem:[#allocation4 + $0x158] sm:$0xff] %v6201
        %6280 = vst [vmem:[#allocation4 + $0x160] sm:$0xff] %v6202
        %6281 = vst [vmem:[#allocation4 + $0x168] sm:$0xff] %v6203
        %6282 = vst [vmem:[#allocation4 + $0x170] sm:$0xff] %v6204
        %6283 = vst [vmem:[#allocation4 + $0x178] sm:$0xff] %v6205
        %6284 = vst [vmem:[#allocation4 + $0x180] sm:$0xff] %v6206
        %6285 = vst [vmem:[#allocation4 + $0x188] sm:$0xff] %v6207
        %6286 = vst [vmem:[#allocation4 + $0x190] sm:$0xff] %v6208
        %6287 = vst [vmem:[#allocation4 + $0x198] sm:$0xff] %v6209
        %6288 = vst [vmem:[#allocation4 + $0x1a0] sm:$0xff] %v6210
        %6289 = vst [vmem:[#allocation4 + $0x1a8] sm:$0xff] %v6211
        %6290 = vst [vmem:[#allocation4 + $0x1b0] sm:$0xff] %v6212
        %6291 = vst [vmem:[#allocation4 + $0x1b8] sm:$0xff] %v6213
        %6292 = vst [vmem:[#allocation4 + $0x1c0] sm:$0xff] %v6214
        %6293 = vst [vmem:[#allocation4 + $0x1c8] sm:$0xff] %v6215
        %6294 = vst [vmem:[#allocation4 + $0x1d0] sm:$0xff] %v6216
        %6295 = vst [vmem:[#allocation4 + $0x1d8] sm:$0xff] %v6217
        %6296 = vst [vmem:[#allocation4 + $0x1e0] sm:$0xff] %v6218
        %6297 = vst [vmem:[#allocation4 + $0x1e8] sm:$0xff] %v6219
        %6298 = vst [vmem:[#allocation4 + $0x1f0] sm:$0xff] %v6220
        %6299 = vst [vmem:[#allocation4 + $0x1f8] sm:$0xff] %v6221
        %6300 = vst [vmem:[#allocation4 + $0x200] sm:$0xff] %v6222
        %6301 = vst [vmem:[#allocation4 + $0x208] sm:$0xff] %v6223
        %6302 = vst [vmem:[#allocation4 + $0x210] sm:$0xff] %v6224
        %6303 = vst [vmem:[#allocation4 + $0x218] sm:$0xff] %v6225
        %6304 = vst [vmem:[#allocation4 + $0x220] sm:$0xff] %v6226
        %6305 = vst [vmem:[#allocation4 + $0x228] sm:$0xff] %v6227
        %6306 = vst [vmem:[#allocation4 + $0x230] sm:$0xff] %v6228
        %6307 = vst [vmem:[#allocation4 + $0x238] sm:$0xff] %v6229
        %6308 = vst [vmem:[#allocation4 + $0x240] sm:$0xff] %v6230
        %6309 = vst [vmem:[#allocation4 + $0x248] sm:$0xff] %v6231
        %6310 = vst [vmem:[#allocation4 + $0x250] sm:$0xff] %v6232
        %6311 = vst [vmem:[#allocation4 + $0x258] sm:$0xff] %v6233
        %6312 = vst [vmem:[#allocation4 + $0x260] sm:$0x7] %v6234
        %6313 = vst [vmem:[#allocation4 + $0x268] sm:$0x7] %v6235
        %v6314 = vld [vmem:[#allocation3 + $0x8] sm:$0xff]
        %v6315 = vld [vmem:[#allocation3 + $0x10] sm:$0xff]
        %v6316 = vld [vmem:[#allocation3 + $0x18] sm:$0xff]
        %v6317 = vld [vmem:[#allocation3 + $0x20] sm:$0xff]
        %v6318 = vld [vmem:[#allocation3 + $0x28] sm:$0xff]
        %v6319 = vld [vmem:[#allocation3 + $0x30] sm:$0xff]
        %v6320 = vld [vmem:[#allocation3 + $0x38] sm:$0xff]
        %v6321 = vld [vmem:[#allocation3 + $0x40] sm:$0xff]
        %v6322 = vld [vmem:[#allocation3 + $0x48] sm:$0xff]
        %v6323 = vld [vmem:[#allocation3 + $0x50] sm:$0xff]
        %v6324 = vld [vmem:[#allocation3 + $0x58] sm:$0xff]
        %v6325 = vld [vmem:[#allocation3 + $0x60] sm:$0xff]
        %v6326 = vld [vmem:[#allocation3 + $0x68] sm:$0xff]
        %v6327 = vld [vmem:[#allocation3 + $0x70] sm:$0xff]
        %v6328 = vld [vmem:[#allocation3 + $0x78] sm:$0xff]
        %v6329 = vld [vmem:[#allocation3 + $0x80] sm:$0xff]
        %v6330 = vld [vmem:[#allocation3 + $0x88] sm:$0xff]
        %v6331 = vld [vmem:[#allocation3 + $0x90] sm:$0xff]
        %v6332 = vld [vmem:[#allocation3 + $0x98] sm:$0xff]
        %v6333 = vld [vmem:[#allocation3 + $0xa0] sm:$0xff]
        %v6334 = vld [vmem:[#allocation3 + $0xa8] sm:$0xff]
        %v6335 = vld [vmem:[#allocation3 + $0xb0] sm:$0xff]
        %v6336 = vld [vmem:[#allocation3 + $0xb8] sm:$0xff]
        %v6337 = vld [vmem:[#allocation3 + $0xc0] sm:$0xff]
        %v6338 = vld [vmem:[#allocation3 + $0xc8] sm:$0xff]
        %v6339 = vld [vmem:[#allocation3 + $0xd0] sm:$0xff]
        %v6340 = vld [vmem:[#allocation3 + $0xd8] sm:$0xff]
        %v6341 = vld [vmem:[#allocation3 + $0xe0] sm:$0xff]
        %v6342 = vld [vmem:[#allocation3 + $0xe8] sm:$0xff]
        %v6343 = vld [vmem:[#allocation3 + $0xf0] sm:$0xff]
        %v6344 = vld [vmem:[#allocation3 + $0xf8] sm:$0xff]
        %v6345 = vld [vmem:[#allocation3 + $0x100] sm:$0xff]
        %v6346 = vld [vmem:[#allocation3 + $0x108] sm:$0xff]
        %v6347 = vld [vmem:[#allocation3 + $0x110] sm:$0xff]
        %v6348 = vld [vmem:[#allocation3 + $0x118] sm:$0xff]
        %v6349 = vld [vmem:[#allocation3 + $0x120] sm:$0xff]
        %v6350 = vld [vmem:[#allocation3 + $0x128] sm:$0xff]
        %v6351 = vld [vmem:[#allocation3 + $0x130] sm:$0xff]
        %v6352 = vld [vmem:[#allocation3 + $0x138] sm:$0x7]
        %s6353 = scalar_lea.vmem %s3, 1024
        %v6354 = vld [vmem:[%s6353] sm:$0xff]
        %v6355 = vld [vmem:[%s6353 + $0x8] sm:$0xff]
        %v6356 = vld [vmem:[%s6353 + $0x10] sm:$0xff]
        %v6357 = vld [vmem:[%s6353 + $0x18] sm:$0xff]
        %v6358 = vld [vmem:[%s6353 + $0x20] sm:$0xff]
        %v6359 = vld [vmem:[%s6353 + $0x28] sm:$0xff]
        %v6360 = vld [vmem:[%s6353 + $0x30] sm:$0xff]
        %v6361 = vld [vmem:[%s6353 + $0x38] sm:$0xff]
        %v6362 = vld [vmem:[%s6353 + $0x40] sm:$0xff]
        %v6363 = vld [vmem:[%s6353 + $0x48] sm:$0xff]
        %v6364 = vld [vmem:[%s6353 + $0x50] sm:$0xff]
        %v6365 = vld [vmem:[%s6353 + $0x58] sm:$0xff]
        %v6366 = vld [vmem:[%s6353 + $0x60] sm:$0xff]
        %v6367 = vld [vmem:[%s6353 + $0x68] sm:$0xff]
        %v6368 = vld [vmem:[%s6353 + $0x70] sm:$0xff]
        %v6369 = vld [vmem:[%s6353 + $0x78] sm:$0xff]
        %v6370 = vld [vmem:[%s6353 + $0x80] sm:$0xff]
        %v6371 = vld [vmem:[%s6353 + $0x88] sm:$0xff]
        %v6372 = vld [vmem:[%s6353 + $0x90] sm:$0xff]
        %v6373 = vld [vmem:[%s6353 + $0x98] sm:$0xff]
        %v6374 = vld [vmem:[%s6353 + $0xa0] sm:$0xff]
        %v6375 = vld [vmem:[%s6353 + $0xa8] sm:$0xff]
        %v6376 = vld [vmem:[%s6353 + $0xb0] sm:$0xff]
        %v6377 = vld [vmem:[%s6353 + $0xb8] sm:$0xff]
        %v6378 = vld [vmem:[%s6353 + $0xc0] sm:$0xff]
        %v6379 = vld [vmem:[%s6353 + $0xc8] sm:$0xff]
        %v6380 = vld [vmem:[%s6353 + $0xd0] sm:$0xff]
        %v6381 = vld [vmem:[%s6353 + $0xd8] sm:$0xff]
        %v6382 = vld [vmem:[%s6353 + $0xe0] sm:$0xff]
        %v6383 = vld [vmem:[%s6353 + $0xe8] sm:$0xff]
        %v6384 = vld [vmem:[%s6353 + $0xf0] sm:$0xff]
        %v6385 = vld [vmem:[%s6353 + $0xf8] sm:$0xff]
        %6386 = vmatprep.subr.mxu0 %v6385
        %6387 = vmatpush1.msra.mxu0 %v6384
        %6388 = vmatprep.subr.mxu0 %v6383
        %6389 = vmatpush1.msra.mxu0 %v6382
        %6390 = vmatprep.subr.mxu0 %v6381
        %6391 = vmatpush1.msra.mxu0 %v6380
        %6392 = vmatprep.subr.mxu0 %v6379
        %6393 = vmatpush1.msra.mxu0 %v6378
        %6394 = vmatprep.subr.mxu0 %v6377
        %6395 = vmatpush1.msra.mxu0 %v6376
        %6396 = vmatprep.subr.mxu0 %v6375
        %6397 = vmatpush1.msra.mxu0 %v6374
        %6398 = vmatprep.subr.mxu0 %v6373
        %6399 = vmatpush1.msra.mxu0 %v6372
        %6400 = vmatprep.subr.mxu0 %v6371
        %6401 = vmatpush1.msra.mxu0 %v6370
        %6402 = vmatprep.subr.mxu0 %v6369
        %6403 = vmatpush1.msra.mxu0 %v6368
        %6404 = vmatprep.subr.mxu0 %v6367
        %6405 = vmatpush1.msra.mxu0 %v6366
        %6406 = vmatprep.subr.mxu0 %v6365
        %6407 = vmatpush1.msra.mxu0 %v6364
        %6408 = vmatprep.subr.mxu0 %v6363
        %6409 = vmatpush1.msra.mxu0 %v6362
        %6410 = vmatprep.subr.mxu0 %v6361
        %6411 = vmatpush1.msra.mxu0 %v6360
        %6412 = vmatprep.subr.mxu0 %v6359
        %6413 = vmatpush1.msra.mxu0 %v6358
        %6414 = vmatprep.subr.mxu0 %v6357
        %6415 = vmatpush1.msra.mxu0 %v6356
        %6416 = vmatprep.subr.mxu0 %v6355
        %6417 = vmatpush1.msra.mxu0 %v6354
        %6418 = vmatprep.subr.mxu0 0.0
        %6419 = vmatpush2.msra.mxu0 0.0
        %6420 = vmatprep.subr.mxu0 0.0
        %6421 = vmatpush2.msra.mxu0 0.0
        %6422 = vmatprep.subr.mxu0 0.0
        %6423 = vmatpush2.msra.mxu0 0.0
        %6424 = vmatprep.subr.mxu0 0.0
        %6425 = vmatpush2.msra.mxu0 0.0
        %6426 = vmatprep.subr.mxu0 0.0
        %6427 = vmatpush2.msra.mxu0 0.0
        %6428 = vmatprep.subr.mxu0 0.0
        %6429 = vmatpush2.msra.mxu0 0.0
        %6430 = vmatprep.subr.mxu0 0.0
        %6431 = vmatpush2.msra.mxu0 0.0
        %6432 = vmatprep.subr.mxu0 0.0
        %6433 = vmatpush2.msra.mxu0 0.0
        %6434 = vmatprep.subr.mxu0 0.0
        %6435 = vmatpush2.msra.mxu0 0.0
        %6436 = vmatprep.subr.mxu0 0.0
        %6437 = vmatpush2.msra.mxu0 0.0
        %6438 = vmatprep.subr.mxu0 0.0
        %6439 = vmatpush2.msra.mxu0 0.0
        %6440 = vmatprep.subr.mxu0 0.0
        %6441 = vmatpush2.msra.mxu0 0.0
        %6442 = vmatprep.subr.mxu0 0.0
        %6443 = vmatpush2.msra.mxu0 0.0
        %6444 = vmatprep.subr.mxu0 0.0
        %6445 = vmatpush2.msra.mxu0 0.0
        %6446 = vmatprep.subr.mxu0 0.0
        %6447 = vmatpush2.msra.mxu0 0.0
        %6448 = vmatprep.subr.mxu0 0.0
        %6449 = vmatpush2.msra.mxu0 0.0
        %6450 = vmatprep.mubr.f32.mxu0 0.0
        %6451 = vmatmul.mubr.f32.gmra.mxu0 %v6314
        %v6452 = vpop.f32.mrf.mxu0
        %v6453 = vadd.f32 0.0, %v6452
        %v6454 = vpop.f32.mrf.mxu0
        %v6455 = vadd.f32 0.0, %v6454
        %6456 = vmatprep.mubr.f32.mxu0 0.0
        %6457 = vmatmul.mubr.f32.gmra.mxu0 %v6315
        %v6458 = vpop.f32.mrf.mxu0
        %v6459 = vadd.f32 0.0, %v6458
        %v6460 = vpop.f32.mrf.mxu0
        %v6461 = vadd.f32 0.0, %v6460
        %6462 = vmatprep.mubr.f32.mxu0 0.0
        %6463 = vmatmul.mubr.f32.gmra.mxu0 %v6316
        %v6464 = vpop.f32.mrf.mxu0
        %v6465 = vadd.f32 0.0, %v6464
        %v6466 = vpop.f32.mrf.mxu0
        %v6467 = vadd.f32 0.0, %v6466
        %6468 = vmatprep.mubr.f32.mxu0 0.0
        %6469 = vmatmul.mubr.f32.gmra.mxu0 %v6317
        %v6470 = vpop.f32.mrf.mxu0
        %v6471 = vadd.f32 0.0, %v6470
        %v6472 = vpop.f32.mrf.mxu0
        %v6473 = vadd.f32 0.0, %v6472
        %6474 = vmatprep.mubr.f32.mxu0 0.0
        %6475 = vmatmul.mubr.f32.gmra.mxu0 %v6318
        %v6476 = vpop.f32.mrf.mxu0
        %v6477 = vadd.f32 0.0, %v6476
        %v6478 = vpop.f32.mrf.mxu0
        %v6479 = vadd.f32 0.0, %v6478
        %6480 = vmatprep.mubr.f32.mxu0 0.0
        %6481 = vmatmul.mubr.f32.gmra.mxu0 %v6319
        %v6482 = vpop.f32.mrf.mxu0
        %v6483 = vadd.f32 0.0, %v6482
        %v6484 = vpop.f32.mrf.mxu0
        %v6485 = vadd.f32 0.0, %v6484
        %6486 = vmatprep.mubr.f32.mxu0 0.0
        %6487 = vmatmul.mubr.f32.gmra.mxu0 %v6320
        %v6488 = vpop.f32.mrf.mxu0
        %v6489 = vadd.f32 0.0, %v6488
        %v6490 = vpop.f32.mrf.mxu0
        %v6491 = vadd.f32 0.0, %v6490
        %6492 = vmatprep.mubr.f32.mxu0 0.0
        %6493 = vmatmul.mubr.f32.gmra.mxu0 %v6321
        %v6494 = vpop.f32.mrf.mxu0
        %v6495 = vadd.f32 0.0, %v6494
        %v6496 = vpop.f32.mrf.mxu0
        %v6497 = vadd.f32 0.0, %v6496
        %6498 = vmatprep.mubr.f32.mxu0 0.0
        %6499 = vmatmul.mubr.f32.gmra.mxu0 %v6322
        %v6500 = vpop.f32.mrf.mxu0
        %v6501 = vadd.f32 0.0, %v6500
        %v6502 = vpop.f32.mrf.mxu0
        %v6503 = vadd.f32 0.0, %v6502
        %6504 = vmatprep.mubr.f32.mxu0 0.0
        %6505 = vmatmul.mubr.f32.gmra.mxu0 %v6323
        %v6506 = vpop.f32.mrf.mxu0
        %v6507 = vadd.f32 0.0, %v6506
        %v6508 = vpop.f32.mrf.mxu0
        %v6509 = vadd.f32 0.0, %v6508
        %6510 = vmatprep.mubr.f32.mxu0 0.0
        %6511 = vmatmul.mubr.f32.gmra.mxu0 %v6324
        %v6512 = vpop.f32.mrf.mxu0
        %v6513 = vadd.f32 0.0, %v6512
        %v6514 = vpop.f32.mrf.mxu0
        %v6515 = vadd.f32 0.0, %v6514
        %6516 = vmatprep.mubr.f32.mxu0 0.0
        %6517 = vmatmul.mubr.f32.gmra.mxu0 %v6325
        %v6518 = vpop.f32.mrf.mxu0
        %v6519 = vadd.f32 0.0, %v6518
        %v6520 = vpop.f32.mrf.mxu0
        %v6521 = vadd.f32 0.0, %v6520
        %6522 = vmatprep.mubr.f32.mxu0 0.0
        %6523 = vmatmul.mubr.f32.gmra.mxu0 %v6326
        %v6524 = vpop.f32.mrf.mxu0
        %v6525 = vadd.f32 0.0, %v6524
        %v6526 = vpop.f32.mrf.mxu0
        %v6527 = vadd.f32 0.0, %v6526
        %6528 = vmatprep.mubr.f32.mxu0 0.0
        %6529 = vmatmul.mubr.f32.gmra.mxu0 %v6327
        %v6530 = vpop.f32.mrf.mxu0
        %v6531 = vadd.f32 0.0, %v6530
        %v6532 = vpop.f32.mrf.mxu0
        %v6533 = vadd.f32 0.0, %v6532
        %6534 = vmatprep.mubr.f32.mxu0 0.0
        %6535 = vmatmul.mubr.f32.gmra.mxu0 %v6328
        %v6536 = vpop.f32.mrf.mxu0
        %v6537 = vadd.f32 0.0, %v6536
        %v6538 = vpop.f32.mrf.mxu0
        %v6539 = vadd.f32 0.0, %v6538
        %6540 = vmatprep.mubr.f32.mxu0 0.0
        %6541 = vmatmul.mubr.f32.gmra.mxu0 %v6329
        %v6542 = vpop.f32.mrf.mxu0
        %v6543 = vadd.f32 0.0, %v6542
        %v6544 = vpop.f32.mrf.mxu0
        %v6545 = vadd.f32 0.0, %v6544
        %6546 = vmatprep.mubr.f32.mxu0 0.0
        %6547 = vmatmul.mubr.f32.gmra.mxu0 %v6330
        %v6548 = vpop.f32.mrf.mxu0
        %v6549 = vadd.f32 0.0, %v6548
        %v6550 = vpop.f32.mrf.mxu0
        %v6551 = vadd.f32 0.0, %v6550
        %6552 = vmatprep.mubr.f32.mxu0 0.0
        %6553 = vmatmul.mubr.f32.gmra.mxu0 %v6331
        %v6554 = vpop.f32.mrf.mxu0
        %v6555 = vadd.f32 0.0, %v6554
        %v6556 = vpop.f32.mrf.mxu0
        %v6557 = vadd.f32 0.0, %v6556
        %6558 = vmatprep.mubr.f32.mxu0 0.0
        %6559 = vmatmul.mubr.f32.gmra.mxu0 %v6332
        %v6560 = vpop.f32.mrf.mxu0
        %v6561 = vadd.f32 0.0, %v6560
        %v6562 = vpop.f32.mrf.mxu0
        %v6563 = vadd.f32 0.0, %v6562
        %6564 = vmatprep.mubr.f32.mxu0 0.0
        %6565 = vmatmul.mubr.f32.gmra.mxu0 %v6333
        %v6566 = vpop.f32.mrf.mxu0
        %v6567 = vadd.f32 0.0, %v6566
        %v6568 = vpop.f32.mrf.mxu0
        %v6569 = vadd.f32 0.0, %v6568
        %6570 = vmatprep.mubr.f32.mxu0 0.0
        %6571 = vmatmul.mubr.f32.gmra.mxu0 %v6334
        %v6572 = vpop.f32.mrf.mxu0
        %v6573 = vadd.f32 0.0, %v6572
        %v6574 = vpop.f32.mrf.mxu0
        %v6575 = vadd.f32 0.0, %v6574
        %6576 = vmatprep.mubr.f32.mxu0 0.0
        %6577 = vmatmul.mubr.f32.gmra.mxu0 %v6335
        %v6578 = vpop.f32.mrf.mxu0
        %v6579 = vadd.f32 0.0, %v6578
        %v6580 = vpop.f32.mrf.mxu0
        %v6581 = vadd.f32 0.0, %v6580
        %6582 = vmatprep.mubr.f32.mxu0 0.0
        %6583 = vmatmul.mubr.f32.gmra.mxu0 %v6336
        %v6584 = vpop.f32.mrf.mxu0
        %v6585 = vadd.f32 0.0, %v6584
        %v6586 = vpop.f32.mrf.mxu0
        %v6587 = vadd.f32 0.0, %v6586
        %6588 = vmatprep.mubr.f32.mxu0 0.0
        %6589 = vmatmul.mubr.f32.gmra.mxu0 %v6337
        %v6590 = vpop.f32.mrf.mxu0
        %v6591 = vadd.f32 0.0, %v6590
        %v6592 = vpop.f32.mrf.mxu0
        %v6593 = vadd.f32 0.0, %v6592
        %6594 = vmatprep.mubr.f32.mxu0 0.0
        %6595 = vmatmul.mubr.f32.gmra.mxu0 %v6338
        %v6596 = vpop.f32.mrf.mxu0
        %v6597 = vadd.f32 0.0, %v6596
        %v6598 = vpop.f32.mrf.mxu0
        %v6599 = vadd.f32 0.0, %v6598
        %6600 = vmatprep.mubr.f32.mxu0 0.0
        %6601 = vmatmul.mubr.f32.gmra.mxu0 %v6339
        %v6602 = vpop.f32.mrf.mxu0
        %v6603 = vadd.f32 0.0, %v6602
        %v6604 = vpop.f32.mrf.mxu0
        %v6605 = vadd.f32 0.0, %v6604
        %6606 = vmatprep.mubr.f32.mxu0 0.0
        %6607 = vmatmul.mubr.f32.gmra.mxu0 %v6340
        %v6608 = vpop.f32.mrf.mxu0
        %v6609 = vadd.f32 0.0, %v6608
        %v6610 = vpop.f32.mrf.mxu0
        %v6611 = vadd.f32 0.0, %v6610
        %6612 = vmatprep.mubr.f32.mxu0 0.0
        %6613 = vmatmul.mubr.f32.gmra.mxu0 %v6341
        %v6614 = vpop.f32.mrf.mxu0
        %v6615 = vadd.f32 0.0, %v6614
        %v6616 = vpop.f32.mrf.mxu0
        %v6617 = vadd.f32 0.0, %v6616
        %6618 = vmatprep.mubr.f32.mxu0 0.0
        %6619 = vmatmul.mubr.f32.gmra.mxu0 %v6342
        %v6620 = vpop.f32.mrf.mxu0
        %v6621 = vadd.f32 0.0, %v6620
        %v6622 = vpop.f32.mrf.mxu0
        %v6623 = vadd.f32 0.0, %v6622
        %6624 = vmatprep.mubr.f32.mxu0 0.0
        %6625 = vmatmul.mubr.f32.gmra.mxu0 %v6343
        %v6626 = vpop.f32.mrf.mxu0
        %v6627 = vadd.f32 0.0, %v6626
        %v6628 = vpop.f32.mrf.mxu0
        %v6629 = vadd.f32 0.0, %v6628
        %6630 = vmatprep.mubr.f32.mxu0 0.0
        %6631 = vmatmul.mubr.f32.gmra.mxu0 %v6344
        %v6632 = vpop.f32.mrf.mxu0
        %v6633 = vadd.f32 0.0, %v6632
        %v6634 = vpop.f32.mrf.mxu0
        %v6635 = vadd.f32 0.0, %v6634
        %6636 = vmatprep.mubr.f32.mxu0 0.0
        %6637 = vmatmul.mubr.f32.gmra.mxu0 %v6345
        %v6638 = vpop.f32.mrf.mxu0
        %v6639 = vadd.f32 0.0, %v6638
        %v6640 = vpop.f32.mrf.mxu0
        %v6641 = vadd.f32 0.0, %v6640
        %6642 = vmatprep.mubr.f32.mxu0 0.0
        %6643 = vmatmul.mubr.f32.gmra.mxu0 %v6346
        %v6644 = vpop.f32.mrf.mxu0
        %v6645 = vadd.f32 0.0, %v6644
        %v6646 = vpop.f32.mrf.mxu0
        %v6647 = vadd.f32 0.0, %v6646
        %6648 = vmatprep.mubr.f32.mxu0 0.0
        %6649 = vmatmul.mubr.f32.gmra.mxu0 %v6347
        %v6650 = vpop.f32.mrf.mxu0
        %v6651 = vadd.f32 0.0, %v6650
        %v6652 = vpop.f32.mrf.mxu0
        %v6653 = vadd.f32 0.0, %v6652
        %6654 = vmatprep.mubr.f32.mxu0 0.0
        %6655 = vmatmul.mubr.f32.gmra.mxu0 %v6348
        %v6656 = vpop.f32.mrf.mxu0
        %v6657 = vadd.f32 0.0, %v6656
        %v6658 = vpop.f32.mrf.mxu0
        %v6659 = vadd.f32 0.0, %v6658
        %6660 = vmatprep.mubr.f32.mxu0 0.0
        %6661 = vmatmul.mubr.f32.gmra.mxu0 %v6349
        %v6662 = vpop.f32.mrf.mxu0
        %v6663 = vadd.f32 0.0, %v6662
        %v6664 = vpop.f32.mrf.mxu0
        %v6665 = vadd.f32 0.0, %v6664
        %6666 = vmatprep.mubr.f32.mxu0 0.0
        %6667 = vmatmul.mubr.f32.gmra.mxu0 %v6350
        %v6668 = vpop.f32.mrf.mxu0
        %v6669 = vadd.f32 0.0, %v6668
        %v6670 = vpop.f32.mrf.mxu0
        %v6671 = vadd.f32 0.0, %v6670
        %6672 = vmatprep.mubr.f32.mxu0 0.0
        %6673 = vmatmul.mubr.f32.gmra.mxu0 %v6351
        %v6674 = vpop.f32.mrf.mxu0
        %v6675 = vadd.f32 0.0, %v6674
        %v6676 = vpop.f32.mrf.mxu0
        %v6677 = vadd.f32 0.0, %v6676
        %6678 = vmatprep.mubr.f32.mxu0 0.0
        %6679 = vmatmul.mubr.f32.gmra.mxu0 %v6352
        %v6680 = vpop.f32.mrf.mxu0
        %v6681 = vadd.f32 0.0, %v6680
        %v6682 = vpop.f32.mrf.mxu0
        %v6683 = vadd.f32 0.0, %v6682
        %6684 = vdwg.mxu0
        %v6685 = vld [vmem:[#allocation4] sm:$0xff]
        %v6686 = vld [vmem:[#allocation4 + $0x8] sm:$0xff]
        %v6687 = vld [vmem:[#allocation4 + $0x10] sm:$0xff]
        %v6688 = vld [vmem:[#allocation4 + $0x18] sm:$0xff]
        %v6689 = vld [vmem:[#allocation4 + $0x20] sm:$0xff]
        %v6690 = vld [vmem:[#allocation4 + $0x28] sm:$0xff]
        %v6691 = vld [vmem:[#allocation4 + $0x30] sm:$0xff]
        %v6692 = vld [vmem:[#allocation4 + $0x38] sm:$0xff]
        %v6693 = vld [vmem:[#allocation4 + $0x40] sm:$0xff]
        %v6694 = vld [vmem:[#allocation4 + $0x48] sm:$0xff]
        %v6695 = vld [vmem:[#allocation4 + $0x50] sm:$0xff]
        %v6696 = vld [vmem:[#allocation4 + $0x58] sm:$0xff]
        %v6697 = vld [vmem:[#allocation4 + $0x60] sm:$0xff]
        %v6698 = vld [vmem:[#allocation4 + $0x68] sm:$0xff]
        %v6699 = vld [vmem:[#allocation4 + $0x70] sm:$0xff]
        %v6700 = vld [vmem:[#allocation4 + $0x78] sm:$0xff]
        %v6701 = vld [vmem:[#allocation4 + $0x80] sm:$0xff]
        %v6702 = vld [vmem:[#allocation4 + $0x88] sm:$0xff]
        %v6703 = vld [vmem:[#allocation4 + $0x90] sm:$0xff]
        %v6704 = vld [vmem:[#allocation4 + $0x98] sm:$0xff]
        %v6705 = vld [vmem:[#allocation4 + $0xa0] sm:$0xff]
        %v6706 = vld [vmem:[#allocation4 + $0xa8] sm:$0xff]
        %v6707 = vld [vmem:[#allocation4 + $0xb0] sm:$0xff]
        %v6708 = vld [vmem:[#allocation4 + $0xb8] sm:$0xff]
        %v6709 = vld [vmem:[#allocation4 + $0xc0] sm:$0xff]
        %v6710 = vld [vmem:[#allocation4 + $0xc8] sm:$0xff]
        %v6711 = vld [vmem:[#allocation4 + $0xd0] sm:$0xff]
        %v6712 = vld [vmem:[#allocation4 + $0xd8] sm:$0xff]
        %v6713 = vld [vmem:[#allocation4 + $0xe0] sm:$0xff]
        %v6714 = vld [vmem:[#allocation4 + $0xe8] sm:$0xff]
        %v6715 = vld [vmem:[#allocation4 + $0xf0] sm:$0xff]
        %v6716 = vld [vmem:[#allocation4 + $0xf8] sm:$0xff]
        %v6717 = vld [vmem:[#allocation4 + $0x100] sm:$0xff]
        %v6718 = vld [vmem:[#allocation4 + $0x108] sm:$0xff]
        %v6719 = vld [vmem:[#allocation4 + $0x110] sm:$0xff]
        %v6720 = vld [vmem:[#allocation4 + $0x118] sm:$0xff]
        %v6721 = vld [vmem:[#allocation4 + $0x120] sm:$0xff]
        %v6722 = vld [vmem:[#allocation4 + $0x128] sm:$0xff]
        %v6723 = vld [vmem:[#allocation4 + $0x130] sm:$0xff]
        %v6724 = vld [vmem:[#allocation4 + $0x138] sm:$0xff]
        %v6725 = vld [vmem:[#allocation4 + $0x140] sm:$0xff]
        %v6726 = vld [vmem:[#allocation4 + $0x148] sm:$0xff]
        %v6727 = vld [vmem:[#allocation4 + $0x150] sm:$0xff]
        %v6728 = vld [vmem:[#allocation4 + $0x158] sm:$0xff]
        %v6729 = vld [vmem:[#allocation4 + $0x160] sm:$0xff]
        %v6730 = vld [vmem:[#allocation4 + $0x168] sm:$0xff]
        %v6731 = vld [vmem:[#allocation4 + $0x170] sm:$0xff]
        %v6732 = vld [vmem:[#allocation4 + $0x178] sm:$0xff]
        %v6733 = vld [vmem:[#allocation4 + $0x180] sm:$0xff]
        %v6734 = vld [vmem:[#allocation4 + $0x188] sm:$0xff]
        %v6735 = vld [vmem:[#allocation4 + $0x190] sm:$0xff]
        %v6736 = vld [vmem:[#allocation4 + $0x198] sm:$0xff]
        %v6737 = vld [vmem:[#allocation4 + $0x1a0] sm:$0xff]
        %v6738 = vld [vmem:[#allocation4 + $0x1a8] sm:$0xff]
        %v6739 = vld [vmem:[#allocation4 + $0x1b0] sm:$0xff]
        %v6740 = vld [vmem:[#allocation4 + $0x1b8] sm:$0xff]
        %v6741 = vld [vmem:[#allocation4 + $0x1c0] sm:$0xff]
        %v6742 = vld [vmem:[#allocation4 + $0x1c8] sm:$0xff]
        %v6743 = vld [vmem:[#allocation4 + $0x1d0] sm:$0xff]
        %v6744 = vld [vmem:[#allocation4 + $0x1d8] sm:$0xff]
        %v6745 = vld [vmem:[#allocation4 + $0x1e0] sm:$0xff]
        %v6746 = vld [vmem:[#allocation4 + $0x1e8] sm:$0xff]
        %v6747 = vld [vmem:[#allocation4 + $0x1f0] sm:$0xff]
        %v6748 = vld [vmem:[#allocation4 + $0x1f8] sm:$0xff]
        %v6749 = vld [vmem:[#allocation4 + $0x200] sm:$0xff]
        %v6750 = vld [vmem:[#allocation4 + $0x208] sm:$0xff]
        %v6751 = vld [vmem:[#allocation4 + $0x210] sm:$0xff]
        %v6752 = vld [vmem:[#allocation4 + $0x218] sm:$0xff]
        %v6753 = vld [vmem:[#allocation4 + $0x220] sm:$0xff]
        %v6754 = vld [vmem:[#allocation4 + $0x228] sm:$0xff]
        %v6755 = vld [vmem:[#allocation4 + $0x230] sm:$0xff]
        %v6756 = vld [vmem:[#allocation4 + $0x238] sm:$0xff]
        %v6757 = vld [vmem:[#allocation4 + $0x240] sm:$0xff]
        %v6758 = vld [vmem:[#allocation4 + $0x248] sm:$0xff]
        %v6759 = vld [vmem:[#allocation4 + $0x250] sm:$0xff]
        %v6760 = vld [vmem:[#allocation4 + $0x258] sm:$0xff]
        %v6761 = vld [vmem:[#allocation4 + $0x260] sm:$0x7]
        %v6762 = vld [vmem:[#allocation4 + $0x268] sm:$0x7]
        %v6763 = vadd.f32 %v6685, %v6453
        %v6764 = vadd.f32 %v6686, %v6455
        %v6765 = vadd.f32 %v6687, %v6459
        %v6766 = vadd.f32 %v6688, %v6461
        %v6767 = vadd.f32 %v6689, %v6465
        %v6768 = vadd.f32 %v6690, %v6467
        %v6769 = vadd.f32 %v6691, %v6471
        %v6770 = vadd.f32 %v6692, %v6473
        %v6771 = vadd.f32 %v6693, %v6477
        %v6772 = vadd.f32 %v6694, %v6479
        %v6773 = vadd.f32 %v6695, %v6483
        %v6774 = vadd.f32 %v6696, %v6485
        %v6775 = vadd.f32 %v6697, %v6489
        %v6776 = vadd.f32 %v6698, %v6491
        %v6777 = vadd.f32 %v6699, %v6495
        %v6778 = vadd.f32 %v6700, %v6497
        %v6779 = vadd.f32 %v6701, %v6501
        %v6780 = vadd.f32 %v6702, %v6503
        %v6781 = vadd.f32 %v6703, %v6507
        %v6782 = vadd.f32 %v6704, %v6509
        %v6783 = vadd.f32 %v6705, %v6513
        %v6784 = vadd.f32 %v6706, %v6515
        %v6785 = vadd.f32 %v6707, %v6519
        %v6786 = vadd.f32 %v6708, %v6521
        %v6787 = vadd.f32 %v6709, %v6525
        %v6788 = vadd.f32 %v6710, %v6527
        %v6789 = vadd.f32 %v6711, %v6531
        %v6790 = vadd.f32 %v6712, %v6533
        %v6791 = vadd.f32 %v6713, %v6537
        %v6792 = vadd.f32 %v6714, %v6539
        %v6793 = vadd.f32 %v6715, %v6543
        %v6794 = vadd.f32 %v6716, %v6545
        %v6795 = vadd.f32 %v6717, %v6549
        %v6796 = vadd.f32 %v6718, %v6551
        %v6797 = vadd.f32 %v6719, %v6555
        %v6798 = vadd.f32 %v6720, %v6557
        %v6799 = vadd.f32 %v6721, %v6561
        %v6800 = vadd.f32 %v6722, %v6563
        %v6801 = vadd.f32 %v6723, %v6567
        %v6802 = vadd.f32 %v6724, %v6569
        %v6803 = vadd.f32 %v6725, %v6573
        %v6804 = vadd.f32 %v6726, %v6575
        %v6805 = vadd.f32 %v6727, %v6579
        %v6806 = vadd.f32 %v6728, %v6581
        %v6807 = vadd.f32 %v6729, %v6585
        %v6808 = vadd.f32 %v6730, %v6587
        %v6809 = vadd.f32 %v6731, %v6591
        %v6810 = vadd.f32 %v6732, %v6593
        %v6811 = vadd.f32 %v6733, %v6597
        %v6812 = vadd.f32 %v6734, %v6599
        %v6813 = vadd.f32 %v6735, %v6603
        %v6814 = vadd.f32 %v6736, %v6605
        %v6815 = vadd.f32 %v6737, %v6609
        %v6816 = vadd.f32 %v6738, %v6611
        %v6817 = vadd.f32 %v6739, %v6615
        %v6818 = vadd.f32 %v6740, %v6617
        %v6819 = vadd.f32 %v6741, %v6621
        %v6820 = vadd.f32 %v6742, %v6623
        %v6821 = vadd.f32 %v6743, %v6627
        %v6822 = vadd.f32 %v6744, %v6629
        %v6823 = vadd.f32 %v6745, %v6633
        %v6824 = vadd.f32 %v6746, %v6635
        %v6825 = vadd.f32 %v6747, %v6639
        %v6826 = vadd.f32 %v6748, %v6641
        %v6827 = vadd.f32 %v6749, %v6645
        %v6828 = vadd.f32 %v6750, %v6647
        %v6829 = vadd.f32 %v6751, %v6651
        %v6830 = vadd.f32 %v6752, %v6653
        %v6831 = vadd.f32 %v6753, %v6657
        %v6832 = vadd.f32 %v6754, %v6659
        %v6833 = vadd.f32 %v6755, %v6663
        %v6834 = vadd.f32 %v6756, %v6665
        %v6835 = vadd.f32 %v6757, %v6669
        %v6836 = vadd.f32 %v6758, %v6671
        %v6837 = vadd.f32 %v6759, %v6675
        %v6838 = vadd.f32 %v6760, %v6677
        %v6839 = vadd.f32 %v6761, %v6681
        %v6840 = vadd.f32 %v6762, %v6683
        %v6841 = vld [vmem:[%s4] sm:$0x3]
        %v6843 = vlaneseq
        %v6844 = vshrl.u32 %v6843, 7
        %v6845 = vsub.s32 0, %v6844
        %v6846 = vrot.slane %v6841, %v6845
        %v6847 = vlaneseq
        %v6848 = vshrl.u32 %v6847, 7
        %v6849 = vsub.s32 1, %v6848
        %v6850 = vrot.slane %v6841, %v6849
        %v6853 = vadd.f32 %v6763, %v6846
        %v6854 = vadd.f32 %v6764, %v6850
        %v6855 = vadd.f32 %v6765, %v6846
        %v6856 = vadd.f32 %v6766, %v6850
        %v6857 = vadd.f32 %v6767, %v6846
        %v6858 = vadd.f32 %v6768, %v6850
        %v6859 = vadd.f32 %v6769, %v6846
        %v6860 = vadd.f32 %v6770, %v6850
        %v6861 = vadd.f32 %v6771, %v6846
        %v6862 = vadd.f32 %v6772, %v6850
        %v6863 = vadd.f32 %v6773, %v6846
        %v6864 = vadd.f32 %v6774, %v6850
        %v6865 = vadd.f32 %v6775, %v6846
        %v6866 = vadd.f32 %v6776, %v6850
        %v6867 = vadd.f32 %v6777, %v6846
        %v6868 = vadd.f32 %v6778, %v6850
        %v6869 = vadd.f32 %v6779, %v6846
        %v6870 = vadd.f32 %v6780, %v6850
        %v6871 = vadd.f32 %v6781, %v6846
        %v6872 = vadd.f32 %v6782, %v6850
        %v6873 = vadd.f32 %v6783, %v6846
        %v6874 = vadd.f32 %v6784, %v6850
        %v6875 = vadd.f32 %v6785, %v6846
        %v6876 = vadd.f32 %v6786, %v6850
        %v6877 = vadd.f32 %v6787, %v6846
        %v6878 = vadd.f32 %v6788, %v6850
        %v6879 = vadd.f32 %v6789, %v6846
        %v6880 = vadd.f32 %v6790, %v6850
        %v6881 = vadd.f32 %v6791, %v6846
        %v6882 = vadd.f32 %v6792, %v6850
        %v6883 = vadd.f32 %v6793, %v6846
        %v6884 = vadd.f32 %v6794, %v6850
        %v6885 = vadd.f32 %v6795, %v6846
        %v6886 = vadd.f32 %v6796, %v6850
        %v6887 = vadd.f32 %v6797, %v6846
        %v6888 = vadd.f32 %v6798, %v6850
        %v6889 = vadd.f32 %v6799, %v6846
        %v6890 = vadd.f32 %v6800, %v6850
        %v6891 = vadd.f32 %v6801, %v6846
        %v6892 = vadd.f32 %v6802, %v6850
        %v6893 = vadd.f32 %v6803, %v6846
        %v6894 = vadd.f32 %v6804, %v6850
        %v6895 = vadd.f32 %v6805, %v6846
        %v6896 = vadd.f32 %v6806, %v6850
        %v6897 = vadd.f32 %v6807, %v6846
        %v6898 = vadd.f32 %v6808, %v6850
        %v6899 = vadd.f32 %v6809, %v6846
        %v6900 = vadd.f32 %v6810, %v6850
        %v6901 = vadd.f32 %v6811, %v6846
        %v6902 = vadd.f32 %v6812, %v6850
        %v6903 = vadd.f32 %v6813, %v6846
        %v6904 = vadd.f32 %v6814, %v6850
        %v6905 = vadd.f32 %v6815, %v6846
        %v6906 = vadd.f32 %v6816, %v6850
        %v6907 = vadd.f32 %v6817, %v6846
        %v6908 = vadd.f32 %v6818, %v6850
        %v6909 = vadd.f32 %v6819, %v6846
        %v6910 = vadd.f32 %v6820, %v6850
        %v6911 = vadd.f32 %v6821, %v6846
        %v6912 = vadd.f32 %v6822, %v6850
        %v6913 = vadd.f32 %v6823, %v6846
        %v6914 = vadd.f32 %v6824, %v6850
        %v6915 = vadd.f32 %v6825, %v6846
        %v6916 = vadd.f32 %v6826, %v6850
        %v6917 = vadd.f32 %v6827, %v6846
        %v6918 = vadd.f32 %v6828, %v6850
        %v6919 = vadd.f32 %v6829, %v6846
        %v6920 = vadd.f32 %v6830, %v6850
        %v6921 = vadd.f32 %v6831, %v6846
        %v6922 = vadd.f32 %v6832, %v6850
        %v6923 = vadd.f32 %v6833, %v6846
        %v6924 = vadd.f32 %v6834, %v6850
        %v6925 = vadd.f32 %v6835, %v6846
        %v6926 = vadd.f32 %v6836, %v6850
        %v6927 = vadd.f32 %v6837, %v6846
        %v6928 = vadd.f32 %v6838, %v6850
        %v6929 = vadd.f32 %v6839, %v6846
        %v6930 = vadd.f32 %v6840, %v6850
        %v6931 = vmax.f32 %v6853, 0.0
        %v6932 = vmax.f32 %v6854, 0.0
        %v6933 = vmax.f32 %v6855, 0.0
        %v6934 = vmax.f32 %v6856, 0.0
        %v6935 = vmax.f32 %v6857, 0.0
        %v6936 = vmax.f32 %v6858, 0.0
        %v6937 = vmax.f32 %v6859, 0.0
        %v6938 = vmax.f32 %v6860, 0.0
        %v6939 = vmax.f32 %v6861, 0.0
        %v6940 = vmax.f32 %v6862, 0.0
        %v6941 = vmax.f32 %v6863, 0.0
        %v6942 = vmax.f32 %v6864, 0.0
        %v6943 = vmax.f32 %v6865, 0.0
        %v6944 = vmax.f32 %v6866, 0.0
        %v6945 = vmax.f32 %v6867, 0.0
        %v6946 = vmax.f32 %v6868, 0.0
        %v6947 = vmax.f32 %v6869, 0.0
        %v6948 = vmax.f32 %v6870, 0.0
        %v6949 = vmax.f32 %v6871, 0.0
        %v6950 = vmax.f32 %v6872, 0.0
        %v6951 = vmax.f32 %v6873, 0.0
        %v6952 = vmax.f32 %v6874, 0.0
        %v6953 = vmax.f32 %v6875, 0.0
        %v6954 = vmax.f32 %v6876, 0.0
        %v6955 = vmax.f32 %v6877, 0.0
        %v6956 = vmax.f32 %v6878, 0.0
        %v6957 = vmax.f32 %v6879, 0.0
        %v6958 = vmax.f32 %v6880, 0.0
        %v6959 = vmax.f32 %v6881, 0.0
        %v6960 = vmax.f32 %v6882, 0.0
        %v6961 = vmax.f32 %v6883, 0.0
        %v6962 = vmax.f32 %v6884, 0.0
        %v6963 = vmax.f32 %v6885, 0.0
        %v6964 = vmax.f32 %v6886, 0.0
        %v6965 = vmax.f32 %v6887, 0.0
        %v6966 = vmax.f32 %v6888, 0.0
        %v6967 = vmax.f32 %v6889, 0.0
        %v6968 = vmax.f32 %v6890, 0.0
        %v6969 = vmax.f32 %v6891, 0.0
        %v6970 = vmax.f32 %v6892, 0.0
        %v6971 = vmax.f32 %v6893, 0.0
        %v6972 = vmax.f32 %v6894, 0.0
        %v6973 = vmax.f32 %v6895, 0.0
        %v6974 = vmax.f32 %v6896, 0.0
        %v6975 = vmax.f32 %v6897, 0.0
        %v6976 = vmax.f32 %v6898, 0.0
        %v6977 = vmax.f32 %v6899, 0.0
        %v6978 = vmax.f32 %v6900, 0.0
        %v6979 = vmax.f32 %v6901, 0.0
        %v6980 = vmax.f32 %v6902, 0.0
        %v6981 = vmax.f32 %v6903, 0.0
        %v6982 = vmax.f32 %v6904, 0.0
        %v6983 = vmax.f32 %v6905, 0.0
        %v6984 = vmax.f32 %v6906, 0.0
        %v6985 = vmax.f32 %v6907, 0.0
        %v6986 = vmax.f32 %v6908, 0.0
        %v6987 = vmax.f32 %v6909, 0.0
        %v6988 = vmax.f32 %v6910, 0.0
        %v6989 = vmax.f32 %v6911, 0.0
        %v6990 = vmax.f32 %v6912, 0.0
        %v6991 = vmax.f32 %v6913, 0.0
        %v6992 = vmax.f32 %v6914, 0.0
        %v6993 = vmax.f32 %v6915, 0.0
        %v6994 = vmax.f32 %v6916, 0.0
        %v6995 = vmax.f32 %v6917, 0.0
        %v6996 = vmax.f32 %v6918, 0.0
        %v6997 = vmax.f32 %v6919, 0.0
        %v6998 = vmax.f32 %v6920, 0.0
        %v6999 = vmax.f32 %v6921, 0.0
        %v7000 = vmax.f32 %v6922, 0.0
        %v7001 = vmax.f32 %v6923, 0.0
        %v7002 = vmax.f32 %v6924, 0.0
        %v7003 = vmax.f32 %v6925, 0.0
        %v7004 = vmax.f32 %v6926, 0.0
        %v7005 = vmax.f32 %v6927, 0.0
        %v7006 = vmax.f32 %v6928, 0.0
        %v7007 = vmax.f32 %v6929, 0.0
        %v7008 = vmax.f32 %v6930, 0.0
        %7009 = vst [vmem:[#allocation4] sm:$0xff] %v6931
        %7010 = vst [vmem:[#allocation4 + $0x8] sm:$0xff] %v6932
        %7011 = vst [vmem:[#allocation4 + $0x10] sm:$0xff] %v6933
        %7012 = vst [vmem:[#allocation4 + $0x18] sm:$0xff] %v6934
        %7013 = vst [vmem:[#allocation4 + $0x20] sm:$0xff] %v6935
        %7014 = vst [vmem:[#allocation4 + $0x28] sm:$0xff] %v6936
        %7015 = vst [vmem:[#allocation4 + $0x30] sm:$0xff] %v6937
        %7016 = vst [vmem:[#allocation4 + $0x38] sm:$0xff] %v6938
        %7017 = vst [vmem:[#allocation4 + $0x40] sm:$0xff] %v6939
        %7018 = vst [vmem:[#allocation4 + $0x48] sm:$0xff] %v6940
        %7019 = vst [vmem:[#allocation4 + $0x50] sm:$0xff] %v6941
        %7020 = vst [vmem:[#allocation4 + $0x58] sm:$0xff] %v6942
        %7021 = vst [vmem:[#allocation4 + $0x60] sm:$0xff] %v6943
        %7022 = vst [vmem:[#allocation4 + $0x68] sm:$0xff] %v6944
        %7023 = vst [vmem:[#allocation4 + $0x70] sm:$0xff] %v6945
        %7024 = vst [vmem:[#allocation4 + $0x78] sm:$0xff] %v6946
        %7025 = vst [vmem:[#allocation4 + $0x80] sm:$0xff] %v6947
        %7026 = vst [vmem:[#allocation4 + $0x88] sm:$0xff] %v6948
        %7027 = vst [vmem:[#allocation4 + $0x90] sm:$0xff] %v6949
        %7028 = vst [vmem:[#allocation4 + $0x98] sm:$0xff] %v6950
        %7029 = vst [vmem:[#allocation4 + $0xa0] sm:$0xff] %v6951
        %7030 = vst [vmem:[#allocation4 + $0xa8] sm:$0xff] %v6952
        %7031 = vst [vmem:[#allocation4 + $0xb0] sm:$0xff] %v6953
        %7032 = vst [vmem:[#allocation4 + $0xb8] sm:$0xff] %v6954
        %7033 = vst [vmem:[#allocation4 + $0xc0] sm:$0xff] %v6955
        %7034 = vst [vmem:[#allocation4 + $0xc8] sm:$0xff] %v6956
        %7035 = vst [vmem:[#allocation4 + $0xd0] sm:$0xff] %v6957
        %7036 = vst [vmem:[#allocation4 + $0xd8] sm:$0xff] %v6958
        %7037 = vst [vmem:[#allocation4 + $0xe0] sm:$0xff] %v6959
        %7038 = vst [vmem:[#allocation4 + $0xe8] sm:$0xff] %v6960
        %7039 = vst [vmem:[#allocation4 + $0xf0] sm:$0xff] %v6961
        %7040 = vst [vmem:[#allocation4 + $0xf8] sm:$0xff] %v6962
        %7041 = vst [vmem:[#allocation4 + $0x100] sm:$0xff] %v6963
        %7042 = vst [vmem:[#allocation4 + $0x108] sm:$0xff] %v6964
        %7043 = vst [vmem:[#allocation4 + $0x110] sm:$0xff] %v6965
        %7044 = vst [vmem:[#allocation4 + $0x118] sm:$0xff] %v6966
        %7045 = vst [vmem:[#allocation4 + $0x120] sm:$0xff] %v6967
        %7046 = vst [vmem:[#allocation4 + $0x128] sm:$0xff] %v6968
        %7047 = vst [vmem:[#allocation4 + $0x130] sm:$0xff] %v6969
        %7048 = vst [vmem:[#allocation4 + $0x138] sm:$0xff] %v6970
        %7049 = vst [vmem:[#allocation4 + $0x140] sm:$0xff] %v6971
        %7050 = vst [vmem:[#allocation4 + $0x148] sm:$0xff] %v6972
        %7051 = vst [vmem:[#allocation4 + $0x150] sm:$0xff] %v6973
        %7052 = vst [vmem:[#allocation4 + $0x158] sm:$0xff] %v6974
        %7053 = vst [vmem:[#allocation4 + $0x160] sm:$0xff] %v6975
        %7054 = vst [vmem:[#allocation4 + $0x168] sm:$0xff] %v6976
        %7055 = vst [vmem:[#allocation4 + $0x170] sm:$0xff] %v6977
        %7056 = vst [vmem:[#allocation4 + $0x178] sm:$0xff] %v6978
        %7057 = vst [vmem:[#allocation4 + $0x180] sm:$0xff] %v6979
        %7058 = vst [vmem:[#allocation4 + $0x188] sm:$0xff] %v6980
        %7059 = vst [vmem:[#allocation4 + $0x190] sm:$0xff] %v6981
        %7060 = vst [vmem:[#allocation4 + $0x198] sm:$0xff] %v6982
        %7061 = vst [vmem:[#allocation4 + $0x1a0] sm:$0xff] %v6983
        %7062 = vst [vmem:[#allocation4 + $0x1a8] sm:$0xff] %v6984
        %7063 = vst [vmem:[#allocation4 + $0x1b0] sm:$0xff] %v6985
        %7064 = vst [vmem:[#allocation4 + $0x1b8] sm:$0xff] %v6986
        %7065 = vst [vmem:[#allocation4 + $0x1c0] sm:$0xff] %v6987
        %7066 = vst [vmem:[#allocation4 + $0x1c8] sm:$0xff] %v6988
        %7067 = vst [vmem:[#allocation4 + $0x1d0] sm:$0xff] %v6989
        %7068 = vst [vmem:[#allocation4 + $0x1d8] sm:$0xff] %v6990
        %7069 = vst [vmem:[#allocation4 + $0x1e0] sm:$0xff] %v6991
        %7070 = vst [vmem:[#allocation4 + $0x1e8] sm:$0xff] %v6992
        %7071 = vst [vmem:[#allocation4 + $0x1f0] sm:$0xff] %v6993
        %7072 = vst [vmem:[#allocation4 + $0x1f8] sm:$0xff] %v6994
        %7073 = vst [vmem:[#allocation4 + $0x200] sm:$0xff] %v6995
        %7074 = vst [vmem:[#allocation4 + $0x208] sm:$0xff] %v6996
        %7075 = vst [vmem:[#allocation4 + $0x210] sm:$0xff] %v6997
        %7076 = vst [vmem:[#allocation4 + $0x218] sm:$0xff] %v6998
        %7077 = vst [vmem:[#allocation4 + $0x220] sm:$0xff] %v6999
        %7078 = vst [vmem:[#allocation4 + $0x228] sm:$0xff] %v7000
        %7079 = vst [vmem:[#allocation4 + $0x230] sm:$0xff] %v7001
        %7080 = vst [vmem:[#allocation4 + $0x238] sm:$0xff] %v7002
        %7081 = vst [vmem:[#allocation4 + $0x240] sm:$0xff] %v7003
        %7082 = vst [vmem:[#allocation4 + $0x248] sm:$0xff] %v7004
        %7083 = vst [vmem:[#allocation4 + $0x250] sm:$0xff] %v7005
        %7084 = vst [vmem:[#allocation4 + $0x258] sm:$0xff] %v7006
        %7085 = vst [vmem:[#allocation4 + $0x260] sm:$0x7] %v7007
        %7086 = vst [vmem:[#allocation4 + $0x268] sm:$0x7] %v7008
        %v7087 = vld [vmem:[#allocation4] sm:$0xff]
        %v7088 = vld [vmem:[#allocation4 + $0x8] sm:$0xff]
        %v7089 = vld [vmem:[#allocation4 + $0x10] sm:$0xff]
        %v7090 = vld [vmem:[#allocation4 + $0x18] sm:$0xff]
        %v7091 = vld [vmem:[#allocation4 + $0x20] sm:$0xff]
        %v7092 = vld [vmem:[#allocation4 + $0x28] sm:$0xff]
        %v7093 = vld [vmem:[#allocation4 + $0x30] sm:$0xff]
        %v7094 = vld [vmem:[#allocation4 + $0x38] sm:$0xff]
        %v7095 = vld [vmem:[#allocation4 + $0x40] sm:$0xff]
        %v7096 = vld [vmem:[#allocation4 + $0x48] sm:$0xff]
        %v7097 = vld [vmem:[#allocation4 + $0x50] sm:$0xff]
        %v7098 = vld [vmem:[#allocation4 + $0x58] sm:$0xff]
        %v7099 = vld [vmem:[#allocation4 + $0x60] sm:$0xff]
        %v7100 = vld [vmem:[#allocation4 + $0x68] sm:$0xff]
        %v7101 = vld [vmem:[#allocation4 + $0x70] sm:$0xff]
        %v7102 = vld [vmem:[#allocation4 + $0x78] sm:$0xff]
        %v7103 = vld [vmem:[#allocation4 + $0x80] sm:$0xff]
        %v7104 = vld [vmem:[#allocation4 + $0x88] sm:$0xff]
        %v7105 = vld [vmem:[#allocation4 + $0x90] sm:$0xff]
        %v7106 = vld [vmem:[#allocation4 + $0x98] sm:$0xff]
        %v7107 = vld [vmem:[#allocation4 + $0xa0] sm:$0xff]
        %v7108 = vld [vmem:[#allocation4 + $0xa8] sm:$0xff]
        %v7109 = vld [vmem:[#allocation4 + $0xb0] sm:$0xff]
        %v7110 = vld [vmem:[#allocation4 + $0xb8] sm:$0xff]
        %v7111 = vld [vmem:[#allocation4 + $0xc0] sm:$0xff]
        %v7112 = vld [vmem:[#allocation4 + $0xc8] sm:$0xff]
        %v7113 = vld [vmem:[#allocation4 + $0xd0] sm:$0xff]
        %v7114 = vld [vmem:[#allocation4 + $0xd8] sm:$0xff]
        %v7115 = vld [vmem:[#allocation4 + $0xe0] sm:$0xff]
        %v7116 = vld [vmem:[#allocation4 + $0xe8] sm:$0xff]
        %v7117 = vld [vmem:[#allocation4 + $0xf0] sm:$0xff]
        %v7118 = vld [vmem:[#allocation4 + $0xf8] sm:$0xff]
        %v7119 = vld [vmem:[#allocation4 + $0x100] sm:$0xff]
        %v7120 = vld [vmem:[#allocation4 + $0x108] sm:$0xff]
        %v7121 = vld [vmem:[#allocation4 + $0x110] sm:$0xff]
        %v7122 = vld [vmem:[#allocation4 + $0x118] sm:$0xff]
        %v7123 = vld [vmem:[#allocation4 + $0x120] sm:$0xff]
        %v7124 = vld [vmem:[#allocation4 + $0x128] sm:$0xff]
        %v7125 = vld [vmem:[#allocation4 + $0x130] sm:$0xff]
        %v7126 = vld [vmem:[#allocation4 + $0x138] sm:$0xff]
        %v7127 = vld [vmem:[#allocation4 + $0x140] sm:$0xff]
        %v7128 = vld [vmem:[#allocation4 + $0x148] sm:$0xff]
        %v7129 = vld [vmem:[#allocation4 + $0x150] sm:$0xff]
        %v7130 = vld [vmem:[#allocation4 + $0x158] sm:$0xff]
        %v7131 = vld [vmem:[#allocation4 + $0x160] sm:$0xff]
        %v7132 = vld [vmem:[#allocation4 + $0x168] sm:$0xff]
        %v7133 = vld [vmem:[#allocation4 + $0x170] sm:$0xff]
        %v7134 = vld [vmem:[#allocation4 + $0x178] sm:$0xff]
        %v7135 = vld [vmem:[#allocation4 + $0x180] sm:$0xff]
        %v7136 = vld [vmem:[#allocation4 + $0x188] sm:$0xff]
        %v7137 = vld [vmem:[#allocation4 + $0x190] sm:$0xff]
        %v7138 = vld [vmem:[#allocation4 + $0x198] sm:$0xff]
        %v7139 = vld [vmem:[#allocation4 + $0x1a0] sm:$0xff]
        %v7140 = vld [vmem:[#allocation4 + $0x1a8] sm:$0xff]
        %v7141 = vld [vmem:[#allocation4 + $0x1b0] sm:$0xff]
        %v7142 = vld [vmem:[#allocation4 + $0x1b8] sm:$0xff]
        %v7143 = vld [vmem:[#allocation4 + $0x1c0] sm:$0xff]
        %v7144 = vld [vmem:[#allocation4 + $0x1c8] sm:$0xff]
        %v7145 = vld [vmem:[#allocation4 + $0x1d0] sm:$0xff]
        %v7146 = vld [vmem:[#allocation4 + $0x1d8] sm:$0xff]
        %v7147 = vld [vmem:[#allocation4 + $0x1e0] sm:$0xff]
        %v7148 = vld [vmem:[#allocation4 + $0x1e8] sm:$0xff]
        %v7149 = vld [vmem:[#allocation4 + $0x1f0] sm:$0xff]
        %v7150 = vld [vmem:[#allocation4 + $0x1f8] sm:$0xff]
        %v7151 = vld [vmem:[#allocation4 + $0x200] sm:$0xff]
        %v7152 = vld [vmem:[#allocation4 + $0x208] sm:$0xff]
        %v7153 = vld [vmem:[#allocation4 + $0x210] sm:$0xff]
        %v7154 = vld [vmem:[#allocation4 + $0x218] sm:$0xff]
        %v7155 = vld [vmem:[#allocation4 + $0x220] sm:$0xff]
        %v7156 = vld [vmem:[#allocation4 + $0x228] sm:$0xff]
        %v7157 = vld [vmem:[#allocation4 + $0x230] sm:$0xff]
        %v7158 = vld [vmem:[#allocation4 + $0x238] sm:$0xff]
        %v7159 = vld [vmem:[#allocation4 + $0x240] sm:$0xff]
        %v7160 = vld [vmem:[#allocation4 + $0x248] sm:$0xff]
        %v7161 = vld [vmem:[#allocation4 + $0x250] sm:$0xff]
        %v7162 = vld [vmem:[#allocation4 + $0x258] sm:$0xff]
        %v7163 = vld [vmem:[#allocation4 + $0x260] sm:$0x1]
        %v7164 = vld [vmem:[#allocation4 + $0x268] sm:$0x1]
        %v7165 = vld [vmem:[#allocation4] sm:$0xfc]
        %v7166 = vld [vmem:[#allocation4 + $0x8] sm:$0xfc]
        %v7167 = vld [vmem:[#allocation4 + $0x260] sm:$0x7]
        %v7168 = vld [vmem:[#allocation4 + $0x268] sm:$0x7]
        %vm7247 = vcmask 1045504
        %v7248 = vrot.slane %v7165, 2
        %v7249 = vrot.slane %v7089, 2
        %v7250 = vsel %vm7247, %v7248, %v7249
        %v7251 = vrot.slane %v7166, 2
        %v7252 = vrot.slane %v7090, 2
        %v7253 = vsel %vm7247, %v7251, %v7252
        %v7254 = vrot.slane %v7091, 2
        %v7255 = vsel %vm7247, %v7249, %v7254
        %v7256 = vrot.slane %v7092, 2
        %v7257 = vsel %vm7247, %v7252, %v7256
        %v7258 = vrot.slane %v7093, 2
        %v7259 = vsel %vm7247, %v7254, %v7258
        %v7260 = vrot.slane %v7094, 2
        %v7261 = vsel %vm7247, %v7256, %v7260
        %v7262 = vrot.slane %v7095, 2
        %v7263 = vsel %vm7247, %v7258, %v7262
        %v7264 = vrot.slane %v7096, 2
        %v7265 = vsel %vm7247, %v7260, %v7264
        %v7266 = vrot.slane %v7097, 2
        %v7267 = vsel %vm7247, %v7262, %v7266
        %v7268 = vrot.slane %v7098, 2
        %v7269 = vsel %vm7247, %v7264, %v7268
        %v7270 = vrot.slane %v7099, 2
        %v7271 = vsel %vm7247, %v7266, %v7270
        %v7272 = vrot.slane %v7100, 2
        %v7273 = vsel %vm7247, %v7268, %v7272
        %v7274 = vrot.slane %v7101, 2
        %v7275 = vsel %vm7247, %v7270, %v7274
        %v7276 = vrot.slane %v7102, 2
        %v7277 = vsel %vm7247, %v7272, %v7276
        %v7278 = vrot.slane %v7103, 2
        %v7279 = vsel %vm7247, %v7274, %v7278
        %v7280 = vrot.slane %v7104, 2
        %v7281 = vsel %vm7247, %v7276, %v7280
        %v7282 = vrot.slane %v7105, 2
        %v7283 = vsel %vm7247, %v7278, %v7282
        %v7284 = vrot.slane %v7106, 2
        %v7285 = vsel %vm7247, %v7280, %v7284
        %v7286 = vrot.slane %v7107, 2
        %v7287 = vsel %vm7247, %v7282, %v7286
        %v7288 = vrot.slane %v7108, 2
        %v7289 = vsel %vm7247, %v7284, %v7288
        %v7290 = vrot.slane %v7109, 2
        %v7291 = vsel %vm7247, %v7286, %v7290
        %v7292 = vrot.slane %v7110, 2
        %v7293 = vsel %vm7247, %v7288, %v7292
        %v7294 = vrot.slane %v7111, 2
        %v7295 = vsel %vm7247, %v7290, %v7294
        %v7296 = vrot.slane %v7112, 2
        %v7297 = vsel %vm7247, %v7292, %v7296
        %v7298 = vrot.slane %v7113, 2
        %v7299 = vsel %vm7247, %v7294, %v7298
        %v7300 = vrot.slane %v7114, 2
        %v7301 = vsel %vm7247, %v7296, %v7300
        %v7302 = vrot.slane %v7115, 2
        %v7303 = vsel %vm7247, %v7298, %v7302
        %v7304 = vrot.slane %v7116, 2
        %v7305 = vsel %vm7247, %v7300, %v7304
        %v7306 = vrot.slane %v7117, 2
        %v7307 = vsel %vm7247, %v7302, %v7306
        %v7308 = vrot.slane %v7118, 2
        %v7309 = vsel %vm7247, %v7304, %v7308
        %v7310 = vrot.slane %v7119, 2
        %v7311 = vsel %vm7247, %v7306, %v7310
        %v7312 = vrot.slane %v7120, 2
        %v7313 = vsel %vm7247, %v7308, %v7312
        %v7314 = vrot.slane %v7121, 2
        %v7315 = vsel %vm7247, %v7310, %v7314
        %v7316 = vrot.slane %v7122, 2
        %v7317 = vsel %vm7247, %v7312, %v7316
        %v7318 = vrot.slane %v7123, 2
        %v7319 = vsel %vm7247, %v7314, %v7318
        %v7320 = vrot.slane %v7124, 2
        %v7321 = vsel %vm7247, %v7316, %v7320
        %v7322 = vrot.slane %v7125, 2
        %v7323 = vsel %vm7247, %v7318, %v7322
        %v7324 = vrot.slane %v7126, 2
        %v7325 = vsel %vm7247, %v7320, %v7324
        %v7326 = vrot.slane %v7127, 2
        %v7327 = vsel %vm7247, %v7322, %v7326
        %v7328 = vrot.slane %v7128, 2
        %v7329 = vsel %vm7247, %v7324, %v7328
        %v7330 = vrot.slane %v7129, 2
        %v7331 = vsel %vm7247, %v7326, %v7330
        %v7332 = vrot.slane %v7130, 2
        %v7333 = vsel %vm7247, %v7328, %v7332
        %v7334 = vrot.slane %v7131, 2
        %v7335 = vsel %vm7247, %v7330, %v7334
        %v7336 = vrot.slane %v7132, 2
        %v7337 = vsel %vm7247, %v7332, %v7336
        %v7338 = vrot.slane %v7133, 2
        %v7339 = vsel %vm7247, %v7334, %v7338
        %v7340 = vrot.slane %v7134, 2
        %v7341 = vsel %vm7247, %v7336, %v7340
        %v7342 = vrot.slane %v7135, 2
        %v7343 = vsel %vm7247, %v7338, %v7342
        %v7344 = vrot.slane %v7136, 2
        %v7345 = vsel %vm7247, %v7340, %v7344
        %v7346 = vrot.slane %v7137, 2
        %v7347 = vsel %vm7247, %v7342, %v7346
        %v7348 = vrot.slane %v7138, 2
        %v7349 = vsel %vm7247, %v7344, %v7348
        %v7350 = vrot.slane %v7139, 2
        %v7351 = vsel %vm7247, %v7346, %v7350
        %v7352 = vrot.slane %v7140, 2
        %v7353 = vsel %vm7247, %v7348, %v7352
        %v7354 = vrot.slane %v7141, 2
        %v7355 = vsel %vm7247, %v7350, %v7354
        %v7356 = vrot.slane %v7142, 2
        %v7357 = vsel %vm7247, %v7352, %v7356
        %v7358 = vrot.slane %v7143, 2
        %v7359 = vsel %vm7247, %v7354, %v7358
        %v7360 = vrot.slane %v7144, 2
        %v7361 = vsel %vm7247, %v7356, %v7360
        %v7362 = vrot.slane %v7145, 2
        %v7363 = vsel %vm7247, %v7358, %v7362
        %v7364 = vrot.slane %v7146, 2
        %v7365 = vsel %vm7247, %v7360, %v7364
        %v7366 = vrot.slane %v7147, 2
        %v7367 = vsel %vm7247, %v7362, %v7366
        %v7368 = vrot.slane %v7148, 2
        %v7369 = vsel %vm7247, %v7364, %v7368
        %v7370 = vrot.slane %v7149, 2
        %v7371 = vsel %vm7247, %v7366, %v7370
        %v7372 = vrot.slane %v7150, 2
        %v7373 = vsel %vm7247, %v7368, %v7372
        %v7374 = vrot.slane %v7151, 2
        %v7375 = vsel %vm7247, %v7370, %v7374
        %v7376 = vrot.slane %v7152, 2
        %v7377 = vsel %vm7247, %v7372, %v7376
        %v7378 = vrot.slane %v7153, 2
        %v7379 = vsel %vm7247, %v7374, %v7378
        %v7380 = vrot.slane %v7154, 2
        %v7381 = vsel %vm7247, %v7376, %v7380
        %v7382 = vrot.slane %v7155, 2
        %v7383 = vsel %vm7247, %v7378, %v7382
        %v7384 = vrot.slane %v7156, 2
        %v7385 = vsel %vm7247, %v7380, %v7384
        %v7386 = vrot.slane %v7157, 2
        %v7387 = vsel %vm7247, %v7382, %v7386
        %v7388 = vrot.slane %v7158, 2
        %v7389 = vsel %vm7247, %v7384, %v7388
        %v7390 = vrot.slane %v7159, 2
        %v7391 = vsel %vm7247, %v7386, %v7390
        %v7392 = vrot.slane %v7160, 2
        %v7393 = vsel %vm7247, %v7388, %v7392
        %v7394 = vrot.slane %v7161, 2
        %v7395 = vsel %vm7247, %v7390, %v7394
        %v7396 = vrot.slane %v7162, 2
        %v7397 = vsel %vm7247, %v7392, %v7396
        %v7398 = vrot.slane %v7167, 2
        %v7399 = vsel %vm7247, %v7394, %v7398
        %v7400 = vrot.slane %v7168, 2
        %v7401 = vsel %vm7247, %v7396, %v7400
        %v7480 = vmax.f32 %v7087, %v7250
        %v7481 = vmax.f32 %v7088, %v7253
        %v7482 = vmax.f32 %v7089, %v7255
        %v7483 = vmax.f32 %v7090, %v7257
        %v7484 = vmax.f32 %v7091, %v7259
        %v7485 = vmax.f32 %v7092, %v7261
        %v7486 = vmax.f32 %v7093, %v7263
        %v7487 = vmax.f32 %v7094, %v7265
        %v7488 = vmax.f32 %v7095, %v7267
        %v7489 = vmax.f32 %v7096, %v7269
        %v7490 = vmax.f32 %v7097, %v7271
        %v7491 = vmax.f32 %v7098, %v7273
        %v7492 = vmax.f32 %v7099, %v7275
        %v7493 = vmax.f32 %v7100, %v7277
        %v7494 = vmax.f32 %v7101, %v7279
        %v7495 = vmax.f32 %v7102, %v7281
        %v7496 = vmax.f32 %v7103, %v7283
        %v7497 = vmax.f32 %v7104, %v7285
        %v7498 = vmax.f32 %v7105, %v7287
        %v7499 = vmax.f32 %v7106, %v7289
        %v7500 = vmax.f32 %v7107, %v7291
        %v7501 = vmax.f32 %v7108, %v7293
        %v7502 = vmax.f32 %v7109, %v7295
        %v7503 = vmax.f32 %v7110, %v7297
        %v7504 = vmax.f32 %v7111, %v7299
        %v7505 = vmax.f32 %v7112, %v7301
        %v7506 = vmax.f32 %v7113, %v7303
        %v7507 = vmax.f32 %v7114, %v7305
        %v7508 = vmax.f32 %v7115, %v7307
        %v7509 = vmax.f32 %v7116, %v7309
        %v7510 = vmax.f32 %v7117, %v7311
        %v7511 = vmax.f32 %v7118, %v7313
        %v7512 = vmax.f32 %v7119, %v7315
        %v7513 = vmax.f32 %v7120, %v7317
        %v7514 = vmax.f32 %v7121, %v7319
        %v7515 = vmax.f32 %v7122, %v7321
        %v7516 = vmax.f32 %v7123, %v7323
        %v7517 = vmax.f32 %v7124, %v7325
        %v7518 = vmax.f32 %v7125, %v7327
        %v7519 = vmax.f32 %v7126, %v7329
        %v7520 = vmax.f32 %v7127, %v7331
        %v7521 = vmax.f32 %v7128, %v7333
        %v7522 = vmax.f32 %v7129, %v7335
        %v7523 = vmax.f32 %v7130, %v7337
        %v7524 = vmax.f32 %v7131, %v7339
        %v7525 = vmax.f32 %v7132, %v7341
        %v7526 = vmax.f32 %v7133, %v7343
        %v7527 = vmax.f32 %v7134, %v7345
        %v7528 = vmax.f32 %v7135, %v7347
        %v7529 = vmax.f32 %v7136, %v7349
        %v7530 = vmax.f32 %v7137, %v7351
        %v7531 = vmax.f32 %v7138, %v7353
        %v7532 = vmax.f32 %v7139, %v7355
        %v7533 = vmax.f32 %v7140, %v7357
        %v7534 = vmax.f32 %v7141, %v7359
        %v7535 = vmax.f32 %v7142, %v7361
        %v7536 = vmax.f32 %v7143, %v7363
        %v7537 = vmax.f32 %v7144, %v7365
        %v7538 = vmax.f32 %v7145, %v7367
        %v7539 = vmax.f32 %v7146, %v7369
        %v7540 = vmax.f32 %v7147, %v7371
        %v7541 = vmax.f32 %v7148, %v7373
        %v7542 = vmax.f32 %v7149, %v7375
        %v7543 = vmax.f32 %v7150, %v7377
        %v7544 = vmax.f32 %v7151, %v7379
        %v7545 = vmax.f32 %v7152, %v7381
        %v7546 = vmax.f32 %v7153, %v7383
        %v7547 = vmax.f32 %v7154, %v7385
        %v7548 = vmax.f32 %v7155, %v7387
        %v7549 = vmax.f32 %v7156, %v7389
        %v7550 = vmax.f32 %v7157, %v7391
        %v7551 = vmax.f32 %v7158, %v7393
        %v7552 = vmax.f32 %v7159, %v7395
        %v7553 = vmax.f32 %v7160, %v7397
        %v7554 = vmax.f32 %v7161, %v7399
        %v7555 = vmax.f32 %v7162, %v7401
        %v7556 = vmax.f32 %v7163, %v7398
        %v7557 = vmax.f32 %v7164, %v7400
        %v7558 = vmax.f32 %v7480, %v7481
        %v7559 = vmax.f32 %v7482, %v7483
        %v7560 = vmax.f32 %v7484, %v7485
        %v7561 = vmax.f32 %v7486, %v7487
        %v7562 = vmax.f32 %v7488, %v7489
        %v7563 = vmax.f32 %v7490, %v7491
        %v7564 = vmax.f32 %v7492, %v7493
        %v7565 = vmax.f32 %v7494, %v7495
        %v7566 = vmax.f32 %v7496, %v7497
        %v7567 = vmax.f32 %v7498, %v7499
        %v7568 = vmax.f32 %v7500, %v7501
        %v7569 = vmax.f32 %v7502, %v7503
        %v7570 = vmax.f32 %v7504, %v7505
        %v7571 = vmax.f32 %v7506, %v7507
        %v7572 = vmax.f32 %v7508, %v7509
        %v7573 = vmax.f32 %v7510, %v7511
        %v7574 = vmax.f32 %v7512, %v7513
        %v7575 = vmax.f32 %v7514, %v7515
        %v7576 = vmax.f32 %v7516, %v7517
        %v7577 = vmax.f32 %v7518, %v7519
        %v7578 = vmax.f32 %v7520, %v7521
        %v7579 = vmax.f32 %v7522, %v7523
        %v7580 = vmax.f32 %v7524, %v7525
        %v7581 = vmax.f32 %v7526, %v7527
        %v7582 = vmax.f32 %v7528, %v7529
        %v7583 = vmax.f32 %v7530, %v7531
        %v7584 = vmax.f32 %v7532, %v7533
        %v7585 = vmax.f32 %v7534, %v7535
        %v7586 = vmax.f32 %v7536, %v7537
        %v7587 = vmax.f32 %v7538, %v7539
        %v7588 = vmax.f32 %v7540, %v7541
        %v7589 = vmax.f32 %v7542, %v7543
        %v7590 = vmax.f32 %v7544, %v7545
        %v7591 = vmax.f32 %v7546, %v7547
        %v7592 = vmax.f32 %v7548, %v7549
        %v7593 = vmax.f32 %v7550, %v7551
        %v7594 = vmax.f32 %v7552, %v7553
        %v7595 = vmax.f32 %v7554, %v7555
        %v7596 = vmax.f32 %v7556, %v7557
        %7597 = vst [vmem:[#allocation5] sm:$0xff] %v7558
        %7598 = vst [vmem:[#allocation5 + $0x8] sm:$0xff] %v7559
        %7599 = vst [vmem:[#allocation5 + $0x10] sm:$0xff] %v7560
        %7600 = vst [vmem:[#allocation5 + $0x18] sm:$0xff] %v7561
        %7601 = vst [vmem:[#allocation5 + $0x20] sm:$0xff] %v7562
        %7602 = vst [vmem:[#allocation5 + $0x28] sm:$0xff] %v7563
        %7603 = vst [vmem:[#allocation5 + $0x30] sm:$0xff] %v7564
        %7604 = vst [vmem:[#allocation5 + $0x38] sm:$0xff] %v7565
        %7605 = vst [vmem:[#allocation5 + $0x40] sm:$0xff] %v7566
        %7606 = vst [vmem:[#allocation5 + $0x48] sm:$0xff] %v7567
        %7607 = vst [vmem:[#allocation5 + $0x50] sm:$0xff] %v7568
        %7608 = vst [vmem:[#allocation5 + $0x58] sm:$0xff] %v7569
        %7609 = vst [vmem:[#allocation5 + $0x60] sm:$0xff] %v7570
        %7610 = vst [vmem:[#allocation5 + $0x68] sm:$0xff] %v7571
        %7611 = vst [vmem:[#allocation5 + $0x70] sm:$0xff] %v7572
        %7612 = vst [vmem:[#allocation5 + $0x78] sm:$0xff] %v7573
        %7613 = vst [vmem:[#allocation5 + $0x80] sm:$0xff] %v7574
        %7614 = vst [vmem:[#allocation5 + $0x88] sm:$0xff] %v7575
        %7615 = vst [vmem:[#allocation5 + $0x90] sm:$0xff] %v7576
        %7616 = vst [vmem:[#allocation5 + $0x98] sm:$0xff] %v7577
        %7617 = vst [vmem:[#allocation5 + $0xa0] sm:$0xff] %v7578
        %7618 = vst [vmem:[#allocation5 + $0xa8] sm:$0xff] %v7579
        %7619 = vst [vmem:[#allocation5 + $0xb0] sm:$0xff] %v7580
        %7620 = vst [vmem:[#allocation5 + $0xb8] sm:$0xff] %v7581
        %7621 = vst [vmem:[#allocation5 + $0xc0] sm:$0xff] %v7582
        %7622 = vst [vmem:[#allocation5 + $0xc8] sm:$0xff] %v7583
        %7623 = vst [vmem:[#allocation5 + $0xd0] sm:$0xff] %v7584
        %7624 = vst [vmem:[#allocation5 + $0xd8] sm:$0xff] %v7585
        %7625 = vst [vmem:[#allocation5 + $0xe0] sm:$0xff] %v7586
        %7626 = vst [vmem:[#allocation5 + $0xe8] sm:$0xff] %v7587
        %7627 = vst [vmem:[#allocation5 + $0xf0] sm:$0xff] %v7588
        %7628 = vst [vmem:[#allocation5 + $0xf8] sm:$0xff] %v7589
        %7629 = vst [vmem:[#allocation5 + $0x100] sm:$0xff] %v7590
        %7630 = vst [vmem:[#allocation5 + $0x108] sm:$0xff] %v7591
        %7631 = vst [vmem:[#allocation5 + $0x110] sm:$0xff] %v7592
        %7632 = vst [vmem:[#allocation5 + $0x118] sm:$0xff] %v7593
        %7633 = vst [vmem:[#allocation5 + $0x120] sm:$0xff] %v7594
        %7634 = vst [vmem:[#allocation5 + $0x128] sm:$0xff] %v7595
        %7635 = vst [vmem:[#allocation5 + $0x130] sm:$0x1] %v7596
        %v7636 = vld [vmem:[#allocation5] sm:$0xff]
        %v7637 = vld [vmem:[#allocation5 + $0x8] sm:$0xff]
        %v7638 = vld [vmem:[#allocation5 + $0x10] sm:$0xff]
        %v7639 = vld [vmem:[#allocation5 + $0x18] sm:$0xff]
        %v7640 = vld [vmem:[#allocation5 + $0x20] sm:$0xff]
        %v7641 = vld [vmem:[#allocation5 + $0x28] sm:$0xff]
        %v7642 = vld [vmem:[#allocation5 + $0x30] sm:$0xff]
        %v7643 = vld [vmem:[#allocation5 + $0x38] sm:$0xff]
        %v7644 = vld [vmem:[#allocation5 + $0x40] sm:$0xff]
        %v7645 = vld [vmem:[#allocation5 + $0x48] sm:$0xff]
        %v7646 = vld [vmem:[#allocation5 + $0x50] sm:$0xff]
        %v7647 = vld [vmem:[#allocation5 + $0x58] sm:$0xff]
        %v7648 = vld [vmem:[#allocation5 + $0x60] sm:$0xff]
        %v7649 = vld [vmem:[#allocation5 + $0x68] sm:$0xff]
        %v7650 = vld [vmem:[#allocation5 + $0x70] sm:$0xff]
        %v7651 = vld [vmem:[#allocation5 + $0x78] sm:$0xff]
        %v7652 = vld [vmem:[#allocation5 + $0x80] sm:$0xff]
        %v7653 = vld [vmem:[#allocation5 + $0x88] sm:$0xff]
        %v7654 = vld [vmem:[#allocation5 + $0x90] sm:$0xff]
        %v7655 = vld [vmem:[#allocation5 + $0x98] sm:$0xff]
        %v7656 = vld [vmem:[#allocation5 + $0xa0] sm:$0xff]
        %v7657 = vld [vmem:[#allocation5 + $0xa8] sm:$0xff]
        %v7658 = vld [vmem:[#allocation5 + $0xb0] sm:$0xff]
        %v7659 = vld [vmem:[#allocation5 + $0xb8] sm:$0xff]
        %v7660 = vld [vmem:[#allocation5 + $0xc0] sm:$0xff]
        %v7661 = vld [vmem:[#allocation5 + $0xc8] sm:$0xff]
        %v7662 = vld [vmem:[#allocation5 + $0xd0] sm:$0xff]
        %v7663 = vld [vmem:[#allocation5 + $0xd8] sm:$0xff]
        %v7664 = vld [vmem:[#allocation5 + $0xe0] sm:$0xff]
        %v7665 = vld [vmem:[#allocation5 + $0xe8] sm:$0xff]
        %v7666 = vld [vmem:[#allocation5 + $0xf0] sm:$0xff]
        %v7667 = vld [vmem:[#allocation5 + $0xf8] sm:$0xff]
        %v7668 = vld [vmem:[#allocation5 + $0x100] sm:$0xff]
        %v7669 = vld [vmem:[#allocation5 + $0x108] sm:$0xff]
        %v7670 = vld [vmem:[#allocation5 + $0x110] sm:$0xff]
        %v7671 = vld [vmem:[#allocation5 + $0x118] sm:$0x1]
        %v7672 = vld [vmem:[%s5] sm:$0xff]
        %v7673 = vld [vmem:[%s5 + $0x8] sm:$0xff]
        %v7674 = vld [vmem:[%s5 + $0x10] sm:$0xff]
        %v7675 = vld [vmem:[%s5 + $0x18] sm:$0xff]
        %v7676 = vld [vmem:[%s5 + $0x20] sm:$0xff]
        %v7677 = vld [vmem:[%s5 + $0x28] sm:$0xff]
        %v7678 = vld [vmem:[%s5 + $0x30] sm:$0xff]
        %v7679 = vld [vmem:[%s5 + $0x38] sm:$0xff]
        %v7680 = vld [vmem:[%s5 + $0x40] sm:$0xff]
        %v7681 = vld [vmem:[%s5 + $0x48] sm:$0xff]
        %v7682 = vld [vmem:[%s5 + $0x50] sm:$0xff]
        %v7683 = vld [vmem:[%s5 + $0x58] sm:$0xff]
        %v7684 = vld [vmem:[%s5 + $0x60] sm:$0xff]
        %v7685 = vld [vmem:[%s5 + $0x68] sm:$0xff]
        %v7686 = vld [vmem:[%s5 + $0x70] sm:$0xff]
        %v7687 = vld [vmem:[%s5 + $0x78] sm:$0xff]
        %7688 = vmatprep.subr.mxu0 0.0
        %7689 = vmatpush1.msra.mxu0 %v7687
        %7690 = vmatprep.subr.mxu0 0.0
        %7691 = vmatpush1.msra.mxu0 %v7686
        %7692 = vmatprep.subr.mxu0 0.0
        %7693 = vmatpush1.msra.mxu0 %v7685
        %7694 = vmatprep.subr.mxu0 0.0
        %7695 = vmatpush1.msra.mxu0 %v7684
        %7696 = vmatprep.subr.mxu0 0.0
        %7697 = vmatpush1.msra.mxu0 %v7683
        %7698 = vmatprep.subr.mxu0 0.0
        %7699 = vmatpush1.msra.mxu0 %v7682
        %7700 = vmatprep.subr.mxu0 0.0
        %7701 = vmatpush1.msra.mxu0 %v7681
        %7702 = vmatprep.subr.mxu0 0.0
        %7703 = vmatpush1.msra.mxu0 %v7680
        %7704 = vmatprep.subr.mxu0 0.0
        %7705 = vmatpush1.msra.mxu0 %v7679
        %7706 = vmatprep.subr.mxu0 0.0
        %7707 = vmatpush1.msra.mxu0 %v7678
        %7708 = vmatprep.subr.mxu0 0.0
        %7709 = vmatpush1.msra.mxu0 %v7677
        %7710 = vmatprep.subr.mxu0 0.0
        %7711 = vmatpush1.msra.mxu0 %v7676
        %7712 = vmatprep.subr.mxu0 0.0
        %7713 = vmatpush1.msra.mxu0 %v7675
        %7714 = vmatprep.subr.mxu0 0.0
        %7715 = vmatpush1.msra.mxu0 %v7674
        %7716 = vmatprep.subr.mxu0 0.0
        %7717 = vmatpush1.msra.mxu0 %v7673
        %7718 = vmatprep.subr.mxu0 0.0
        %7719 = vmatpush1.msra.mxu0 %v7672
        %7720 = vmatprep.subr.mxu0 0.0
        %7721 = vmatpush2.msra.mxu0 0.0
        %7722 = vmatprep.subr.mxu0 0.0
        %7723 = vmatpush2.msra.mxu0 0.0
        %7724 = vmatprep.subr.mxu0 0.0
        %7725 = vmatpush2.msra.mxu0 0.0
        %7726 = vmatprep.subr.mxu0 0.0
        %7727 = vmatpush2.msra.mxu0 0.0
        %7728 = vmatprep.subr.mxu0 0.0
        %7729 = vmatpush2.msra.mxu0 0.0
        %7730 = vmatprep.subr.mxu0 0.0
        %7731 = vmatpush2.msra.mxu0 0.0
        %7732 = vmatprep.subr.mxu0 0.0
        %7733 = vmatpush2.msra.mxu0 0.0
        %7734 = vmatprep.subr.mxu0 0.0
        %7735 = vmatpush2.msra.mxu0 0.0
        %7736 = vmatprep.subr.mxu0 0.0
        %7737 = vmatpush2.msra.mxu0 0.0
        %7738 = vmatprep.subr.mxu0 0.0
        %7739 = vmatpush2.msra.mxu0 0.0
        %7740 = vmatprep.subr.mxu0 0.0
        %7741 = vmatpush2.msra.mxu0 0.0
        %7742 = vmatprep.subr.mxu0 0.0
        %7743 = vmatpush2.msra.mxu0 0.0
        %7744 = vmatprep.subr.mxu0 0.0
        %7745 = vmatpush2.msra.mxu0 0.0
        %7746 = vmatprep.subr.mxu0 0.0
        %7747 = vmatpush2.msra.mxu0 0.0
        %7748 = vmatprep.subr.mxu0 0.0
        %7749 = vmatpush2.msra.mxu0 0.0
        %7750 = vmatprep.subr.mxu0 0.0
        %7751 = vmatpush2.msra.mxu0 0.0
        %7752 = vmatprep.mubr.f32.mxu0 0.0
        %7753 = vmatmul.mubr.f32.gmra.mxu0 %v7636
        %v7754 = vpop.f32.mrf.mxu0
        %v7755 = vadd.f32 0.0, %v7754
        %v7756 = vpop.f32.mrf.mxu0
        %7757 = vmatprep.mubr.f32.mxu0 0.0
        %7758 = vmatmul.mubr.f32.gmra.mxu0 %v7637
        %v7759 = vpop.f32.mrf.mxu0
        %v7760 = vadd.f32 0.0, %v7759
        %v7761 = vpop.f32.mrf.mxu0
        %7762 = vmatprep.mubr.f32.mxu0 0.0
        %7763 = vmatmul.mubr.f32.gmra.mxu0 %v7638
        %v7764 = vpop.f32.mrf.mxu0
        %v7765 = vadd.f32 0.0, %v7764
        %v7766 = vpop.f32.mrf.mxu0
        %7767 = vmatprep.mubr.f32.mxu0 0.0
        %7768 = vmatmul.mubr.f32.gmra.mxu0 %v7639
        %v7769 = vpop.f32.mrf.mxu0
        %v7770 = vadd.f32 0.0, %v7769
        %v7771 = vpop.f32.mrf.mxu0
        %7772 = vmatprep.mubr.f32.mxu0 0.0
        %7773 = vmatmul.mubr.f32.gmra.mxu0 %v7640
        %v7774 = vpop.f32.mrf.mxu0
        %v7775 = vadd.f32 0.0, %v7774
        %v7776 = vpop.f32.mrf.mxu0
        %7777 = vmatprep.mubr.f32.mxu0 0.0
        %7778 = vmatmul.mubr.f32.gmra.mxu0 %v7641
        %v7779 = vpop.f32.mrf.mxu0
        %v7780 = vadd.f32 0.0, %v7779
        %v7781 = vpop.f32.mrf.mxu0
        %7782 = vmatprep.mubr.f32.mxu0 0.0
        %7783 = vmatmul.mubr.f32.gmra.mxu0 %v7642
        %v7784 = vpop.f32.mrf.mxu0
        %v7785 = vadd.f32 0.0, %v7784
        %v7786 = vpop.f32.mrf.mxu0
        %7787 = vmatprep.mubr.f32.mxu0 0.0
        %7788 = vmatmul.mubr.f32.gmra.mxu0 %v7643
        %v7789 = vpop.f32.mrf.mxu0
        %v7790 = vadd.f32 0.0, %v7789
        %v7791 = vpop.f32.mrf.mxu0
        %7792 = vmatprep.mubr.f32.mxu0 0.0
        %7793 = vmatmul.mubr.f32.gmra.mxu0 %v7644
        %v7794 = vpop.f32.mrf.mxu0
        %v7795 = vadd.f32 0.0, %v7794
        %v7796 = vpop.f32.mrf.mxu0
        %7797 = vmatprep.mubr.f32.mxu0 0.0
        %7798 = vmatmul.mubr.f32.gmra.mxu0 %v7645
        %v7799 = vpop.f32.mrf.mxu0
        %v7800 = vadd.f32 0.0, %v7799
        %v7801 = vpop.f32.mrf.mxu0
        %7802 = vmatprep.mubr.f32.mxu0 0.0
        %7803 = vmatmul.mubr.f32.gmra.mxu0 %v7646
        %v7804 = vpop.f32.mrf.mxu0
        %v7805 = vadd.f32 0.0, %v7804
        %v7806 = vpop.f32.mrf.mxu0
        %7807 = vmatprep.mubr.f32.mxu0 0.0
        %7808 = vmatmul.mubr.f32.gmra.mxu0 %v7647
        %v7809 = vpop.f32.mrf.mxu0
        %v7810 = vadd.f32 0.0, %v7809
        %v7811 = vpop.f32.mrf.mxu0
        %7812 = vmatprep.mubr.f32.mxu0 0.0
        %7813 = vmatmul.mubr.f32.gmra.mxu0 %v7648
        %v7814 = vpop.f32.mrf.mxu0
        %v7815 = vadd.f32 0.0, %v7814
        %v7816 = vpop.f32.mrf.mxu0
        %7817 = vmatprep.mubr.f32.mxu0 0.0
        %7818 = vmatmul.mubr.f32.gmra.mxu0 %v7649
        %v7819 = vpop.f32.mrf.mxu0
        %v7820 = vadd.f32 0.0, %v7819
        %v7821 = vpop.f32.mrf.mxu0
        %7822 = vmatprep.mubr.f32.mxu0 0.0
        %7823 = vmatmul.mubr.f32.gmra.mxu0 %v7650
        %v7824 = vpop.f32.mrf.mxu0
        %v7825 = vadd.f32 0.0, %v7824
        %v7826 = vpop.f32.mrf.mxu0
        %7827 = vmatprep.mubr.f32.mxu0 0.0
        %7828 = vmatmul.mubr.f32.gmra.mxu0 %v7651
        %v7829 = vpop.f32.mrf.mxu0
        %v7830 = vadd.f32 0.0, %v7829
        %v7831 = vpop.f32.mrf.mxu0
        %7832 = vmatprep.mubr.f32.mxu0 0.0
        %7833 = vmatmul.mubr.f32.gmra.mxu0 %v7652
        %v7834 = vpop.f32.mrf.mxu0
        %v7835 = vadd.f32 0.0, %v7834
        %v7836 = vpop.f32.mrf.mxu0
        %7837 = vmatprep.mubr.f32.mxu0 0.0
        %7838 = vmatmul.mubr.f32.gmra.mxu0 %v7653
        %v7839 = vpop.f32.mrf.mxu0
        %v7840 = vadd.f32 0.0, %v7839
        %v7841 = vpop.f32.mrf.mxu0
        %7842 = vmatprep.mubr.f32.mxu0 0.0
        %7843 = vmatmul.mubr.f32.gmra.mxu0 %v7654
        %v7844 = vpop.f32.mrf.mxu0
        %v7845 = vadd.f32 0.0, %v7844
        %v7846 = vpop.f32.mrf.mxu0
        %7847 = vmatprep.mubr.f32.mxu0 0.0
        %7848 = vmatmul.mubr.f32.gmra.mxu0 %v7655
        %v7849 = vpop.f32.mrf.mxu0
        %v7850 = vadd.f32 0.0, %v7849
        %v7851 = vpop.f32.mrf.mxu0
        %7852 = vmatprep.mubr.f32.mxu0 0.0
        %7853 = vmatmul.mubr.f32.gmra.mxu0 %v7656
        %v7854 = vpop.f32.mrf.mxu0
        %v7855 = vadd.f32 0.0, %v7854
        %v7856 = vpop.f32.mrf.mxu0
        %7857 = vmatprep.mubr.f32.mxu0 0.0
        %7858 = vmatmul.mubr.f32.gmra.mxu0 %v7657
        %v7859 = vpop.f32.mrf.mxu0
        %v7860 = vadd.f32 0.0, %v7859
        %v7861 = vpop.f32.mrf.mxu0
        %7862 = vmatprep.mubr.f32.mxu0 0.0
        %7863 = vmatmul.mubr.f32.gmra.mxu0 %v7658
        %v7864 = vpop.f32.mrf.mxu0
        %v7865 = vadd.f32 0.0, %v7864
        %v7866 = vpop.f32.mrf.mxu0
        %7867 = vmatprep.mubr.f32.mxu0 0.0
        %7868 = vmatmul.mubr.f32.gmra.mxu0 %v7659
        %v7869 = vpop.f32.mrf.mxu0
        %v7870 = vadd.f32 0.0, %v7869
        %v7871 = vpop.f32.mrf.mxu0
        %7872 = vmatprep.mubr.f32.mxu0 0.0
        %7873 = vmatmul.mubr.f32.gmra.mxu0 %v7660
        %v7874 = vpop.f32.mrf.mxu0
        %v7875 = vadd.f32 0.0, %v7874
        %v7876 = vpop.f32.mrf.mxu0
        %7877 = vmatprep.mubr.f32.mxu0 0.0
        %7878 = vmatmul.mubr.f32.gmra.mxu0 %v7661
        %v7879 = vpop.f32.mrf.mxu0
        %v7880 = vadd.f32 0.0, %v7879
        %v7881 = vpop.f32.mrf.mxu0
        %7882 = vmatprep.mubr.f32.mxu0 0.0
        %7883 = vmatmul.mubr.f32.gmra.mxu0 %v7662
        %v7884 = vpop.f32.mrf.mxu0
        %v7885 = vadd.f32 0.0, %v7884
        %v7886 = vpop.f32.mrf.mxu0
        %7887 = vmatprep.mubr.f32.mxu0 0.0
        %7888 = vmatmul.mubr.f32.gmra.mxu0 %v7663
        %v7889 = vpop.f32.mrf.mxu0
        %v7890 = vadd.f32 0.0, %v7889
        %v7891 = vpop.f32.mrf.mxu0
        %7892 = vmatprep.mubr.f32.mxu0 0.0
        %7893 = vmatmul.mubr.f32.gmra.mxu0 %v7664
        %v7894 = vpop.f32.mrf.mxu0
        %v7895 = vadd.f32 0.0, %v7894
        %v7896 = vpop.f32.mrf.mxu0
        %7897 = vmatprep.mubr.f32.mxu0 0.0
        %7898 = vmatmul.mubr.f32.gmra.mxu0 %v7665
        %v7899 = vpop.f32.mrf.mxu0
        %v7900 = vadd.f32 0.0, %v7899
        %v7901 = vpop.f32.mrf.mxu0
        %7902 = vmatprep.mubr.f32.mxu0 0.0
        %7903 = vmatmul.mubr.f32.gmra.mxu0 %v7666
        %v7904 = vpop.f32.mrf.mxu0
        %v7905 = vadd.f32 0.0, %v7904
        %v7906 = vpop.f32.mrf.mxu0
        %7907 = vmatprep.mubr.f32.mxu0 0.0
        %7908 = vmatmul.mubr.f32.gmra.mxu0 %v7667
        %v7909 = vpop.f32.mrf.mxu0
        %v7910 = vadd.f32 0.0, %v7909
        %v7911 = vpop.f32.mrf.mxu0
        %7912 = vmatprep.mubr.f32.mxu0 0.0
        %7913 = vmatmul.mubr.f32.gmra.mxu0 %v7668
        %v7914 = vpop.f32.mrf.mxu0
        %v7915 = vadd.f32 0.0, %v7914
        %v7916 = vpop.f32.mrf.mxu0
        %7917 = vmatprep.mubr.f32.mxu0 0.0
        %7918 = vmatmul.mubr.f32.gmra.mxu0 %v7669
        %v7919 = vpop.f32.mrf.mxu0
        %v7920 = vadd.f32 0.0, %v7919
        %v7921 = vpop.f32.mrf.mxu0
        %7922 = vmatprep.mubr.f32.mxu0 0.0
        %7923 = vmatmul.mubr.f32.gmra.mxu0 %v7670
        %v7924 = vpop.f32.mrf.mxu0
        %v7925 = vadd.f32 0.0, %v7924
        %v7926 = vpop.f32.mrf.mxu0
        %7927 = vmatprep.mubr.f32.mxu0 0.0
        %7928 = vmatmul.mubr.f32.gmra.mxu0 %v7671
        %v7929 = vpop.f32.mrf.mxu0
        %v7930 = vadd.f32 0.0, %v7929
        %v7931 = vpop.f32.mrf.mxu0
        %7932 = vdwg.mxu0
        %7933 = vst [vmem:[#allocation6] sm:$0xff] %v7755
        %7934 = vst [vmem:[#allocation6 + $0x8] sm:$0xff] %v7760
        %7935 = vst [vmem:[#allocation6 + $0x10] sm:$0xff] %v7765
        %7936 = vst [vmem:[#allocation6 + $0x18] sm:$0xff] %v7770
        %7937 = vst [vmem:[#allocation6 + $0x20] sm:$0xff] %v7775
        %7938 = vst [vmem:[#allocation6 + $0x28] sm:$0xff] %v7780
        %7939 = vst [vmem:[#allocation6 + $0x30] sm:$0xff] %v7785
        %7940 = vst [vmem:[#allocation6 + $0x38] sm:$0xff] %v7790
        %7941 = vst [vmem:[#allocation6 + $0x40] sm:$0xff] %v7795
        %7942 = vst [vmem:[#allocation6 + $0x48] sm:$0xff] %v7800
        %7943 = vst [vmem:[#allocation6 + $0x50] sm:$0xff] %v7805
        %7944 = vst [vmem:[#allocation6 + $0x58] sm:$0xff] %v7810
        %7945 = vst [vmem:[#allocation6 + $0x60] sm:$0xff] %v7815
        %7946 = vst [vmem:[#allocation6 + $0x68] sm:$0xff] %v7820
        %7947 = vst [vmem:[#allocation6 + $0x70] sm:$0xff] %v7825
        %7948 = vst [vmem:[#allocation6 + $0x78] sm:$0xff] %v7830
        %7949 = vst [vmem:[#allocation6 + $0x80] sm:$0xff] %v7835
        %7950 = vst [vmem:[#allocation6 + $0x88] sm:$0xff] %v7840
        %7951 = vst [vmem:[#allocation6 + $0x90] sm:$0xff] %v7845
        %7952 = vst [vmem:[#allocation6 + $0x98] sm:$0xff] %v7850
        %7953 = vst [vmem:[#allocation6 + $0xa0] sm:$0xff] %v7855
        %7954 = vst [vmem:[#allocation6 + $0xa8] sm:$0xff] %v7860
        %7955 = vst [vmem:[#allocation6 + $0xb0] sm:$0xff] %v7865
        %7956 = vst [vmem:[#allocation6 + $0xb8] sm:$0xff] %v7870
        %7957 = vst [vmem:[#allocation6 + $0xc0] sm:$0xff] %v7875
        %7958 = vst [vmem:[#allocation6 + $0xc8] sm:$0xff] %v7880
        %7959 = vst [vmem:[#allocation6 + $0xd0] sm:$0xff] %v7885
        %7960 = vst [vmem:[#allocation6 + $0xd8] sm:$0xff] %v7890
        %7961 = vst [vmem:[#allocation6 + $0xe0] sm:$0xff] %v7895
        %7962 = vst [vmem:[#allocation6 + $0xe8] sm:$0xff] %v7900
        %7963 = vst [vmem:[#allocation6 + $0xf0] sm:$0xff] %v7905
        %7964 = vst [vmem:[#allocation6 + $0xf8] sm:$0xff] %v7910
        %7965 = vst [vmem:[#allocation6 + $0x100] sm:$0xff] %v7915
        %7966 = vst [vmem:[#allocation6 + $0x108] sm:$0xff] %v7920
        %7967 = vst [vmem:[#allocation6 + $0x110] sm:$0xff] %v7925
        %7968 = vst [vmem:[#allocation6 + $0x118] sm:$0x1] %v7930
        %v7969 = vld [vmem:[#allocation5 + $0x4] sm:$0xff]
        %v7970 = vld [vmem:[#allocation5 + $0xc] sm:$0xff]
        %v7971 = vld [vmem:[#allocation5 + $0x14] sm:$0xff]
        %v7972 = vld [vmem:[#allocation5 + $0x1c] sm:$0xff]
        %v7973 = vld [vmem:[#allocation5 + $0x24] sm:$0xff]
        %v7974 = vld [vmem:[#allocation5 + $0x2c] sm:$0xff]
        %v7975 = vld [vmem:[#allocation5 + $0x34] sm:$0xff]
        %v7976 = vld [vmem:[#allocation5 + $0x3c] sm:$0xff]
        %v7977 = vld [vmem:[#allocation5 + $0x44] sm:$0xff]
        %v7978 = vld [vmem:[#allocation5 + $0x4c] sm:$0xff]
        %v7979 = vld [vmem:[#allocation5 + $0x54] sm:$0xff]
        %v7980 = vld [vmem:[#allocation5 + $0x5c] sm:$0xff]
        %v7981 = vld [vmem:[#allocation5 + $0x64] sm:$0xff]
        %v7982 = vld [vmem:[#allocation5 + $0x6c] sm:$0xff]
        %v7983 = vld [vmem:[#allocation5 + $0x74] sm:$0xff]
        %v7984 = vld [vmem:[#allocation5 + $0x7c] sm:$0xff]
        %v7985 = vld [vmem:[#allocation5 + $0x84] sm:$0xff]
        %v7986 = vld [vmem:[#allocation5 + $0x8c] sm:$0xff]
        %v7987 = vld [vmem:[#allocation5 + $0x94] sm:$0xff]
        %v7988 = vld [vmem:[#allocation5 + $0x9c] sm:$0xff]
        %v7989 = vld [vmem:[#allocation5 + $0xa4] sm:$0xff]
        %v7990 = vld [vmem:[#allocation5 + $0xac] sm:$0xff]
        %v7991 = vld [vmem:[#allocation5 + $0xb4] sm:$0xff]
        %v7992 = vld [vmem:[#allocation5 + $0xbc] sm:$0xff]
        %v7993 = vld [vmem:[#allocation5 + $0xc4] sm:$0xff]
        %v7994 = vld [vmem:[#allocation5 + $0xcc] sm:$0xff]
        %v7995 = vld [vmem:[#allocation5 + $0xd4] sm:$0xff]
        %v7996 = vld [vmem:[#allocation5 + $0xdc] sm:$0xff]
        %v7997 = vld [vmem:[#allocation5 + $0xe4] sm:$0xff]
        %v7998 = vld [vmem:[#allocation5 + $0xec] sm:$0xff]
        %v7999 = vld [vmem:[#allocation5 + $0xf4] sm:$0xff]
        %v8000 = vld [vmem:[#allocation5 + $0xfc] sm:$0xff]
        %v8001 = vld [vmem:[#allocation5 + $0x104] sm:$0xff]
        %v8002 = vld [vmem:[#allocation5 + $0x10c] sm:$0xff]
        %v8003 = vld [vmem:[#allocation5 + $0x114] sm:$0xff]
        %v8004 = vld [vmem:[#allocation5 + $0x11c] sm:$0x1]
        %s8005 = scalar_lea.vmem %s5, 128
        %v8006 = vld [vmem:[%s8005] sm:$0xff]
        %v8007 = vld [vmem:[%s8005 + $0x8] sm:$0xff]
        %v8008 = vld [vmem:[%s8005 + $0x10] sm:$0xff]
        %v8009 = vld [vmem:[%s8005 + $0x18] sm:$0xff]
        %v8010 = vld [vmem:[%s8005 + $0x20] sm:$0xff]
        %v8011 = vld [vmem:[%s8005 + $0x28] sm:$0xff]
        %v8012 = vld [vmem:[%s8005 + $0x30] sm:$0xff]
        %v8013 = vld [vmem:[%s8005 + $0x38] sm:$0xff]
        %v8014 = vld [vmem:[%s8005 + $0x40] sm:$0xff]
        %v8015 = vld [vmem:[%s8005 + $0x48] sm:$0xff]
        %v8016 = vld [vmem:[%s8005 + $0x50] sm:$0xff]
        %v8017 = vld [vmem:[%s8005 + $0x58] sm:$0xff]
        %v8018 = vld [vmem:[%s8005 + $0x60] sm:$0xff]
        %v8019 = vld [vmem:[%s8005 + $0x68] sm:$0xff]
        %v8020 = vld [vmem:[%s8005 + $0x70] sm:$0xff]
        %v8021 = vld [vmem:[%s8005 + $0x78] sm:$0xff]
        %8022 = vmatprep.subr.mxu0 0.0
        %8023 = vmatpush1.msra.mxu0 %v8021
        %8024 = vmatprep.subr.mxu0 0.0
        %8025 = vmatpush1.msra.mxu0 %v8020
        %8026 = vmatprep.subr.mxu0 0.0
        %8027 = vmatpush1.msra.mxu0 %v8019
        %8028 = vmatprep.subr.mxu0 0.0
        %8029 = vmatpush1.msra.mxu0 %v8018
        %8030 = vmatprep.subr.mxu0 0.0
        %8031 = vmatpush1.msra.mxu0 %v8017
        %8032 = vmatprep.subr.mxu0 0.0
        %8033 = vmatpush1.msra.mxu0 %v8016
        %8034 = vmatprep.subr.mxu0 0.0
        %8035 = vmatpush1.msra.mxu0 %v8015
        %8036 = vmatprep.subr.mxu0 0.0
        %8037 = vmatpush1.msra.mxu0 %v8014
        %8038 = vmatprep.subr.mxu0 0.0
        %8039 = vmatpush1.msra.mxu0 %v8013
        %8040 = vmatprep.subr.mxu0 0.0
        %8041 = vmatpush1.msra.mxu0 %v8012
        %8042 = vmatprep.subr.mxu0 0.0
        %8043 = vmatpush1.msra.mxu0 %v8011
        %8044 = vmatprep.subr.mxu0 0.0
        %8045 = vmatpush1.msra.mxu0 %v8010
        %8046 = vmatprep.subr.mxu0 0.0
        %8047 = vmatpush1.msra.mxu0 %v8009
        %8048 = vmatprep.subr.mxu0 0.0
        %8049 = vmatpush1.msra.mxu0 %v8008
        %8050 = vmatprep.subr.mxu0 0.0
        %8051 = vmatpush1.msra.mxu0 %v8007
        %8052 = vmatprep.subr.mxu0 0.0
        %8053 = vmatpush1.msra.mxu0 %v8006
        %8054 = vmatprep.subr.mxu0 0.0
        %8055 = vmatpush2.msra.mxu0 0.0
        %8056 = vmatprep.subr.mxu0 0.0
        %8057 = vmatpush2.msra.mxu0 0.0
        %8058 = vmatprep.subr.mxu0 0.0
        %8059 = vmatpush2.msra.mxu0 0.0
        %8060 = vmatprep.subr.mxu0 0.0
        %8061 = vmatpush2.msra.mxu0 0.0
        %8062 = vmatprep.subr.mxu0 0.0
        %8063 = vmatpush2.msra.mxu0 0.0
        %8064 = vmatprep.subr.mxu0 0.0
        %8065 = vmatpush2.msra.mxu0 0.0
        %8066 = vmatprep.subr.mxu0 0.0
        %8067 = vmatpush2.msra.mxu0 0.0
        %8068 = vmatprep.subr.mxu0 0.0
        %8069 = vmatpush2.msra.mxu0 0.0
        %8070 = vmatprep.subr.mxu0 0.0
        %8071 = vmatpush2.msra.mxu0 0.0
        %8072 = vmatprep.subr.mxu0 0.0
        %8073 = vmatpush2.msra.mxu0 0.0
        %8074 = vmatprep.subr.mxu0 0.0
        %8075 = vmatpush2.msra.mxu0 0.0
        %8076 = vmatprep.subr.mxu0 0.0
        %8077 = vmatpush2.msra.mxu0 0.0
        %8078 = vmatprep.subr.mxu0 0.0
        %8079 = vmatpush2.msra.mxu0 0.0
        %8080 = vmatprep.subr.mxu0 0.0
        %8081 = vmatpush2.msra.mxu0 0.0
        %8082 = vmatprep.subr.mxu0 0.0
        %8083 = vmatpush2.msra.mxu0 0.0
        %8084 = vmatprep.subr.mxu0 0.0
        %8085 = vmatpush2.msra.mxu0 0.0
        %8086 = vmatprep.mubr.f32.mxu0 0.0
        %8087 = vmatmul.mubr.f32.gmra.mxu0 %v7969
        %v8088 = vpop.f32.mrf.mxu0
        %v8089 = vadd.f32 0.0, %v8088
        %v8090 = vpop.f32.mrf.mxu0
        %8091 = vmatprep.mubr.f32.mxu0 0.0
        %8092 = vmatmul.mubr.f32.gmra.mxu0 %v7970
        %v8093 = vpop.f32.mrf.mxu0
        %v8094 = vadd.f32 0.0, %v8093
        %v8095 = vpop.f32.mrf.mxu0
        %8096 = vmatprep.mubr.f32.mxu0 0.0
        %8097 = vmatmul.mubr.f32.gmra.mxu0 %v7971
        %v8098 = vpop.f32.mrf.mxu0
        %v8099 = vadd.f32 0.0, %v8098
        %v8100 = vpop.f32.mrf.mxu0
        %8101 = vmatprep.mubr.f32.mxu0 0.0
        %8102 = vmatmul.mubr.f32.gmra.mxu0 %v7972
        %v8103 = vpop.f32.mrf.mxu0
        %v8104 = vadd.f32 0.0, %v8103
        %v8105 = vpop.f32.mrf.mxu0
        %8106 = vmatprep.mubr.f32.mxu0 0.0
        %8107 = vmatmul.mubr.f32.gmra.mxu0 %v7973
        %v8108 = vpop.f32.mrf.mxu0
        %v8109 = vadd.f32 0.0, %v8108
        %v8110 = vpop.f32.mrf.mxu0
        %8111 = vmatprep.mubr.f32.mxu0 0.0
        %8112 = vmatmul.mubr.f32.gmra.mxu0 %v7974
        %v8113 = vpop.f32.mrf.mxu0
        %v8114 = vadd.f32 0.0, %v8113
        %v8115 = vpop.f32.mrf.mxu0
        %8116 = vmatprep.mubr.f32.mxu0 0.0
        %8117 = vmatmul.mubr.f32.gmra.mxu0 %v7975
        %v8118 = vpop.f32.mrf.mxu0
        %v8119 = vadd.f32 0.0, %v8118
        %v8120 = vpop.f32.mrf.mxu0
        %8121 = vmatprep.mubr.f32.mxu0 0.0
        %8122 = vmatmul.mubr.f32.gmra.mxu0 %v7976
        %v8123 = vpop.f32.mrf.mxu0
        %v8124 = vadd.f32 0.0, %v8123
        %v8125 = vpop.f32.mrf.mxu0
        %8126 = vmatprep.mubr.f32.mxu0 0.0
        %8127 = vmatmul.mubr.f32.gmra.mxu0 %v7977
        %v8128 = vpop.f32.mrf.mxu0
        %v8129 = vadd.f32 0.0, %v8128
        %v8130 = vpop.f32.mrf.mxu0
        %8131 = vmatprep.mubr.f32.mxu0 0.0
        %8132 = vmatmul.mubr.f32.gmra.mxu0 %v7978
        %v8133 = vpop.f32.mrf.mxu0
        %v8134 = vadd.f32 0.0, %v8133
        %v8135 = vpop.f32.mrf.mxu0
        %8136 = vmatprep.mubr.f32.mxu0 0.0
        %8137 = vmatmul.mubr.f32.gmra.mxu0 %v7979
        %v8138 = vpop.f32.mrf.mxu0
        %v8139 = vadd.f32 0.0, %v8138
        %v8140 = vpop.f32.mrf.mxu0
        %8141 = vmatprep.mubr.f32.mxu0 0.0
        %8142 = vmatmul.mubr.f32.gmra.mxu0 %v7980
        %v8143 = vpop.f32.mrf.mxu0
        %v8144 = vadd.f32 0.0, %v8143
        %v8145 = vpop.f32.mrf.mxu0
        %8146 = vmatprep.mubr.f32.mxu0 0.0
        %8147 = vmatmul.mubr.f32.gmra.mxu0 %v7981
        %v8148 = vpop.f32.mrf.mxu0
        %v8149 = vadd.f32 0.0, %v8148
        %v8150 = vpop.f32.mrf.mxu0
        %8151 = vmatprep.mubr.f32.mxu0 0.0
        %8152 = vmatmul.mubr.f32.gmra.mxu0 %v7982
        %v8153 = vpop.f32.mrf.mxu0
        %v8154 = vadd.f32 0.0, %v8153
        %v8155 = vpop.f32.mrf.mxu0
        %8156 = vmatprep.mubr.f32.mxu0 0.0
        %8157 = vmatmul.mubr.f32.gmra.mxu0 %v7983
        %v8158 = vpop.f32.mrf.mxu0
        %v8159 = vadd.f32 0.0, %v8158
        %v8160 = vpop.f32.mrf.mxu0
        %8161 = vmatprep.mubr.f32.mxu0 0.0
        %8162 = vmatmul.mubr.f32.gmra.mxu0 %v7984
        %v8163 = vpop.f32.mrf.mxu0
        %v8164 = vadd.f32 0.0, %v8163
        %v8165 = vpop.f32.mrf.mxu0
        %8166 = vmatprep.mubr.f32.mxu0 0.0
        %8167 = vmatmul.mubr.f32.gmra.mxu0 %v7985
        %v8168 = vpop.f32.mrf.mxu0
        %v8169 = vadd.f32 0.0, %v8168
        %v8170 = vpop.f32.mrf.mxu0
        %8171 = vmatprep.mubr.f32.mxu0 0.0
        %8172 = vmatmul.mubr.f32.gmra.mxu0 %v7986
        %v8173 = vpop.f32.mrf.mxu0
        %v8174 = vadd.f32 0.0, %v8173
        %v8175 = vpop.f32.mrf.mxu0
        %8176 = vmatprep.mubr.f32.mxu0 0.0
        %8177 = vmatmul.mubr.f32.gmra.mxu0 %v7987
        %v8178 = vpop.f32.mrf.mxu0
        %v8179 = vadd.f32 0.0, %v8178
        %v8180 = vpop.f32.mrf.mxu0
        %8181 = vmatprep.mubr.f32.mxu0 0.0
        %8182 = vmatmul.mubr.f32.gmra.mxu0 %v7988
        %v8183 = vpop.f32.mrf.mxu0
        %v8184 = vadd.f32 0.0, %v8183
        %v8185 = vpop.f32.mrf.mxu0
        %8186 = vmatprep.mubr.f32.mxu0 0.0
        %8187 = vmatmul.mubr.f32.gmra.mxu0 %v7989
        %v8188 = vpop.f32.mrf.mxu0
        %v8189 = vadd.f32 0.0, %v8188
        %v8190 = vpop.f32.mrf.mxu0
        %8191 = vmatprep.mubr.f32.mxu0 0.0
        %8192 = vmatmul.mubr.f32.gmra.mxu0 %v7990
        %v8193 = vpop.f32.mrf.mxu0
        %v8194 = vadd.f32 0.0, %v8193
        %v8195 = vpop.f32.mrf.mxu0
        %8196 = vmatprep.mubr.f32.mxu0 0.0
        %8197 = vmatmul.mubr.f32.gmra.mxu0 %v7991
        %v8198 = vpop.f32.mrf.mxu0
        %v8199 = vadd.f32 0.0, %v8198
        %v8200 = vpop.f32.mrf.mxu0
        %8201 = vmatprep.mubr.f32.mxu0 0.0
        %8202 = vmatmul.mubr.f32.gmra.mxu0 %v7992
        %v8203 = vpop.f32.mrf.mxu0
        %v8204 = vadd.f32 0.0, %v8203
        %v8205 = vpop.f32.mrf.mxu0
        %8206 = vmatprep.mubr.f32.mxu0 0.0
        %8207 = vmatmul.mubr.f32.gmra.mxu0 %v7993
        %v8208 = vpop.f32.mrf.mxu0
        %v8209 = vadd.f32 0.0, %v8208
        %v8210 = vpop.f32.mrf.mxu0
        %8211 = vmatprep.mubr.f32.mxu0 0.0
        %8212 = vmatmul.mubr.f32.gmra.mxu0 %v7994
        %v8213 = vpop.f32.mrf.mxu0
        %v8214 = vadd.f32 0.0, %v8213
        %v8215 = vpop.f32.mrf.mxu0
        %8216 = vmatprep.mubr.f32.mxu0 0.0
        %8217 = vmatmul.mubr.f32.gmra.mxu0 %v7995
        %v8218 = vpop.f32.mrf.mxu0
        %v8219 = vadd.f32 0.0, %v8218
        %v8220 = vpop.f32.mrf.mxu0
        %8221 = vmatprep.mubr.f32.mxu0 0.0
        %8222 = vmatmul.mubr.f32.gmra.mxu0 %v7996
        %v8223 = vpop.f32.mrf.mxu0
        %v8224 = vadd.f32 0.0, %v8223
        %v8225 = vpop.f32.mrf.mxu0
        %8226 = vmatprep.mubr.f32.mxu0 0.0
        %8227 = vmatmul.mubr.f32.gmra.mxu0 %v7997
        %v8228 = vpop.f32.mrf.mxu0
        %v8229 = vadd.f32 0.0, %v8228
        %v8230 = vpop.f32.mrf.mxu0
        %8231 = vmatprep.mubr.f32.mxu0 0.0
        %8232 = vmatmul.mubr.f32.gmra.mxu0 %v7998
        %v8233 = vpop.f32.mrf.mxu0
        %v8234 = vadd.f32 0.0, %v8233
        %v8235 = vpop.f32.mrf.mxu0
        %8236 = vmatprep.mubr.f32.mxu0 0.0
        %8237 = vmatmul.mubr.f32.gmra.mxu0 %v7999
        %v8238 = vpop.f32.mrf.mxu0
        %v8239 = vadd.f32 0.0, %v8238
        %v8240 = vpop.f32.mrf.mxu0
        %8241 = vmatprep.mubr.f32.mxu0 0.0
        %8242 = vmatmul.mubr.f32.gmra.mxu0 %v8000
        %v8243 = vpop.f32.mrf.mxu0
        %v8244 = vadd.f32 0.0, %v8243
        %v8245 = vpop.f32.mrf.mxu0
        %8246 = vmatprep.mubr.f32.mxu0 0.0
        %8247 = vmatmul.mubr.f32.gmra.mxu0 %v8001
        %v8248 = vpop.f32.mrf.mxu0
        %v8249 = vadd.f32 0.0, %v8248
        %v8250 = vpop.f32.mrf.mxu0
        %8251 = vmatprep.mubr.f32.mxu0 0.0
        %8252 = vmatmul.mubr.f32.gmra.mxu0 %v8002
        %v8253 = vpop.f32.mrf.mxu0
        %v8254 = vadd.f32 0.0, %v8253
        %v8255 = vpop.f32.mrf.mxu0
        %8256 = vmatprep.mubr.f32.mxu0 0.0
        %8257 = vmatmul.mubr.f32.gmra.mxu0 %v8003
        %v8258 = vpop.f32.mrf.mxu0
        %v8259 = vadd.f32 0.0, %v8258
        %v8260 = vpop.f32.mrf.mxu0
        %8261 = vmatprep.mubr.f32.mxu0 0.0
        %8262 = vmatmul.mubr.f32.gmra.mxu0 %v8004
        %v8263 = vpop.f32.mrf.mxu0
        %v8264 = vadd.f32 0.0, %v8263
        %v8265 = vpop.f32.mrf.mxu0
        %8266 = vdwg.mxu0
        %v8267 = vld [vmem:[#allocation6] sm:$0xff]
        %v8268 = vld [vmem:[#allocation6 + $0x8] sm:$0xff]
        %v8269 = vld [vmem:[#allocation6 + $0x10] sm:$0xff]
        %v8270 = vld [vmem:[#allocation6 + $0x18] sm:$0xff]
        %v8271 = vld [vmem:[#allocation6 + $0x20] sm:$0xff]
        %v8272 = vld [vmem:[#allocation6 + $0x28] sm:$0xff]
        %v8273 = vld [vmem:[#allocation6 + $0x30] sm:$0xff]
        %v8274 = vld [vmem:[#allocation6 + $0x38] sm:$0xff]
        %v8275 = vld [vmem:[#allocation6 + $0x40] sm:$0xff]
        %v8276 = vld [vmem:[#allocation6 + $0x48] sm:$0xff]
        %v8277 = vld [vmem:[#allocation6 + $0x50] sm:$0xff]
        %v8278 = vld [vmem:[#allocation6 + $0x58] sm:$0xff]
        %v8279 = vld [vmem:[#allocation6 + $0x60] sm:$0xff]
        %v8280 = vld [vmem:[#allocation6 + $0x68] sm:$0xff]
        %v8281 = vld [vmem:[#allocation6 + $0x70] sm:$0xff]
        %v8282 = vld [vmem:[#allocation6 + $0x78] sm:$0xff]
        %v8283 = vld [vmem:[#allocation6 + $0x80] sm:$0xff]
        %v8284 = vld [vmem:[#allocation6 + $0x88] sm:$0xff]
        %v8285 = vld [vmem:[#allocation6 + $0x90] sm:$0xff]
        %v8286 = vld [vmem:[#allocation6 + $0x98] sm:$0xff]
        %v8287 = vld [vmem:[#allocation6 + $0xa0] sm:$0xff]
        %v8288 = vld [vmem:[#allocation6 + $0xa8] sm:$0xff]
        %v8289 = vld [vmem:[#allocation6 + $0xb0] sm:$0xff]
        %v8290 = vld [vmem:[#allocation6 + $0xb8] sm:$0xff]
        %v8291 = vld [vmem:[#allocation6 + $0xc0] sm:$0xff]
        %v8292 = vld [vmem:[#allocation6 + $0xc8] sm:$0xff]
        %v8293 = vld [vmem:[#allocation6 + $0xd0] sm:$0xff]
        %v8294 = vld [vmem:[#allocation6 + $0xd8] sm:$0xff]
        %v8295 = vld [vmem:[#allocation6 + $0xe0] sm:$0xff]
        %v8296 = vld [vmem:[#allocation6 + $0xe8] sm:$0xff]
        %v8297 = vld [vmem:[#allocation6 + $0xf0] sm:$0xff]
        %v8298 = vld [vmem:[#allocation6 + $0xf8] sm:$0xff]
        %v8299 = vld [vmem:[#allocation6 + $0x100] sm:$0xff]
        %v8300 = vld [vmem:[#allocation6 + $0x108] sm:$0xff]
        %v8301 = vld [vmem:[#allocation6 + $0x110] sm:$0xff]
        %v8302 = vld [vmem:[#allocation6 + $0x118] sm:$0x1]
        %v8303 = vadd.f32 %v8267, %v8089
        %v8304 = vadd.f32 %v8268, %v8094
        %v8305 = vadd.f32 %v8269, %v8099
        %v8306 = vadd.f32 %v8270, %v8104
        %v8307 = vadd.f32 %v8271, %v8109
        %v8308 = vadd.f32 %v8272, %v8114
        %v8309 = vadd.f32 %v8273, %v8119
        %v8310 = vadd.f32 %v8274, %v8124
        %v8311 = vadd.f32 %v8275, %v8129
        %v8312 = vadd.f32 %v8276, %v8134
        %v8313 = vadd.f32 %v8277, %v8139
        %v8314 = vadd.f32 %v8278, %v8144
        %v8315 = vadd.f32 %v8279, %v8149
        %v8316 = vadd.f32 %v8280, %v8154
        %v8317 = vadd.f32 %v8281, %v8159
        %v8318 = vadd.f32 %v8282, %v8164
        %v8319 = vadd.f32 %v8283, %v8169
        %v8320 = vadd.f32 %v8284, %v8174
        %v8321 = vadd.f32 %v8285, %v8179
        %v8322 = vadd.f32 %v8286, %v8184
        %v8323 = vadd.f32 %v8287, %v8189
        %v8324 = vadd.f32 %v8288, %v8194
        %v8325 = vadd.f32 %v8289, %v8199
        %v8326 = vadd.f32 %v8290, %v8204
        %v8327 = vadd.f32 %v8291, %v8209
        %v8328 = vadd.f32 %v8292, %v8214
        %v8329 = vadd.f32 %v8293, %v8219
        %v8330 = vadd.f32 %v8294, %v8224
        %v8331 = vadd.f32 %v8295, %v8229
        %v8332 = vadd.f32 %v8296, %v8234
        %v8333 = vadd.f32 %v8297, %v8239
        %v8334 = vadd.f32 %v8298, %v8244
        %v8335 = vadd.f32 %v8299, %v8249
        %v8336 = vadd.f32 %v8300, %v8254
        %v8337 = vadd.f32 %v8301, %v8259
        %v8338 = vadd.f32 %v8302, %v8264
        %8339 = vst [vmem:[#allocation6] sm:$0xff] %v8303
        %8340 = vst [vmem:[#allocation6 + $0x8] sm:$0xff] %v8304
        %8341 = vst [vmem:[#allocation6 + $0x10] sm:$0xff] %v8305
        %8342 = vst [vmem:[#allocation6 + $0x18] sm:$0xff] %v8306
        %8343 = vst [vmem:[#allocation6 + $0x20] sm:$0xff] %v8307
        %8344 = vst [vmem:[#allocation6 + $0x28] sm:$0xff] %v8308
        %8345 = vst [vmem:[#allocation6 + $0x30] sm:$0xff] %v8309
        %8346 = vst [vmem:[#allocation6 + $0x38] sm:$0xff] %v8310
        %8347 = vst [vmem:[#allocation6 + $0x40] sm:$0xff] %v8311
        %8348 = vst [vmem:[#allocation6 + $0x48] sm:$0xff] %v8312
        %8349 = vst [vmem:[#allocation6 + $0x50] sm:$0xff] %v8313
        %8350 = vst [vmem:[#allocation6 + $0x58] sm:$0xff] %v8314
        %8351 = vst [vmem:[#allocation6 + $0x60] sm:$0xff] %v8315
        %8352 = vst [vmem:[#allocation6 + $0x68] sm:$0xff] %v8316
        %8353 = vst [vmem:[#allocation6 + $0x70] sm:$0xff] %v8317
        %8354 = vst [vmem:[#allocation6 + $0x78] sm:$0xff] %v8318
        %8355 = vst [vmem:[#allocation6 + $0x80] sm:$0xff] %v8319
        %8356 = vst [vmem:[#allocation6 + $0x88] sm:$0xff] %v8320
        %8357 = vst [vmem:[#allocation6 + $0x90] sm:$0xff] %v8321
        %8358 = vst [vmem:[#allocation6 + $0x98] sm:$0xff] %v8322
        %8359 = vst [vmem:[#allocation6 + $0xa0] sm:$0xff] %v8323
        %8360 = vst [vmem:[#allocation6 + $0xa8] sm:$0xff] %v8324
        %8361 = vst [vmem:[#allocation6 + $0xb0] sm:$0xff] %v8325
        %8362 = vst [vmem:[#allocation6 + $0xb8] sm:$0xff] %v8326
        %8363 = vst [vmem:[#allocation6 + $0xc0] sm:$0xff] %v8327
        %8364 = vst [vmem:[#allocation6 + $0xc8] sm:$0xff] %v8328
        %8365 = vst [vmem:[#allocation6 + $0xd0] sm:$0xff] %v8329
        %8366 = vst [vmem:[#allocation6 + $0xd8] sm:$0xff] %v8330
        %8367 = vst [vmem:[#allocation6 + $0xe0] sm:$0xff] %v8331
        %8368 = vst [vmem:[#allocation6 + $0xe8] sm:$0xff] %v8332
        %8369 = vst [vmem:[#allocation6 + $0xf0] sm:$0xff] %v8333
        %8370 = vst [vmem:[#allocation6 + $0xf8] sm:$0xff] %v8334
        %8371 = vst [vmem:[#allocation6 + $0x100] sm:$0xff] %v8335
        %8372 = vst [vmem:[#allocation6 + $0x108] sm:$0xff] %v8336
        %8373 = vst [vmem:[#allocation6 + $0x110] sm:$0xff] %v8337
        %8374 = vst [vmem:[#allocation6 + $0x118] sm:$0x1] %v8338
        %v8375 = vld [vmem:[#allocation5 + $0x8] sm:$0xff]
        %v8376 = vld [vmem:[#allocation5 + $0x10] sm:$0xff]
        %v8377 = vld [vmem:[#allocation5 + $0x18] sm:$0xff]
        %v8378 = vld [vmem:[#allocation5 + $0x20] sm:$0xff]
        %v8379 = vld [vmem:[#allocation5 + $0x28] sm:$0xff]
        %v8380 = vld [vmem:[#allocation5 + $0x30] sm:$0xff]
        %v8381 = vld [vmem:[#allocation5 + $0x38] sm:$0xff]
        %v8382 = vld [vmem:[#allocation5 + $0x40] sm:$0xff]
        %v8383 = vld [vmem:[#allocation5 + $0x48] sm:$0xff]
        %v8384 = vld [vmem:[#allocation5 + $0x50] sm:$0xff]
        %v8385 = vld [vmem:[#allocation5 + $0x58] sm:$0xff]
        %v8386 = vld [vmem:[#allocation5 + $0x60] sm:$0xff]
        %v8387 = vld [vmem:[#allocation5 + $0x68] sm:$0xff]
        %v8388 = vld [vmem:[#allocation5 + $0x70] sm:$0xff]
        %v8389 = vld [vmem:[#allocation5 + $0x78] sm:$0xff]
        %v8390 = vld [vmem:[#allocation5 + $0x80] sm:$0xff]
        %v8391 = vld [vmem:[#allocation5 + $0x88] sm:$0xff]
        %v8392 = vld [vmem:[#allocation5 + $0x90] sm:$0xff]
        %v8393 = vld [vmem:[#allocation5 + $0x98] sm:$0xff]
        %v8394 = vld [vmem:[#allocation5 + $0xa0] sm:$0xff]
        %v8395 = vld [vmem:[#allocation5 + $0xa8] sm:$0xff]
        %v8396 = vld [vmem:[#allocation5 + $0xb0] sm:$0xff]
        %v8397 = vld [vmem:[#allocation5 + $0xb8] sm:$0xff]
        %v8398 = vld [vmem:[#allocation5 + $0xc0] sm:$0xff]
        %v8399 = vld [vmem:[#allocation5 + $0xc8] sm:$0xff]
        %v8400 = vld [vmem:[#allocation5 + $0xd0] sm:$0xff]
        %v8401 = vld [vmem:[#allocation5 + $0xd8] sm:$0xff]
        %v8402 = vld [vmem:[#allocation5 + $0xe0] sm:$0xff]
        %v8403 = vld [vmem:[#allocation5 + $0xe8] sm:$0xff]
        %v8404 = vld [vmem:[#allocation5 + $0xf0] sm:$0xff]
        %v8405 = vld [vmem:[#allocation5 + $0xf8] sm:$0xff]
        %v8406 = vld [vmem:[#allocation5 + $0x100] sm:$0xff]
        %v8407 = vld [vmem:[#allocation5 + $0x108] sm:$0xff]
        %v8408 = vld [vmem:[#allocation5 + $0x110] sm:$0xff]
        %v8409 = vld [vmem:[#allocation5 + $0x118] sm:$0xff]
        %v8410 = vld [vmem:[#allocation5 + $0x120] sm:$0x1]
        %s8411 = scalar_lea.vmem %s5, 256
        %v8412 = vld [vmem:[%s8411] sm:$0xff]
        %v8413 = vld [vmem:[%s8411 + $0x8] sm:$0xff]
        %v8414 = vld [vmem:[%s8411 + $0x10] sm:$0xff]
        %v8415 = vld [vmem:[%s8411 + $0x18] sm:$0xff]
        %v8416 = vld [vmem:[%s8411 + $0x20] sm:$0xff]
        %v8417 = vld [vmem:[%s8411 + $0x28] sm:$0xff]
        %v8418 = vld [vmem:[%s8411 + $0x30] sm:$0xff]
        %v8419 = vld [vmem:[%s8411 + $0x38] sm:$0xff]
        %v8420 = vld [vmem:[%s8411 + $0x40] sm:$0xff]
        %v8421 = vld [vmem:[%s8411 + $0x48] sm:$0xff]
        %v8422 = vld [vmem:[%s8411 + $0x50] sm:$0xff]
        %v8423 = vld [vmem:[%s8411 + $0x58] sm:$0xff]
        %v8424 = vld [vmem:[%s8411 + $0x60] sm:$0xff]
        %v8425 = vld [vmem:[%s8411 + $0x68] sm:$0xff]
        %v8426 = vld [vmem:[%s8411 + $0x70] sm:$0xff]
        %v8427 = vld [vmem:[%s8411 + $0x78] sm:$0xff]
        %8428 = vmatprep.subr.mxu0 0.0
        %8429 = vmatpush1.msra.mxu0 %v8427
        %8430 = vmatprep.subr.mxu0 0.0
        %8431 = vmatpush1.msra.mxu0 %v8426
        %8432 = vmatprep.subr.mxu0 0.0
        %8433 = vmatpush1.msra.mxu0 %v8425
        %8434 = vmatprep.subr.mxu0 0.0
        %8435 = vmatpush1.msra.mxu0 %v8424
        %8436 = vmatprep.subr.mxu0 0.0
        %8437 = vmatpush1.msra.mxu0 %v8423
        %8438 = vmatprep.subr.mxu0 0.0
        %8439 = vmatpush1.msra.mxu0 %v8422
        %8440 = vmatprep.subr.mxu0 0.0
        %8441 = vmatpush1.msra.mxu0 %v8421
        %8442 = vmatprep.subr.mxu0 0.0
        %8443 = vmatpush1.msra.mxu0 %v8420
        %8444 = vmatprep.subr.mxu0 0.0
        %8445 = vmatpush1.msra.mxu0 %v8419
        %8446 = vmatprep.subr.mxu0 0.0
        %8447 = vmatpush1.msra.mxu0 %v8418
        %8448 = vmatprep.subr.mxu0 0.0
        %8449 = vmatpush1.msra.mxu0 %v8417
        %8450 = vmatprep.subr.mxu0 0.0
        %8451 = vmatpush1.msra.mxu0 %v8416
        %8452 = vmatprep.subr.mxu0 0.0
        %8453 = vmatpush1.msra.mxu0 %v8415
        %8454 = vmatprep.subr.mxu0 0.0
        %8455 = vmatpush1.msra.mxu0 %v8414
        %8456 = vmatprep.subr.mxu0 0.0
        %8457 = vmatpush1.msra.mxu0 %v8413
        %8458 = vmatprep.subr.mxu0 0.0
        %8459 = vmatpush1.msra.mxu0 %v8412
        %8460 = vmatprep.subr.mxu0 0.0
        %8461 = vmatpush2.msra.mxu0 0.0
        %8462 = vmatprep.subr.mxu0 0.0
        %8463 = vmatpush2.msra.mxu0 0.0
        %8464 = vmatprep.subr.mxu0 0.0
        %8465 = vmatpush2.msra.mxu0 0.0
        %8466 = vmatprep.subr.mxu0 0.0
        %8467 = vmatpush2.msra.mxu0 0.0
        %8468 = vmatprep.subr.mxu0 0.0
        %8469 = vmatpush2.msra.mxu0 0.0
        %8470 = vmatprep.subr.mxu0 0.0
        %8471 = vmatpush2.msra.mxu0 0.0
        %8472 = vmatprep.subr.mxu0 0.0
        %8473 = vmatpush2.msra.mxu0 0.0
        %8474 = vmatprep.subr.mxu0 0.0
        %8475 = vmatpush2.msra.mxu0 0.0
        %8476 = vmatprep.subr.mxu0 0.0
        %8477 = vmatpush2.msra.mxu0 0.0
        %8478 = vmatprep.subr.mxu0 0.0
        %8479 = vmatpush2.msra.mxu0 0.0
        %8480 = vmatprep.subr.mxu0 0.0
        %8481 = vmatpush2.msra.mxu0 0.0
        %8482 = vmatprep.subr.mxu0 0.0
        %8483 = vmatpush2.msra.mxu0 0.0
        %8484 = vmatprep.subr.mxu0 0.0
        %8485 = vmatpush2.msra.mxu0 0.0
        %8486 = vmatprep.subr.mxu0 0.0
        %8487 = vmatpush2.msra.mxu0 0.0
        %8488 = vmatprep.subr.mxu0 0.0
        %8489 = vmatpush2.msra.mxu0 0.0
        %8490 = vmatprep.subr.mxu0 0.0
        %8491 = vmatpush2.msra.mxu0 0.0
        %8492 = vmatprep.mubr.f32.mxu0 0.0
        %8493 = vmatmul.mubr.f32.gmra.mxu0 %v8375
        %v8494 = vpop.f32.mrf.mxu0
        %v8495 = vadd.f32 0.0, %v8494
        %v8496 = vpop.f32.mrf.mxu0
        %8497 = vmatprep.mubr.f32.mxu0 0.0
        %8498 = vmatmul.mubr.f32.gmra.mxu0 %v8376
        %v8499 = vpop.f32.mrf.mxu0
        %v8500 = vadd.f32 0.0, %v8499
        %v8501 = vpop.f32.mrf.mxu0
        %8502 = vmatprep.mubr.f32.mxu0 0.0
        %8503 = vmatmul.mubr.f32.gmra.mxu0 %v8377
        %v8504 = vpop.f32.mrf.mxu0
        %v8505 = vadd.f32 0.0, %v8504
        %v8506 = vpop.f32.mrf.mxu0
        %8507 = vmatprep.mubr.f32.mxu0 0.0
        %8508 = vmatmul.mubr.f32.gmra.mxu0 %v8378
        %v8509 = vpop.f32.mrf.mxu0
        %v8510 = vadd.f32 0.0, %v8509
        %v8511 = vpop.f32.mrf.mxu0
        %8512 = vmatprep.mubr.f32.mxu0 0.0
        %8513 = vmatmul.mubr.f32.gmra.mxu0 %v8379
        %v8514 = vpop.f32.mrf.mxu0
        %v8515 = vadd.f32 0.0, %v8514
        %v8516 = vpop.f32.mrf.mxu0
        %8517 = vmatprep.mubr.f32.mxu0 0.0
        %8518 = vmatmul.mubr.f32.gmra.mxu0 %v8380
        %v8519 = vpop.f32.mrf.mxu0
        %v8520 = vadd.f32 0.0, %v8519
        %v8521 = vpop.f32.mrf.mxu0
        %8522 = vmatprep.mubr.f32.mxu0 0.0
        %8523 = vmatmul.mubr.f32.gmra.mxu0 %v8381
        %v8524 = vpop.f32.mrf.mxu0
        %v8525 = vadd.f32 0.0, %v8524
        %v8526 = vpop.f32.mrf.mxu0
        %8527 = vmatprep.mubr.f32.mxu0 0.0
        %8528 = vmatmul.mubr.f32.gmra.mxu0 %v8382
        %v8529 = vpop.f32.mrf.mxu0
        %v8530 = vadd.f32 0.0, %v8529
        %v8531 = vpop.f32.mrf.mxu0
        %8532 = vmatprep.mubr.f32.mxu0 0.0
        %8533 = vmatmul.mubr.f32.gmra.mxu0 %v8383
        %v8534 = vpop.f32.mrf.mxu0
        %v8535 = vadd.f32 0.0, %v8534
        %v8536 = vpop.f32.mrf.mxu0
        %8537 = vmatprep.mubr.f32.mxu0 0.0
        %8538 = vmatmul.mubr.f32.gmra.mxu0 %v8384
        %v8539 = vpop.f32.mrf.mxu0
        %v8540 = vadd.f32 0.0, %v8539
        %v8541 = vpop.f32.mrf.mxu0
        %8542 = vmatprep.mubr.f32.mxu0 0.0
        %8543 = vmatmul.mubr.f32.gmra.mxu0 %v8385
        %v8544 = vpop.f32.mrf.mxu0
        %v8545 = vadd.f32 0.0, %v8544
        %v8546 = vpop.f32.mrf.mxu0
        %8547 = vmatprep.mubr.f32.mxu0 0.0
        %8548 = vmatmul.mubr.f32.gmra.mxu0 %v8386
        %v8549 = vpop.f32.mrf.mxu0
        %v8550 = vadd.f32 0.0, %v8549
        %v8551 = vpop.f32.mrf.mxu0
        %8552 = vmatprep.mubr.f32.mxu0 0.0
        %8553 = vmatmul.mubr.f32.gmra.mxu0 %v8387
        %v8554 = vpop.f32.mrf.mxu0
        %v8555 = vadd.f32 0.0, %v8554
        %v8556 = vpop.f32.mrf.mxu0
        %8557 = vmatprep.mubr.f32.mxu0 0.0
        %8558 = vmatmul.mubr.f32.gmra.mxu0 %v8388
        %v8559 = vpop.f32.mrf.mxu0
        %v8560 = vadd.f32 0.0, %v8559
        %v8561 = vpop.f32.mrf.mxu0
        %8562 = vmatprep.mubr.f32.mxu0 0.0
        %8563 = vmatmul.mubr.f32.gmra.mxu0 %v8389
        %v8564 = vpop.f32.mrf.mxu0
        %v8565 = vadd.f32 0.0, %v8564
        %v8566 = vpop.f32.mrf.mxu0
        %8567 = vmatprep.mubr.f32.mxu0 0.0
        %8568 = vmatmul.mubr.f32.gmra.mxu0 %v8390
        %v8569 = vpop.f32.mrf.mxu0
        %v8570 = vadd.f32 0.0, %v8569
        %v8571 = vpop.f32.mrf.mxu0
        %8572 = vmatprep.mubr.f32.mxu0 0.0
        %8573 = vmatmul.mubr.f32.gmra.mxu0 %v8391
        %v8574 = vpop.f32.mrf.mxu0
        %v8575 = vadd.f32 0.0, %v8574
        %v8576 = vpop.f32.mrf.mxu0
        %8577 = vmatprep.mubr.f32.mxu0 0.0
        %8578 = vmatmul.mubr.f32.gmra.mxu0 %v8392
        %v8579 = vpop.f32.mrf.mxu0
        %v8580 = vadd.f32 0.0, %v8579
        %v8581 = vpop.f32.mrf.mxu0
        %8582 = vmatprep.mubr.f32.mxu0 0.0
        %8583 = vmatmul.mubr.f32.gmra.mxu0 %v8393
        %v8584 = vpop.f32.mrf.mxu0
        %v8585 = vadd.f32 0.0, %v8584
        %v8586 = vpop.f32.mrf.mxu0
        %8587 = vmatprep.mubr.f32.mxu0 0.0
        %8588 = vmatmul.mubr.f32.gmra.mxu0 %v8394
        %v8589 = vpop.f32.mrf.mxu0
        %v8590 = vadd.f32 0.0, %v8589
        %v8591 = vpop.f32.mrf.mxu0
        %8592 = vmatprep.mubr.f32.mxu0 0.0
        %8593 = vmatmul.mubr.f32.gmra.mxu0 %v8395
        %v8594 = vpop.f32.mrf.mxu0
        %v8595 = vadd.f32 0.0, %v8594
        %v8596 = vpop.f32.mrf.mxu0
        %8597 = vmatprep.mubr.f32.mxu0 0.0
        %8598 = vmatmul.mubr.f32.gmra.mxu0 %v8396
        %v8599 = vpop.f32.mrf.mxu0
        %v8600 = vadd.f32 0.0, %v8599
        %v8601 = vpop.f32.mrf.mxu0
        %8602 = vmatprep.mubr.f32.mxu0 0.0
        %8603 = vmatmul.mubr.f32.gmra.mxu0 %v8397
        %v8604 = vpop.f32.mrf.mxu0
        %v8605 = vadd.f32 0.0, %v8604
        %v8606 = vpop.f32.mrf.mxu0
        %8607 = vmatprep.mubr.f32.mxu0 0.0
        %8608 = vmatmul.mubr.f32.gmra.mxu0 %v8398
        %v8609 = vpop.f32.mrf.mxu0
        %v8610 = vadd.f32 0.0, %v8609
        %v8611 = vpop.f32.mrf.mxu0
        %8612 = vmatprep.mubr.f32.mxu0 0.0
        %8613 = vmatmul.mubr.f32.gmra.mxu0 %v8399
        %v8614 = vpop.f32.mrf.mxu0
        %v8615 = vadd.f32 0.0, %v8614
        %v8616 = vpop.f32.mrf.mxu0
        %8617 = vmatprep.mubr.f32.mxu0 0.0
        %8618 = vmatmul.mubr.f32.gmra.mxu0 %v8400
        %v8619 = vpop.f32.mrf.mxu0
        %v8620 = vadd.f32 0.0, %v8619
        %v8621 = vpop.f32.mrf.mxu0
        %8622 = vmatprep.mubr.f32.mxu0 0.0
        %8623 = vmatmul.mubr.f32.gmra.mxu0 %v8401
        %v8624 = vpop.f32.mrf.mxu0
        %v8625 = vadd.f32 0.0, %v8624
        %v8626 = vpop.f32.mrf.mxu0
        %8627 = vmatprep.mubr.f32.mxu0 0.0
        %8628 = vmatmul.mubr.f32.gmra.mxu0 %v8402
        %v8629 = vpop.f32.mrf.mxu0
        %v8630 = vadd.f32 0.0, %v8629
        %v8631 = vpop.f32.mrf.mxu0
        %8632 = vmatprep.mubr.f32.mxu0 0.0
        %8633 = vmatmul.mubr.f32.gmra.mxu0 %v8403
        %v8634 = vpop.f32.mrf.mxu0
        %v8635 = vadd.f32 0.0, %v8634
        %v8636 = vpop.f32.mrf.mxu0
        %8637 = vmatprep.mubr.f32.mxu0 0.0
        %8638 = vmatmul.mubr.f32.gmra.mxu0 %v8404
        %v8639 = vpop.f32.mrf.mxu0
        %v8640 = vadd.f32 0.0, %v8639
        %v8641 = vpop.f32.mrf.mxu0
        %8642 = vmatprep.mubr.f32.mxu0 0.0
        %8643 = vmatmul.mubr.f32.gmra.mxu0 %v8405
        %v8644 = vpop.f32.mrf.mxu0
        %v8645 = vadd.f32 0.0, %v8644
        %v8646 = vpop.f32.mrf.mxu0
        %8647 = vmatprep.mubr.f32.mxu0 0.0
        %8648 = vmatmul.mubr.f32.gmra.mxu0 %v8406
        %v8649 = vpop.f32.mrf.mxu0
        %v8650 = vadd.f32 0.0, %v8649
        %v8651 = vpop.f32.mrf.mxu0
        %8652 = vmatprep.mubr.f32.mxu0 0.0
        %8653 = vmatmul.mubr.f32.gmra.mxu0 %v8407
        %v8654 = vpop.f32.mrf.mxu0
        %v8655 = vadd.f32 0.0, %v8654
        %v8656 = vpop.f32.mrf.mxu0
        %8657 = vmatprep.mubr.f32.mxu0 0.0
        %8658 = vmatmul.mubr.f32.gmra.mxu0 %v8408
        %v8659 = vpop.f32.mrf.mxu0
        %v8660 = vadd.f32 0.0, %v8659
        %v8661 = vpop.f32.mrf.mxu0
        %8662 = vmatprep.mubr.f32.mxu0 0.0
        %8663 = vmatmul.mubr.f32.gmra.mxu0 %v8409
        %v8664 = vpop.f32.mrf.mxu0
        %v8665 = vadd.f32 0.0, %v8664
        %v8666 = vpop.f32.mrf.mxu0
        %8667 = vmatprep.mubr.f32.mxu0 0.0
        %8668 = vmatmul.mubr.f32.gmra.mxu0 %v8410
        %v8669 = vpop.f32.mrf.mxu0
        %v8670 = vadd.f32 0.0, %v8669
        %v8671 = vpop.f32.mrf.mxu0
        %8672 = vdwg.mxu0
        %v8673 = vld [vmem:[#allocation6] sm:$0xff]
        %v8674 = vld [vmem:[#allocation6 + $0x8] sm:$0xff]
        %v8675 = vld [vmem:[#allocation6 + $0x10] sm:$0xff]
        %v8676 = vld [vmem:[#allocation6 + $0x18] sm:$0xff]
        %v8677 = vld [vmem:[#allocation6 + $0x20] sm:$0xff]
        %v8678 = vld [vmem:[#allocation6 + $0x28] sm:$0xff]
        %v8679 = vld [vmem:[#allocation6 + $0x30] sm:$0xff]
        %v8680 = vld [vmem:[#allocation6 + $0x38] sm:$0xff]
        %v8681 = vld [vmem:[#allocation6 + $0x40] sm:$0xff]
        %v8682 = vld [vmem:[#allocation6 + $0x48] sm:$0xff]
        %v8683 = vld [vmem:[#allocation6 + $0x50] sm:$0xff]
        %v8684 = vld [vmem:[#allocation6 + $0x58] sm:$0xff]
        %v8685 = vld [vmem:[#allocation6 + $0x60] sm:$0xff]
        %v8686 = vld [vmem:[#allocation6 + $0x68] sm:$0xff]
        %v8687 = vld [vmem:[#allocation6 + $0x70] sm:$0xff]
        %v8688 = vld [vmem:[#allocation6 + $0x78] sm:$0xff]
        %v8689 = vld [vmem:[#allocation6 + $0x80] sm:$0xff]
        %v8690 = vld [vmem:[#allocation6 + $0x88] sm:$0xff]
        %v8691 = vld [vmem:[#allocation6 + $0x90] sm:$0xff]
        %v8692 = vld [vmem:[#allocation6 + $0x98] sm:$0xff]
        %v8693 = vld [vmem:[#allocation6 + $0xa0] sm:$0xff]
        %v8694 = vld [vmem:[#allocation6 + $0xa8] sm:$0xff]
        %v8695 = vld [vmem:[#allocation6 + $0xb0] sm:$0xff]
        %v8696 = vld [vmem:[#allocation6 + $0xb8] sm:$0xff]
        %v8697 = vld [vmem:[#allocation6 + $0xc0] sm:$0xff]
        %v8698 = vld [vmem:[#allocation6 + $0xc8] sm:$0xff]
        %v8699 = vld [vmem:[#allocation6 + $0xd0] sm:$0xff]
        %v8700 = vld [vmem:[#allocation6 + $0xd8] sm:$0xff]
        %v8701 = vld [vmem:[#allocation6 + $0xe0] sm:$0xff]
        %v8702 = vld [vmem:[#allocation6 + $0xe8] sm:$0xff]
        %v8703 = vld [vmem:[#allocation6 + $0xf0] sm:$0xff]
        %v8704 = vld [vmem:[#allocation6 + $0xf8] sm:$0xff]
        %v8705 = vld [vmem:[#allocation6 + $0x100] sm:$0xff]
        %v8706 = vld [vmem:[#allocation6 + $0x108] sm:$0xff]
        %v8707 = vld [vmem:[#allocation6 + $0x110] sm:$0xff]
        %v8708 = vld [vmem:[#allocation6 + $0x118] sm:$0x1]
        %v8709 = vadd.f32 %v8673, %v8495
        %v8710 = vadd.f32 %v8674, %v8500
        %v8711 = vadd.f32 %v8675, %v8505
        %v8712 = vadd.f32 %v8676, %v8510
        %v8713 = vadd.f32 %v8677, %v8515
        %v8714 = vadd.f32 %v8678, %v8520
        %v8715 = vadd.f32 %v8679, %v8525
        %v8716 = vadd.f32 %v8680, %v8530
        %v8717 = vadd.f32 %v8681, %v8535
        %v8718 = vadd.f32 %v8682, %v8540
        %v8719 = vadd.f32 %v8683, %v8545
        %v8720 = vadd.f32 %v8684, %v8550
        %v8721 = vadd.f32 %v8685, %v8555
        %v8722 = vadd.f32 %v8686, %v8560
        %v8723 = vadd.f32 %v8687, %v8565
        %v8724 = vadd.f32 %v8688, %v8570
        %v8725 = vadd.f32 %v8689, %v8575
        %v8726 = vadd.f32 %v8690, %v8580
        %v8727 = vadd.f32 %v8691, %v8585
        %v8728 = vadd.f32 %v8692, %v8590
        %v8729 = vadd.f32 %v8693, %v8595
        %v8730 = vadd.f32 %v8694, %v8600
        %v8731 = vadd.f32 %v8695, %v8605
        %v8732 = vadd.f32 %v8696, %v8610
        %v8733 = vadd.f32 %v8697, %v8615
        %v8734 = vadd.f32 %v8698, %v8620
        %v8735 = vadd.f32 %v8699, %v8625
        %v8736 = vadd.f32 %v8700, %v8630
        %v8737 = vadd.f32 %v8701, %v8635
        %v8738 = vadd.f32 %v8702, %v8640
        %v8739 = vadd.f32 %v8703, %v8645
        %v8740 = vadd.f32 %v8704, %v8650
        %v8741 = vadd.f32 %v8705, %v8655
        %v8742 = vadd.f32 %v8706, %v8660
        %v8743 = vadd.f32 %v8707, %v8665
        %v8744 = vadd.f32 %v8708, %v8670
        %8745 = vst [vmem:[#allocation6] sm:$0xff] %v8709
        %8746 = vst [vmem:[#allocation6 + $0x8] sm:$0xff] %v8710
        %8747 = vst [vmem:[#allocation6 + $0x10] sm:$0xff] %v8711
        %8748 = vst [vmem:[#allocation6 + $0x18] sm:$0xff] %v8712
        %8749 = vst [vmem:[#allocation6 + $0x20] sm:$0xff] %v8713
        %8750 = vst [vmem:[#allocation6 + $0x28] sm:$0xff] %v8714
        %8751 = vst [vmem:[#allocation6 + $0x30] sm:$0xff] %v8715
        %8752 = vst [vmem:[#allocation6 + $0x38] sm:$0xff] %v8716
        %8753 = vst [vmem:[#allocation6 + $0x40] sm:$0xff] %v8717
        %8754 = vst [vmem:[#allocation6 + $0x48] sm:$0xff] %v8718
        %8755 = vst [vmem:[#allocation6 + $0x50] sm:$0xff] %v8719
        %8756 = vst [vmem:[#allocation6 + $0x58] sm:$0xff] %v8720
        %8757 = vst [vmem:[#allocation6 + $0x60] sm:$0xff] %v8721
        %8758 = vst [vmem:[#allocation6 + $0x68] sm:$0xff] %v8722
        %8759 = vst [vmem:[#allocation6 + $0x70] sm:$0xff] %v8723
        %8760 = vst [vmem:[#allocation6 + $0x78] sm:$0xff] %v8724
        %8761 = vst [vmem:[#allocation6 + $0x80] sm:$0xff] %v8725
        %8762 = vst [vmem:[#allocation6 + $0x88] sm:$0xff] %v8726
        %8763 = vst [vmem:[#allocation6 + $0x90] sm:$0xff] %v8727
        %8764 = vst [vmem:[#allocation6 + $0x98] sm:$0xff] %v8728
        %8765 = vst [vmem:[#allocation6 + $0xa0] sm:$0xff] %v8729
        %8766 = vst [vmem:[#allocation6 + $0xa8] sm:$0xff] %v8730
        %8767 = vst [vmem:[#allocation6 + $0xb0] sm:$0xff] %v8731
        %8768 = vst [vmem:[#allocation6 + $0xb8] sm:$0xff] %v8732
        %8769 = vst [vmem:[#allocation6 + $0xc0] sm:$0xff] %v8733
        %8770 = vst [vmem:[#allocation6 + $0xc8] sm:$0xff] %v8734
        %8771 = vst [vmem:[#allocation6 + $0xd0] sm:$0xff] %v8735
        %8772 = vst [vmem:[#allocation6 + $0xd8] sm:$0xff] %v8736
        %8773 = vst [vmem:[#allocation6 + $0xe0] sm:$0xff] %v8737
        %8774 = vst [vmem:[#allocation6 + $0xe8] sm:$0xff] %v8738
        %8775 = vst [vmem:[#allocation6 + $0xf0] sm:$0xff] %v8739
        %8776 = vst [vmem:[#allocation6 + $0xf8] sm:$0xff] %v8740
        %8777 = vst [vmem:[#allocation6 + $0x100] sm:$0xff] %v8741
        %8778 = vst [vmem:[#allocation6 + $0x108] sm:$0xff] %v8742
        %8779 = vst [vmem:[#allocation6 + $0x110] sm:$0xff] %v8743
        %8780 = vst [vmem:[#allocation6 + $0x118] sm:$0x1] %v8744
        %v8781 = vld [vmem:[#allocation5 + $0xc] sm:$0xff]
        %v8782 = vld [vmem:[#allocation5 + $0x14] sm:$0xff]
        %v8783 = vld [vmem:[#allocation5 + $0x1c] sm:$0xff]
        %v8784 = vld [vmem:[#allocation5 + $0x24] sm:$0xff]
        %v8785 = vld [vmem:[#allocation5 + $0x2c] sm:$0xff]
        %v8786 = vld [vmem:[#allocation5 + $0x34] sm:$0xff]
        %v8787 = vld [vmem:[#allocation5 + $0x3c] sm:$0xff]
        %v8788 = vld [vmem:[#allocation5 + $0x44] sm:$0xff]
        %v8789 = vld [vmem:[#allocation5 + $0x4c] sm:$0xff]
        %v8790 = vld [vmem:[#allocation5 + $0x54] sm:$0xff]
        %v8791 = vld [vmem:[#allocation5 + $0x5c] sm:$0xff]
        %v8792 = vld [vmem:[#allocation5 + $0x64] sm:$0xff]
        %v8793 = vld [vmem:[#allocation5 + $0x6c] sm:$0xff]
        %v8794 = vld [vmem:[#allocation5 + $0x74] sm:$0xff]
        %v8795 = vld [vmem:[#allocation5 + $0x7c] sm:$0xff]
        %v8796 = vld [vmem:[#allocation5 + $0x84] sm:$0xff]
        %v8797 = vld [vmem:[#allocation5 + $0x8c] sm:$0xff]
        %v8798 = vld [vmem:[#allocation5 + $0x94] sm:$0xff]
        %v8799 = vld [vmem:[#allocation5 + $0x9c] sm:$0xff]
        %v8800 = vld [vmem:[#allocation5 + $0xa4] sm:$0xff]
        %v8801 = vld [vmem:[#allocation5 + $0xac] sm:$0xff]
        %v8802 = vld [vmem:[#allocation5 + $0xb4] sm:$0xff]
        %v8803 = vld [vmem:[#allocation5 + $0xbc] sm:$0xff]
        %v8804 = vld [vmem:[#allocation5 + $0xc4] sm:$0xff]
        %v8805 = vld [vmem:[#allocation5 + $0xcc] sm:$0xff]
        %v8806 = vld [vmem:[#allocation5 + $0xd4] sm:$0xff]
        %v8807 = vld [vmem:[#allocation5 + $0xdc] sm:$0xff]
        %v8808 = vld [vmem:[#allocation5 + $0xe4] sm:$0xff]
        %v8809 = vld [vmem:[#allocation5 + $0xec] sm:$0xff]
        %v8810 = vld [vmem:[#allocation5 + $0xf4] sm:$0xff]
        %v8811 = vld [vmem:[#allocation5 + $0xfc] sm:$0xff]
        %v8812 = vld [vmem:[#allocation5 + $0x104] sm:$0xff]
        %v8813 = vld [vmem:[#allocation5 + $0x10c] sm:$0xff]
        %v8814 = vld [vmem:[#allocation5 + $0x114] sm:$0xff]
        %v8815 = vld [vmem:[#allocation5 + $0x11c] sm:$0xff]
        %v8816 = vld [vmem:[#allocation5 + $0x124] sm:$0x1]
        %s8817 = scalar_lea.vmem %s5, 384
        %v8818 = vld [vmem:[%s8817] sm:$0xff]
        %v8819 = vld [vmem:[%s8817 + $0x8] sm:$0xff]
        %v8820 = vld [vmem:[%s8817 + $0x10] sm:$0xff]
        %v8821 = vld [vmem:[%s8817 + $0x18] sm:$0xff]
        %v8822 = vld [vmem:[%s8817 + $0x20] sm:$0xff]
        %v8823 = vld [vmem:[%s8817 + $0x28] sm:$0xff]
        %v8824 = vld [vmem:[%s8817 + $0x30] sm:$0xff]
        %v8825 = vld [vmem:[%s8817 + $0x38] sm:$0xff]
        %v8826 = vld [vmem:[%s8817 + $0x40] sm:$0xff]
        %v8827 = vld [vmem:[%s8817 + $0x48] sm:$0xff]
        %v8828 = vld [vmem:[%s8817 + $0x50] sm:$0xff]
        %v8829 = vld [vmem:[%s8817 + $0x58] sm:$0xff]
        %v8830 = vld [vmem:[%s8817 + $0x60] sm:$0xff]
        %v8831 = vld [vmem:[%s8817 + $0x68] sm:$0xff]
        %v8832 = vld [vmem:[%s8817 + $0x70] sm:$0xff]
        %v8833 = vld [vmem:[%s8817 + $0x78] sm:$0xff]
        %8834 = vmatprep.subr.mxu0 0.0
        %8835 = vmatpush1.msra.mxu0 %v8833
        %8836 = vmatprep.subr.mxu0 0.0
        %8837 = vmatpush1.msra.mxu0 %v8832
        %8838 = vmatprep.subr.mxu0 0.0
        %8839 = vmatpush1.msra.mxu0 %v8831
        %8840 = vmatprep.subr.mxu0 0.0
        %8841 = vmatpush1.msra.mxu0 %v8830
        %8842 = vmatprep.subr.mxu0 0.0
        %8843 = vmatpush1.msra.mxu0 %v8829
        %8844 = vmatprep.subr.mxu0 0.0
        %8845 = vmatpush1.msra.mxu0 %v8828
        %8846 = vmatprep.subr.mxu0 0.0
        %8847 = vmatpush1.msra.mxu0 %v8827
        %8848 = vmatprep.subr.mxu0 0.0
        %8849 = vmatpush1.msra.mxu0 %v8826
        %8850 = vmatprep.subr.mxu0 0.0
        %8851 = vmatpush1.msra.mxu0 %v8825
        %8852 = vmatprep.subr.mxu0 0.0
        %8853 = vmatpush1.msra.mxu0 %v8824
        %8854 = vmatprep.subr.mxu0 0.0
        %8855 = vmatpush1.msra.mxu0 %v8823
        %8856 = vmatprep.subr.mxu0 0.0
        %8857 = vmatpush1.msra.mxu0 %v8822
        %8858 = vmatprep.subr.mxu0 0.0
        %8859 = vmatpush1.msra.mxu0 %v8821
        %8860 = vmatprep.subr.mxu0 0.0
        %8861 = vmatpush1.msra.mxu0 %v8820
        %8862 = vmatprep.subr.mxu0 0.0
        %8863 = vmatpush1.msra.mxu0 %v8819
        %8864 = vmatprep.subr.mxu0 0.0
        %8865 = vmatpush1.msra.mxu0 %v8818
        %8866 = vmatprep.subr.mxu0 0.0
        %8867 = vmatpush2.msra.mxu0 0.0
        %8868 = vmatprep.subr.mxu0 0.0
        %8869 = vmatpush2.msra.mxu0 0.0
        %8870 = vmatprep.subr.mxu0 0.0
        %8871 = vmatpush2.msra.mxu0 0.0
        %8872 = vmatprep.subr.mxu0 0.0
        %8873 = vmatpush2.msra.mxu0 0.0
        %8874 = vmatprep.subr.mxu0 0.0
        %8875 = vmatpush2.msra.mxu0 0.0
        %8876 = vmatprep.subr.mxu0 0.0
        %8877 = vmatpush2.msra.mxu0 0.0
        %8878 = vmatprep.subr.mxu0 0.0
        %8879 = vmatpush2.msra.mxu0 0.0
        %8880 = vmatprep.subr.mxu0 0.0
        %8881 = vmatpush2.msra.mxu0 0.0
        %8882 = vmatprep.subr.mxu0 0.0
        %8883 = vmatpush2.msra.mxu0 0.0
        %8884 = vmatprep.subr.mxu0 0.0
        %8885 = vmatpush2.msra.mxu0 0.0
        %8886 = vmatprep.subr.mxu0 0.0
        %8887 = vmatpush2.msra.mxu0 0.0
        %8888 = vmatprep.subr.mxu0 0.0
        %8889 = vmatpush2.msra.mxu0 0.0
        %8890 = vmatprep.subr.mxu0 0.0
        %8891 = vmatpush2.msra.mxu0 0.0
        %8892 = vmatprep.subr.mxu0 0.0
        %8893 = vmatpush2.msra.mxu0 0.0
        %8894 = vmatprep.subr.mxu0 0.0
        %8895 = vmatpush2.msra.mxu0 0.0
        %8896 = vmatprep.subr.mxu0 0.0
        %8897 = vmatpush2.msra.mxu0 0.0
        %8898 = vmatprep.mubr.f32.mxu0 0.0
        %8899 = vmatmul.mubr.f32.gmra.mxu0 %v8781
        %v8900 = vpop.f32.mrf.mxu0
        %v8901 = vadd.f32 0.0, %v8900
        %v8902 = vpop.f32.mrf.mxu0
        %8903 = vmatprep.mubr.f32.mxu0 0.0
        %8904 = vmatmul.mubr.f32.gmra.mxu0 %v8782
        %v8905 = vpop.f32.mrf.mxu0
        %v8906 = vadd.f32 0.0, %v8905
        %v8907 = vpop.f32.mrf.mxu0
        %8908 = vmatprep.mubr.f32.mxu0 0.0
        %8909 = vmatmul.mubr.f32.gmra.mxu0 %v8783
        %v8910 = vpop.f32.mrf.mxu0
        %v8911 = vadd.f32 0.0, %v8910
        %v8912 = vpop.f32.mrf.mxu0
        %8913 = vmatprep.mubr.f32.mxu0 0.0
        %8914 = vmatmul.mubr.f32.gmra.mxu0 %v8784
        %v8915 = vpop.f32.mrf.mxu0
        %v8916 = vadd.f32 0.0, %v8915
        %v8917 = vpop.f32.mrf.mxu0
        %8918 = vmatprep.mubr.f32.mxu0 0.0
        %8919 = vmatmul.mubr.f32.gmra.mxu0 %v8785
        %v8920 = vpop.f32.mrf.mxu0
        %v8921 = vadd.f32 0.0, %v8920
        %v8922 = vpop.f32.mrf.mxu0
        %8923 = vmatprep.mubr.f32.mxu0 0.0
        %8924 = vmatmul.mubr.f32.gmra.mxu0 %v8786
        %v8925 = vpop.f32.mrf.mxu0
        %v8926 = vadd.f32 0.0, %v8925
        %v8927 = vpop.f32.mrf.mxu0
        %8928 = vmatprep.mubr.f32.mxu0 0.0
        %8929 = vmatmul.mubr.f32.gmra.mxu0 %v8787
        %v8930 = vpop.f32.mrf.mxu0
        %v8931 = vadd.f32 0.0, %v8930
        %v8932 = vpop.f32.mrf.mxu0
        %8933 = vmatprep.mubr.f32.mxu0 0.0
        %8934 = vmatmul.mubr.f32.gmra.mxu0 %v8788
        %v8935 = vpop.f32.mrf.mxu0
        %v8936 = vadd.f32 0.0, %v8935
        %v8937 = vpop.f32.mrf.mxu0
        %8938 = vmatprep.mubr.f32.mxu0 0.0
        %8939 = vmatmul.mubr.f32.gmra.mxu0 %v8789
        %v8940 = vpop.f32.mrf.mxu0
        %v8941 = vadd.f32 0.0, %v8940
        %v8942 = vpop.f32.mrf.mxu0
        %8943 = vmatprep.mubr.f32.mxu0 0.0
        %8944 = vmatmul.mubr.f32.gmra.mxu0 %v8790
        %v8945 = vpop.f32.mrf.mxu0
        %v8946 = vadd.f32 0.0, %v8945
        %v8947 = vpop.f32.mrf.mxu0
        %8948 = vmatprep.mubr.f32.mxu0 0.0
        %8949 = vmatmul.mubr.f32.gmra.mxu0 %v8791
        %v8950 = vpop.f32.mrf.mxu0
        %v8951 = vadd.f32 0.0, %v8950
        %v8952 = vpop.f32.mrf.mxu0
        %8953 = vmatprep.mubr.f32.mxu0 0.0
        %8954 = vmatmul.mubr.f32.gmra.mxu0 %v8792
        %v8955 = vpop.f32.mrf.mxu0
        %v8956 = vadd.f32 0.0, %v8955
        %v8957 = vpop.f32.mrf.mxu0
        %8958 = vmatprep.mubr.f32.mxu0 0.0
        %8959 = vmatmul.mubr.f32.gmra.mxu0 %v8793
        %v8960 = vpop.f32.mrf.mxu0
        %v8961 = vadd.f32 0.0, %v8960
        %v8962 = vpop.f32.mrf.mxu0
        %8963 = vmatprep.mubr.f32.mxu0 0.0
        %8964 = vmatmul.mubr.f32.gmra.mxu0 %v8794
        %v8965 = vpop.f32.mrf.mxu0
        %v8966 = vadd.f32 0.0, %v8965
        %v8967 = vpop.f32.mrf.mxu0
        %8968 = vmatprep.mubr.f32.mxu0 0.0
        %8969 = vmatmul.mubr.f32.gmra.mxu0 %v8795
        %v8970 = vpop.f32.mrf.mxu0
        %v8971 = vadd.f32 0.0, %v8970
        %v8972 = vpop.f32.mrf.mxu0
        %8973 = vmatprep.mubr.f32.mxu0 0.0
        %8974 = vmatmul.mubr.f32.gmra.mxu0 %v8796
        %v8975 = vpop.f32.mrf.mxu0
        %v8976 = vadd.f32 0.0, %v8975
        %v8977 = vpop.f32.mrf.mxu0
        %8978 = vmatprep.mubr.f32.mxu0 0.0
        %8979 = vmatmul.mubr.f32.gmra.mxu0 %v8797
        %v8980 = vpop.f32.mrf.mxu0
        %v8981 = vadd.f32 0.0, %v8980
        %v8982 = vpop.f32.mrf.mxu0
        %8983 = vmatprep.mubr.f32.mxu0 0.0
        %8984 = vmatmul.mubr.f32.gmra.mxu0 %v8798
        %v8985 = vpop.f32.mrf.mxu0
        %v8986 = vadd.f32 0.0, %v8985
        %v8987 = vpop.f32.mrf.mxu0
        %8988 = vmatprep.mubr.f32.mxu0 0.0
        %8989 = vmatmul.mubr.f32.gmra.mxu0 %v8799
        %v8990 = vpop.f32.mrf.mxu0
        %v8991 = vadd.f32 0.0, %v8990
        %v8992 = vpop.f32.mrf.mxu0
        %8993 = vmatprep.mubr.f32.mxu0 0.0
        %8994 = vmatmul.mubr.f32.gmra.mxu0 %v8800
        %v8995 = vpop.f32.mrf.mxu0
        %v8996 = vadd.f32 0.0, %v8995
        %v8997 = vpop.f32.mrf.mxu0
        %8998 = vmatprep.mubr.f32.mxu0 0.0
        %8999 = vmatmul.mubr.f32.gmra.mxu0 %v8801
        %v9000 = vpop.f32.mrf.mxu0
        %v9001 = vadd.f32 0.0, %v9000
        %v9002 = vpop.f32.mrf.mxu0
        %9003 = vmatprep.mubr.f32.mxu0 0.0
        %9004 = vmatmul.mubr.f32.gmra.mxu0 %v8802
        %v9005 = vpop.f32.mrf.mxu0
        %v9006 = vadd.f32 0.0, %v9005
        %v9007 = vpop.f32.mrf.mxu0
        %9008 = vmatprep.mubr.f32.mxu0 0.0
        %9009 = vmatmul.mubr.f32.gmra.mxu0 %v8803
        %v9010 = vpop.f32.mrf.mxu0
        %v9011 = vadd.f32 0.0, %v9010
        %v9012 = vpop.f32.mrf.mxu0
        %9013 = vmatprep.mubr.f32.mxu0 0.0
        %9014 = vmatmul.mubr.f32.gmra.mxu0 %v8804
        %v9015 = vpop.f32.mrf.mxu0
        %v9016 = vadd.f32 0.0, %v9015
        %v9017 = vpop.f32.mrf.mxu0
        %9018 = vmatprep.mubr.f32.mxu0 0.0
        %9019 = vmatmul.mubr.f32.gmra.mxu0 %v8805
        %v9020 = vpop.f32.mrf.mxu0
        %v9021 = vadd.f32 0.0, %v9020
        %v9022 = vpop.f32.mrf.mxu0
        %9023 = vmatprep.mubr.f32.mxu0 0.0
        %9024 = vmatmul.mubr.f32.gmra.mxu0 %v8806
        %v9025 = vpop.f32.mrf.mxu0
        %v9026 = vadd.f32 0.0, %v9025
        %v9027 = vpop.f32.mrf.mxu0
        %9028 = vmatprep.mubr.f32.mxu0 0.0
        %9029 = vmatmul.mubr.f32.gmra.mxu0 %v8807
        %v9030 = vpop.f32.mrf.mxu0
        %v9031 = vadd.f32 0.0, %v9030
        %v9032 = vpop.f32.mrf.mxu0
        %9033 = vmatprep.mubr.f32.mxu0 0.0
        %9034 = vmatmul.mubr.f32.gmra.mxu0 %v8808
        %v9035 = vpop.f32.mrf.mxu0
        %v9036 = vadd.f32 0.0, %v9035
        %v9037 = vpop.f32.mrf.mxu0
        %9038 = vmatprep.mubr.f32.mxu0 0.0
        %9039 = vmatmul.mubr.f32.gmra.mxu0 %v8809
        %v9040 = vpop.f32.mrf.mxu0
        %v9041 = vadd.f32 0.0, %v9040
        %v9042 = vpop.f32.mrf.mxu0
        %9043 = vmatprep.mubr.f32.mxu0 0.0
        %9044 = vmatmul.mubr.f32.gmra.mxu0 %v8810
        %v9045 = vpop.f32.mrf.mxu0
        %v9046 = vadd.f32 0.0, %v9045
        %v9047 = vpop.f32.mrf.mxu0
        %9048 = vmatprep.mubr.f32.mxu0 0.0
        %9049 = vmatmul.mubr.f32.gmra.mxu0 %v8811
        %v9050 = vpop.f32.mrf.mxu0
        %v9051 = vadd.f32 0.0, %v9050
        %v9052 = vpop.f32.mrf.mxu0
        %9053 = vmatprep.mubr.f32.mxu0 0.0
        %9054 = vmatmul.mubr.f32.gmra.mxu0 %v8812
        %v9055 = vpop.f32.mrf.mxu0
        %v9056 = vadd.f32 0.0, %v9055
        %v9057 = vpop.f32.mrf.mxu0
        %9058 = vmatprep.mubr.f32.mxu0 0.0
        %9059 = vmatmul.mubr.f32.gmra.mxu0 %v8813
        %v9060 = vpop.f32.mrf.mxu0
        %v9061 = vadd.f32 0.0, %v9060
        %v9062 = vpop.f32.mrf.mxu0
        %9063 = vmatprep.mubr.f32.mxu0 0.0
        %9064 = vmatmul.mubr.f32.gmra.mxu0 %v8814
        %v9065 = vpop.f32.mrf.mxu0
        %v9066 = vadd.f32 0.0, %v9065
        %v9067 = vpop.f32.mrf.mxu0
        %9068 = vmatprep.mubr.f32.mxu0 0.0
        %9069 = vmatmul.mubr.f32.gmra.mxu0 %v8815
        %v9070 = vpop.f32.mrf.mxu0
        %v9071 = vadd.f32 0.0, %v9070
        %v9072 = vpop.f32.mrf.mxu0
        %9073 = vmatprep.mubr.f32.mxu0 0.0
        %9074 = vmatmul.mubr.f32.gmra.mxu0 %v8816
        %v9075 = vpop.f32.mrf.mxu0
        %v9076 = vadd.f32 0.0, %v9075
        %v9077 = vpop.f32.mrf.mxu0
        %9078 = vdwg.mxu0
        %v9079 = vld [vmem:[#allocation6] sm:$0xff]
        %v9080 = vld [vmem:[#allocation6 + $0x8] sm:$0xff]
        %v9081 = vld [vmem:[#allocation6 + $0x10] sm:$0xff]
        %v9082 = vld [vmem:[#allocation6 + $0x18] sm:$0xff]
        %v9083 = vld [vmem:[#allocation6 + $0x20] sm:$0xff]
        %v9084 = vld [vmem:[#allocation6 + $0x28] sm:$0xff]
        %v9085 = vld [vmem:[#allocation6 + $0x30] sm:$0xff]
        %v9086 = vld [vmem:[#allocation6 + $0x38] sm:$0xff]
        %v9087 = vld [vmem:[#allocation6 + $0x40] sm:$0xff]
        %v9088 = vld [vmem:[#allocation6 + $0x48] sm:$0xff]
        %v9089 = vld [vmem:[#allocation6 + $0x50] sm:$0xff]
        %v9090 = vld [vmem:[#allocation6 + $0x58] sm:$0xff]
        %v9091 = vld [vmem:[#allocation6 + $0x60] sm:$0xff]
        %v9092 = vld [vmem:[#allocation6 + $0x68] sm:$0xff]
        %v9093 = vld [vmem:[#allocation6 + $0x70] sm:$0xff]
        %v9094 = vld [vmem:[#allocation6 + $0x78] sm:$0xff]
        %v9095 = vld [vmem:[#allocation6 + $0x80] sm:$0xff]
        %v9096 = vld [vmem:[#allocation6 + $0x88] sm:$0xff]
        %v9097 = vld [vmem:[#allocation6 + $0x90] sm:$0xff]
        %v9098 = vld [vmem:[#allocation6 + $0x98] sm:$0xff]
        %v9099 = vld [vmem:[#allocation6 + $0xa0] sm:$0xff]
        %v9100 = vld [vmem:[#allocation6 + $0xa8] sm:$0xff]
        %v9101 = vld [vmem:[#allocation6 + $0xb0] sm:$0xff]
        %v9102 = vld [vmem:[#allocation6 + $0xb8] sm:$0xff]
        %v9103 = vld [vmem:[#allocation6 + $0xc0] sm:$0xff]
        %v9104 = vld [vmem:[#allocation6 + $0xc8] sm:$0xff]
        %v9105 = vld [vmem:[#allocation6 + $0xd0] sm:$0xff]
        %v9106 = vld [vmem:[#allocation6 + $0xd8] sm:$0xff]
        %v9107 = vld [vmem:[#allocation6 + $0xe0] sm:$0xff]
        %v9108 = vld [vmem:[#allocation6 + $0xe8] sm:$0xff]
        %v9109 = vld [vmem:[#allocation6 + $0xf0] sm:$0xff]
        %v9110 = vld [vmem:[#allocation6 + $0xf8] sm:$0xff]
        %v9111 = vld [vmem:[#allocation6 + $0x100] sm:$0xff]
        %v9112 = vld [vmem:[#allocation6 + $0x108] sm:$0xff]
        %v9113 = vld [vmem:[#allocation6 + $0x110] sm:$0xff]
        %v9114 = vld [vmem:[#allocation6 + $0x118] sm:$0x1]
        %v9115 = vadd.f32 %v9079, %v8901
        %v9116 = vadd.f32 %v9080, %v8906
        %v9117 = vadd.f32 %v9081, %v8911
        %v9118 = vadd.f32 %v9082, %v8916
        %v9119 = vadd.f32 %v9083, %v8921
        %v9120 = vadd.f32 %v9084, %v8926
        %v9121 = vadd.f32 %v9085, %v8931
        %v9122 = vadd.f32 %v9086, %v8936
        %v9123 = vadd.f32 %v9087, %v8941
        %v9124 = vadd.f32 %v9088, %v8946
        %v9125 = vadd.f32 %v9089, %v8951
        %v9126 = vadd.f32 %v9090, %v8956
        %v9127 = vadd.f32 %v9091, %v8961
        %v9128 = vadd.f32 %v9092, %v8966
        %v9129 = vadd.f32 %v9093, %v8971
        %v9130 = vadd.f32 %v9094, %v8976
        %v9131 = vadd.f32 %v9095, %v8981
        %v9132 = vadd.f32 %v9096, %v8986
        %v9133 = vadd.f32 %v9097, %v8991
        %v9134 = vadd.f32 %v9098, %v8996
        %v9135 = vadd.f32 %v9099, %v9001
        %v9136 = vadd.f32 %v9100, %v9006
        %v9137 = vadd.f32 %v9101, %v9011
        %v9138 = vadd.f32 %v9102, %v9016
        %v9139 = vadd.f32 %v9103, %v9021
        %v9140 = vadd.f32 %v9104, %v9026
        %v9141 = vadd.f32 %v9105, %v9031
        %v9142 = vadd.f32 %v9106, %v9036
        %v9143 = vadd.f32 %v9107, %v9041
        %v9144 = vadd.f32 %v9108, %v9046
        %v9145 = vadd.f32 %v9109, %v9051
        %v9146 = vadd.f32 %v9110, %v9056
        %v9147 = vadd.f32 %v9111, %v9061
        %v9148 = vadd.f32 %v9112, %v9066
        %v9149 = vadd.f32 %v9113, %v9071
        %v9150 = vadd.f32 %v9114, %v9076
        %9151 = vst [vmem:[#allocation6] sm:$0xff] %v9115
        %9152 = vst [vmem:[#allocation6 + $0x8] sm:$0xff] %v9116
        %9153 = vst [vmem:[#allocation6 + $0x10] sm:$0xff] %v9117
        %9154 = vst [vmem:[#allocation6 + $0x18] sm:$0xff] %v9118
        %9155 = vst [vmem:[#allocation6 + $0x20] sm:$0xff] %v9119
        %9156 = vst [vmem:[#allocation6 + $0x28] sm:$0xff] %v9120
        %9157 = vst [vmem:[#allocation6 + $0x30] sm:$0xff] %v9121
        %9158 = vst [vmem:[#allocation6 + $0x38] sm:$0xff] %v9122
        %9159 = vst [vmem:[#allocation6 + $0x40] sm:$0xff] %v9123
        %9160 = vst [vmem:[#allocation6 + $0x48] sm:$0xff] %v9124
        %9161 = vst [vmem:[#allocation6 + $0x50] sm:$0xff] %v9125
        %9162 = vst [vmem:[#allocation6 + $0x58] sm:$0xff] %v9126
        %9163 = vst [vmem:[#allocation6 + $0x60] sm:$0xff] %v9127
        %9164 = vst [vmem:[#allocation6 + $0x68] sm:$0xff] %v9128
        %9165 = vst [vmem:[#allocation6 + $0x70] sm:$0xff] %v9129
        %9166 = vst [vmem:[#allocation6 + $0x78] sm:$0xff] %v9130
        %9167 = vst [vmem:[#allocation6 + $0x80] sm:$0xff] %v9131
        %9168 = vst [vmem:[#allocation6 + $0x88] sm:$0xff] %v9132
        %9169 = vst [vmem:[#allocation6 + $0x90] sm:$0xff] %v9133
        %9170 = vst [vmem:[#allocation6 + $0x98] sm:$0xff] %v9134
        %9171 = vst [vmem:[#allocation6 + $0xa0] sm:$0xff] %v9135
        %9172 = vst [vmem:[#allocation6 + $0xa8] sm:$0xff] %v9136
        %9173 = vst [vmem:[#allocation6 + $0xb0] sm:$0xff] %v9137
        %9174 = vst [vmem:[#allocation6 + $0xb8] sm:$0xff] %v9138
        %9175 = vst [vmem:[#allocation6 + $0xc0] sm:$0xff] %v9139
        %9176 = vst [vmem:[#allocation6 + $0xc8] sm:$0xff] %v9140
        %9177 = vst [vmem:[#allocation6 + $0xd0] sm:$0xff] %v9141
        %9178 = vst [vmem:[#allocation6 + $0xd8] sm:$0xff] %v9142
        %9179 = vst [vmem:[#allocation6 + $0xe0] sm:$0xff] %v9143
        %9180 = vst [vmem:[#allocation6 + $0xe8] sm:$0xff] %v9144
        %9181 = vst [vmem:[#allocation6 + $0xf0] sm:$0xff] %v9145
        %9182 = vst [vmem:[#allocation6 + $0xf8] sm:$0xff] %v9146
        %9183 = vst [vmem:[#allocation6 + $0x100] sm:$0xff] %v9147
        %9184 = vst [vmem:[#allocation6 + $0x108] sm:$0xff] %v9148
        %9185 = vst [vmem:[#allocation6 + $0x110] sm:$0xff] %v9149
        %9186 = vst [vmem:[#allocation6 + $0x118] sm:$0x1] %v9150
        %v9187 = vld [vmem:[#allocation5 + $0x10] sm:$0xff]
        %v9188 = vld [vmem:[#allocation5 + $0x18] sm:$0xff]
        %v9189 = vld [vmem:[#allocation5 + $0x20] sm:$0xff]
        %v9190 = vld [vmem:[#allocation5 + $0x28] sm:$0xff]
        %v9191 = vld [vmem:[#allocation5 + $0x30] sm:$0xff]
        %v9192 = vld [vmem:[#allocation5 + $0x38] sm:$0xff]
        %v9193 = vld [vmem:[#allocation5 + $0x40] sm:$0xff]
        %v9194 = vld [vmem:[#allocation5 + $0x48] sm:$0xff]
        %v9195 = vld [vmem:[#allocation5 + $0x50] sm:$0xff]
        %v9196 = vld [vmem:[#allocation5 + $0x58] sm:$0xff]
        %v9197 = vld [vmem:[#allocation5 + $0x60] sm:$0xff]
        %v9198 = vld [vmem:[#allocation5 + $0x68] sm:$0xff]
        %v9199 = vld [vmem:[#allocation5 + $0x70] sm:$0xff]
        %v9200 = vld [vmem:[#allocation5 + $0x78] sm:$0xff]
        %v9201 = vld [vmem:[#allocation5 + $0x80] sm:$0xff]
        %v9202 = vld [vmem:[#allocation5 + $0x88] sm:$0xff]
        %v9203 = vld [vmem:[#allocation5 + $0x90] sm:$0xff]
        %v9204 = vld [vmem:[#allocation5 + $0x98] sm:$0xff]
        %v9205 = vld [vmem:[#allocation5 + $0xa0] sm:$0xff]
        %v9206 = vld [vmem:[#allocation5 + $0xa8] sm:$0xff]
        %v9207 = vld [vmem:[#allocation5 + $0xb0] sm:$0xff]
        %v9208 = vld [vmem:[#allocation5 + $0xb8] sm:$0xff]
        %v9209 = vld [vmem:[#allocation5 + $0xc0] sm:$0xff]
        %v9210 = vld [vmem:[#allocation5 + $0xc8] sm:$0xff]
        %v9211 = vld [vmem:[#allocation5 + $0xd0] sm:$0xff]
        %v9212 = vld [vmem:[#allocation5 + $0xd8] sm:$0xff]
        %v9213 = vld [vmem:[#allocation5 + $0xe0] sm:$0xff]
        %v9214 = vld [vmem:[#allocation5 + $0xe8] sm:$0xff]
        %v9215 = vld [vmem:[#allocation5 + $0xf0] sm:$0xff]
        %v9216 = vld [vmem:[#allocation5 + $0xf8] sm:$0xff]
        %v9217 = vld [vmem:[#allocation5 + $0x100] sm:$0xff]
        %v9218 = vld [vmem:[#allocation5 + $0x108] sm:$0xff]
        %v9219 = vld [vmem:[#allocation5 + $0x110] sm:$0xff]
        %v9220 = vld [vmem:[#allocation5 + $0x118] sm:$0xff]
        %v9221 = vld [vmem:[#allocation5 + $0x120] sm:$0xff]
        %v9222 = vld [vmem:[#allocation5 + $0x128] sm:$0x1]
        %s9223 = scalar_lea.vmem %s5, 512
        %v9224 = vld [vmem:[%s9223] sm:$0xff]
        %v9225 = vld [vmem:[%s9223 + $0x8] sm:$0xff]
        %v9226 = vld [vmem:[%s9223 + $0x10] sm:$0xff]
        %v9227 = vld [vmem:[%s9223 + $0x18] sm:$0xff]
        %v9228 = vld [vmem:[%s9223 + $0x20] sm:$0xff]
        %v9229 = vld [vmem:[%s9223 + $0x28] sm:$0xff]
        %v9230 = vld [vmem:[%s9223 + $0x30] sm:$0xff]
        %v9231 = vld [vmem:[%s9223 + $0x38] sm:$0xff]
        %v9232 = vld [vmem:[%s9223 + $0x40] sm:$0xff]
        %v9233 = vld [vmem:[%s9223 + $0x48] sm:$0xff]
        %v9234 = vld [vmem:[%s9223 + $0x50] sm:$0xff]
        %v9235 = vld [vmem:[%s9223 + $0x58] sm:$0xff]
        %v9236 = vld [vmem:[%s9223 + $0x60] sm:$0xff]
        %v9237 = vld [vmem:[%s9223 + $0x68] sm:$0xff]
        %v9238 = vld [vmem:[%s9223 + $0x70] sm:$0xff]
        %v9239 = vld [vmem:[%s9223 + $0x78] sm:$0xff]
        %9240 = vmatprep.subr.mxu0 0.0
        %9241 = vmatpush1.msra.mxu0 %v9239
        %9242 = vmatprep.subr.mxu0 0.0
        %9243 = vmatpush1.msra.mxu0 %v9238
        %9244 = vmatprep.subr.mxu0 0.0
        %9245 = vmatpush1.msra.mxu0 %v9237
        %9246 = vmatprep.subr.mxu0 0.0
        %9247 = vmatpush1.msra.mxu0 %v9236
        %9248 = vmatprep.subr.mxu0 0.0
        %9249 = vmatpush1.msra.mxu0 %v9235
        %9250 = vmatprep.subr.mxu0 0.0
        %9251 = vmatpush1.msra.mxu0 %v9234
        %9252 = vmatprep.subr.mxu0 0.0
        %9253 = vmatpush1.msra.mxu0 %v9233
        %9254 = vmatprep.subr.mxu0 0.0
        %9255 = vmatpush1.msra.mxu0 %v9232
        %9256 = vmatprep.subr.mxu0 0.0
        %9257 = vmatpush1.msra.mxu0 %v9231
        %9258 = vmatprep.subr.mxu0 0.0
        %9259 = vmatpush1.msra.mxu0 %v9230
        %9260 = vmatprep.subr.mxu0 0.0
        %9261 = vmatpush1.msra.mxu0 %v9229
        %9262 = vmatprep.subr.mxu0 0.0
        %9263 = vmatpush1.msra.mxu0 %v9228
        %9264 = vmatprep.subr.mxu0 0.0
        %9265 = vmatpush1.msra.mxu0 %v9227
        %9266 = vmatprep.subr.mxu0 0.0
        %9267 = vmatpush1.msra.mxu0 %v9226
        %9268 = vmatprep.subr.mxu0 0.0
        %9269 = vmatpush1.msra.mxu0 %v9225
        %9270 = vmatprep.subr.mxu0 0.0
        %9271 = vmatpush1.msra.mxu0 %v9224
        %9272 = vmatprep.subr.mxu0 0.0
        %9273 = vmatpush2.msra.mxu0 0.0
        %9274 = vmatprep.subr.mxu0 0.0
        %9275 = vmatpush2.msra.mxu0 0.0
        %9276 = vmatprep.subr.mxu0 0.0
        %9277 = vmatpush2.msra.mxu0 0.0
        %9278 = vmatprep.subr.mxu0 0.0
        %9279 = vmatpush2.msra.mxu0 0.0
        %9280 = vmatprep.subr.mxu0 0.0
        %9281 = vmatpush2.msra.mxu0 0.0
        %9282 = vmatprep.subr.mxu0 0.0
        %9283 = vmatpush2.msra.mxu0 0.0
        %9284 = vmatprep.subr.mxu0 0.0
        %9285 = vmatpush2.msra.mxu0 0.0
        %9286 = vmatprep.subr.mxu0 0.0
        %9287 = vmatpush2.msra.mxu0 0.0
        %9288 = vmatprep.subr.mxu0 0.0
        %9289 = vmatpush2.msra.mxu0 0.0
        %9290 = vmatprep.subr.mxu0 0.0
        %9291 = vmatpush2.msra.mxu0 0.0
        %9292 = vmatprep.subr.mxu0 0.0
        %9293 = vmatpush2.msra.mxu0 0.0
        %9294 = vmatprep.subr.mxu0 0.0
        %9295 = vmatpush2.msra.mxu0 0.0
        %9296 = vmatprep.subr.mxu0 0.0
        %9297 = vmatpush2.msra.mxu0 0.0
        %9298 = vmatprep.subr.mxu0 0.0
        %9299 = vmatpush2.msra.mxu0 0.0
        %9300 = vmatprep.subr.mxu0 0.0
        %9301 = vmatpush2.msra.mxu0 0.0
        %9302 = vmatprep.subr.mxu0 0.0
        %9303 = vmatpush2.msra.mxu0 0.0
        %9304 = vmatprep.mubr.f32.mxu0 0.0
        %9305 = vmatmul.mubr.f32.gmra.mxu0 %v9187
        %v9306 = vpop.f32.mrf.mxu0
        %v9307 = vadd.f32 0.0, %v9306
        %v9308 = vpop.f32.mrf.mxu0
        %9309 = vmatprep.mubr.f32.mxu0 0.0
        %9310 = vmatmul.mubr.f32.gmra.mxu0 %v9188
        %v9311 = vpop.f32.mrf.mxu0
        %v9312 = vadd.f32 0.0, %v9311
        %v9313 = vpop.f32.mrf.mxu0
        %9314 = vmatprep.mubr.f32.mxu0 0.0
        %9315 = vmatmul.mubr.f32.gmra.mxu0 %v9189
        %v9316 = vpop.f32.mrf.mxu0
        %v9317 = vadd.f32 0.0, %v9316
        %v9318 = vpop.f32.mrf.mxu0
        %9319 = vmatprep.mubr.f32.mxu0 0.0
        %9320 = vmatmul.mubr.f32.gmra.mxu0 %v9190
        %v9321 = vpop.f32.mrf.mxu0
        %v9322 = vadd.f32 0.0, %v9321
        %v9323 = vpop.f32.mrf.mxu0
        %9324 = vmatprep.mubr.f32.mxu0 0.0
        %9325 = vmatmul.mubr.f32.gmra.mxu0 %v9191
        %v9326 = vpop.f32.mrf.mxu0
        %v9327 = vadd.f32 0.0, %v9326
        %v9328 = vpop.f32.mrf.mxu0
        %9329 = vmatprep.mubr.f32.mxu0 0.0
        %9330 = vmatmul.mubr.f32.gmra.mxu0 %v9192
        %v9331 = vpop.f32.mrf.mxu0
        %v9332 = vadd.f32 0.0, %v9331
        %v9333 = vpop.f32.mrf.mxu0
        %9334 = vmatprep.mubr.f32.mxu0 0.0
        %9335 = vmatmul.mubr.f32.gmra.mxu0 %v9193
        %v9336 = vpop.f32.mrf.mxu0
        %v9337 = vadd.f32 0.0, %v9336
        %v9338 = vpop.f32.mrf.mxu0
        %9339 = vmatprep.mubr.f32.mxu0 0.0
        %9340 = vmatmul.mubr.f32.gmra.mxu0 %v9194
        %v9341 = vpop.f32.mrf.mxu0
        %v9342 = vadd.f32 0.0, %v9341
        %v9343 = vpop.f32.mrf.mxu0
        %9344 = vmatprep.mubr.f32.mxu0 0.0
        %9345 = vmatmul.mubr.f32.gmra.mxu0 %v9195
        %v9346 = vpop.f32.mrf.mxu0
        %v9347 = vadd.f32 0.0, %v9346
        %v9348 = vpop.f32.mrf.mxu0
        %9349 = vmatprep.mubr.f32.mxu0 0.0
        %9350 = vmatmul.mubr.f32.gmra.mxu0 %v9196
        %v9351 = vpop.f32.mrf.mxu0
        %v9352 = vadd.f32 0.0, %v9351
        %v9353 = vpop.f32.mrf.mxu0
        %9354 = vmatprep.mubr.f32.mxu0 0.0
        %9355 = vmatmul.mubr.f32.gmra.mxu0 %v9197
        %v9356 = vpop.f32.mrf.mxu0
        %v9357 = vadd.f32 0.0, %v9356
        %v9358 = vpop.f32.mrf.mxu0
        %9359 = vmatprep.mubr.f32.mxu0 0.0
        %9360 = vmatmul.mubr.f32.gmra.mxu0 %v9198
        %v9361 = vpop.f32.mrf.mxu0
        %v9362 = vadd.f32 0.0, %v9361
        %v9363 = vpop.f32.mrf.mxu0
        %9364 = vmatprep.mubr.f32.mxu0 0.0
        %9365 = vmatmul.mubr.f32.gmra.mxu0 %v9199
        %v9366 = vpop.f32.mrf.mxu0
        %v9367 = vadd.f32 0.0, %v9366
        %v9368 = vpop.f32.mrf.mxu0
        %9369 = vmatprep.mubr.f32.mxu0 0.0
        %9370 = vmatmul.mubr.f32.gmra.mxu0 %v9200
        %v9371 = vpop.f32.mrf.mxu0
        %v9372 = vadd.f32 0.0, %v9371
        %v9373 = vpop.f32.mrf.mxu0
        %9374 = vmatprep.mubr.f32.mxu0 0.0
        %9375 = vmatmul.mubr.f32.gmra.mxu0 %v9201
        %v9376 = vpop.f32.mrf.mxu0
        %v9377 = vadd.f32 0.0, %v9376
        %v9378 = vpop.f32.mrf.mxu0
        %9379 = vmatprep.mubr.f32.mxu0 0.0
        %9380 = vmatmul.mubr.f32.gmra.mxu0 %v9202
        %v9381 = vpop.f32.mrf.mxu0
        %v9382 = vadd.f32 0.0, %v9381
        %v9383 = vpop.f32.mrf.mxu0
        %9384 = vmatprep.mubr.f32.mxu0 0.0
        %9385 = vmatmul.mubr.f32.gmra.mxu0 %v9203
        %v9386 = vpop.f32.mrf.mxu0
        %v9387 = vadd.f32 0.0, %v9386
        %v9388 = vpop.f32.mrf.mxu0
        %9389 = vmatprep.mubr.f32.mxu0 0.0
        %9390 = vmatmul.mubr.f32.gmra.mxu0 %v9204
        %v9391 = vpop.f32.mrf.mxu0
        %v9392 = vadd.f32 0.0, %v9391
        %v9393 = vpop.f32.mrf.mxu0
        %9394 = vmatprep.mubr.f32.mxu0 0.0
        %9395 = vmatmul.mubr.f32.gmra.mxu0 %v9205
        %v9396 = vpop.f32.mrf.mxu0
        %v9397 = vadd.f32 0.0, %v9396
        %v9398 = vpop.f32.mrf.mxu0
        %9399 = vmatprep.mubr.f32.mxu0 0.0
        %9400 = vmatmul.mubr.f32.gmra.mxu0 %v9206
        %v9401 = vpop.f32.mrf.mxu0
        %v9402 = vadd.f32 0.0, %v9401
        %v9403 = vpop.f32.mrf.mxu0
        %9404 = vmatprep.mubr.f32.mxu0 0.0
        %9405 = vmatmul.mubr.f32.gmra.mxu0 %v9207
        %v9406 = vpop.f32.mrf.mxu0
        %v9407 = vadd.f32 0.0, %v9406
        %v9408 = vpop.f32.mrf.mxu0
        %9409 = vmatprep.mubr.f32.mxu0 0.0
        %9410 = vmatmul.mubr.f32.gmra.mxu0 %v9208
        %v9411 = vpop.f32.mrf.mxu0
        %v9412 = vadd.f32 0.0, %v9411
        %v9413 = vpop.f32.mrf.mxu0
        %9414 = vmatprep.mubr.f32.mxu0 0.0
        %9415 = vmatmul.mubr.f32.gmra.mxu0 %v9209
        %v9416 = vpop.f32.mrf.mxu0
        %v9417 = vadd.f32 0.0, %v9416
        %v9418 = vpop.f32.mrf.mxu0
        %9419 = vmatprep.mubr.f32.mxu0 0.0
        %9420 = vmatmul.mubr.f32.gmra.mxu0 %v9210
        %v9421 = vpop.f32.mrf.mxu0
        %v9422 = vadd.f32 0.0, %v9421
        %v9423 = vpop.f32.mrf.mxu0
        %9424 = vmatprep.mubr.f32.mxu0 0.0
        %9425 = vmatmul.mubr.f32.gmra.mxu0 %v9211
        %v9426 = vpop.f32.mrf.mxu0
        %v9427 = vadd.f32 0.0, %v9426
        %v9428 = vpop.f32.mrf.mxu0
        %9429 = vmatprep.mubr.f32.mxu0 0.0
        %9430 = vmatmul.mubr.f32.gmra.mxu0 %v9212
        %v9431 = vpop.f32.mrf.mxu0
        %v9432 = vadd.f32 0.0, %v9431
        %v9433 = vpop.f32.mrf.mxu0
        %9434 = vmatprep.mubr.f32.mxu0 0.0
        %9435 = vmatmul.mubr.f32.gmra.mxu0 %v9213
        %v9436 = vpop.f32.mrf.mxu0
        %v9437 = vadd.f32 0.0, %v9436
        %v9438 = vpop.f32.mrf.mxu0
        %9439 = vmatprep.mubr.f32.mxu0 0.0
        %9440 = vmatmul.mubr.f32.gmra.mxu0 %v9214
        %v9441 = vpop.f32.mrf.mxu0
        %v9442 = vadd.f32 0.0, %v9441
        %v9443 = vpop.f32.mrf.mxu0
        %9444 = vmatprep.mubr.f32.mxu0 0.0
        %9445 = vmatmul.mubr.f32.gmra.mxu0 %v9215
        %v9446 = vpop.f32.mrf.mxu0
        %v9447 = vadd.f32 0.0, %v9446
        %v9448 = vpop.f32.mrf.mxu0
        %9449 = vmatprep.mubr.f32.mxu0 0.0
        %9450 = vmatmul.mubr.f32.gmra.mxu0 %v9216
        %v9451 = vpop.f32.mrf.mxu0
        %v9452 = vadd.f32 0.0, %v9451
        %v9453 = vpop.f32.mrf.mxu0
        %9454 = vmatprep.mubr.f32.mxu0 0.0
        %9455 = vmatmul.mubr.f32.gmra.mxu0 %v9217
        %v9456 = vpop.f32.mrf.mxu0
        %v9457 = vadd.f32 0.0, %v9456
        %v9458 = vpop.f32.mrf.mxu0
        %9459 = vmatprep.mubr.f32.mxu0 0.0
        %9460 = vmatmul.mubr.f32.gmra.mxu0 %v9218
        %v9461 = vpop.f32.mrf.mxu0
        %v9462 = vadd.f32 0.0, %v9461
        %v9463 = vpop.f32.mrf.mxu0
        %9464 = vmatprep.mubr.f32.mxu0 0.0
        %9465 = vmatmul.mubr.f32.gmra.mxu0 %v9219
        %v9466 = vpop.f32.mrf.mxu0
        %v9467 = vadd.f32 0.0, %v9466
        %v9468 = vpop.f32.mrf.mxu0
        %9469 = vmatprep.mubr.f32.mxu0 0.0
        %9470 = vmatmul.mubr.f32.gmra.mxu0 %v9220
        %v9471 = vpop.f32.mrf.mxu0
        %v9472 = vadd.f32 0.0, %v9471
        %v9473 = vpop.f32.mrf.mxu0
        %9474 = vmatprep.mubr.f32.mxu0 0.0
        %9475 = vmatmul.mubr.f32.gmra.mxu0 %v9221
        %v9476 = vpop.f32.mrf.mxu0
        %v9477 = vadd.f32 0.0, %v9476
        %v9478 = vpop.f32.mrf.mxu0
        %9479 = vmatprep.mubr.f32.mxu0 0.0
        %9480 = vmatmul.mubr.f32.gmra.mxu0 %v9222
        %v9481 = vpop.f32.mrf.mxu0
        %v9482 = vadd.f32 0.0, %v9481
        %v9483 = vpop.f32.mrf.mxu0
        %9484 = vdwg.mxu0
        %v9485 = vld [vmem:[#allocation6] sm:$0xff]
        %v9486 = vld [vmem:[#allocation6 + $0x8] sm:$0xff]
        %v9487 = vld [vmem:[#allocation6 + $0x10] sm:$0xff]
        %v9488 = vld [vmem:[#allocation6 + $0x18] sm:$0xff]
        %v9489 = vld [vmem:[#allocation6 + $0x20] sm:$0xff]
        %v9490 = vld [vmem:[#allocation6 + $0x28] sm:$0xff]
        %v9491 = vld [vmem:[#allocation6 + $0x30] sm:$0xff]
        %v9492 = vld [vmem:[#allocation6 + $0x38] sm:$0xff]
        %v9493 = vld [vmem:[#allocation6 + $0x40] sm:$0xff]
        %v9494 = vld [vmem:[#allocation6 + $0x48] sm:$0xff]
        %v9495 = vld [vmem:[#allocation6 + $0x50] sm:$0xff]
        %v9496 = vld [vmem:[#allocation6 + $0x58] sm:$0xff]
        %v9497 = vld [vmem:[#allocation6 + $0x60] sm:$0xff]
        %v9498 = vld [vmem:[#allocation6 + $0x68] sm:$0xff]
        %v9499 = vld [vmem:[#allocation6 + $0x70] sm:$0xff]
        %v9500 = vld [vmem:[#allocation6 + $0x78] sm:$0xff]
        %v9501 = vld [vmem:[#allocation6 + $0x80] sm:$0xff]
        %v9502 = vld [vmem:[#allocation6 + $0x88] sm:$0xff]
        %v9503 = vld [vmem:[#allocation6 + $0x90] sm:$0xff]
        %v9504 = vld [vmem:[#allocation6 + $0x98] sm:$0xff]
        %v9505 = vld [vmem:[#allocation6 + $0xa0] sm:$0xff]
        %v9506 = vld [vmem:[#allocation6 + $0xa8] sm:$0xff]
        %v9507 = vld [vmem:[#allocation6 + $0xb0] sm:$0xff]
        %v9508 = vld [vmem:[#allocation6 + $0xb8] sm:$0xff]
        %v9509 = vld [vmem:[#allocation6 + $0xc0] sm:$0xff]
        %v9510 = vld [vmem:[#allocation6 + $0xc8] sm:$0xff]
        %v9511 = vld [vmem:[#allocation6 + $0xd0] sm:$0xff]
        %v9512 = vld [vmem:[#allocation6 + $0xd8] sm:$0xff]
        %v9513 = vld [vmem:[#allocation6 + $0xe0] sm:$0xff]
        %v9514 = vld [vmem:[#allocation6 + $0xe8] sm:$0xff]
        %v9515 = vld [vmem:[#allocation6 + $0xf0] sm:$0xff]
        %v9516 = vld [vmem:[#allocation6 + $0xf8] sm:$0xff]
        %v9517 = vld [vmem:[#allocation6 + $0x100] sm:$0xff]
        %v9518 = vld [vmem:[#allocation6 + $0x108] sm:$0xff]
        %v9519 = vld [vmem:[#allocation6 + $0x110] sm:$0xff]
        %v9520 = vld [vmem:[#allocation6 + $0x118] sm:$0x1]
        %v9521 = vadd.f32 %v9485, %v9307
        %v9522 = vadd.f32 %v9486, %v9312
        %v9523 = vadd.f32 %v9487, %v9317
        %v9524 = vadd.f32 %v9488, %v9322
        %v9525 = vadd.f32 %v9489, %v9327
        %v9526 = vadd.f32 %v9490, %v9332
        %v9527 = vadd.f32 %v9491, %v9337
        %v9528 = vadd.f32 %v9492, %v9342
        %v9529 = vadd.f32 %v9493, %v9347
        %v9530 = vadd.f32 %v9494, %v9352
        %v9531 = vadd.f32 %v9495, %v9357
        %v9532 = vadd.f32 %v9496, %v9362
        %v9533 = vadd.f32 %v9497, %v9367
        %v9534 = vadd.f32 %v9498, %v9372
        %v9535 = vadd.f32 %v9499, %v9377
        %v9536 = vadd.f32 %v9500, %v9382
        %v9537 = vadd.f32 %v9501, %v9387
        %v9538 = vadd.f32 %v9502, %v9392
        %v9539 = vadd.f32 %v9503, %v9397
        %v9540 = vadd.f32 %v9504, %v9402
        %v9541 = vadd.f32 %v9505, %v9407
        %v9542 = vadd.f32 %v9506, %v9412
        %v9543 = vadd.f32 %v9507, %v9417
        %v9544 = vadd.f32 %v9508, %v9422
        %v9545 = vadd.f32 %v9509, %v9427
        %v9546 = vadd.f32 %v9510, %v9432
        %v9547 = vadd.f32 %v9511, %v9437
        %v9548 = vadd.f32 %v9512, %v9442
        %v9549 = vadd.f32 %v9513, %v9447
        %v9550 = vadd.f32 %v9514, %v9452
        %v9551 = vadd.f32 %v9515, %v9457
        %v9552 = vadd.f32 %v9516, %v9462
        %v9553 = vadd.f32 %v9517, %v9467
        %v9554 = vadd.f32 %v9518, %v9472
        %v9555 = vadd.f32 %v9519, %v9477
        %v9556 = vadd.f32 %v9520, %v9482
        %9557 = vst [vmem:[#allocation6] sm:$0xff] %v9521
        %9558 = vst [vmem:[#allocation6 + $0x8] sm:$0xff] %v9522
        %9559 = vst [vmem:[#allocation6 + $0x10] sm:$0xff] %v9523
        %9560 = vst [vmem:[#allocation6 + $0x18] sm:$0xff] %v9524
        %9561 = vst [vmem:[#allocation6 + $0x20] sm:$0xff] %v9525
        %9562 = vst [vmem:[#allocation6 + $0x28] sm:$0xff] %v9526
        %9563 = vst [vmem:[#allocation6 + $0x30] sm:$0xff] %v9527
        %9564 = vst [vmem:[#allocation6 + $0x38] sm:$0xff] %v9528
        %9565 = vst [vmem:[#allocation6 + $0x40] sm:$0xff] %v9529
        %9566 = vst [vmem:[#allocation6 + $0x48] sm:$0xff] %v9530
        %9567 = vst [vmem:[#allocation6 + $0x50] sm:$0xff] %v9531
        %9568 = vst [vmem:[#allocation6 + $0x58] sm:$0xff] %v9532
        %9569 = vst [vmem:[#allocation6 + $0x60] sm:$0xff] %v9533
        %9570 = vst [vmem:[#allocation6 + $0x68] sm:$0xff] %v9534
        %9571 = vst [vmem:[#allocation6 + $0x70] sm:$0xff] %v9535
        %9572 = vst [vmem:[#allocation6 + $0x78] sm:$0xff] %v9536
        %9573 = vst [vmem:[#allocation6 + $0x80] sm:$0xff] %v9537
        %9574 = vst [vmem:[#allocation6 + $0x88] sm:$0xff] %v9538
        %9575 = vst [vmem:[#allocation6 + $0x90] sm:$0xff] %v9539
        %9576 = vst [vmem:[#allocation6 + $0x98] sm:$0xff] %v9540
        %9577 = vst [vmem:[#allocation6 + $0xa0] sm:$0xff] %v9541
        %9578 = vst [vmem:[#allocation6 + $0xa8] sm:$0xff] %v9542
        %9579 = vst [vmem:[#allocation6 + $0xb0] sm:$0xff] %v9543
        %9580 = vst [vmem:[#allocation6 + $0xb8] sm:$0xff] %v9544
        %9581 = vst [vmem:[#allocation6 + $0xc0] sm:$0xff] %v9545
        %9582 = vst [vmem:[#allocation6 + $0xc8] sm:$0xff] %v9546
        %9583 = vst [vmem:[#allocation6 + $0xd0] sm:$0xff] %v9547
        %9584 = vst [vmem:[#allocation6 + $0xd8] sm:$0xff] %v9548
        %9585 = vst [vmem:[#allocation6 + $0xe0] sm:$0xff] %v9549
        %9586 = vst [vmem:[#allocation6 + $0xe8] sm:$0xff] %v9550
        %9587 = vst [vmem:[#allocation6 + $0xf0] sm:$0xff] %v9551
        %9588 = vst [vmem:[#allocation6 + $0xf8] sm:$0xff] %v9552
        %9589 = vst [vmem:[#allocation6 + $0x100] sm:$0xff] %v9553
        %9590 = vst [vmem:[#allocation6 + $0x108] sm:$0xff] %v9554
        %9591 = vst [vmem:[#allocation6 + $0x110] sm:$0xff] %v9555
        %9592 = vst [vmem:[#allocation6 + $0x118] sm:$0x1] %v9556
        %v9593 = vld [vmem:[#allocation6] sm:$0x1]
        %v9594 = vld [vmem:[#allocation6 + $0x28] sm:$0x1]
        %v9595 = vld [vmem:[#allocation6 + $0x50] sm:$0x1]
        %v9596 = vld [vmem:[#allocation6 + $0x78] sm:$0x1]
        %v9597 = vld [vmem:[#allocation6 + $0xa0] sm:$0x1]
        %v9598 = vld [vmem:[#allocation6 + $0xc8] sm:$0x1]
        %v9599 = vld [vmem:[#allocation6 + $0xf0] sm:$0x1]
        %v9600 = vld [vmem:[#allocation6 + $0x118] sm:$0x1]
        %v9602 = vrot.slane %v9594, 7
        %v9605 = vrot.slane %v9595, 6
        %v9608 = vrot.slane %v9596, 5
        %v9611 = vrot.slane %v9597, 4
        %v9614 = vrot.slane %v9598, 3
        %v9617 = vrot.slane %v9599, 2
        %v9620 = vrot.slane %v9600, 1
        %vm9622 = vcmask 1040384
        %v9623 = vsel %vm9622, %v9593, %v9602
        %vm9624 = vcmask 1041408
        %v9625 = vsel %vm9624, %v9623, %v9605
        %vm9626 = vcmask 1042432
        %v9627 = vsel %vm9626, %v9625, %v9608
        %vm9628 = vcmask 1043456
        %v9629 = vsel %vm9628, %v9627, %v9611
        %vm9630 = vcmask 1044480
        %v9631 = vsel %vm9630, %v9629, %v9614
        %v9632 = vsel %vm7247, %v9631, %v9617
        %v9633 = vsel %vm3652, %v9632, %v9620
        %v9634 = vld [vmem:[%s6] sm:$0x1]
        %v9636 = vlaneseq
        %v9637 = vshrl.u32 %v9636, 7
        %v9638 = vsub.s32 0, %v9637
        %v9639 = vrot.slane %v9634, %v9638
        %v9641 = vadd.f32 %v9633, %v9639
        %v9642 = vmax.f32 %v9641, 0.0
        %v9643 = vld [vmem:[%s7] sm:$0xff]
        %v9644 = vld [vmem:[%s7 + $0x8] sm:$0xff]
        %v9645 = vld [vmem:[%s7 + $0x10] sm:$0xff]
        %v9646 = vld [vmem:[%s7 + $0x18] sm:$0xff]
        %v9647 = vld [vmem:[%s7 + $0x20] sm:$0xff]
        %v9648 = vld [vmem:[%s7 + $0x28] sm:$0xff]
        %v9649 = vld [vmem:[%s7 + $0x30] sm:$0xff]
        %v9650 = vld [vmem:[%s7 + $0x38] sm:$0xff]
        %v9651 = vld [vmem:[%s7 + $0x40] sm:$0xff]
        %v9652 = vld [vmem:[%s7 + $0x48] sm:$0xff]
        %v9653 = vld [vmem:[%s7 + $0x50] sm:$0xff]
        %v9654 = vld [vmem:[%s7 + $0x58] sm:$0xff]
        %v9655 = vld [vmem:[%s7 + $0x60] sm:$0xff]
        %v9656 = vld [vmem:[%s7 + $0x68] sm:$0xff]
        %v9657 = vld [vmem:[%s7 + $0x70] sm:$0xff]
        %v9658 = vld [vmem:[%s7 + $0x78] sm:$0xff]
        %v9659 = vld [vmem:[%s8] sm:$0x1]
        %v9661 = vlaneseq
        %v9662 = vshrl.u32 %v9661, 7
        %v9663 = vsub.s32 0, %v9662
        %v9664 = vrot.slane %v9659, %v9663
        %9666 = vmatprep.subr.mxu0 0.0
        %9667 = vmatpush1.msra.mxu0 %v9658
        %9668 = vmatprep.subr.mxu0 0.0
        %9669 = vmatpush1.msra.mxu0 %v9657
        %9670 = vmatprep.subr.mxu0 0.0
        %9671 = vmatpush1.msra.mxu0 %v9656
        %9672 = vmatprep.subr.mxu0 0.0
        %9673 = vmatpush1.msra.mxu0 %v9655
        %9674 = vmatprep.subr.mxu0 0.0
        %9675 = vmatpush1.msra.mxu0 %v9654
        %9676 = vmatprep.subr.mxu0 0.0
        %9677 = vmatpush1.msra.mxu0 %v9653
        %9678 = vmatprep.subr.mxu0 0.0
        %9679 = vmatpush1.msra.mxu0 %v9652
        %9680 = vmatprep.subr.mxu0 0.0
        %9681 = vmatpush1.msra.mxu0 %v9651
        %9682 = vmatprep.subr.mxu0 0.0
        %9683 = vmatpush1.msra.mxu0 %v9650
        %9684 = vmatprep.subr.mxu0 0.0
        %9685 = vmatpush1.msra.mxu0 %v9649
        %9686 = vmatprep.subr.mxu0 0.0
        %9687 = vmatpush1.msra.mxu0 %v9648
        %9688 = vmatprep.subr.mxu0 0.0
        %9689 = vmatpush1.msra.mxu0 %v9647
        %9690 = vmatprep.subr.mxu0 0.0
        %9691 = vmatpush1.msra.mxu0 %v9646
        %9692 = vmatprep.subr.mxu0 0.0
        %9693 = vmatpush1.msra.mxu0 %v9645
        %9694 = vmatprep.subr.mxu0 0.0
        %9695 = vmatpush1.msra.mxu0 %v9644
        %9696 = vmatprep.subr.mxu0 0.0
        %9697 = vmatpush1.msra.mxu0 %v9643
        %9698 = vmatprep.subr.mxu0 0.0
        %9699 = vmatpush2.msra.mxu0 0.0
        %9700 = vmatprep.subr.mxu0 0.0
        %9701 = vmatpush2.msra.mxu0 0.0
        %9702 = vmatprep.subr.mxu0 0.0
        %9703 = vmatpush2.msra.mxu0 0.0
        %9704 = vmatprep.subr.mxu0 0.0
        %9705 = vmatpush2.msra.mxu0 0.0
        %9706 = vmatprep.subr.mxu0 0.0
        %9707 = vmatpush2.msra.mxu0 0.0
        %9708 = vmatprep.subr.mxu0 0.0
        %9709 = vmatpush2.msra.mxu0 0.0
        %9710 = vmatprep.subr.mxu0 0.0
        %9711 = vmatpush2.msra.mxu0 0.0
        %9712 = vmatprep.subr.mxu0 0.0
        %9713 = vmatpush2.msra.mxu0 0.0
        %9714 = vmatprep.subr.mxu0 0.0
        %9715 = vmatpush2.msra.mxu0 0.0
        %9716 = vmatprep.subr.mxu0 0.0
        %9717 = vmatpush2.msra.mxu0 0.0
        %9718 = vmatprep.subr.mxu0 0.0
        %9719 = vmatpush2.msra.mxu0 0.0
        %9720 = vmatprep.subr.mxu0 0.0
        %9721 = vmatpush2.msra.mxu0 0.0
        %9722 = vmatprep.subr.mxu0 0.0
        %9723 = vmatpush2.msra.mxu0 0.0
        %9724 = vmatprep.subr.mxu0 0.0
        %9725 = vmatpush2.msra.mxu0 0.0
        %9726 = vmatprep.subr.mxu0 0.0
        %9727 = vmatpush2.msra.mxu0 0.0
        %9728 = vmatprep.subr.mxu0 0.0
        %9729 = vmatpush2.msra.mxu0 0.0
        %9730 = vmatprep.mubr.f32.mxu0 0.0
        %9731 = vmatmul.mubr.f32.gmra.mxu0 %v9642
        %v9732 = vpop.f32.mrf.mxu0
        %v9733 = vadd.f32 %v9664, %v9732
        %v9734 = vpop.f32.mrf.mxu0
        %9735 = vdwg.mxu0
        %v9736 = vmax.f32 %v9733, 0.0
        %v9737 = vld [vmem:[%s9] sm:$0xff]
        %v9738 = vld [vmem:[%s9 + $0x8] sm:$0xff]
        %v9739 = vld [vmem:[%s9 + $0x10] sm:$0xff]
        %v9740 = vld [vmem:[%s9 + $0x18] sm:$0xff]
        %v9741 = vld [vmem:[%s9 + $0x20] sm:$0xff]
        %v9742 = vld [vmem:[%s9 + $0x28] sm:$0xff]
        %v9743 = vld [vmem:[%s9 + $0x30] sm:$0xff]
        %v9744 = vld [vmem:[%s9 + $0x38] sm:$0xff]
        %v9745 = vld [vmem:[%s9 + $0x40] sm:$0xff]
        %v9746 = vld [vmem:[%s9 + $0x48] sm:$0xff]
        %v9747 = vld [vmem:[%s9 + $0x50] sm:$0xff]
        %v9748 = vld [vmem:[%s9 + $0x58] sm:$0xff]
        %v9749 = vld [vmem:[%s9 + $0x60] sm:$0xff]
        %v9750 = vld [vmem:[%s9 + $0x68] sm:$0xff]
        %v9751 = vld [vmem:[%s9 + $0x70] sm:$0xff]
        %v9752 = vld [vmem:[%s9 + $0x78] sm:$0xff]
        %v9753 = vld [vmem:[%s10] sm:$0x1]
        %v9755 = vlaneseq
        %v9756 = vshrl.u32 %v9755, 7
        %v9757 = vsub.s32 0, %v9756
        %v9758 = vrot.slane %v9753, %v9757
        %9760 = vmatprep.subr.mxu0 0.0
        %9761 = vmatpush1.msra.mxu0 %v9752
        %9762 = vmatprep.subr.mxu0 0.0
        %9763 = vmatpush1.msra.mxu0 %v9751
        %9764 = vmatprep.subr.mxu0 0.0
        %9765 = vmatpush1.msra.mxu0 %v9750
        %9766 = vmatprep.subr.mxu0 0.0
        %9767 = vmatpush1.msra.mxu0 %v9749
        %9768 = vmatprep.subr.mxu0 0.0
        %9769 = vmatpush1.msra.mxu0 %v9748
        %9770 = vmatprep.subr.mxu0 0.0
        %9771 = vmatpush1.msra.mxu0 %v9747
        %9772 = vmatprep.subr.mxu0 0.0
        %9773 = vmatpush1.msra.mxu0 %v9746
        %9774 = vmatprep.subr.mxu0 0.0
        %9775 = vmatpush1.msra.mxu0 %v9745
        %9776 = vmatprep.subr.mxu0 0.0
        %9777 = vmatpush1.msra.mxu0 %v9744
        %9778 = vmatprep.subr.mxu0 0.0
        %9779 = vmatpush1.msra.mxu0 %v9743
        %9780 = vmatprep.subr.mxu0 0.0
        %9781 = vmatpush1.msra.mxu0 %v9742
        %9782 = vmatprep.subr.mxu0 0.0
        %9783 = vmatpush1.msra.mxu0 %v9741
        %9784 = vmatprep.subr.mxu0 0.0
        %9785 = vmatpush1.msra.mxu0 %v9740
        %9786 = vmatprep.subr.mxu0 0.0
        %9787 = vmatpush1.msra.mxu0 %v9739
        %9788 = vmatprep.subr.mxu0 0.0
        %9789 = vmatpush1.msra.mxu0 %v9738
        %9790 = vmatprep.subr.mxu0 0.0
        %9791 = vmatpush1.msra.mxu0 %v9737
        %9792 = vmatprep.subr.mxu0 0.0
        %9793 = vmatpush2.msra.mxu0 0.0
        %9794 = vmatprep.subr.mxu0 0.0
        %9795 = vmatpush2.msra.mxu0 0.0
        %9796 = vmatprep.subr.mxu0 0.0
        %9797 = vmatpush2.msra.mxu0 0.0
        %9798 = vmatprep.subr.mxu0 0.0
        %9799 = vmatpush2.msra.mxu0 0.0
        %9800 = vmatprep.subr.mxu0 0.0
        %9801 = vmatpush2.msra.mxu0 0.0
        %9802 = vmatprep.subr.mxu0 0.0
        %9803 = vmatpush2.msra.mxu0 0.0
        %9804 = vmatprep.subr.mxu0 0.0
        %9805 = vmatpush2.msra.mxu0 0.0
        %9806 = vmatprep.subr.mxu0 0.0
        %9807 = vmatpush2.msra.mxu0 0.0
        %9808 = vmatprep.subr.mxu0 0.0
        %9809 = vmatpush2.msra.mxu0 0.0
        %9810 = vmatprep.subr.mxu0 0.0
        %9811 = vmatpush2.msra.mxu0 0.0
        %9812 = vmatprep.subr.mxu0 0.0
        %9813 = vmatpush2.msra.mxu0 0.0
        %9814 = vmatprep.subr.mxu0 0.0
        %9815 = vmatpush2.msra.mxu0 0.0
        %9816 = vmatprep.subr.mxu0 0.0
        %9817 = vmatpush2.msra.mxu0 0.0
        %9818 = vmatprep.subr.mxu0 0.0
        %9819 = vmatpush2.msra.mxu0 0.0
        %9820 = vmatprep.subr.mxu0 0.0
        %9821 = vmatpush2.msra.mxu0 0.0
        %9822 = vmatprep.subr.mxu0 0.0
        %9823 = vmatpush2.msra.mxu0 0.0
        %9824 = vmatprep.mubr.f32.mxu0 0.0
        %9825 = vmatmul.mubr.f32.gmra.mxu0 %v9736
        %v9826 = vpop.f32.mrf.mxu0
        %v9827 = vadd.f32 %v9758, %v9826
        %v9828 = vpop.f32.mrf.mxu0
        %9829 = vdwg.mxu0
        %9830 = vst [vmem:[%s380] sm:$0xff] %v9827
        %s9831 = sand.u32 %s269, 1
        %s9832 = scalar_lea.sflag [#allocation8], %s9831
        %s9833 = sand.u32 %s269, 1
        %s9834 = smul.addr %s9833, 8
        %s9835 = scalar_lea.vmem [#allocation7], %s9834
        // Predicated region
        $region65: #{simple_cnn_forward.1} parent=63 // pred_check
          %p9836 = pneg %p279
        $region66: #{simple_cnn_forward.1} parent=63 // pred_check_branch
          %9838 = sbr.rel (%p9836) target = $region68
        $region67: #{simple_cnn_forward.1} parent=63 // pred_region
          %s9840 = ssub.s32 128, 128
          %9841 = vsyncadd %s9832, %s9840
          %s9842 = smul.addr %s25, 128
          %s9843 = scalar_lea.hbm %s11, %s9842
          %s9845 = sshll.u32 %s9835, 4
          %s9846 = int_to_ptr.vmem [resolvable:$true] %s9845
          %9848 = dma.vmem_to_hbm [thread:$0]  %s9846, 128, %s9843, %s9832
        $region68: #{simple_cnn_forward.1} parent=63 // pred_fallthru
          _
      $region64: #{simple_cnn_forward.1} parent=5 // pred_fallthru
        _
      %p9849 = scmp.le.s32.totalorder 2, %s20
      // Predicated region
      $region69: #{simple_cnn_forward.1} parent=5 // pred_check
        %p9850 = pneg %p9849
      $region70: #{simple_cnn_forward.1} parent=5 // pred_check_branch
        %9852 = sbr.rel (%p9850) target = $region72
      $region71: #{simple_cnn_forward.1} parent=5 // pred_region
        %s9853 = ssub.s32 %s20, 2
        // Predicated region
        $region73: #{simple_cnn_forward.1} parent=71 // pred_check
          %p9854 = pneg %p285
        $region74: #{simple_cnn_forward.1} parent=71 // pred_check_branch
          %9856 = sbr.rel (%p9854) target = $region76
        $region75: #{simple_cnn_forward.1} parent=71 // pred_region
          %s9857 = sand.u32 %s270, 1
          %s9858 = scalar_lea.sflag [#allocation8], %s9857
          %s9859 = sand.u32 %s270, 1
          %s9860 = smul.addr %s9859, 8
          %s9861 = scalar_lea.vmem [#allocation7], %s9860
          %9862 = dma.done %s9858, 128
        $region76: #{simple_cnn_forward.1} parent=71 // pred_fallthru
          _
      $region72: #{simple_cnn_forward.1} parent=5 // pred_fallthru
        _
    $region6: #{simple_cnn_forward.1} parent=1 // loop_footer
      %s24 = sadd.s32 1, %s20
    $region7: #{simple_cnn_forward.1} parent=1 // loop_footer_branch
      %19 = sbr.rel target = $region3
    $region8: #{simple_cnn_forward.1} parent=1 // loop_exit
      _
    %9863 = vsyncpa [#allocation8], 1
    %s9864 = scalar_lea.sflag [#allocation8], 1
    %9865 = vsyncpa %s9864, 1

</llo_original>
